<compile_context>
chip_gen: v7x
topology: tpu7x:2x2x1
jax: 0.10.0
libtpu: 0.0.40
codegen_flags: <defaults>
</compile_context>

<pallas_src>
import numpy as np

import jax
import jax.numpy as jnp
from jax.experimental import pallas as pl
from jax.experimental.pallas import tpu as pltpu
from jax.scipy.special import erf as _erf_exact


# ----------------------------- in-kernel math helpers -----------------------------

def _erf_approx(x):
    # Abramowitz & Stegun 7.1.26 (max abs error ~1.5e-7). torch.erf has no direct
    # Mosaic lowering, so evaluate the polynomial on the VPU; the reciprocal goes
    # to the EUP slot (approx=True) so it is essentially free next to the VALU work.
    p = 0.3275911
    a1, a2, a3, a4, a5 = (0.254829592, -0.284496736, 1.421413741,
                          -1.453152027, 1.061405429)
    sign = jnp.where(x >= 0.0, 1.0, -1.0)
    ax = jnp.abs(x)
    t = pl.reciprocal(1.0 + p * ax, approx=True)
    poly = t * (a1 + t * (a2 + t * (a3 + t * (a4 + t * a5))))
    return sign * (1.0 - poly * jnp.exp(-ax * ax))


def _gelu_erf(x):
    # Matches the module exactly: (v*0.5) * (erf(v*0.7071067811865476) + 1)
    return (x * 0.5) * (_erf_approx(x * 0.7071067811865476) + 1.0)


# ----------------------------- fused forward kernel -----------------------------

# Parity tables for the stride-2 transposed conv (kernel 5, padding 1):
# output row oh = 2*m + pr gets contributions from kernel rows kh with parity
# (pr+1) % 2, reading padded-grid row ihp = m + r0 (grid is 1-zero-padded, 16 rows).
_TAPS = {
    0: ((1, 1), (3, 0)),            # even output rows: (kh, row start in padded grid)
    1: ((0, 2), (2, 1), (4, 0)),    # odd output rows
}


def _fused_forward_kernel(xs_ref, w1_ref, b1_ref, sel_ref, msk_ref, w2_ref, b2_ref,
                          out_ref, t3_ref):
    # ---- conv_transpose1 (1x1, stride 3, pad 2) at its 16 live positions, + GELU
    y1 = jnp.dot(xs_ref[...], w1_ref[...], preferred_element_type=jnp.float32)
    b1 = b1_ref[...]                               # (1, 88)
    v6_used = _gelu_erf(y1 + b1)                   # (16, 88) live rows
    g_b1 = _gelu_erf(b1)                           # (1, 88) bias-only background

    # ---- assemble zero-padded GELU'd activation on the 16x16 padded grid
    #      (256 rows, p = ihp*16 + iwp).  sel one-hot scatters the 16 live rows;
    #      msk fills the interior 12x12 with gelu(b1); borders / pad stay exactly 0.
    v6p = jnp.dot(sel_ref[...], v6_used - g_b1, preferred_element_type=jnp.float32)
    v6p = v6p + msk_ref[...] * g_b1                # (256, 88)

    # ---- channel contraction for all 25 conv2 taps at once: (256,88)@(88,800).
    #      Row split 256 -> (16,16) is sublane-tile aligned, so the reshape+store
    #      is free (this replaces the old 14-row repack loop).
    t3_ref[...] = jnp.dot(v6p, w2_ref[...],
                          preferred_element_type=jnp.float32).reshape(16, 16, 800)

    # ---- transposed-conv accumulation by output parity class, + bias + GELU.
    #      Each tap window is a static box slice; channel blocks are 32-aligned.
    b2 = b2_ref[...]                               # (1, 1, 24)
    for pr in (0, 1):
        for pc in (0, 1):
            acc = None
            for kh, r0 in _TAPS[pr]:
                for kw, c0 in _TAPS[pc]:
                    t = kh * 5 + kw
                    win = t3_ref[r0:r0 + 13, c0:c0 + 13, t * 32:(t + 1) * 32]
                    acc = win if acc is None else acc + win
            out_ref[pr * 2 + pc] = _gelu_erf(acc[:, :, :24] + b2)


# ----------------------------- wrapper -----------------------------

def _scatter_constants():
    # sel[p, r] = 1 where padded-grid position p = ihp*16 + iwp is the r-th live
    # conv1 output (ihp, iwp in {2,5,8,11}); msk[p] = 1 on the interior 12x12.
    # Columns/rows 0, 13, 14, 15 of the grid stay exactly zero.
    sel = np.zeros((256, 16), np.float32)
    msk = np.zeros((256, 1), np.float32)
    live = (2, 5, 8, 11)
    for ihp in range(16):
        for iwp in range(16):
            p = ihp * 16 + iwp
            if 1 <= ihp <= 12 and 1 <= iwp <= 12:
                msk[p, 0] = 1.0
            if ihp in live and iwp in live:
                sel[p, live.index(ihp) * 4 + live.index(iwp)] = 1.0
    return jnp.asarray(sel), jnp.asarray(msk)


def model_forward(x, w1, b1, w2, b2):
    # x: (1, 5, 6, 6) NCHW  ->  (1, 24, 25, 25) NCHW
    sel, msk = _scatter_constants()

    # tiny layout prep (XLA): live input pixels + flattened / tap-padded weights
    x_sub = jnp.transpose(x[0, :, 1:5, 1:5], (1, 2, 0)).reshape(16, 5)
    w1m = w1.reshape(5, 88)
    b1r = b1.reshape(1, 88)
    # w2all[ic, (kh*5+kw)*32 + oc] = w2[ic, oc, kh, kw]  (oc padded 24 -> 32)
    w2t = jnp.transpose(w2, (0, 2, 3, 1))                 # (88, 5, 5, 24)
    w2t = jnp.pad(w2t, ((0, 0), (0, 0), (0, 0), (0, 8)))  # (88, 5, 5, 32)
    w2all = w2t.reshape(88, 800)
    b2r = b2.reshape(1, 1, 24)

    # single invocation, full-array VMEM blocks (no grid / pipelining machinery)
    blk = pl.pallas_call(
        _fused_forward_kernel,
        out_shape=jax.ShapeDtypeStruct((4, 13, 13, 24), jnp.float32),
        scratch_shapes=[pltpu.VMEM((16, 16, 800), jnp.float32)],
    )(x_sub, w1m, b1r, sel, msk, w2all, b2r)

    # parity de-interleave + NCHW transpose as one reshape/transpose chain
    blk = blk.reshape(2, 2, 13, 13, 24)                    # (pr, pc, m, n, oc)
    out = jnp.transpose(blk, (2, 0, 3, 1, 4)).reshape(26, 26, 24)[:25, :25, :]
    return jnp.transpose(out, (2, 0, 1))[None]


# ----------------------------- pure-JAX reference -----------------------------

def _reference_forward(x, w1, b1, w2, b2):
    y = jnp.einsum('chw,cd->dhw', x[0, :, 1:5, 1:5], w1.reshape(5, 88))   # (88,4,4)
    v1 = jnp.broadcast_to(b1[:, None, None], (88, 12, 12))
    v1 = v1.at[:, 1:12:3, 1:12:3].set(y + b1[:, None, None])
    v6 = v1 * 0.5 * (_erf_exact(v1 * 0.7071067811865476) + 1.0)
    w_c = jnp.flip(w2, (2, 3)).transpose(1, 0, 2, 3)                      # OIHW, flipped
    v7 = jax.lax.conv_general_dilated(
        v6[None], w_c, window_strides=(1, 1), padding=[(3, 3), (3, 3)],
        lhs_dilation=(2, 2), rhs_dilation=(1, 1),
        dimension_numbers=('NCHW', 'OIHW', 'NCHW'),
        precision=jax.lax.Precision.HIGHEST)
    v7 = v7 + b2[None, :, None, None]
    return v7 * 0.5 * (_erf_exact(v7 * 0.7071067811865476) + 1.0)


if __name__ == "__main__":
    key = jax.random.PRNGKey(0)
    k1, k2, k3, k4, k5 = jax.random.split(key, 5)

    # module-implied shapes: input (1,5,6,6); ConvT(5->88,k=1); ConvT(88->24,k=5)
    x1 = jax.random.normal(k1, (1, 5, 6, 6), jnp.float32)
    w1 = jax.random.normal(k2, (5, 88, 1, 1), jnp.float32) * (1.0 / 5.0) ** 0.5
    b1 = jax.random.normal(k3, (88,), jnp.float32) * 0.1
    w2 = jax.random.normal(k4, (88, 24, 5, 5), jnp.float32) * (1.0 / (88 * 25)) ** 0.5
    b2 = jax.random.normal(k5, (24,), jnp.float32) * 0.1

    out = jax.jit(model_forward)(x1, w1, b1, w2, b2)
    out = jax.block_until_ready(out)

    assert out.shape == (1, 24, 25, 25), out.shape
    assert bool(jnp.all(jnp.isfinite(out)))

    ref = _reference_forward(x1, w1, b1, w2, b2)
    max_err = float(jnp.max(jnp.abs(out - ref)))
    assert max_err < 1e-2, f"mismatch vs reference: max abs err = {max_err}"

    print("KERNEL_OK")
</pallas_src>

<mosaic_0001>
module attributes {stable_mosaic.version = 11 : i64} {
  func.func @_fused_forward_kernel(%arg0: memref<16x5xf32, #tpu.memory_space<vmem>>, %arg1: memref<5x88xf32, #tpu.memory_space<vmem>>, %arg2: memref<1x88xf32, #tpu.memory_space<vmem>>, %arg3: memref<256x16xf32, #tpu.memory_space<vmem>>, %arg4: memref<256x1xf32, #tpu.memory_space<vmem>>, %arg5: memref<88x800xf32, #tpu.memory_space<vmem>>, %arg6: memref<1x1x24xf32, #tpu.memory_space<vmem>>, %arg7: memref<4x13x13x24xf32, #tpu.memory_space<vmem>>, %arg8: memref<16x16x800xf32, #tpu.memory_space<vmem>>) attributes {dimension_semantics = [], scalar_prefetch = 0 : i64, scratch_operands = 1 : i64, tpu.core_type = #tpu.core_type<tc>} {
    %c0 = arith.constant 0 : index
    %c0_0 = arith.constant 0 : index
    %0 = vector.load %arg0[%c0, %c0_0] : memref<16x5xf32, #tpu.memory_space<vmem>>, vector<16x5xf32>
    %c0_1 = arith.constant 0 : index
    %c0_2 = arith.constant 0 : index
    %1 = vector.load %arg1[%c0_1, %c0_2] : memref<5x88xf32, #tpu.memory_space<vmem>>, vector<5x88xf32>
    %cst = arith.constant dense<0.000000e+00> : vector<16x88xf32>
    %2 = tpu.matmul %0, %1, %cst {dimension_numbers = #tpu.dot_dimension_numbers<[1], [0], [0], [1], [0, 0, 1, 1], [], []>} : vector<16x5xf32>, vector<5x88xf32>, vector<16x88xf32> -> vector<16x88xf32>
    %c0_3 = arith.constant 0 : index
    %c0_4 = arith.constant 0 : index
    %3 = vector.load %arg2[%c0_3, %c0_4] : memref<1x88xf32, #tpu.memory_space<vmem>>, vector<1x88xf32>
    %4 = vector.broadcast %3 : vector<1x88xf32> to vector<16x88xf32>
    %5 = arith.addf %2, %4 : vector<16x88xf32>
    %cst_5 = arith.constant 5.000000e-01 : f32
    %6 = vector.broadcast %cst_5 : f32 to vector<16x88xf32>
    %7 = arith.mulf %5, %6 : vector<16x88xf32>
    %cst_6 = arith.constant 0.707106769 : f32
    %8 = vector.broadcast %cst_6 : f32 to vector<16x88xf32>
    %9 = arith.mulf %5, %8 : vector<16x88xf32>
    %cst_7 = arith.constant 0.000000e+00 : f32
    %10 = vector.broadcast %cst_7 : f32 to vector<16x88xf32>
    %11 = arith.cmpf oge, %9, %10 : vector<16x88xf32>
    %cst_8 = arith.constant 1.000000e+00 : f32
    %cst_9 = arith.constant -1.000000e+00 : f32
    %12 = vector.broadcast %cst_8 : f32 to vector<16x88xf32>
    %13 = vector.broadcast %cst_9 : f32 to vector<16x88xf32>
    %14 = arith.select %11, %12, %13 : vector<16x88xi1>, vector<16x88xf32>
    %15 = math.absf %9 : vector<16x88xf32>
    %cst_10 = arith.constant 0.327591091 : f32
    %16 = vector.broadcast %cst_10 : f32 to vector<16x88xf32>
    %17 = arith.mulf %16, %15 : vector<16x88xf32>
    %cst_11 = arith.constant 1.000000e+00 : f32
    %18 = vector.broadcast %cst_11 : f32 to vector<16x88xf32>
    %19 = arith.addf %18, %17 : vector<16x88xf32>
    %20 = tpu.reciprocal %19 {approx = true} : vector<16x88xf32> -> vector<16x88xf32>
    %cst_12 = arith.constant 1.06140542 : f32
    %21 = vector.broadcast %cst_12 : f32 to vector<16x88xf32>
    %22 = arith.mulf %20, %21 : vector<16x88xf32>
    %cst_13 = arith.constant -1.45315206 : f32
    %23 = vector.broadcast %cst_13 : f32 to vector<16x88xf32>
    %24 = arith.addf %23, %22 : vector<16x88xf32>
    %25 = arith.mulf %20, %24 : vector<16x88xf32>
    %cst_14 = arith.constant 1.42141378 : f32
    %26 = vector.broadcast %cst_14 : f32 to vector<16x88xf32>
    %27 = arith.addf %26, %25 : vector<16x88xf32>
    %28 = arith.mulf %20, %27 : vector<16x88xf32>
    %cst_15 = arith.constant -0.284496725 : f32
    %29 = vector.broadcast %cst_15 : f32 to vector<16x88xf32>
    %30 = arith.addf %29, %28 : vector<16x88xf32>
    %31 = arith.mulf %20, %30 : vector<16x88xf32>
    %cst_16 = arith.constant 0.254829586 : f32
    %32 = vector.broadcast %cst_16 : f32 to vector<16x88xf32>
    %33 = arith.addf %32, %31 : vector<16x88xf32>
    %34 = arith.mulf %20, %33 : vector<16x88xf32>
    %cst_17 = arith.constant 0.000000e+00 : f32
    %35 = vector.broadcast %cst_17 : f32 to vector<16x88xf32>
    %36 = arith.subf %35, %15 : vector<16x88xf32>
    %37 = arith.mulf %36, %15 : vector<16x88xf32>
    %38 = math.exp %37 : vector<16x88xf32>
    %39 = arith.mulf %34, %38 : vector<16x88xf32>
    %cst_18 = arith.constant 1.000000e+00 : f32
    %40 = vector.broadcast %cst_18 : f32 to vector<16x88xf32>
    %41 = arith.subf %40, %39 : vector<16x88xf32>
    %42 = arith.mulf %14, %41 : vector<16x88xf32>
    %cst_19 = arith.constant 1.000000e+00 : f32
    %43 = vector.broadcast %cst_19 : f32 to vector<16x88xf32>
    %44 = arith.addf %42, %43 : vector<16x88xf32>
    %45 = arith.mulf %7, %44 : vector<16x88xf32>
    %cst_20 = arith.constant 5.000000e-01 : f32
    %46 = vector.broadcast %cst_20 : f32 to vector<1x88xf32>
    %47 = arith.mulf %3, %46 : vector<1x88xf32>
    %cst_21 = arith.constant 0.707106769 : f32
    %48 = vector.broadcast %cst_21 : f32 to vector<1x88xf32>
    %49 = arith.mulf %3, %48 : vector<1x88xf32>
    %cst_22 = arith.constant 0.000000e+00 : f32
    %50 = vector.broadcast %cst_22 : f32 to vector<1x88xf32>
    %51 = arith.cmpf oge, %49, %50 : vector<1x88xf32>
    %cst_23 = arith.constant 1.000000e+00 : f32
    %cst_24 = arith.constant -1.000000e+00 : f32
    %52 = vector.broadcast %cst_23 : f32 to vector<1x88xf32>
    %53 = vector.broadcast %cst_24 : f32 to vector<1x88xf32>
    %54 = arith.select %51, %52, %53 : vector<1x88xi1>, vector<1x88xf32>
    %55 = math.absf %49 : vector<1x88xf32>
    %cst_25 = arith.constant 0.327591091 : f32
    %56 = vector.broadcast %cst_25 : f32 to vector<1x88xf32>
    %57 = arith.mulf %56, %55 : vector<1x88xf32>
    %cst_26 = arith.constant 1.000000e+00 : f32
    %58 = vector.broadcast %cst_26 : f32 to vector<1x88xf32>
    %59 = arith.addf %58, %57 : vector<1x88xf32>
    %60 = tpu.reciprocal %59 {approx = true} : vector<1x88xf32> -> vector<1x88xf32>
    %cst_27 = arith.constant 1.06140542 : f32
    %61 = vector.broadcast %cst_27 : f32 to vector<1x88xf32>
    %62 = arith.mulf %60, %61 : vector<1x88xf32>
    %cst_28 = arith.constant -1.45315206 : f32
    %63 = vector.broadcast %cst_28 : f32 to vector<1x88xf32>
    %64 = arith.addf %63, %62 : vector<1x88xf32>
    %65 = arith.mulf %60, %64 : vector<1x88xf32>
    %cst_29 = arith.constant 1.42141378 : f32
    %66 = vector.broadcast %cst_29 : f32 to vector<1x88xf32>
    %67 = arith.addf %66, %65 : vector<1x88xf32>
    %68 = arith.mulf %60, %67 : vector<1x88xf32>
    %cst_30 = arith.constant -0.284496725 : f32
    %69 = vector.broadcast %cst_30 : f32 to vector<1x88xf32>
    %70 = arith.addf %69, %68 : vector<1x88xf32>
    %71 = arith.mulf %60, %70 : vector<1x88xf32>
    %cst_31 = arith.constant 0.254829586 : f32
    %72 = vector.broadcast %cst_31 : f32 to vector<1x88xf32>
    %73 = arith.addf %72, %71 : vector<1x88xf32>
    %74 = arith.mulf %60, %73 : vector<1x88xf32>
    %cst_32 = arith.constant 0.000000e+00 : f32
    %75 = vector.broadcast %cst_32 : f32 to vector<1x88xf32>
    %76 = arith.subf %75, %55 : vector<1x88xf32>
    %77 = arith.mulf %76, %55 : vector<1x88xf32>
    %78 = math.exp %77 : vector<1x88xf32>
    %79 = arith.mulf %74, %78 : vector<1x88xf32>
    %cst_33 = arith.constant 1.000000e+00 : f32
    %80 = vector.broadcast %cst_33 : f32 to vector<1x88xf32>
    %81 = arith.subf %80, %79 : vector<1x88xf32>
    %82 = arith.mulf %54, %81 : vector<1x88xf32>
    %cst_34 = arith.constant 1.000000e+00 : f32
    %83 = vector.broadcast %cst_34 : f32 to vector<1x88xf32>
    %84 = arith.addf %82, %83 : vector<1x88xf32>
    %85 = arith.mulf %47, %84 : vector<1x88xf32>
    %c0_35 = arith.constant 0 : index
    %c0_36 = arith.constant 0 : index
    %86 = vector.load %arg3[%c0_35, %c0_36] : memref<256x16xf32, #tpu.memory_space<vmem>>, vector<256x16xf32>
    %87 = vector.broadcast %85 : vector<1x88xf32> to vector<16x88xf32>
    %88 = arith.subf %45, %87 : vector<16x88xf32>
    %cst_37 = arith.constant dense<0.000000e+00> : vector<256x88xf32>
    %89 = tpu.matmul %86, %88, %cst_37 {dimension_numbers = #tpu.dot_dimension_numbers<[1], [0], [0], [1], [0, 0, 1, 1], [], []>} : vector<256x16xf32>, vector<16x88xf32>, vector<256x88xf32> -> vector<256x88xf32>
    %c0_38 = arith.constant 0 : index
    %c0_39 = arith.constant 0 : index
    %90 = vector.load %arg4[%c0_38, %c0_39] : memref<256x1xf32, #tpu.memory_space<vmem>>, vector<256x1xf32>
    %91 = vector.broadcast %90 : vector<256x1xf32> to vector<256x88xf32>
    %92 = vector.broadcast %85 : vector<1x88xf32> to vector<256x88xf32>
    %93 = arith.mulf %91, %92 : vector<256x88xf32>
    %94 = arith.addf %89, %93 : vector<256x88xf32>
    %c0_40 = arith.constant 0 : index
    %c0_41 = arith.constant 0 : index
    %95 = vector.load %arg5[%c0_40, %c0_41] : memref<88x800xf32, #tpu.memory_space<vmem>>, vector<88x800xf32>
    %cst_42 = arith.constant dense<0.000000e+00> : vector<256x800xf32>
    %96 = tpu.matmul %94, %95, %cst_42 {dimension_numbers = #tpu.dot_dimension_numbers<[1], [0], [0], [1], [0, 0, 1, 1], [], []>} : vector<256x88xf32>, vector<88x800xf32>, vector<256x800xf32> -> vector<256x800xf32>
    %97 = vector.shape_cast %96 : vector<256x800xf32> to vector<16x16x800xf32>
    %c0_43 = arith.constant 0 : index
    %c0_44 = arith.constant 0 : index
    %c0_45 = arith.constant 0 : index
    %98 = vector.load %arg8[%c0_43, %c0_44, %c0_45] : memref<16x16x800xf32, #tpu.memory_space<vmem>>, vector<16x16x800xf32>
    tpu.vector_store %arg8[%c0_43, %c0_44, %c0_45], %97 {strides = array<i32>} : memref<16x16x800xf32, #tpu.memory_space<vmem>>, vector<16x16x800xf32>,
    %c0_46 = arith.constant 0 : index
    %c0_47 = arith.constant 0 : index
    %c0_48 = arith.constant 0 : index
    %99 = vector.load %arg6[%c0_46, %c0_47, %c0_48] : memref<1x1x24xf32, #tpu.memory_space<vmem>>, vector<1x1x24xf32>
    %c1 = arith.constant 1 : index
    %c1_49 = arith.constant 1 : index
    %c192 = arith.constant 192 : index
    %100 = vector.load %arg8[%c1, %c1_49, %c192] : memref<16x16x800xf32, #tpu.memory_space<vmem>>, vector<13x13x32xf32>
    %c1_50 = arith.constant 1 : index
    %c0_51 = arith.constant 0 : index
    %c256 = arith.constant 256 : index
    %101 = vector.load %arg8[%c1_50, %c0_51, %c256] : memref<16x16x800xf32, #tpu.memory_space<vmem>>, vector<13x13x32xf32>
    %102 = arith.addf %100, %101 : vector<13x13x32xf32>
    %c0_52 = arith.constant 0 : index
    %c1_53 = arith.constant 1 : index
    %c512 = arith.constant 512 : index
    %103 = vector.load %arg8[%c0_52, %c1_53, %c512] : memref<16x16x800xf32, #tpu.memory_space<vmem>>, vector<13x13x32xf32>
    %104 = arith.addf %102, %103 : vector<13x13x32xf32>
    %c0_54 = arith.constant 0 : index
    %c0_55 = arith.constant 0 : index
    %c576 = arith.constant 576 : index
    %105 = vector.load %arg8[%c0_54, %c0_55, %c576] : memref<16x16x800xf32, #tpu.memory_space<vmem>>, vector<13x13x32xf32>
    %106 = arith.addf %104, %105 : vector<13x13x32xf32>
    %107 = vector.extract_strided_slice %106 {offsets = [0, 0, 0], sizes = [13, 13, 24], strides = [1, 1, 1]} : vector<13x13x32xf32> to vector<13x13x24xf32>
    %108 = vector.broadcast %99 : vector<1x1x24xf32> to vector<13x13x24xf32>
    %109 = arith.addf %107, %108 : vector<13x13x24xf32>
    %cst_56 = arith.constant 5.000000e-01 : f32
    %110 = vector.broadcast %cst_56 : f32 to vector<13x13x24xf32>
    %111 = arith.mulf %109, %110 : vector<13x13x24xf32>
    %cst_57 = arith.constant 0.707106769 : f32
    %112 = vector.broadcast %cst_57 : f32 to vector<13x13x24xf32>
    %113 = arith.mulf %109, %112 : vector<13x13x24xf32>
    %cst_58 = arith.constant 0.000000e+00 : f32
    %114 = vector.broadcast %cst_58 : f32 to vector<13x13x24xf32>
    %115 = arith.cmpf oge, %113, %114 : vector<13x13x24xf32>
    %cst_59 = arith.constant 1.000000e+00 : f32
    %cst_60 = arith.constant -1.000000e+00 : f32
    %116 = vector.broadcast %cst_59 : f32 to vector<13x13x24xf32>
    %117 = vector.broadcast %cst_60 : f32 to vector<13x13x24xf32>
    %118 = arith.select %115, %116, %117 : vector<13x13x24xi1>, vector<13x13x24xf32>
    %119 = math.absf %113 : vector<13x13x24xf32>
    %cst_61 = arith.constant 0.327591091 : f32
    %120 = vector.broadcast %cst_61 : f32 to vector<13x13x24xf32>
    %121 = arith.mulf %120, %119 : vector<13x13x24xf32>
    %cst_62 = arith.constant 1.000000e+00 : f32
    %122 = vector.broadcast %cst_62 : f32 to vector<13x13x24xf32>
    %123 = arith.addf %122, %121 : vector<13x13x24xf32>
    %124 = tpu.reciprocal %123 {approx = true} : vector<13x13x24xf32> -> vector<13x13x24xf32>
    %cst_63 = arith.constant 1.06140542 : f32
    %125 = vector.broadcast %cst_63 : f32 to vector<13x13x24xf32>
    %126 = arith.mulf %124, %125 : vector<13x13x24xf32>
    %cst_64 = arith.constant -1.45315206 : f32
    %127 = vector.broadcast %cst_64 : f32 to vector<13x13x24xf32>
    %128 = arith.addf %127, %126 : vector<13x13x24xf32>
    %129 = arith.mulf %124, %128 : vector<13x13x24xf32>
    %cst_65 = arith.constant 1.42141378 : f32
    %130 = vector.broadcast %cst_65 : f32 to vector<13x13x24xf32>
    %131 = arith.addf %130, %129 : vector<13x13x24xf32>
    %132 = arith.mulf %124, %131 : vector<13x13x24xf32>
    %cst_66 = arith.constant -0.284496725 : f32
    %133 = vector.broadcast %cst_66 : f32 to vector<13x13x24xf32>
    %134 = arith.addf %133, %132 : vector<13x13x24xf32>
    %135 = arith.mulf %124, %134 : vector<13x13x24xf32>
    %cst_67 = arith.constant 0.254829586 : f32
    %136 = vector.broadcast %cst_67 : f32 to vector<13x13x24xf32>
    %137 = arith.addf %136, %135 : vector<13x13x24xf32>
    %138 = arith.mulf %124, %137 : vector<13x13x24xf32>
    %cst_68 = arith.constant 0.000000e+00 : f32
    %139 = vector.broadcast %cst_68 : f32 to vector<13x13x24xf32>
    %140 = arith.subf %139, %119 : vector<13x13x24xf32>
    %141 = arith.mulf %140, %119 : vector<13x13x24xf32>
    %142 = math.exp %141 : vector<13x13x24xf32>
    %143 = arith.mulf %138, %142 : vector<13x13x24xf32>
    %cst_69 = arith.constant 1.000000e+00 : f32
    %144 = vector.broadcast %cst_69 : f32 to vector<13x13x24xf32>
    %145 = arith.subf %144, %143 : vector<13x13x24xf32>
    %146 = arith.mulf %118, %145 : vector<13x13x24xf32>
    %cst_70 = arith.constant 1.000000e+00 : f32
    %147 = vector.broadcast %cst_70 : f32 to vector<13x13x24xf32>
    %148 = arith.addf %146, %147 : vector<13x13x24xf32>
    %149 = arith.mulf %111, %148 : vector<13x13x24xf32>
    %c0_71 = arith.constant 0 : index
    %c0_72 = arith.constant 0 : index
    %c0_73 = arith.constant 0 : index
    %c0_74 = arith.constant 0 : index
    %150 = vector.load %arg7[%c0_71, %c0_72, %c0_73, %c0_74] : memref<4x13x13x24xf32, #tpu.memory_space<vmem>>, vector<1x13x13x24xf32>
    %151 = vector.shape_cast %150 : vector<1x13x13x24xf32> to vector<13x13x24xf32>
    %152 = vector.shape_cast %149 : vector<13x13x24xf32> to vector<1x13x13x24xf32>
    tpu.vector_store %arg7[%c0_71, %c0_72, %c0_73, %c0_74], %152 {strides = array<i32>} : memref<4x13x13x24xf32, #tpu.memory_space<vmem>>, vector<1x13x13x24xf32>,
    %c1_75 = arith.constant 1 : index
    %c2 = arith.constant 2 : index
    %c160 = arith.constant 160 : index
    %153 = vector.load %arg8[%c1_75, %c2, %c160] : memref<16x16x800xf32, #tpu.memory_space<vmem>>, vector<13x13x32xf32>
    %c1_76 = arith.constant 1 : index
    %c1_77 = arith.constant 1 : index
    %c224 = arith.constant 224 : index
    %154 = vector.load %arg8[%c1_76, %c1_77, %c224] : memref<16x16x800xf32, #tpu.memory_space<vmem>>, vector<13x13x32xf32>
    %155 = arith.addf %153, %154 : vector<13x13x32xf32>
    %c1_78 = arith.constant 1 : index
    %c0_79 = arith.constant 0 : index
    %c288 = arith.constant 288 : index
    %156 = vector.load %arg8[%c1_78, %c0_79, %c288] : memref<16x16x800xf32, #tpu.memory_space<vmem>>, vector<13x13x32xf32>
    %157 = arith.addf %155, %156 : vector<13x13x32xf32>
    %c0_80 = arith.constant 0 : index
    %c2_81 = arith.constant 2 : index
    %c480 = arith.constant 480 : index
    %158 = vector.load %arg8[%c0_80, %c2_81, %c480] : memref<16x16x800xf32, #tpu.memory_space<vmem>>, vector<13x13x32xf32>
    %159 = arith.addf %157, %158 : vector<13x13x32xf32>
    %c0_82 = arith.constant 0 : index
    %c1_83 = arith.constant 1 : index
    %c544 = arith.constant 544 : index
    %160 = vector.load %arg8[%c0_82, %c1_83, %c544] : memref<16x16x800xf32, #tpu.memory_space<vmem>>, vector<13x13x32xf32>
    %161 = arith.addf %159, %160 : vector<13x13x32xf32>
    %c0_84 = arith.constant 0 : index
    %c0_85 = arith.constant 0 : index
    %c608 = arith.constant 608 : index
    %162 = vector.load %arg8[%c0_84, %c0_85, %c608] : memref<16x16x800xf32, #tpu.memory_space<vmem>>, vector<13x13x32xf32>
    %163 = arith.addf %161, %162 : vector<13x13x32xf32>
    %164 = vector.extract_strided_slice %163 {offsets = [0, 0, 0], sizes = [13, 13, 24], strides = [1, 1, 1]} : vector<13x13x32xf32> to vector<13x13x24xf32>
    %165 = vector.broadcast %99 : vector<1x1x24xf32> to vector<13x13x24xf32>
    %166 = arith.addf %164, %165 : vector<13x13x24xf32>
    %cst_86 = arith.constant 5.000000e-01 : f32
    %167 = vector.broadcast %cst_86 : f32 to vector<13x13x24xf32>
    %168 = arith.mulf %166, %167 : vector<13x13x24xf32>
    %cst_87 = arith.constant 0.707106769 : f32
    %169 = vector.broadcast %cst_87 : f32 to vector<13x13x24xf32>
    %170 = arith.mulf %166, %169 : vector<13x13x24xf32>
    %cst_88 = arith.constant 0.000000e+00 : f32
    %171 = vector.broadcast %cst_88 : f32 to vector<13x13x24xf32>
    %172 = arith.cmpf oge, %170, %171 : vector<13x13x24xf32>
    %cst_89 = arith.constant 1.000000e+00 : f32
    %cst_90 = arith.constant -1.000000e+00 : f32
    %173 = vector.broadcast %cst_89 : f32 to vector<13x13x24xf32>
    %174 = vector.broadcast %cst_90 : f32 to vector<13x13x24xf32>
    %175 = arith.select %172, %173, %174 : vector<13x13x24xi1>, vector<13x13x24xf32>
    %176 = math.absf %170 : vector<13x13x24xf32>
    %cst_91 = arith.constant 0.327591091 : f32
    %177 = vector.broadcast %cst_91 : f32 to vector<13x13x24xf32>
    %178 = arith.mulf %177, %176 : vector<13x13x24xf32>
    %cst_92 = arith.constant 1.000000e+00 : f32
    %179 = vector.broadcast %cst_92 : f32 to vector<13x13x24xf32>
    %180 = arith.addf %179, %178 : vector<13x13x24xf32>
    %181 = tpu.reciprocal %180 {approx = true} : vector<13x13x24xf32> -> vector<13x13x24xf32>
    %cst_93 = arith.constant 1.06140542 : f32
    %182 = vector.broadcast %cst_93 : f32 to vector<13x13x24xf32>
    %183 = arith.mulf %181, %182 : vector<13x13x24xf32>
    %cst_94 = arith.constant -1.45315206 : f32
    %184 = vector.broadcast %cst_94 : f32 to vector<13x13x24xf32>
    %185 = arith.addf %184, %183 : vector<13x13x24xf32>
    %186 = arith.mulf %181, %185 : vector<13x13x24xf32>
    %cst_95 = arith.constant 1.42141378 : f32
    %187 = vector.broadcast %cst_95 : f32 to vector<13x13x24xf32>
    %188 = arith.addf %187, %186 : vector<13x13x24xf32>
    %189 = arith.mulf %181, %188 : vector<13x13x24xf32>
    %cst_96 = arith.constant -0.284496725 : f32
    %190 = vector.broadcast %cst_96 : f32 to vector<13x13x24xf32>
    %191 = arith.addf %190, %189 : vector<13x13x24xf32>
    %192 = arith.mulf %181, %191 : vector<13x13x24xf32>
    %cst_97 = arith.constant 0.254829586 : f32
    %193 = vector.broadcast %cst_97 : f32 to vector<13x13x24xf32>
    %194 = arith.addf %193, %192 : vector<13x13x24xf32>
    %195 = arith.mulf %181, %194 : vector<13x13x24xf32>
    %cst_98 = arith.constant 0.000000e+00 : f32
    %196 = vector.broadcast %cst_98 : f32 to vector<13x13x24xf32>
    %197 = arith.subf %196, %176 : vector<13x13x24xf32>
    %198 = arith.mulf %197, %176 : vector<13x13x24xf32>
    %199 = math.exp %198 : vector<13x13x24xf32>
    %200 = arith.mulf %195, %199 : vector<13x13x24xf32>
    %cst_99 = arith.constant 1.000000e+00 : f32
    %201 = vector.broadcast %cst_99 : f32 to vector<13x13x24xf32>
    %202 = arith.subf %201, %200 : vector<13x13x24xf32>
    %203 = arith.mulf %175, %202 : vector<13x13x24xf32>
    %cst_100 = arith.constant 1.000000e+00 : f32
    %204 = vector.broadcast %cst_100 : f32 to vector<13x13x24xf32>
    %205 = arith.addf %203, %204 : vector<13x13x24xf32>
    %206 = arith.mulf %168, %205 : vector<13x13x24xf32>
    %c1_101 = arith.constant 1 : index
    %c0_102 = arith.constant 0 : index
    %c0_103 = arith.constant 0 : index
    %c0_104 = arith.constant 0 : index
    %207 = vector.load %arg7[%c1_101, %c0_102, %c0_103, %c0_104] : memref<4x13x13x24xf32, #tpu.memory_space<vmem>>, vector<1x13x13x24xf32>
    %208 = vector.shape_cast %207 : vector<1x13x13x24xf32> to vector<13x13x24xf32>
    %209 = vector.shape_cast %206 : vector<13x13x24xf32> to vector<1x13x13x24xf32>
    tpu.vector_store %arg7[%c1_101, %c0_102, %c0_103, %c0_104], %209 {strides = array<i32>} : memref<4x13x13x24xf32, #tpu.memory_space<vmem>>, vector<1x13x13x24xf32>,
    %c2_105 = arith.constant 2 : index
    %c1_106 = arith.constant 1 : index
    %c32 = arith.constant 32 : index
    %210 = vector.load %arg8[%c2_105, %c1_106, %c32] : memref<16x16x800xf32, #tpu.memory_space<vmem>>, vector<13x13x32xf32>
    %c2_107 = arith.constant 2 : index
    %c0_108 = arith.constant 0 : index
    %c96 = arith.constant 96 : index
    %211 = vector.load %arg8[%c2_107, %c0_108, %c96] : memref<16x16x800xf32, #tpu.memory_space<vmem>>, vector<13x13x32xf32>
    %212 = arith.addf %210, %211 : vector<13x13x32xf32>
    %c1_109 = arith.constant 1 : index
    %c1_110 = arith.constant 1 : index
    %c352 = arith.constant 352 : index
    %213 = vector.load %arg8[%c1_109, %c1_110, %c352] : memref<16x16x800xf32, #tpu.memory_space<vmem>>, vector<13x13x32xf32>
    %214 = arith.addf %212, %213 : vector<13x13x32xf32>
    %c1_111 = arith.constant 1 : index
    %c0_112 = arith.constant 0 : index
    %c416 = arith.constant 416 : index
    %215 = vector.load %arg8[%c1_111, %c0_112, %c416] : memref<16x16x800xf32, #tpu.memory_space<vmem>>, vector<13x13x32xf32>
    %216 = arith.addf %214, %215 : vector<13x13x32xf32>
    %c0_113 = arith.constant 0 : index
    %c1_114 = arith.constant 1 : index
    %c672 = arith.constant 672 : index
    %217 = vector.load %arg8[%c0_113, %c1_114, %c672] : memref<16x16x800xf32, #tpu.memory_space<vmem>>, vector<13x13x32xf32>
    %218 = arith.addf %216, %217 : vector<13x13x32xf32>
    %c0_115 = arith.constant 0 : index
    %c0_116 = arith.constant 0 : index
    %c736 = arith.constant 736 : index
    %219 = vector.load %arg8[%c0_115, %c0_116, %c736] : memref<16x16x800xf32, #tpu.memory_space<vmem>>, vector<13x13x32xf32>
    %220 = arith.addf %218, %219 : vector<13x13x32xf32>
    %221 = vector.extract_strided_slice %220 {offsets = [0, 0, 0], sizes = [13, 13, 24], strides = [1, 1, 1]} : vector<13x13x32xf32> to vector<13x13x24xf32>
    %222 = vector.broadcast %99 : vector<1x1x24xf32> to vector<13x13x24xf32>
    %223 = arith.addf %221, %222 : vector<13x13x24xf32>
    %cst_117 = arith.constant 5.000000e-01 : f32
    %224 = vector.broadcast %cst_117 : f32 to vector<13x13x24xf32>
    %225 = arith.mulf %223, %224 : vector<13x13x24xf32>
    %cst_118 = arith.constant 0.707106769 : f32
    %226 = vector.broadcast %cst_118 : f32 to vector<13x13x24xf32>
    %227 = arith.mulf %223, %226 : vector<13x13x24xf32>
    %cst_119 = arith.constant 0.000000e+00 : f32
    %228 = vector.broadcast %cst_119 : f32 to vector<13x13x24xf32>
    %229 = arith.cmpf oge, %227, %228 : vector<13x13x24xf32>
    %cst_120 = arith.constant 1.000000e+00 : f32
    %cst_121 = arith.constant -1.000000e+00 : f32
    %230 = vector.broadcast %cst_120 : f32 to vector<13x13x24xf32>
    %231 = vector.broadcast %cst_121 : f32 to vector<13x13x24xf32>
    %232 = arith.select %229, %230, %231 : vector<13x13x24xi1>, vector<13x13x24xf32>
    %233 = math.absf %227 : vector<13x13x24xf32>
    %cst_122 = arith.constant 0.327591091 : f32
    %234 = vector.broadcast %cst_122 : f32 to vector<13x13x24xf32>
    %235 = arith.mulf %234, %233 : vector<13x13x24xf32>
    %cst_123 = arith.constant 1.000000e+00 : f32
    %236 = vector.broadcast %cst_123 : f32 to vector<13x13x24xf32>
    %237 = arith.addf %236, %235 : vector<13x13x24xf32>
    %238 = tpu.reciprocal %237 {approx = true} : vector<13x13x24xf32> -> vector<13x13x24xf32>
    %cst_124 = arith.constant 1.06140542 : f32
    %239 = vector.broadcast %cst_124 : f32 to vector<13x13x24xf32>
    %240 = arith.mulf %238, %239 : vector<13x13x24xf32>
    %cst_125 = arith.constant -1.45315206 : f32
    %241 = vector.broadcast %cst_125 : f32 to vector<13x13x24xf32>
    %242 = arith.addf %241, %240 : vector<13x13x24xf32>
    %243 = arith.mulf %238, %242 : vector<13x13x24xf32>
    %cst_126 = arith.constant 1.42141378 : f32
    %244 = vector.broadcast %cst_126 : f32 to vector<13x13x24xf32>
    %245 = arith.addf %244, %243 : vector<13x13x24xf32>
    %246 = arith.mulf %238, %245 : vector<13x13x24xf32>
    %cst_127 = arith.constant -0.284496725 : f32
    %247 = vector.broadcast %cst_127 : f32 to vector<13x13x24xf32>
    %248 = arith.addf %247, %246 : vector<13x13x24xf32>
    %249 = arith.mulf %238, %248 : vector<13x13x24xf32>
    %cst_128 = arith.constant 0.254829586 : f32
    %250 = vector.broadcast %cst_128 : f32 to vector<13x13x24xf32>
    %251 = arith.addf %250, %249 : vector<13x13x24xf32>
    %252 = arith.mulf %238, %251 : vector<13x13x24xf32>
    %cst_129 = arith.constant 0.000000e+00 : f32
    %253 = vector.broadcast %cst_129 : f32 to vector<13x13x24xf32>
    %254 = arith.subf %253, %233 : vector<13x13x24xf32>
    %255 = arith.mulf %254, %233 : vector<13x13x24xf32>
    %256 = math.exp %255 : vector<13x13x24xf32>
    %257 = arith.mulf %252, %256 : vector<13x13x24xf32>
    %cst_130 = arith.constant 1.000000e+00 : f32
    %258 = vector.broadcast %cst_130 : f32 to vector<13x13x24xf32>
    %259 = arith.subf %258, %257 : vector<13x13x24xf32>
    %260 = arith.mulf %232, %259 : vector<13x13x24xf32>
    %cst_131 = arith.constant 1.000000e+00 : f32
    %261 = vector.broadcast %cst_131 : f32 to vector<13x13x24xf32>
    %262 = arith.addf %260, %261 : vector<13x13x24xf32>
    %263 = arith.mulf %225, %262 : vector<13x13x24xf32>
    %c2_132 = arith.constant 2 : index
    %c0_133 = arith.constant 0 : index
    %c0_134 = arith.constant 0 : index
    %c0_135 = arith.constant 0 : index
    %264 = vector.load %arg7[%c2_132, %c0_133, %c0_134, %c0_135] : memref<4x13x13x24xf32, #tpu.memory_space<vmem>>, vector<1x13x13x24xf32>
    %265 = vector.shape_cast %264 : vector<1x13x13x24xf32> to vector<13x13x24xf32>
    %266 = vector.shape_cast %263 : vector<13x13x24xf32> to vector<1x13x13x24xf32>
    tpu.vector_store %arg7[%c2_132, %c0_133, %c0_134, %c0_135], %266 {strides = array<i32>} : memref<4x13x13x24xf32, #tpu.memory_space<vmem>>, vector<1x13x13x24xf32>,
    %c2_136 = arith.constant 2 : index
    %c2_137 = arith.constant 2 : index
    %c0_138 = arith.constant 0 : index
    %267 = vector.load %arg8[%c2_136, %c2_137, %c0_138] : memref<16x16x800xf32, #tpu.memory_space<vmem>>, vector<13x13x32xf32>
    %c2_139 = arith.constant 2 : index
    %c1_140 = arith.constant 1 : index
    %c64 = arith.constant 64 : index
    %268 = vector.load %arg8[%c2_139, %c1_140, %c64] : memref<16x16x800xf32, #tpu.memory_space<vmem>>, vector<13x13x32xf32>
    %269 = arith.addf %267, %268 : vector<13x13x32xf32>
    %c2_141 = arith.constant 2 : index
    %c0_142 = arith.constant 0 : index
    %c128 = arith.constant 128 : index
    %270 = vector.load %arg8[%c2_141, %c0_142, %c128] : memref<16x16x800xf32, #tpu.memory_space<vmem>>, vector<13x13x32xf32>
    %271 = arith.addf %269, %270 : vector<13x13x32xf32>
    %c1_143 = arith.constant 1 : index
    %c2_144 = arith.constant 2 : index
    %c320 = arith.constant 320 : index
    %272 = vector.load %arg8[%c1_143, %c2_144, %c320] : memref<16x16x800xf32, #tpu.memory_space<vmem>>, vector<13x13x32xf32>
    %273 = arith.addf %271, %272 : vector<13x13x32xf32>
    %c1_145 = arith.constant 1 : index
    %c1_146 = arith.constant 1 : index
    %c384 = arith.constant 384 : index
    %274 = vector.load %arg8[%c1_145, %c1_146, %c384] : memref<16x16x800xf32, #tpu.memory_space<vmem>>, vector<13x13x32xf32>
    %275 = arith.addf %273, %274 : vector<13x13x32xf32>
    %c1_147 = arith.constant 1 : index
    %c0_148 = arith.constant 0 : index
    %c448 = arith.constant 448 : index
    %276 = vector.load %arg8[%c1_147, %c0_148, %c448] : memref<16x16x800xf32, #tpu.memory_space<vmem>>, vector<13x13x32xf32>
    %277 = arith.addf %275, %276 : vector<13x13x32xf32>
    %c0_149 = arith.constant 0 : index
    %c2_150 = arith.constant 2 : index
    %c640 = arith.constant 640 : index
    %278 = vector.load %arg8[%c0_149, %c2_150, %c640] : memref<16x16x800xf32, #tpu.memory_space<vmem>>, vector<13x13x32xf32>
    %279 = arith.addf %277, %278 : vector<13x13x32xf32>
    %c0_151 = arith.constant 0 : index
    %c1_152 = arith.constant 1 : index
    %c704 = arith.constant 704 : index
    %280 = vector.load %arg8[%c0_151, %c1_152, %c704] : memref<16x16x800xf32, #tpu.memory_space<vmem>>, vector<13x13x32xf32>
    %281 = arith.addf %279, %280 : vector<13x13x32xf32>
    %c0_153 = arith.constant 0 : index
    %c0_154 = arith.constant 0 : index
    %c768 = arith.constant 768 : index
    %282 = vector.load %arg8[%c0_153, %c0_154, %c768] : memref<16x16x800xf32, #tpu.memory_space<vmem>>, vector<13x13x32xf32>
    %283 = arith.addf %281, %282 : vector<13x13x32xf32>
    %284 = vector.extract_strided_slice %283 {offsets = [0, 0, 0], sizes = [13, 13, 24], strides = [1, 1, 1]} : vector<13x13x32xf32> to vector<13x13x24xf32>
    %285 = vector.broadcast %99 : vector<1x1x24xf32> to vector<13x13x24xf32>
    %286 = arith.addf %284, %285 : vector<13x13x24xf32>
    %cst_155 = arith.constant 5.000000e-01 : f32
    %287 = vector.broadcast %cst_155 : f32 to vector<13x13x24xf32>
    %288 = arith.mulf %286, %287 : vector<13x13x24xf32>
    %cst_156 = arith.constant 0.707106769 : f32
    %289 = vector.broadcast %cst_156 : f32 to vector<13x13x24xf32>
    %290 = arith.mulf %286, %289 : vector<13x13x24xf32>
    %cst_157 = arith.constant 0.000000e+00 : f32
    %291 = vector.broadcast %cst_157 : f32 to vector<13x13x24xf32>
    %292 = arith.cmpf oge, %290, %291 : vector<13x13x24xf32>
    %cst_158 = arith.constant 1.000000e+00 : f32
    %cst_159 = arith.constant -1.000000e+00 : f32
    %293 = vector.broadcast %cst_158 : f32 to vector<13x13x24xf32>
    %294 = vector.broadcast %cst_159 : f32 to vector<13x13x24xf32>
    %295 = arith.select %292, %293, %294 : vector<13x13x24xi1>, vector<13x13x24xf32>
    %296 = math.absf %290 : vector<13x13x24xf32>
    %cst_160 = arith.constant 0.327591091 : f32
    %297 = vector.broadcast %cst_160 : f32 to vector<13x13x24xf32>
    %298 = arith.mulf %297, %296 : vector<13x13x24xf32>
    %cst_161 = arith.constant 1.000000e+00 : f32
    %299 = vector.broadcast %cst_161 : f32 to vector<13x13x24xf32>
    %300 = arith.addf %299, %298 : vector<13x13x24xf32>
    %301 = tpu.reciprocal %300 {approx = true} : vector<13x13x24xf32> -> vector<13x13x24xf32>
    %cst_162 = arith.constant 1.06140542 : f32
    %302 = vector.broadcast %cst_162 : f32 to vector<13x13x24xf32>
    %303 = arith.mulf %301, %302 : vector<13x13x24xf32>
    %cst_163 = arith.constant -1.45315206 : f32
    %304 = vector.broadcast %cst_163 : f32 to vector<13x13x24xf32>
    %305 = arith.addf %304, %303 : vector<13x13x24xf32>
    %306 = arith.mulf %301, %305 : vector<13x13x24xf32>
    %cst_164 = arith.constant 1.42141378 : f32
    %307 = vector.broadcast %cst_164 : f32 to vector<13x13x24xf32>
    %308 = arith.addf %307, %306 : vector<13x13x24xf32>
    %309 = arith.mulf %301, %308 : vector<13x13x24xf32>
    %cst_165 = arith.constant -0.284496725 : f32
    %310 = vector.broadcast %cst_165 : f32 to vector<13x13x24xf32>
    %311 = arith.addf %310, %309 : vector<13x13x24xf32>
    %312 = arith.mulf %301, %311 : vector<13x13x24xf32>
    %cst_166 = arith.constant 0.254829586 : f32
    %313 = vector.broadcast %cst_166 : f32 to vector<13x13x24xf32>
    %314 = arith.addf %313, %312 : vector<13x13x24xf32>
    %315 = arith.mulf %301, %314 : vector<13x13x24xf32>
    %cst_167 = arith.constant 0.000000e+00 : f32
    %316 = vector.broadcast %cst_167 : f32 to vector<13x13x24xf32>
    %317 = arith.subf %316, %296 : vector<13x13x24xf32>
    %318 = arith.mulf %317, %296 : vector<13x13x24xf32>
    %319 = math.exp %318 : vector<13x13x24xf32>
    %320 = arith.mulf %315, %319 : vector<13x13x24xf32>
    %cst_168 = arith.constant 1.000000e+00 : f32
    %321 = vector.broadcast %cst_168 : f32 to vector<13x13x24xf32>
    %322 = arith.subf %321, %320 : vector<13x13x24xf32>
    %323 = arith.mulf %295, %322 : vector<13x13x24xf32>
    %cst_169 = arith.constant 1.000000e+00 : f32
    %324 = vector.broadcast %cst_169 : f32 to vector<13x13x24xf32>
    %325 = arith.addf %323, %324 : vector<13x13x24xf32>
    %326 = arith.mulf %288, %325 : vector<13x13x24xf32>
    %c3 = arith.constant 3 : index
    %c0_170 = arith.constant 0 : index
    %c0_171 = arith.constant 0 : index
    %c0_172 = arith.constant 0 : index
    %327 = vector.load %arg7[%c3, %c0_170, %c0_171, %c0_172] : memref<4x13x13x24xf32, #tpu.memory_space<vmem>>, vector<1x13x13x24xf32>
    %328 = vector.shape_cast %327 : vector<1x13x13x24xf32> to vector<13x13x24xf32>
    %329 = vector.shape_cast %326 : vector<13x13x24xf32> to vector<1x13x13x24xf32>
    tpu.vector_store %arg7[%c3, %c0_170, %c0_171, %c0_172], %329 {strides = array<i32>} : memref<4x13x13x24xf32, #tpu.memory_space<vmem>>, vector<1x13x13x24xf32>,
    return
  }
}

</mosaic_0001>

<llo_original>
// kernel: model_forward.1
$region0: #{model_forward.1}
  #allocation0 [shape = 'u32[]', space=smem, size = 0x4, offset = 0x4, fixed_abs, tag = 'smem constant byte address 0x4 - core index']
  #allocation1 [shape = 'u32[144,128]{1,0:T(1,128)}', space=vmem, size = 0x12000, scoped, tag = 'internal scratch']
  #allocation2 [shape = 'f32[16,16,800]{2,1,0:T(8,128)}', space=vmem, size = 0xe0000, scoped, tag = 'scratch operand']
  %s0 = inlined_call_operand.vmem [shape: f32[16,5], index: 0, kind: input, shape index: {}]
  %s1 = inlined_call_operand.vmem [shape: f32[5,88], index: 1, kind: input, shape index: {}]
  %s2 = inlined_call_operand.vmem [shape: f32[1,88], index: 2, kind: input, shape index: {}]
  %s3 = inlined_call_operand.vmem [shape: f32[256,16], index: 3, kind: input, shape index: {}]
  %s4 = inlined_call_operand.vmem [shape: f32[256,1], index: 4, kind: input, shape index: {}]
  %s5 = inlined_call_operand.vmem [shape: f32[88,800], index: 5, kind: input, shape index: {}]
  %s6 = inlined_call_operand.vmem [shape: f32[1,1,24], index: 6, kind: input, shape index: {}]
  %s7 = inlined_call_operand.vmem [shape: f32[4,13,13,24], index: 7, kind: output, shape index: {}]
  %s8 = sld [smem:[#allocation0]]
  $region38: #{model_forward.1} parent=0
    _
  %s10 = ssub.s32 1, %s8
  %s11 = scalar_select 0, %s10, %s8
  // Predicated region
  $region2: #{model_forward.1} parent=0 // pred_check
    _
  $region3: #{model_forward.1} parent=0 // pred_check_branch
    %13 = sbr.rel (0) target = $region5
  $region4: #{model_forward.1} parent=0 // pred_region
    _
  $region5: #{model_forward.1} parent=0 // pred_fallthru
    _
  // Predicated region
  $region6: #{model_forward.1} parent=0 // pred_check
    _
  $region7: #{model_forward.1} parent=0 // pred_check_branch
    %15 = sbr.rel (0) target = $region9
  $region8: #{model_forward.1} parent=0 // pred_region
    _
  $region9: #{model_forward.1} parent=0 // pred_fallthru
    _
  // Predicated region
  $region10: #{model_forward.1} parent=0 // pred_check
    _
  $region11: #{model_forward.1} parent=0 // pred_check_branch
    %17 = sbr.rel (0) target = $region13
  $region12: #{model_forward.1} parent=0 // pred_region
    _
  $region13: #{model_forward.1} parent=0 // pred_fallthru
    _
  // Predicated region
  $region14: #{model_forward.1} parent=0 // pred_check
    _
  $region15: #{model_forward.1} parent=0 // pred_check_branch
    %19 = sbr.rel (0) target = $region17
  $region16: #{model_forward.1} parent=0 // pred_region
    _
  $region17: #{model_forward.1} parent=0 // pred_fallthru
    _
  // Predicated region
  $region18: #{model_forward.1} parent=0 // pred_check
    _
  $region19: #{model_forward.1} parent=0 // pred_check_branch
    %21 = sbr.rel (0) target = $region21
  $region20: #{model_forward.1} parent=0 // pred_region
    _
  $region21: #{model_forward.1} parent=0 // pred_fallthru
    _
  // Predicated region
  $region22: #{model_forward.1} parent=0 // pred_check
    _
  $region23: #{model_forward.1} parent=0 // pred_check_branch
    %23 = sbr.rel (0) target = $region25
  $region24: #{model_forward.1} parent=0 // pred_region
    _
  $region25: #{model_forward.1} parent=0 // pred_fallthru
    _
  // Predicated region
  $region26: #{model_forward.1} parent=0 // pred_check
    _
  $region27: #{model_forward.1} parent=0 // pred_check_branch
    %25 = sbr.rel (0) target = $region29
  $region28: #{model_forward.1} parent=0 // pred_region
    _
  $region29: #{model_forward.1} parent=0 // pred_fallthru
    _
  %v26 = vld [vmem:[%s0] sm:$0xff]
  %v27 = vld [vmem:[%s0 + $0x8] sm:$0xff]
  %v28 = vld [vmem:[%s1] sm:$0x1f]
  %v29 = vld [vmem:[%s2] sm:$0x1]
  %v31 = vlaneseq
  %v32 = vshrl.u32 %v31, 7
  %v33 = vsub.s32 0, %v32
  %v34 = vrot.slane %v29, %v33
  %vm36 = vcmask 39936
  %v38 = vsel %vm36, %v26, 0
  %v41 = vsel %vm36, %v27, 0
  %vm43 = vcmask 1044480
  %v45 = vsel %vm43, %v28, 0
  %47 = vmatprep.subr.mxu0 0.0
  %48 = vmatpush1.msra.mxu0 %v45
  %49 = vmatprep.subr.mxu0 0.0
  %50 = vmatpush1.msra.mxu0 0.0
  %51 = vmatprep.subr.mxu0 0.0
  %52 = vmatpush1.msra.mxu0 0.0
  %53 = vmatprep.subr.mxu0 0.0
  %54 = vmatpush1.msra.mxu0 0.0
  %55 = vmatprep.subr.mxu0 0.0
  %56 = vmatpush1.msra.mxu0 0.0
  %57 = vmatprep.subr.mxu0 0.0
  %58 = vmatpush1.msra.mxu0 0.0
  %59 = vmatprep.subr.mxu0 0.0
  %60 = vmatpush1.msra.mxu0 0.0
  %61 = vmatprep.subr.mxu0 0.0
  %62 = vmatpush1.msra.mxu0 0.0
  %63 = vmatprep.subr.mxu0 0.0
  %64 = vmatpush1.msra.mxu0 0.0
  %65 = vmatprep.subr.mxu0 0.0
  %66 = vmatpush1.msra.mxu0 0.0
  %67 = vmatprep.subr.mxu0 0.0
  %68 = vmatpush1.msra.mxu0 0.0
  %69 = vmatprep.subr.mxu0 0.0
  %70 = vmatpush1.msra.mxu0 0.0
  %71 = vmatprep.subr.mxu0 0.0
  %72 = vmatpush1.msra.mxu0 0.0
  %73 = vmatprep.subr.mxu0 0.0
  %74 = vmatpush1.msra.mxu0 0.0
  %75 = vmatprep.subr.mxu0 0.0
  %76 = vmatpush1.msra.mxu0 0.0
  %77 = vmatprep.subr.mxu0 0.0
  %78 = vmatpush1.msra.mxu0 0.0
  %79 = vmatprep.subr.mxu0 0.0
  %80 = vmatpush1.msra.mxu0 0.0
  %81 = vmatprep.subr.mxu0 0.0
  %82 = vmatpush1.msra.mxu0 0.0
  %83 = vmatprep.subr.mxu0 0.0
  %84 = vmatpush1.msra.mxu0 0.0
  %85 = vmatprep.subr.mxu0 0.0
  %86 = vmatpush1.msra.mxu0 0.0
  %87 = vmatprep.subr.mxu0 0.0
  %88 = vmatpush1.msra.mxu0 0.0
  %89 = vmatprep.subr.mxu0 0.0
  %90 = vmatpush1.msra.mxu0 0.0
  %91 = vmatprep.subr.mxu0 0.0
  %92 = vmatpush1.msra.mxu0 0.0
  %93 = vmatprep.subr.mxu0 0.0
  %94 = vmatpush1.msra.mxu0 0.0
  %95 = vmatprep.subr.mxu0 0.0
  %96 = vmatpush1.msra.mxu0 0.0
  %97 = vmatprep.subr.mxu0 0.0
  %98 = vmatpush1.msra.mxu0 0.0
  %99 = vmatprep.subr.mxu0 0.0
  %100 = vmatpush1.msra.mxu0 0.0
  %101 = vmatprep.subr.mxu0 0.0
  %102 = vmatpush1.msra.mxu0 0.0
  %103 = vmatprep.subr.mxu0 0.0
  %104 = vmatpush1.msra.mxu0 0.0
  %105 = vmatprep.subr.mxu0 0.0
  %106 = vmatpush1.msra.mxu0 0.0
  %107 = vmatprep.subr.mxu0 0.0
  %108 = vmatpush1.msra.mxu0 0.0
  %109 = vmatprep.subr.mxu0 0.0
  %110 = vmatpush1.msra.mxu0 0.0
  %111 = vmatprep.mubr.f32.mxu0 0.0
  %112 = vmatmul.mubr.f32.gmra.mrb[0].mxu0 %v38
  %v113 = vpop.f32.mrb[0].mxu0
  %v114 = vadd.f32 %v34, %v113
  %v115 = vpop.f32.mrb[0].mxu0
  %116 = vmatprep.mubr.f32.mxu0 0.0
  %117 = vmatmul.mubr.f32.gmra.mrb[0].mxu0 %v41
  %v118 = vpop.f32.mrb[0].mxu0
  %v119 = vadd.f32 %v34, %v118
  %v120 = vpop.f32.mrb[0].mxu0
  %121 = vdwg.mxu0
  %v122 = vmul.f32 %v114, 0.5
  %v123 = vmul.f32 %v119, 0.5
  %v124 = vmul.f32 %v114, 0.70710677
  %v125 = vmul.f32 %v119, 0.70710677
  %vm126 = vcmp.ge.f32.partialorder %v124, 0.0
  %vm127 = vcmp.ge.f32.partialorder %v125, 0.0
  %v128 = vsel %vm126, 1.0, -1.0
  %v129 = vsel %vm127, 1.0, -1.0
  %v130 = vand.u32 2147483647, %v124
  %v131 = vand.u32 2147483647, %v125
  %v132 = vmul.f32 %v130, 0.3275911
  %v133 = vmul.f32 %v131, 0.3275911
  %v134 = vadd.f32 %v132, 1.0
  %v135 = vadd.f32 %v133, 1.0
  %v136 = vrcp.pop %v134
  %v137 = vrcp.pop %v135
  %v138 = vmul.f32 %v136, 1.0614054
  %v139 = vmul.f32 %v137, 1.0614054
  %v140 = vadd.f32 %v138, -1.4531521
  %v141 = vadd.f32 %v139, -1.4531521
  %v142 = vmul.f32 %v136, %v140
  %v143 = vmul.f32 %v137, %v141
  %v144 = vadd.f32 %v142, 1.4214138
  %v145 = vadd.f32 %v143, 1.4214138
  %v146 = vmul.f32 %v136, %v144
  %v147 = vmul.f32 %v137, %v145
  %v148 = vadd.f32 %v146, -0.28449672
  %v149 = vadd.f32 %v147, -0.28449672
  %v150 = vmul.f32 %v136, %v148
  %v151 = vmul.f32 %v137, %v149
  %v152 = vadd.f32 %v150, 0.2548296
  %v153 = vadd.f32 %v151, 0.2548296
  %v154 = vmul.f32 %v136, %v152
  %v155 = vmul.f32 %v137, %v153
  %v156 = vsub.f32 0.0, %v130
  %v157 = vsub.f32 0.0, %v131
  %v158 = vmul.f32 %v156, %v130
  %v159 = vmul.f32 %v157, %v131
  %v160 = vmul.f32 %v158, 1.442695
  %v161 = vpow.pop %v160
  %v162 = vmul.f32 %v159, 1.442695
  %v163 = vpow.pop %v162
  %v164 = vmul.f32 %v154, %v161
  %v165 = vmul.f32 %v155, %v163
  %v166 = vsub.f32 1.0, %v164
  %v167 = vsub.f32 1.0, %v165
  %v168 = vmul.f32 %v128, %v166
  %v169 = vmul.f32 %v129, %v167
  %v170 = vadd.f32 %v168, 1.0
  %v171 = vadd.f32 %v169, 1.0
  %v172 = vmul.f32 %v122, %v170
  %v173 = vmul.f32 %v123, %v171
  %v174 = vmul.f32 %v29, 0.5
  %v175 = vmul.f32 %v29, 0.70710677
  %vm176 = vcmp.ge.f32.partialorder %v175, 0.0
  %v177 = vsel %vm176, 1.0, -1.0
  %v178 = vand.u32 2147483647, %v175
  %v179 = vmul.f32 %v178, 0.3275911
  %v180 = vadd.f32 %v179, 1.0
  %v181 = vrcp.pop %v180
  %v182 = vmul.f32 %v181, 1.0614054
  %v183 = vadd.f32 %v182, -1.4531521
  %v184 = vmul.f32 %v181, %v183
  %v185 = vadd.f32 %v184, 1.4214138
  %v186 = vmul.f32 %v181, %v185
  %v187 = vadd.f32 %v186, -0.28449672
  %v188 = vmul.f32 %v181, %v187
  %v189 = vadd.f32 %v188, 0.2548296
  %v190 = vmul.f32 %v181, %v189
  %v191 = vsub.f32 0.0, %v178
  %v192 = vmul.f32 %v191, %v178
  %v193 = vmul.f32 %v192, 1.442695
  %v194 = vpow.pop %v193
  %v195 = vmul.f32 %v190, %v194
  %v196 = vsub.f32 1.0, %v195
  %v197 = vmul.f32 %v177, %v196
  %v198 = vadd.f32 %v197, 1.0
  %v199 = vmul.f32 %v174, %v198
  %v200 = vld [vmem:[%s3] sm:$0xff]
  %v201 = vld [vmem:[%s3 + $0x8] sm:$0xff]
  %v202 = vld [vmem:[%s3 + $0x10] sm:$0xff]
  %v203 = vld [vmem:[%s3 + $0x18] sm:$0xff]
  %v204 = vld [vmem:[%s3 + $0x20] sm:$0xff]
  %v205 = vld [vmem:[%s3 + $0x28] sm:$0xff]
  %v206 = vld [vmem:[%s3 + $0x30] sm:$0xff]
  %v207 = vld [vmem:[%s3 + $0x38] sm:$0xff]
  %v208 = vld [vmem:[%s3 + $0x40] sm:$0xff]
  %v209 = vld [vmem:[%s3 + $0x48] sm:$0xff]
  %v210 = vld [vmem:[%s3 + $0x50] sm:$0xff]
  %v211 = vld [vmem:[%s3 + $0x58] sm:$0xff]
  %v212 = vld [vmem:[%s3 + $0x60] sm:$0xff]
  %v213 = vld [vmem:[%s3 + $0x68] sm:$0xff]
  %v214 = vld [vmem:[%s3 + $0x70] sm:$0xff]
  %v215 = vld [vmem:[%s3 + $0x78] sm:$0xff]
  %v216 = vld [vmem:[%s3 + $0x80] sm:$0xff]
  %v217 = vld [vmem:[%s3 + $0x88] sm:$0xff]
  %v218 = vld [vmem:[%s3 + $0x90] sm:$0xff]
  %v219 = vld [vmem:[%s3 + $0x98] sm:$0xff]
  %v220 = vld [vmem:[%s3 + $0xa0] sm:$0xff]
  %v221 = vld [vmem:[%s3 + $0xa8] sm:$0xff]
  %v222 = vld [vmem:[%s3 + $0xb0] sm:$0xff]
  %v223 = vld [vmem:[%s3 + $0xb8] sm:$0xff]
  %v224 = vld [vmem:[%s3 + $0xc0] sm:$0xff]
  %v225 = vld [vmem:[%s3 + $0xc8] sm:$0xff]
  %v226 = vld [vmem:[%s3 + $0xd0] sm:$0xff]
  %v227 = vld [vmem:[%s3 + $0xd8] sm:$0xff]
  %v228 = vld [vmem:[%s3 + $0xe0] sm:$0xff]
  %v229 = vld [vmem:[%s3 + $0xe8] sm:$0xff]
  %v230 = vld [vmem:[%s3 + $0xf0] sm:$0xff]
  %v231 = vld [vmem:[%s3 + $0xf8] sm:$0xff]
  %v233 = vlaneseq
  %v234 = vshrl.u32 %v233, 7
  %v235 = vsub.s32 0, %v234
  %v236 = vrot.slane %v199, %v235
  %v238 = vsub.f32 %v172, %v236
  %v239 = vsub.f32 %v173, %v236
  %v240 = vld [vmem:[%s4] sm:$0xff]
  %v241 = vld [vmem:[%s4 + $0x8] sm:$0xff]
  %v242 = vld [vmem:[%s4 + $0x10] sm:$0xff]
  %v243 = vld [vmem:[%s4 + $0x18] sm:$0xff]
  %v244 = vld [vmem:[%s4 + $0x20] sm:$0xff]
  %v245 = vld [vmem:[%s4 + $0x28] sm:$0xff]
  %v246 = vld [vmem:[%s4 + $0x30] sm:$0xff]
  %v247 = vld [vmem:[%s4 + $0x38] sm:$0xff]
  %v248 = vld [vmem:[%s4 + $0x40] sm:$0xff]
  %v249 = vld [vmem:[%s4 + $0x48] sm:$0xff]
  %v250 = vld [vmem:[%s4 + $0x50] sm:$0xff]
  %v251 = vld [vmem:[%s4 + $0x58] sm:$0xff]
  %v252 = vld [vmem:[%s4 + $0x60] sm:$0xff]
  %v253 = vld [vmem:[%s4 + $0x68] sm:$0xff]
  %v254 = vld [vmem:[%s4 + $0x70] sm:$0xff]
  %v255 = vld [vmem:[%s4 + $0x78] sm:$0xff]
  %v256 = vld [vmem:[%s4 + $0x80] sm:$0xff]
  %v257 = vld [vmem:[%s4 + $0x88] sm:$0xff]
  %v258 = vld [vmem:[%s4 + $0x90] sm:$0xff]
  %v259 = vld [vmem:[%s4 + $0x98] sm:$0xff]
  %v260 = vld [vmem:[%s4 + $0xa0] sm:$0xff]
  %v261 = vld [vmem:[%s4 + $0xa8] sm:$0xff]
  %v262 = vld [vmem:[%s4 + $0xb0] sm:$0xff]
  %v263 = vld [vmem:[%s4 + $0xb8] sm:$0xff]
  %v264 = vld [vmem:[%s4 + $0xc0] sm:$0xff]
  %v265 = vld [vmem:[%s4 + $0xc8] sm:$0xff]
  %v266 = vld [vmem:[%s4 + $0xd0] sm:$0xff]
  %v267 = vld [vmem:[%s4 + $0xd8] sm:$0xff]
  %v268 = vld [vmem:[%s4 + $0xe0] sm:$0xff]
  %v269 = vld [vmem:[%s4 + $0xe8] sm:$0xff]
  %v270 = vld [vmem:[%s4 + $0xf0] sm:$0xff]
  %v271 = vld [vmem:[%s4 + $0xf8] sm:$0xff]
  %273 = vset.pattern.permute.xlu0 0
  %274 = vperm.xlu0 %273, %v240
  %v275 = vpop.permute.xlu0 %274
  %278 = vset.pattern.permute.xlu0 0
  %279 = vperm.xlu0 %278, %v241
  %v280 = vpop.permute.xlu0 %279
  %283 = vset.pattern.permute.xlu0 0
  %284 = vperm.xlu0 %283, %v242
  %v285 = vpop.permute.xlu0 %284
  %288 = vset.pattern.permute.xlu0 0
  %289 = vperm.xlu0 %288, %v243
  %v290 = vpop.permute.xlu0 %289
  %293 = vset.pattern.permute.xlu0 0
  %294 = vperm.xlu0 %293, %v244
  %v295 = vpop.permute.xlu0 %294
  %298 = vset.pattern.permute.xlu0 0
  %299 = vperm.xlu0 %298, %v245
  %v300 = vpop.permute.xlu0 %299
  %303 = vset.pattern.permute.xlu0 0
  %304 = vperm.xlu0 %303, %v246
  %v305 = vpop.permute.xlu0 %304
  %308 = vset.pattern.permute.xlu0 0
  %309 = vperm.xlu0 %308, %v247
  %v310 = vpop.permute.xlu0 %309
  %313 = vset.pattern.permute.xlu0 0
  %314 = vperm.xlu0 %313, %v248
  %v315 = vpop.permute.xlu0 %314
  %318 = vset.pattern.permute.xlu0 0
  %319 = vperm.xlu0 %318, %v249
  %v320 = vpop.permute.xlu0 %319
  %323 = vset.pattern.permute.xlu0 0
  %324 = vperm.xlu0 %323, %v250
  %v325 = vpop.permute.xlu0 %324
  %328 = vset.pattern.permute.xlu0 0
  %329 = vperm.xlu0 %328, %v251
  %v330 = vpop.permute.xlu0 %329
  %333 = vset.pattern.permute.xlu0 0
  %334 = vperm.xlu0 %333, %v252
  %v335 = vpop.permute.xlu0 %334
  %338 = vset.pattern.permute.xlu0 0
  %339 = vperm.xlu0 %338, %v253
  %v340 = vpop.permute.xlu0 %339
  %343 = vset.pattern.permute.xlu0 0
  %344 = vperm.xlu0 %343, %v254
  %v345 = vpop.permute.xlu0 %344
  %348 = vset.pattern.permute.xlu0 0
  %349 = vperm.xlu0 %348, %v255
  %v350 = vpop.permute.xlu0 %349
  %353 = vset.pattern.permute.xlu0 0
  %354 = vperm.xlu0 %353, %v256
  %v355 = vpop.permute.xlu0 %354
  %358 = vset.pattern.permute.xlu0 0
  %359 = vperm.xlu0 %358, %v257
  %v360 = vpop.permute.xlu0 %359
  %363 = vset.pattern.permute.xlu0 0
  %364 = vperm.xlu0 %363, %v258
  %v365 = vpop.permute.xlu0 %364
  %368 = vset.pattern.permute.xlu0 0
  %369 = vperm.xlu0 %368, %v259
  %v370 = vpop.permute.xlu0 %369
  %373 = vset.pattern.permute.xlu0 0
  %374 = vperm.xlu0 %373, %v260
  %v375 = vpop.permute.xlu0 %374
  %378 = vset.pattern.permute.xlu0 0
  %379 = vperm.xlu0 %378, %v261
  %v380 = vpop.permute.xlu0 %379
  %383 = vset.pattern.permute.xlu0 0
  %384 = vperm.xlu0 %383, %v262
  %v385 = vpop.permute.xlu0 %384
  %388 = vset.pattern.permute.xlu0 0
  %389 = vperm.xlu0 %388, %v263
  %v390 = vpop.permute.xlu0 %389
  %393 = vset.pattern.permute.xlu0 0
  %394 = vperm.xlu0 %393, %v264
  %v395 = vpop.permute.xlu0 %394
  %398 = vset.pattern.permute.xlu0 0
  %399 = vperm.xlu0 %398, %v265
  %v400 = vpop.permute.xlu0 %399
  %403 = vset.pattern.permute.xlu0 0
  %404 = vperm.xlu0 %403, %v266
  %v405 = vpop.permute.xlu0 %404
  %408 = vset.pattern.permute.xlu0 0
  %409 = vperm.xlu0 %408, %v267
  %v410 = vpop.permute.xlu0 %409
  %413 = vset.pattern.permute.xlu0 0
  %414 = vperm.xlu0 %413, %v268
  %v415 = vpop.permute.xlu0 %414
  %418 = vset.pattern.permute.xlu0 0
  %419 = vperm.xlu0 %418, %v269
  %v420 = vpop.permute.xlu0 %419
  %423 = vset.pattern.permute.xlu0 0
  %424 = vperm.xlu0 %423, %v270
  %v425 = vpop.permute.xlu0 %424
  %428 = vset.pattern.permute.xlu0 0
  %429 = vperm.xlu0 %428, %v271
  %v430 = vpop.permute.xlu0 %429
  %v432 = vmul.f32 %v275, %v236
  %v433 = vmul.f32 %v280, %v236
  %v434 = vmul.f32 %v285, %v236
  %v435 = vmul.f32 %v290, %v236
  %v436 = vmul.f32 %v295, %v236
  %v437 = vmul.f32 %v300, %v236
  %v438 = vmul.f32 %v305, %v236
  %v439 = vmul.f32 %v310, %v236
  %v440 = vmul.f32 %v315, %v236
  %v441 = vmul.f32 %v320, %v236
  %v442 = vmul.f32 %v325, %v236
  %v443 = vmul.f32 %v330, %v236
  %v444 = vmul.f32 %v335, %v236
  %v445 = vmul.f32 %v340, %v236
  %v446 = vmul.f32 %v345, %v236
  %v447 = vmul.f32 %v350, %v236
  %v448 = vmul.f32 %v355, %v236
  %v449 = vmul.f32 %v360, %v236
  %v450 = vmul.f32 %v365, %v236
  %v451 = vmul.f32 %v370, %v236
  %v452 = vmul.f32 %v375, %v236
  %v453 = vmul.f32 %v380, %v236
  %v454 = vmul.f32 %v385, %v236
  %v455 = vmul.f32 %v390, %v236
  %v456 = vmul.f32 %v395, %v236
  %v457 = vmul.f32 %v400, %v236
  %v458 = vmul.f32 %v405, %v236
  %v459 = vmul.f32 %v410, %v236
  %v460 = vmul.f32 %v415, %v236
  %v461 = vmul.f32 %v420, %v236
  %v462 = vmul.f32 %v425, %v236
  %v463 = vmul.f32 %v430, %v236
  %vm464 = vcmask 130048
  %v466 = vsel %vm464, %v200, 0
  %v469 = vsel %vm464, %v201, 0
  %v472 = vsel %vm464, %v202, 0
  %v475 = vsel %vm464, %v203, 0
  %v478 = vsel %vm464, %v204, 0
  %v481 = vsel %vm464, %v205, 0
  %v484 = vsel %vm464, %v206, 0
  %v487 = vsel %vm464, %v207, 0
  %v490 = vsel %vm464, %v208, 0
  %v493 = vsel %vm464, %v209, 0
  %v496 = vsel %vm464, %v210, 0
  %v499 = vsel %vm464, %v211, 0
  %v502 = vsel %vm464, %v212, 0
  %v505 = vsel %vm464, %v213, 0
  %v508 = vsel %vm464, %v214, 0
  %v511 = vsel %vm464, %v215, 0
  %v514 = vsel %vm464, %v216, 0
  %v517 = vsel %vm464, %v217, 0
  %v520 = vsel %vm464, %v218, 0
  %v523 = vsel %vm464, %v219, 0
  %v526 = vsel %vm464, %v220, 0
  %v529 = vsel %vm464, %v221, 0
  %v532 = vsel %vm464, %v222, 0
  %v535 = vsel %vm464, %v223, 0
  %v538 = vsel %vm464, %v224, 0
  %v541 = vsel %vm464, %v225, 0
  %v544 = vsel %vm464, %v226, 0
  %v547 = vsel %vm464, %v227, 0
  %v550 = vsel %vm464, %v228, 0
  %v553 = vsel %vm464, %v229, 0
  %v556 = vsel %vm464, %v230, 0
  %v559 = vsel %vm464, %v231, 0
  %561 = vmatprep.subr.mxu0 0.0
  %562 = vmatpush1.msra.mxu0 %v238
  %563 = vmatprep.subr.mxu0 0.0
  %564 = vmatpush1.msra.mxu0 %v239
  %565 = vmatprep.subr.mxu0 0.0
  %566 = vmatpush1.msra.mxu0 0.0
  %567 = vmatprep.subr.mxu0 0.0
  %568 = vmatpush1.msra.mxu0 0.0
  %569 = vmatprep.subr.mxu0 0.0
  %570 = vmatpush1.msra.mxu0 0.0
  %571 = vmatprep.subr.mxu0 0.0
  %572 = vmatpush1.msra.mxu0 0.0
  %573 = vmatprep.subr.mxu0 0.0
  %574 = vmatpush1.msra.mxu0 0.0
  %575 = vmatprep.subr.mxu0 0.0
  %576 = vmatpush1.msra.mxu0 0.0
  %577 = vmatprep.subr.mxu0 0.0
  %578 = vmatpush1.msra.mxu0 0.0
  %579 = vmatprep.subr.mxu0 0.0
  %580 = vmatpush1.msra.mxu0 0.0
  %581 = vmatprep.subr.mxu0 0.0
  %582 = vmatpush1.msra.mxu0 0.0
  %583 = vmatprep.subr.mxu0 0.0
  %584 = vmatpush1.msra.mxu0 0.0
  %585 = vmatprep.subr.mxu0 0.0
  %586 = vmatpush1.msra.mxu0 0.0
  %587 = vmatprep.subr.mxu0 0.0
  %588 = vmatpush1.msra.mxu0 0.0
  %589 = vmatprep.subr.mxu0 0.0
  %590 = vmatpush1.msra.mxu0 0.0
  %591 = vmatprep.subr.mxu0 0.0
  %592 = vmatpush1.msra.mxu0 0.0
  %593 = vmatprep.subr.mxu0 0.0
  %594 = vmatpush1.msra.mxu0 0.0
  %595 = vmatprep.subr.mxu0 0.0
  %596 = vmatpush1.msra.mxu0 0.0
  %597 = vmatprep.subr.mxu0 0.0
  %598 = vmatpush1.msra.mxu0 0.0
  %599 = vmatprep.subr.mxu0 0.0
  %600 = vmatpush1.msra.mxu0 0.0
  %601 = vmatprep.subr.mxu0 0.0
  %602 = vmatpush1.msra.mxu0 0.0
  %603 = vmatprep.subr.mxu0 0.0
  %604 = vmatpush1.msra.mxu0 0.0
  %605 = vmatprep.subr.mxu0 0.0
  %606 = vmatpush1.msra.mxu0 0.0
  %607 = vmatprep.subr.mxu0 0.0
  %608 = vmatpush1.msra.mxu0 0.0
  %609 = vmatprep.subr.mxu0 0.0
  %610 = vmatpush1.msra.mxu0 0.0
  %611 = vmatprep.subr.mxu0 0.0
  %612 = vmatpush1.msra.mxu0 0.0
  %613 = vmatprep.subr.mxu0 0.0
  %614 = vmatpush1.msra.mxu0 0.0
  %615 = vmatprep.subr.mxu0 0.0
  %616 = vmatpush1.msra.mxu0 0.0
  %617 = vmatprep.subr.mxu0 0.0
  %618 = vmatpush1.msra.mxu0 0.0
  %619 = vmatprep.subr.mxu0 0.0
  %620 = vmatpush1.msra.mxu0 0.0
  %621 = vmatprep.subr.mxu0 0.0
  %622 = vmatpush1.msra.mxu0 0.0
  %623 = vmatprep.subr.mxu0 0.0
  %624 = vmatpush1.msra.mxu0 0.0
  %625 = vmatprep.mubr.f32.mxu0 0.0
  %626 = vmatmul.mubr.f32.gmra.mrb[0].mxu0 %v466
  %v627 = vpop.f32.mrb[0].mxu0
  %v628 = vadd.f32 %v432, %v627
  %v629 = vpop.f32.mrb[0].mxu0
  %630 = vmatprep.mubr.f32.mxu0 0.0
  %631 = vmatmul.mubr.f32.gmra.mrb[0].mxu0 %v469
  %v632 = vpop.f32.mrb[0].mxu0
  %v633 = vadd.f32 %v433, %v632
  %v634 = vpop.f32.mrb[0].mxu0
  %635 = vmatprep.mubr.f32.mxu0 0.0
  %636 = vmatmul.mubr.f32.gmra.mrb[0].mxu0 %v472
  %v637 = vpop.f32.mrb[0].mxu0
  %v638 = vadd.f32 %v434, %v637
  %v639 = vpop.f32.mrb[0].mxu0
  %640 = vmatprep.mubr.f32.mxu0 0.0
  %641 = vmatmul.mubr.f32.gmra.mrb[0].mxu0 %v475
  %v642 = vpop.f32.mrb[0].mxu0
  %v643 = vadd.f32 %v435, %v642
  %v644 = vpop.f32.mrb[0].mxu0
  %645 = vmatprep.mubr.f32.mxu0 0.0
  %646 = vmatmul.mubr.f32.gmra.mrb[0].mxu0 %v478
  %v647 = vpop.f32.mrb[0].mxu0
  %v648 = vadd.f32 %v436, %v647
  %v649 = vpop.f32.mrb[0].mxu0
  %650 = vmatprep.mubr.f32.mxu0 0.0
  %651 = vmatmul.mubr.f32.gmra.mrb[0].mxu0 %v481
  %v652 = vpop.f32.mrb[0].mxu0
  %v653 = vadd.f32 %v437, %v652
  %v654 = vpop.f32.mrb[0].mxu0
  %655 = vmatprep.mubr.f32.mxu0 0.0
  %656 = vmatmul.mubr.f32.gmra.mrb[0].mxu0 %v484
  %v657 = vpop.f32.mrb[0].mxu0
  %v658 = vadd.f32 %v438, %v657
  %v659 = vpop.f32.mrb[0].mxu0
  %660 = vmatprep.mubr.f32.mxu0 0.0
  %661 = vmatmul.mubr.f32.gmra.mrb[0].mxu0 %v487
  %v662 = vpop.f32.mrb[0].mxu0
  %v663 = vadd.f32 %v439, %v662
  %v664 = vpop.f32.mrb[0].mxu0
  %665 = vmatprep.mubr.f32.mxu0 0.0
  %666 = vmatmul.mubr.f32.gmra.mrb[0].mxu0 %v490
  %v667 = vpop.f32.mrb[0].mxu0
  %v668 = vadd.f32 %v440, %v667
  %v669 = vpop.f32.mrb[0].mxu0
  %670 = vmatprep.mubr.f32.mxu0 0.0
  %671 = vmatmul.mubr.f32.gmra.mrb[0].mxu0 %v493
  %v672 = vpop.f32.mrb[0].mxu0
  %v673 = vadd.f32 %v441, %v672
  %v674 = vpop.f32.mrb[0].mxu0
  %675 = vmatprep.mubr.f32.mxu0 0.0
  %676 = vmatmul.mubr.f32.gmra.mrb[0].mxu0 %v496
  %v677 = vpop.f32.mrb[0].mxu0
  %v678 = vadd.f32 %v442, %v677
  %v679 = vpop.f32.mrb[0].mxu0
  %680 = vmatprep.mubr.f32.mxu0 0.0
  %681 = vmatmul.mubr.f32.gmra.mrb[0].mxu0 %v499
  %v682 = vpop.f32.mrb[0].mxu0
  %v683 = vadd.f32 %v443, %v682
  %v684 = vpop.f32.mrb[0].mxu0
  %685 = vmatprep.mubr.f32.mxu0 0.0
  %686 = vmatmul.mubr.f32.gmra.mrb[0].mxu0 %v502
  %v687 = vpop.f32.mrb[0].mxu0
  %v688 = vadd.f32 %v444, %v687
  %v689 = vpop.f32.mrb[0].mxu0
  %690 = vmatprep.mubr.f32.mxu0 0.0
  %691 = vmatmul.mubr.f32.gmra.mrb[0].mxu0 %v505
  %v692 = vpop.f32.mrb[0].mxu0
  %v693 = vadd.f32 %v445, %v692
  %v694 = vpop.f32.mrb[0].mxu0
  %695 = vmatprep.mubr.f32.mxu0 0.0
  %696 = vmatmul.mubr.f32.gmra.mrb[0].mxu0 %v508
  %v697 = vpop.f32.mrb[0].mxu0
  %v698 = vadd.f32 %v446, %v697
  %v699 = vpop.f32.mrb[0].mxu0
  %700 = vmatprep.mubr.f32.mxu0 0.0
  %701 = vmatmul.mubr.f32.gmra.mrb[0].mxu0 %v511
  %v702 = vpop.f32.mrb[0].mxu0
  %v703 = vadd.f32 %v447, %v702
  %v704 = vpop.f32.mrb[0].mxu0
  %705 = vmatprep.mubr.f32.mxu0 0.0
  %706 = vmatmul.mubr.f32.gmra.mrb[0].mxu0 %v514
  %v707 = vpop.f32.mrb[0].mxu0
  %v708 = vadd.f32 %v448, %v707
  %v709 = vpop.f32.mrb[0].mxu0
  %710 = vmatprep.mubr.f32.mxu0 0.0
  %711 = vmatmul.mubr.f32.gmra.mrb[0].mxu0 %v517
  %v712 = vpop.f32.mrb[0].mxu0
  %v713 = vadd.f32 %v449, %v712
  %v714 = vpop.f32.mrb[0].mxu0
  %715 = vmatprep.mubr.f32.mxu0 0.0
  %716 = vmatmul.mubr.f32.gmra.mrb[0].mxu0 %v520
  %v717 = vpop.f32.mrb[0].mxu0
  %v718 = vadd.f32 %v450, %v717
  %v719 = vpop.f32.mrb[0].mxu0
  %720 = vmatprep.mubr.f32.mxu0 0.0
  %721 = vmatmul.mubr.f32.gmra.mrb[0].mxu0 %v523
  %v722 = vpop.f32.mrb[0].mxu0
  %v723 = vadd.f32 %v451, %v722
  %v724 = vpop.f32.mrb[0].mxu0
  %725 = vmatprep.mubr.f32.mxu0 0.0
  %726 = vmatmul.mubr.f32.gmra.mrb[0].mxu0 %v526
  %v727 = vpop.f32.mrb[0].mxu0
  %v728 = vadd.f32 %v452, %v727
  %v729 = vpop.f32.mrb[0].mxu0
  %730 = vmatprep.mubr.f32.mxu0 0.0
  %731 = vmatmul.mubr.f32.gmra.mrb[0].mxu0 %v529
  %v732 = vpop.f32.mrb[0].mxu0
  %v733 = vadd.f32 %v453, %v732
  %v734 = vpop.f32.mrb[0].mxu0
  %735 = vmatprep.mubr.f32.mxu0 0.0
  %736 = vmatmul.mubr.f32.gmra.mrb[0].mxu0 %v532
  %v737 = vpop.f32.mrb[0].mxu0
  %v738 = vadd.f32 %v454, %v737
  %v739 = vpop.f32.mrb[0].mxu0
  %740 = vmatprep.mubr.f32.mxu0 0.0
  %741 = vmatmul.mubr.f32.gmra.mrb[0].mxu0 %v535
  %v742 = vpop.f32.mrb[0].mxu0
  %v743 = vadd.f32 %v455, %v742
  %v744 = vpop.f32.mrb[0].mxu0
  %745 = vmatprep.mubr.f32.mxu0 0.0
  %746 = vmatmul.mubr.f32.gmra.mrb[0].mxu0 %v538
  %v747 = vpop.f32.mrb[0].mxu0
  %v748 = vadd.f32 %v456, %v747
  %v749 = vpop.f32.mrb[0].mxu0
  %750 = vmatprep.mubr.f32.mxu0 0.0
  %751 = vmatmul.mubr.f32.gmra.mrb[0].mxu0 %v541
  %v752 = vpop.f32.mrb[0].mxu0
  %v753 = vadd.f32 %v457, %v752
  %v754 = vpop.f32.mrb[0].mxu0
  %755 = vmatprep.mubr.f32.mxu0 0.0
  %756 = vmatmul.mubr.f32.gmra.mrb[0].mxu0 %v544
  %v757 = vpop.f32.mrb[0].mxu0
  %v758 = vadd.f32 %v458, %v757
  %v759 = vpop.f32.mrb[0].mxu0
  %760 = vmatprep.mubr.f32.mxu0 0.0
  %761 = vmatmul.mubr.f32.gmra.mrb[0].mxu0 %v547
  %v762 = vpop.f32.mrb[0].mxu0
  %v763 = vadd.f32 %v459, %v762
  %v764 = vpop.f32.mrb[0].mxu0
  %765 = vmatprep.mubr.f32.mxu0 0.0
  %766 = vmatmul.mubr.f32.gmra.mrb[0].mxu0 %v550
  %v767 = vpop.f32.mrb[0].mxu0
  %v768 = vadd.f32 %v460, %v767
  %v769 = vpop.f32.mrb[0].mxu0
  %770 = vmatprep.mubr.f32.mxu0 0.0
  %771 = vmatmul.mubr.f32.gmra.mrb[0].mxu0 %v553
  %v772 = vpop.f32.mrb[0].mxu0
  %v773 = vadd.f32 %v461, %v772
  %v774 = vpop.f32.mrb[0].mxu0
  %775 = vmatprep.mubr.f32.mxu0 0.0
  %776 = vmatmul.mubr.f32.gmra.mrb[0].mxu0 %v556
  %v777 = vpop.f32.mrb[0].mxu0
  %v778 = vadd.f32 %v462, %v777
  %v779 = vpop.f32.mrb[0].mxu0
  %780 = vmatprep.mubr.f32.mxu0 0.0
  %781 = vmatmul.mubr.f32.gmra.mrb[0].mxu0 %v559
  %v782 = vpop.f32.mrb[0].mxu0
  %v783 = vadd.f32 %v463, %v782
  %v784 = vpop.f32.mrb[0].mxu0
  %785 = vdwg.mxu0
  %v786 = vld [vmem:[%s5] sm:$0xff]
  %v787 = vld [vmem:[%s5 + $0x8] sm:$0xff]
  %v788 = vld [vmem:[%s5 + $0x10] sm:$0xff]
  %v789 = vld [vmem:[%s5 + $0x18] sm:$0xff]
  %v790 = vld [vmem:[%s5 + $0x20] sm:$0xff]
  %v791 = vld [vmem:[%s5 + $0x28] sm:$0xff]
  %v792 = vld [vmem:[%s5 + $0x30] sm:$0xff]
  %v793 = vld [vmem:[%s5 + $0x38] sm:$0xff]
  %v794 = vld [vmem:[%s5 + $0x40] sm:$0xff]
  %v795 = vld [vmem:[%s5 + $0x48] sm:$0xff]
  %v796 = vld [vmem:[%s5 + $0x50] sm:$0xff]
  %v797 = vld [vmem:[%s5 + $0x58] sm:$0xff]
  %v798 = vld [vmem:[%s5 + $0x60] sm:$0xff]
  %v799 = vld [vmem:[%s5 + $0x68] sm:$0xff]
  %v800 = vld [vmem:[%s5 + $0x70] sm:$0xff]
  %v801 = vld [vmem:[%s5 + $0x78] sm:$0xff]
  %v802 = vld [vmem:[%s5 + $0x80] sm:$0xff]
  %v803 = vld [vmem:[%s5 + $0x88] sm:$0xff]
  %v804 = vld [vmem:[%s5 + $0x90] sm:$0xff]
  %v805 = vld [vmem:[%s5 + $0x98] sm:$0xff]
  %v806 = vld [vmem:[%s5 + $0xa0] sm:$0xff]
  %v807 = vld [vmem:[%s5 + $0xa8] sm:$0xff]
  %v808 = vld [vmem:[%s5 + $0xb0] sm:$0xff]
  %v809 = vld [vmem:[%s5 + $0xb8] sm:$0xff]
  %v810 = vld [vmem:[%s5 + $0xc0] sm:$0xff]
  %v811 = vld [vmem:[%s5 + $0xc8] sm:$0xff]
  %v812 = vld [vmem:[%s5 + $0xd0] sm:$0xff]
  %v813 = vld [vmem:[%s5 + $0xd8] sm:$0xff]
  %v814 = vld [vmem:[%s5 + $0xe0] sm:$0xff]
  %v815 = vld [vmem:[%s5 + $0xe8] sm:$0xff]
  %v816 = vld [vmem:[%s5 + $0xf0] sm:$0xff]
  %v817 = vld [vmem:[%s5 + $0xf8] sm:$0xff]
  %v818 = vld [vmem:[%s5 + $0x100] sm:$0xff]
  %v819 = vld [vmem:[%s5 + $0x108] sm:$0xff]
  %v820 = vld [vmem:[%s5 + $0x110] sm:$0xff]
  %v821 = vld [vmem:[%s5 + $0x118] sm:$0xff]
  %v822 = vld [vmem:[%s5 + $0x120] sm:$0xff]
  %v823 = vld [vmem:[%s5 + $0x128] sm:$0xff]
  %v824 = vld [vmem:[%s5 + $0x130] sm:$0xff]
  %v825 = vld [vmem:[%s5 + $0x138] sm:$0xff]
  %v826 = vld [vmem:[%s5 + $0x140] sm:$0xff]
  %v827 = vld [vmem:[%s5 + $0x148] sm:$0xff]
  %v828 = vld [vmem:[%s5 + $0x150] sm:$0xff]
  %v829 = vld [vmem:[%s5 + $0x158] sm:$0xff]
  %v830 = vld [vmem:[%s5 + $0x160] sm:$0xff]
  %v831 = vld [vmem:[%s5 + $0x168] sm:$0xff]
  %v832 = vld [vmem:[%s5 + $0x170] sm:$0xff]
  %v833 = vld [vmem:[%s5 + $0x178] sm:$0xff]
  %v834 = vld [vmem:[%s5 + $0x180] sm:$0xff]
  %v835 = vld [vmem:[%s5 + $0x188] sm:$0xff]
  %v836 = vld [vmem:[%s5 + $0x190] sm:$0xff]
  %v837 = vld [vmem:[%s5 + $0x198] sm:$0xff]
  %v838 = vld [vmem:[%s5 + $0x1a0] sm:$0xff]
  %v839 = vld [vmem:[%s5 + $0x1a8] sm:$0xff]
  %v840 = vld [vmem:[%s5 + $0x1b0] sm:$0xff]
  %v841 = vld [vmem:[%s5 + $0x1b8] sm:$0xff]
  %v842 = vld [vmem:[%s5 + $0x1c0] sm:$0xff]
  %v843 = vld [vmem:[%s5 + $0x1c8] sm:$0xff]
  %v844 = vld [vmem:[%s5 + $0x1d0] sm:$0xff]
  %v845 = vld [vmem:[%s5 + $0x1d8] sm:$0xff]
  %v846 = vld [vmem:[%s5 + $0x1e0] sm:$0xff]
  %v847 = vld [vmem:[%s5 + $0x1e8] sm:$0xff]
  %v848 = vld [vmem:[%s5 + $0x1f0] sm:$0xff]
  %v849 = vld [vmem:[%s5 + $0x1f8] sm:$0xff]
  %v850 = vld [vmem:[%s5 + $0x200] sm:$0xff]
  %v851 = vld [vmem:[%s5 + $0x208] sm:$0xff]
  %v852 = vld [vmem:[%s5 + $0x210] sm:$0xff]
  %v853 = vld [vmem:[%s5 + $0x218] sm:$0xff]
  %v854 = vld [vmem:[%s5 + $0x220] sm:$0xff]
  %v855 = vld [vmem:[%s5 + $0x228] sm:$0xff]
  %v856 = vld [vmem:[%s5 + $0x230] sm:$0xff]
  %v857 = vld [vmem:[%s5 + $0x238] sm:$0xff]
  %v858 = vld [vmem:[%s5 + $0x240] sm:$0xff]
  %v859 = vld [vmem:[%s5 + $0x248] sm:$0xff]
  %v860 = vld [vmem:[%s5 + $0x250] sm:$0xff]
  %v861 = vld [vmem:[%s5 + $0x258] sm:$0xff]
  %v862 = vld [vmem:[%s5 + $0x260] sm:$0xff]
  %vm863 = vcmask 719872
  %v865 = vsel %vm863, %v628, 0
  %v868 = vsel %vm863, %v633, 0
  %v871 = vsel %vm863, %v638, 0
  %v874 = vsel %vm863, %v643, 0
  %v877 = vsel %vm863, %v648, 0
  %v880 = vsel %vm863, %v653, 0
  %v883 = vsel %vm863, %v658, 0
  %v886 = vsel %vm863, %v663, 0
  %v889 = vsel %vm863, %v668, 0
  %v892 = vsel %vm863, %v673, 0
  %v895 = vsel %vm863, %v678, 0
  %v898 = vsel %vm863, %v683, 0
  %v901 = vsel %vm863, %v688, 0
  %v904 = vsel %vm863, %v693, 0
  %v907 = vsel %vm863, %v698, 0
  %v910 = vsel %vm863, %v703, 0
  %v913 = vsel %vm863, %v708, 0
  %v916 = vsel %vm863, %v713, 0
  %v919 = vsel %vm863, %v718, 0
  %v922 = vsel %vm863, %v723, 0
  %v925 = vsel %vm863, %v728, 0
  %v928 = vsel %vm863, %v733, 0
  %v931 = vsel %vm863, %v738, 0
  %v934 = vsel %vm863, %v743, 0
  %v937 = vsel %vm863, %v748, 0
  %v940 = vsel %vm863, %v753, 0
  %v943 = vsel %vm863, %v758, 0
  %v946 = vsel %vm863, %v763, 0
  %v949 = vsel %vm863, %v768, 0
  %v952 = vsel %vm863, %v773, 0
  %v955 = vsel %vm863, %v778, 0
  %v958 = vsel %vm863, %v783, 0
  %960 = vmatprep.subr.mxu0 %v787
  %961 = vmatpush1.msra.mxu0 %v786
  %962 = vmatprep.subr.mxu0 %v794
  %963 = vmatpush1.msra.mxu0 %v793
  %964 = vmatprep.subr.mxu0 %v801
  %965 = vmatpush1.msra.mxu0 %v800
  %966 = vmatprep.subr.mxu0 %v808
  %967 = vmatpush1.msra.mxu0 %v807
  %968 = vmatprep.subr.mxu0 %v815
  %969 = vmatpush1.msra.mxu0 %v814
  %970 = vmatprep.subr.mxu0 %v822
  %971 = vmatpush1.msra.mxu0 %v821
  %972 = vmatprep.subr.mxu0 %v829
  %973 = vmatpush1.msra.mxu0 %v828
  %974 = vmatprep.subr.mxu0 %v836
  %975 = vmatpush1.msra.mxu0 %v835
  %976 = vmatprep.subr.mxu0 %v843
  %977 = vmatpush1.msra.mxu0 %v842
  %978 = vmatprep.subr.mxu0 %v850
  %979 = vmatpush1.msra.mxu0 %v849
  %980 = vmatprep.subr.mxu0 %v857
  %981 = vmatpush1.msra.mxu0 %v856
  %982 = vmatprep.subr.mxu0 0.0
  %983 = vmatpush1.msra.mxu0 0.0
  %984 = vmatprep.subr.mxu0 0.0
  %985 = vmatpush1.msra.mxu0 0.0
  %986 = vmatprep.subr.mxu0 0.0
  %987 = vmatpush1.msra.mxu0 0.0
  %988 = vmatprep.subr.mxu0 0.0
  %989 = vmatpush1.msra.mxu0 0.0
  %990 = vmatprep.subr.mxu0 0.0
  %991 = vmatpush1.msra.mxu0 0.0
  %992 = vmatprep.subr.mxu0 0.0
  %993 = vmatpush1.msra.mxu0 0.0
  %994 = vmatprep.subr.mxu0 0.0
  %995 = vmatpush1.msra.mxu0 0.0
  %996 = vmatprep.subr.mxu0 0.0
  %997 = vmatpush1.msra.mxu0 0.0
  %998 = vmatprep.subr.mxu0 0.0
  %999 = vmatpush1.msra.mxu0 0.0
  %1000 = vmatprep.subr.mxu0 0.0
  %1001 = vmatpush1.msra.mxu0 0.0
  %1002 = vmatprep.subr.mxu0 0.0
  %1003 = vmatpush1.msra.mxu0 0.0
  %1004 = vmatprep.subr.mxu0 0.0
  %1005 = vmatpush1.msra.mxu0 0.0
  %1006 = vmatprep.subr.mxu0 0.0
  %1007 = vmatpush1.msra.mxu0 0.0
  %1008 = vmatprep.subr.mxu0 0.0
  %1009 = vmatpush1.msra.mxu0 0.0
  %1010 = vmatprep.subr.mxu0 0.0
  %1011 = vmatpush1.msra.mxu0 0.0
  %1012 = vmatprep.subr.mxu0 0.0
  %1013 = vmatpush1.msra.mxu0 0.0
  %1014 = vmatprep.subr.mxu0 0.0
  %1015 = vmatpush1.msra.mxu0 0.0
  %1016 = vmatprep.subr.mxu0 0.0
  %1017 = vmatpush1.msra.mxu0 0.0
  %1018 = vmatprep.subr.mxu0 0.0
  %1019 = vmatpush1.msra.mxu0 0.0
  %1020 = vmatprep.subr.mxu0 0.0
  %1021 = vmatpush1.msra.mxu0 0.0
  %1022 = vmatprep.subr.mxu0 0.0
  %1023 = vmatpush1.msra.mxu0 0.0
  %1024 = vmatprep.mubr.f32.mxu0 0.0
  %1025 = vmatmul.mubr.f32.gmra.mrb[0].mxu0 %v865
  %v1026 = vpop.f32.mrb[0].mxu0
  %v1027 = vadd.f32 0.0, %v1026
  %v1028 = vpop.f32.mrb[0].mxu0
  %v1029 = vadd.f32 0.0, %v1028
  %1030 = vmatprep.mubr.f32.mxu0 0.0
  %1031 = vmatmul.mubr.f32.gmra.mrb[0].mxu0 %v868
  %v1032 = vpop.f32.mrb[0].mxu0
  %v1033 = vadd.f32 0.0, %v1032
  %v1034 = vpop.f32.mrb[0].mxu0
  %v1035 = vadd.f32 0.0, %v1034
  %1036 = vmatprep.mubr.f32.mxu0 0.0
  %1037 = vmatmul.mubr.f32.gmra.mrb[0].mxu0 %v871
  %v1038 = vpop.f32.mrb[0].mxu0
  %v1039 = vadd.f32 0.0, %v1038
  %v1040 = vpop.f32.mrb[0].mxu0
  %v1041 = vadd.f32 0.0, %v1040
  %1042 = vmatprep.mubr.f32.mxu0 0.0
  %1043 = vmatmul.mubr.f32.gmra.mrb[0].mxu0 %v874
  %v1044 = vpop.f32.mrb[0].mxu0
  %v1045 = vadd.f32 0.0, %v1044
  %v1046 = vpop.f32.mrb[0].mxu0
  %v1047 = vadd.f32 0.0, %v1046
  %1048 = vmatprep.mubr.f32.mxu0 0.0
  %1049 = vmatmul.mubr.f32.gmra.mrb[0].mxu0 %v877
  %v1050 = vpop.f32.mrb[0].mxu0
  %v1051 = vadd.f32 0.0, %v1050
  %v1052 = vpop.f32.mrb[0].mxu0
  %v1053 = vadd.f32 0.0, %v1052
  %1054 = vmatprep.mubr.f32.mxu0 0.0
  %1055 = vmatmul.mubr.f32.gmra.mrb[0].mxu0 %v880
  %v1056 = vpop.f32.mrb[0].mxu0
  %v1057 = vadd.f32 0.0, %v1056
  %v1058 = vpop.f32.mrb[0].mxu0
  %v1059 = vadd.f32 0.0, %v1058
  %1060 = vmatprep.mubr.f32.mxu0 0.0
  %1061 = vmatmul.mubr.f32.gmra.mrb[0].mxu0 %v883
  %v1062 = vpop.f32.mrb[0].mxu0
  %v1063 = vadd.f32 0.0, %v1062
  %v1064 = vpop.f32.mrb[0].mxu0
  %v1065 = vadd.f32 0.0, %v1064
  %1066 = vmatprep.mubr.f32.mxu0 0.0
  %1067 = vmatmul.mubr.f32.gmra.mrb[0].mxu0 %v886
  %v1068 = vpop.f32.mrb[0].mxu0
  %v1069 = vadd.f32 0.0, %v1068
  %v1070 = vpop.f32.mrb[0].mxu0
  %v1071 = vadd.f32 0.0, %v1070
  %1072 = vmatprep.mubr.f32.mxu0 0.0
  %1073 = vmatmul.mubr.f32.gmra.mrb[0].mxu0 %v889
  %v1074 = vpop.f32.mrb[0].mxu0
  %v1075 = vadd.f32 0.0, %v1074
  %v1076 = vpop.f32.mrb[0].mxu0
  %v1077 = vadd.f32 0.0, %v1076
  %1078 = vmatprep.mubr.f32.mxu0 0.0
  %1079 = vmatmul.mubr.f32.gmra.mrb[0].mxu0 %v892
  %v1080 = vpop.f32.mrb[0].mxu0
  %v1081 = vadd.f32 0.0, %v1080
  %v1082 = vpop.f32.mrb[0].mxu0
  %v1083 = vadd.f32 0.0, %v1082
  %1084 = vmatprep.mubr.f32.mxu0 0.0
  %1085 = vmatmul.mubr.f32.gmra.mrb[0].mxu0 %v895
  %v1086 = vpop.f32.mrb[0].mxu0
  %v1087 = vadd.f32 0.0, %v1086
  %v1088 = vpop.f32.mrb[0].mxu0
  %v1089 = vadd.f32 0.0, %v1088
  %1090 = vmatprep.mubr.f32.mxu0 0.0
  %1091 = vmatmul.mubr.f32.gmra.mrb[0].mxu0 %v898
  %v1092 = vpop.f32.mrb[0].mxu0
  %v1093 = vadd.f32 0.0, %v1092
  %v1094 = vpop.f32.mrb[0].mxu0
  %v1095 = vadd.f32 0.0, %v1094
  %1096 = vmatprep.mubr.f32.mxu0 0.0
  %1097 = vmatmul.mubr.f32.gmra.mrb[0].mxu0 %v901
  %v1098 = vpop.f32.mrb[0].mxu0
  %v1099 = vadd.f32 0.0, %v1098
  %v1100 = vpop.f32.mrb[0].mxu0
  %v1101 = vadd.f32 0.0, %v1100
  %1102 = vmatprep.mubr.f32.mxu0 0.0
  %1103 = vmatmul.mubr.f32.gmra.mrb[0].mxu0 %v904
  %v1104 = vpop.f32.mrb[0].mxu0
  %v1105 = vadd.f32 0.0, %v1104
  %v1106 = vpop.f32.mrb[0].mxu0
  %v1107 = vadd.f32 0.0, %v1106
  %1108 = vmatprep.mubr.f32.mxu0 0.0
  %1109 = vmatmul.mubr.f32.gmra.mrb[0].mxu0 %v907
  %v1110 = vpop.f32.mrb[0].mxu0
  %v1111 = vadd.f32 0.0, %v1110
  %v1112 = vpop.f32.mrb[0].mxu0
  %v1113 = vadd.f32 0.0, %v1112
  %1114 = vmatprep.mubr.f32.mxu0 0.0
  %1115 = vmatmul.mubr.f32.gmra.mrb[0].mxu0 %v910
  %v1116 = vpop.f32.mrb[0].mxu0
  %v1117 = vadd.f32 0.0, %v1116
  %v1118 = vpop.f32.mrb[0].mxu0
  %v1119 = vadd.f32 0.0, %v1118
  %1120 = vmatprep.mubr.f32.mxu0 0.0
  %1121 = vmatmul.mubr.f32.gmra.mrb[0].mxu0 %v913
  %v1122 = vpop.f32.mrb[0].mxu0
  %v1123 = vadd.f32 0.0, %v1122
  %v1124 = vpop.f32.mrb[0].mxu0
  %v1125 = vadd.f32 0.0, %v1124
  %1126 = vmatprep.mubr.f32.mxu0 0.0
  %1127 = vmatmul.mubr.f32.gmra.mrb[0].mxu0 %v916
  %v1128 = vpop.f32.mrb[0].mxu0
  %v1129 = vadd.f32 0.0, %v1128
  %v1130 = vpop.f32.mrb[0].mxu0
  %v1131 = vadd.f32 0.0, %v1130
  %1132 = vmatprep.mubr.f32.mxu0 0.0
  %1133 = vmatmul.mubr.f32.gmra.mrb[0].mxu0 %v919
  %v1134 = vpop.f32.mrb[0].mxu0
  %v1135 = vadd.f32 0.0, %v1134
  %v1136 = vpop.f32.mrb[0].mxu0
  %v1137 = vadd.f32 0.0, %v1136
  %1138 = vmatprep.mubr.f32.mxu0 0.0
  %1139 = vmatmul.mubr.f32.gmra.mrb[0].mxu0 %v922
  %v1140 = vpop.f32.mrb[0].mxu0
  %v1141 = vadd.f32 0.0, %v1140
  %v1142 = vpop.f32.mrb[0].mxu0
  %v1143 = vadd.f32 0.0, %v1142
  %1144 = vmatprep.mubr.f32.mxu0 0.0
  %1145 = vmatmul.mubr.f32.gmra.mrb[0].mxu0 %v925
  %v1146 = vpop.f32.mrb[0].mxu0
  %v1147 = vadd.f32 0.0, %v1146
  %v1148 = vpop.f32.mrb[0].mxu0
  %v1149 = vadd.f32 0.0, %v1148
  %1150 = vmatprep.mubr.f32.mxu0 0.0
  %1151 = vmatmul.mubr.f32.gmra.mrb[0].mxu0 %v928
  %v1152 = vpop.f32.mrb[0].mxu0
  %v1153 = vadd.f32 0.0, %v1152
  %v1154 = vpop.f32.mrb[0].mxu0
  %v1155 = vadd.f32 0.0, %v1154
  %1156 = vmatprep.mubr.f32.mxu0 0.0
  %1157 = vmatmul.mubr.f32.gmra.mrb[0].mxu0 %v931
  %v1158 = vpop.f32.mrb[0].mxu0
  %v1159 = vadd.f32 0.0, %v1158
  %v1160 = vpop.f32.mrb[0].mxu0
  %v1161 = vadd.f32 0.0, %v1160
  %1162 = vmatprep.mubr.f32.mxu0 0.0
  %1163 = vmatmul.mubr.f32.gmra.mrb[0].mxu0 %v934
  %v1164 = vpop.f32.mrb[0].mxu0
  %v1165 = vadd.f32 0.0, %v1164
  %v1166 = vpop.f32.mrb[0].mxu0
  %v1167 = vadd.f32 0.0, %v1166
  %1168 = vmatprep.mubr.f32.mxu0 0.0
  %1169 = vmatmul.mubr.f32.gmra.mrb[0].mxu0 %v937
  %v1170 = vpop.f32.mrb[0].mxu0
  %v1171 = vadd.f32 0.0, %v1170
  %v1172 = vpop.f32.mrb[0].mxu0
  %v1173 = vadd.f32 0.0, %v1172
  %1174 = vmatprep.mubr.f32.mxu0 0.0
  %1175 = vmatmul.mubr.f32.gmra.mrb[0].mxu0 %v940
  %v1176 = vpop.f32.mrb[0].mxu0
  %v1177 = vadd.f32 0.0, %v1176
  %v1178 = vpop.f32.mrb[0].mxu0
  %v1179 = vadd.f32 0.0, %v1178
  %1180 = vmatprep.mubr.f32.mxu0 0.0
  %1181 = vmatmul.mubr.f32.gmra.mrb[0].mxu0 %v943
  %v1182 = vpop.f32.mrb[0].mxu0
  %v1183 = vadd.f32 0.0, %v1182
  %v1184 = vpop.f32.mrb[0].mxu0
  %v1185 = vadd.f32 0.0, %v1184
  %1186 = vmatprep.mubr.f32.mxu0 0.0
  %1187 = vmatmul.mubr.f32.gmra.mrb[0].mxu0 %v946
  %v1188 = vpop.f32.mrb[0].mxu0
  %v1189 = vadd.f32 0.0, %v1188
  %v1190 = vpop.f32.mrb[0].mxu0
  %v1191 = vadd.f32 0.0, %v1190
  %1192 = vmatprep.mubr.f32.mxu0 0.0
  %1193 = vmatmul.mubr.f32.gmra.mrb[0].mxu0 %v949
  %v1194 = vpop.f32.mrb[0].mxu0
  %v1195 = vadd.f32 0.0, %v1194
  %v1196 = vpop.f32.mrb[0].mxu0
  %v1197 = vadd.f32 0.0, %v1196
  %1198 = vmatprep.mubr.f32.mxu0 0.0
  %1199 = vmatmul.mubr.f32.gmra.mrb[0].mxu0 %v952
  %v1200 = vpop.f32.mrb[0].mxu0
  %v1201 = vadd.f32 0.0, %v1200
  %v1202 = vpop.f32.mrb[0].mxu0
  %v1203 = vadd.f32 0.0, %v1202
  %1204 = vmatprep.mubr.f32.mxu0 0.0
  %1205 = vmatmul.mubr.f32.gmra.mrb[0].mxu0 %v955
  %v1206 = vpop.f32.mrb[0].mxu0
  %v1207 = vadd.f32 0.0, %v1206
  %v1208 = vpop.f32.mrb[0].mxu0
  %v1209 = vadd.f32 0.0, %v1208
  %1210 = vmatprep.mubr.f32.mxu0 0.0
  %1211 = vmatmul.mubr.f32.gmra.mrb[0].mxu0 %v958
  %v1212 = vpop.f32.mrb[0].mxu0
  %v1213 = vadd.f32 0.0, %v1212
  %v1214 = vpop.f32.mrb[0].mxu0
  %v1215 = vadd.f32 0.0, %v1214
  %1216 = vdwg.mxu0
  %1217 = vmatprep.subr.mxu0 %v789
  %1218 = vmatpush1.msra.mxu0 %v788
  %1219 = vmatprep.subr.mxu0 %v796
  %1220 = vmatpush1.msra.mxu0 %v795
  %1221 = vmatprep.subr.mxu0 %v803
  %1222 = vmatpush1.msra.mxu0 %v802
  %1223 = vmatprep.subr.mxu0 %v810
  %1224 = vmatpush1.msra.mxu0 %v809
  %1225 = vmatprep.subr.mxu0 %v817
  %1226 = vmatpush1.msra.mxu0 %v816
  %1227 = vmatprep.subr.mxu0 %v824
  %1228 = vmatpush1.msra.mxu0 %v823
  %1229 = vmatprep.subr.mxu0 %v831
  %1230 = vmatpush1.msra.mxu0 %v830
  %1231 = vmatprep.subr.mxu0 %v838
  %1232 = vmatpush1.msra.mxu0 %v837
  %1233 = vmatprep.subr.mxu0 %v845
  %1234 = vmatpush1.msra.mxu0 %v844
  %1235 = vmatprep.subr.mxu0 %v852
  %1236 = vmatpush1.msra.mxu0 %v851
  %1237 = vmatprep.subr.mxu0 %v859
  %1238 = vmatpush1.msra.mxu0 %v858
  %1239 = vmatprep.subr.mxu0 0.0
  %1240 = vmatpush1.msra.mxu0 0.0
  %1241 = vmatprep.subr.mxu0 0.0
  %1242 = vmatpush1.msra.mxu0 0.0
  %1243 = vmatprep.subr.mxu0 0.0
  %1244 = vmatpush1.msra.mxu0 0.0
  %1245 = vmatprep.subr.mxu0 0.0
  %1246 = vmatpush1.msra.mxu0 0.0
  %1247 = vmatprep.subr.mxu0 0.0
  %1248 = vmatpush1.msra.mxu0 0.0
  %1249 = vmatprep.subr.mxu0 0.0
  %1250 = vmatpush1.msra.mxu0 0.0
  %1251 = vmatprep.subr.mxu0 0.0
  %1252 = vmatpush1.msra.mxu0 0.0
  %1253 = vmatprep.subr.mxu0 0.0
  %1254 = vmatpush1.msra.mxu0 0.0
  %1255 = vmatprep.subr.mxu0 0.0
  %1256 = vmatpush1.msra.mxu0 0.0
  %1257 = vmatprep.subr.mxu0 0.0
  %1258 = vmatpush1.msra.mxu0 0.0
  %1259 = vmatprep.subr.mxu0 0.0
  %1260 = vmatpush1.msra.mxu0 0.0
  %1261 = vmatprep.subr.mxu0 0.0
  %1262 = vmatpush1.msra.mxu0 0.0
  %1263 = vmatprep.subr.mxu0 0.0
  %1264 = vmatpush1.msra.mxu0 0.0
  %1265 = vmatprep.subr.mxu0 0.0
  %1266 = vmatpush1.msra.mxu0 0.0
  %1267 = vmatprep.subr.mxu0 0.0
  %1268 = vmatpush1.msra.mxu0 0.0
  %1269 = vmatprep.subr.mxu0 0.0
  %1270 = vmatpush1.msra.mxu0 0.0
  %1271 = vmatprep.subr.mxu0 0.0
  %1272 = vmatpush1.msra.mxu0 0.0
  %1273 = vmatprep.subr.mxu0 0.0
  %1274 = vmatpush1.msra.mxu0 0.0
  %1275 = vmatprep.subr.mxu0 0.0
  %1276 = vmatpush1.msra.mxu0 0.0
  %1277 = vmatprep.subr.mxu0 0.0
  %1278 = vmatpush1.msra.mxu0 0.0
  %1279 = vmatprep.subr.mxu0 0.0
  %1280 = vmatpush1.msra.mxu0 0.0
  %1281 = vmatprep.mubr.f32.mxu0 0.0
  %1282 = vmatmul.mubr.f32.gmra.mrb[0].mxu0 %v865
  %v1283 = vpop.f32.mrb[0].mxu0
  %v1284 = vadd.f32 0.0, %v1283
  %v1285 = vpop.f32.mrb[0].mxu0
  %v1286 = vadd.f32 0.0, %v1285
  %1287 = vmatprep.mubr.f32.mxu0 0.0
  %1288 = vmatmul.mubr.f32.gmra.mrb[0].mxu0 %v868
  %v1289 = vpop.f32.mrb[0].mxu0
  %v1290 = vadd.f32 0.0, %v1289
  %v1291 = vpop.f32.mrb[0].mxu0
  %v1292 = vadd.f32 0.0, %v1291
  %1293 = vmatprep.mubr.f32.mxu0 0.0
  %1294 = vmatmul.mubr.f32.gmra.mrb[0].mxu0 %v871
  %v1295 = vpop.f32.mrb[0].mxu0
  %v1296 = vadd.f32 0.0, %v1295
  %v1297 = vpop.f32.mrb[0].mxu0
  %v1298 = vadd.f32 0.0, %v1297
  %1299 = vmatprep.mubr.f32.mxu0 0.0
  %1300 = vmatmul.mubr.f32.gmra.mrb[0].mxu0 %v874
  %v1301 = vpop.f32.mrb[0].mxu0
  %v1302 = vadd.f32 0.0, %v1301
  %v1303 = vpop.f32.mrb[0].mxu0
  %v1304 = vadd.f32 0.0, %v1303
  %1305 = vmatprep.mubr.f32.mxu0 0.0
  %1306 = vmatmul.mubr.f32.gmra.mrb[0].mxu0 %v877
  %v1307 = vpop.f32.mrb[0].mxu0
  %v1308 = vadd.f32 0.0, %v1307
  %v1309 = vpop.f32.mrb[0].mxu0
  %v1310 = vadd.f32 0.0, %v1309
  %1311 = vmatprep.mubr.f32.mxu0 0.0
  %1312 = vmatmul.mubr.f32.gmra.mrb[0].mxu0 %v880
  %v1313 = vpop.f32.mrb[0].mxu0
  %v1314 = vadd.f32 0.0, %v1313
  %v1315 = vpop.f32.mrb[0].mxu0
  %v1316 = vadd.f32 0.0, %v1315
  %1317 = vmatprep.mubr.f32.mxu0 0.0
  %1318 = vmatmul.mubr.f32.gmra.mrb[0].mxu0 %v883
  %v1319 = vpop.f32.mrb[0].mxu0
  %v1320 = vadd.f32 0.0, %v1319
  %v1321 = vpop.f32.mrb[0].mxu0
  %v1322 = vadd.f32 0.0, %v1321
  %1323 = vmatprep.mubr.f32.mxu0 0.0
  %1324 = vmatmul.mubr.f32.gmra.mrb[0].mxu0 %v886
  %v1325 = vpop.f32.mrb[0].mxu0
  %v1326 = vadd.f32 0.0, %v1325
  %v1327 = vpop.f32.mrb[0].mxu0
  %v1328 = vadd.f32 0.0, %v1327
  %1329 = vmatprep.mubr.f32.mxu0 0.0
  %1330 = vmatmul.mubr.f32.gmra.mrb[0].mxu0 %v889
  %v1331 = vpop.f32.mrb[0].mxu0
  %v1332 = vadd.f32 0.0, %v1331
  %v1333 = vpop.f32.mrb[0].mxu0
  %v1334 = vadd.f32 0.0, %v1333
  %1335 = vmatprep.mubr.f32.mxu0 0.0
  %1336 = vmatmul.mubr.f32.gmra.mrb[0].mxu0 %v892
  %v1337 = vpop.f32.mrb[0].mxu0
  %v1338 = vadd.f32 0.0, %v1337
  %v1339 = vpop.f32.mrb[0].mxu0
  %v1340 = vadd.f32 0.0, %v1339
  %1341 = vmatprep.mubr.f32.mxu0 0.0
  %1342 = vmatmul.mubr.f32.gmra.mrb[0].mxu0 %v895
  %v1343 = vpop.f32.mrb[0].mxu0
  %v1344 = vadd.f32 0.0, %v1343
  %v1345 = vpop.f32.mrb[0].mxu0
  %v1346 = vadd.f32 0.0, %v1345
  %1347 = vmatprep.mubr.f32.mxu0 0.0
  %1348 = vmatmul.mubr.f32.gmra.mrb[0].mxu0 %v898
  %v1349 = vpop.f32.mrb[0].mxu0
  %v1350 = vadd.f32 0.0, %v1349
  %v1351 = vpop.f32.mrb[0].mxu0
  %v1352 = vadd.f32 0.0, %v1351
  %1353 = vmatprep.mubr.f32.mxu0 0.0
  %1354 = vmatmul.mubr.f32.gmra.mrb[0].mxu0 %v901
  %v1355 = vpop.f32.mrb[0].mxu0
  %v1356 = vadd.f32 0.0, %v1355
  %v1357 = vpop.f32.mrb[0].mxu0
  %v1358 = vadd.f32 0.0, %v1357
  %1359 = vmatprep.mubr.f32.mxu0 0.0
  %1360 = vmatmul.mubr.f32.gmra.mrb[0].mxu0 %v904
  %v1361 = vpop.f32.mrb[0].mxu0
  %v1362 = vadd.f32 0.0, %v1361
  %v1363 = vpop.f32.mrb[0].mxu0
  %v1364 = vadd.f32 0.0, %v1363
  %1365 = vmatprep.mubr.f32.mxu0 0.0
  %1366 = vmatmul.mubr.f32.gmra.mrb[0].mxu0 %v907
  %v1367 = vpop.f32.mrb[0].mxu0
  %v1368 = vadd.f32 0.0, %v1367
  %v1369 = vpop.f32.mrb[0].mxu0
  %v1370 = vadd.f32 0.0, %v1369
  %1371 = vmatprep.mubr.f32.mxu0 0.0
  %1372 = vmatmul.mubr.f32.gmra.mrb[0].mxu0 %v910
  %v1373 = vpop.f32.mrb[0].mxu0
  %v1374 = vadd.f32 0.0, %v1373
  %v1375 = vpop.f32.mrb[0].mxu0
  %v1376 = vadd.f32 0.0, %v1375
  %1377 = vmatprep.mubr.f32.mxu0 0.0
  %1378 = vmatmul.mubr.f32.gmra.mrb[0].mxu0 %v913
  %v1379 = vpop.f32.mrb[0].mxu0
  %v1380 = vadd.f32 0.0, %v1379
  %v1381 = vpop.f32.mrb[0].mxu0
  %v1382 = vadd.f32 0.0, %v1381
  %1383 = vmatprep.mubr.f32.mxu0 0.0
  %1384 = vmatmul.mubr.f32.gmra.mrb[0].mxu0 %v916
  %v1385 = vpop.f32.mrb[0].mxu0
  %v1386 = vadd.f32 0.0, %v1385
  %v1387 = vpop.f32.mrb[0].mxu0
  %v1388 = vadd.f32 0.0, %v1387
  %1389 = vmatprep.mubr.f32.mxu0 0.0
  %1390 = vmatmul.mubr.f32.gmra.mrb[0].mxu0 %v919
  %v1391 = vpop.f32.mrb[0].mxu0
  %v1392 = vadd.f32 0.0, %v1391
  %v1393 = vpop.f32.mrb[0].mxu0
  %v1394 = vadd.f32 0.0, %v1393
  %1395 = vmatprep.mubr.f32.mxu0 0.0
  %1396 = vmatmul.mubr.f32.gmra.mrb[0].mxu0 %v922
  %v1397 = vpop.f32.mrb[0].mxu0
  %v1398 = vadd.f32 0.0, %v1397
  %v1399 = vpop.f32.mrb[0].mxu0
  %v1400 = vadd.f32 0.0, %v1399
  %1401 = vmatprep.mubr.f32.mxu0 0.0
  %1402 = vmatmul.mubr.f32.gmra.mrb[0].mxu0 %v925
  %v1403 = vpop.f32.mrb[0].mxu0
  %v1404 = vadd.f32 0.0, %v1403
  %v1405 = vpop.f32.mrb[0].mxu0
  %v1406 = vadd.f32 0.0, %v1405
  %1407 = vmatprep.mubr.f32.mxu0 0.0
  %1408 = vmatmul.mubr.f32.gmra.mrb[0].mxu0 %v928
  %v1409 = vpop.f32.mrb[0].mxu0
  %v1410 = vadd.f32 0.0, %v1409
  %v1411 = vpop.f32.mrb[0].mxu0
  %v1412 = vadd.f32 0.0, %v1411
  %1413 = vmatprep.mubr.f32.mxu0 0.0
  %1414 = vmatmul.mubr.f32.gmra.mrb[0].mxu0 %v931
  %v1415 = vpop.f32.mrb[0].mxu0
  %v1416 = vadd.f32 0.0, %v1415
  %v1417 = vpop.f32.mrb[0].mxu0
  %v1418 = vadd.f32 0.0, %v1417
  %1419 = vmatprep.mubr.f32.mxu0 0.0
  %1420 = vmatmul.mubr.f32.gmra.mrb[0].mxu0 %v934
  %v1421 = vpop.f32.mrb[0].mxu0
  %v1422 = vadd.f32 0.0, %v1421
  %v1423 = vpop.f32.mrb[0].mxu0
  %v1424 = vadd.f32 0.0, %v1423
  %1425 = vmatprep.mubr.f32.mxu0 0.0
  %1426 = vmatmul.mubr.f32.gmra.mrb[0].mxu0 %v937
  %v1427 = vpop.f32.mrb[0].mxu0
  %v1428 = vadd.f32 0.0, %v1427
  %v1429 = vpop.f32.mrb[0].mxu0
  %v1430 = vadd.f32 0.0, %v1429
  %1431 = vmatprep.mubr.f32.mxu0 0.0
  %1432 = vmatmul.mubr.f32.gmra.mrb[0].mxu0 %v940
  %v1433 = vpop.f32.mrb[0].mxu0
  %v1434 = vadd.f32 0.0, %v1433
  %v1435 = vpop.f32.mrb[0].mxu0
  %v1436 = vadd.f32 0.0, %v1435
  %1437 = vmatprep.mubr.f32.mxu0 0.0
  %1438 = vmatmul.mubr.f32.gmra.mrb[0].mxu0 %v943
  %v1439 = vpop.f32.mrb[0].mxu0
  %v1440 = vadd.f32 0.0, %v1439
  %v1441 = vpop.f32.mrb[0].mxu0
  %v1442 = vadd.f32 0.0, %v1441
  %1443 = vmatprep.mubr.f32.mxu0 0.0
  %1444 = vmatmul.mubr.f32.gmra.mrb[0].mxu0 %v946
  %v1445 = vpop.f32.mrb[0].mxu0
  %v1446 = vadd.f32 0.0, %v1445
  %v1447 = vpop.f32.mrb[0].mxu0
  %v1448 = vadd.f32 0.0, %v1447
  %1449 = vmatprep.mubr.f32.mxu0 0.0
  %1450 = vmatmul.mubr.f32.gmra.mrb[0].mxu0 %v949
  %v1451 = vpop.f32.mrb[0].mxu0
  %v1452 = vadd.f32 0.0, %v1451
  %v1453 = vpop.f32.mrb[0].mxu0
  %v1454 = vadd.f32 0.0, %v1453
  %1455 = vmatprep.mubr.f32.mxu0 0.0
  %1456 = vmatmul.mubr.f32.gmra.mrb[0].mxu0 %v952
  %v1457 = vpop.f32.mrb[0].mxu0
  %v1458 = vadd.f32 0.0, %v1457
  %v1459 = vpop.f32.mrb[0].mxu0
  %v1460 = vadd.f32 0.0, %v1459
  %1461 = vmatprep.mubr.f32.mxu0 0.0
  %1462 = vmatmul.mubr.f32.gmra.mrb[0].mxu0 %v955
  %v1463 = vpop.f32.mrb[0].mxu0
  %v1464 = vadd.f32 0.0, %v1463
  %v1465 = vpop.f32.mrb[0].mxu0
  %v1466 = vadd.f32 0.0, %v1465
  %1467 = vmatprep.mubr.f32.mxu0 0.0
  %1468 = vmatmul.mubr.f32.gmra.mrb[0].mxu0 %v958
  %v1469 = vpop.f32.mrb[0].mxu0
  %v1470 = vadd.f32 0.0, %v1469
  %v1471 = vpop.f32.mrb[0].mxu0
  %v1472 = vadd.f32 0.0, %v1471
  %1473 = vdwg.mxu0
  %1474 = vmatprep.subr.mxu0 %v791
  %1475 = vmatpush1.msra.mxu0 %v790
  %1476 = vmatprep.subr.mxu0 %v798
  %1477 = vmatpush1.msra.mxu0 %v797
  %1478 = vmatprep.subr.mxu0 %v805
  %1479 = vmatpush1.msra.mxu0 %v804
  %1480 = vmatprep.subr.mxu0 %v812
  %1481 = vmatpush1.msra.mxu0 %v811
  %1482 = vmatprep.subr.mxu0 %v819
  %1483 = vmatpush1.msra.mxu0 %v818
  %1484 = vmatprep.subr.mxu0 %v826
  %1485 = vmatpush1.msra.mxu0 %v825
  %1486 = vmatprep.subr.mxu0 %v833
  %1487 = vmatpush1.msra.mxu0 %v832
  %1488 = vmatprep.subr.mxu0 %v840
  %1489 = vmatpush1.msra.mxu0 %v839
  %1490 = vmatprep.subr.mxu0 %v847
  %1491 = vmatpush1.msra.mxu0 %v846
  %1492 = vmatprep.subr.mxu0 %v854
  %1493 = vmatpush1.msra.mxu0 %v853
  %1494 = vmatprep.subr.mxu0 %v861
  %1495 = vmatpush1.msra.mxu0 %v860
  %1496 = vmatprep.subr.mxu0 0.0
  %1497 = vmatpush1.msra.mxu0 0.0
  %1498 = vmatprep.subr.mxu0 0.0
  %1499 = vmatpush1.msra.mxu0 0.0
  %1500 = vmatprep.subr.mxu0 0.0
  %1501 = vmatpush1.msra.mxu0 0.0
  %1502 = vmatprep.subr.mxu0 0.0
  %1503 = vmatpush1.msra.mxu0 0.0
  %1504 = vmatprep.subr.mxu0 0.0
  %1505 = vmatpush1.msra.mxu0 0.0
  %1506 = vmatprep.subr.mxu0 0.0
  %1507 = vmatpush1.msra.mxu0 0.0
  %1508 = vmatprep.subr.mxu0 0.0
  %1509 = vmatpush1.msra.mxu0 0.0
  %1510 = vmatprep.subr.mxu0 0.0
  %1511 = vmatpush1.msra.mxu0 0.0
  %1512 = vmatprep.subr.mxu0 0.0
  %1513 = vmatpush1.msra.mxu0 0.0
  %1514 = vmatprep.subr.mxu0 0.0
  %1515 = vmatpush1.msra.mxu0 0.0
  %1516 = vmatprep.subr.mxu0 0.0
  %1517 = vmatpush1.msra.mxu0 0.0
  %1518 = vmatprep.subr.mxu0 0.0
  %1519 = vmatpush1.msra.mxu0 0.0
  %1520 = vmatprep.subr.mxu0 0.0
  %1521 = vmatpush1.msra.mxu0 0.0
  %1522 = vmatprep.subr.mxu0 0.0
  %1523 = vmatpush1.msra.mxu0 0.0
  %1524 = vmatprep.subr.mxu0 0.0
  %1525 = vmatpush1.msra.mxu0 0.0
  %1526 = vmatprep.subr.mxu0 0.0
  %1527 = vmatpush1.msra.mxu0 0.0
  %1528 = vmatprep.subr.mxu0 0.0
  %1529 = vmatpush1.msra.mxu0 0.0
  %1530 = vmatprep.subr.mxu0 0.0
  %1531 = vmatpush1.msra.mxu0 0.0
  %1532 = vmatprep.subr.mxu0 0.0
  %1533 = vmatpush1.msra.mxu0 0.0
  %1534 = vmatprep.subr.mxu0 0.0
  %1535 = vmatpush1.msra.mxu0 0.0
  %1536 = vmatprep.subr.mxu0 0.0
  %1537 = vmatpush1.msra.mxu0 0.0
  %1538 = vmatprep.mubr.f32.mxu0 0.0
  %1539 = vmatmul.mubr.f32.gmra.mrb[0].mxu0 %v865
  %v1540 = vpop.f32.mrb[0].mxu0
  %v1541 = vadd.f32 0.0, %v1540
  %v1542 = vpop.f32.mrb[0].mxu0
  %v1543 = vadd.f32 0.0, %v1542
  %1544 = vmatprep.mubr.f32.mxu0 0.0
  %1545 = vmatmul.mubr.f32.gmra.mrb[0].mxu0 %v868
  %v1546 = vpop.f32.mrb[0].mxu0
  %v1547 = vadd.f32 0.0, %v1546
  %v1548 = vpop.f32.mrb[0].mxu0
  %v1549 = vadd.f32 0.0, %v1548
  %1550 = vmatprep.mubr.f32.mxu0 0.0
  %1551 = vmatmul.mubr.f32.gmra.mrb[0].mxu0 %v871
  %v1552 = vpop.f32.mrb[0].mxu0
  %v1553 = vadd.f32 0.0, %v1552
  %v1554 = vpop.f32.mrb[0].mxu0
  %v1555 = vadd.f32 0.0, %v1554
  %1556 = vmatprep.mubr.f32.mxu0 0.0
  %1557 = vmatmul.mubr.f32.gmra.mrb[0].mxu0 %v874
  %v1558 = vpop.f32.mrb[0].mxu0
  %v1559 = vadd.f32 0.0, %v1558
  %v1560 = vpop.f32.mrb[0].mxu0
  %v1561 = vadd.f32 0.0, %v1560
  %1562 = vmatprep.mubr.f32.mxu0 0.0
  %1563 = vmatmul.mubr.f32.gmra.mrb[0].mxu0 %v877
  %v1564 = vpop.f32.mrb[0].mxu0
  %v1565 = vadd.f32 0.0, %v1564
  %v1566 = vpop.f32.mrb[0].mxu0
  %v1567 = vadd.f32 0.0, %v1566
  %1568 = vmatprep.mubr.f32.mxu0 0.0
  %1569 = vmatmul.mubr.f32.gmra.mrb[0].mxu0 %v880
  %v1570 = vpop.f32.mrb[0].mxu0
  %v1571 = vadd.f32 0.0, %v1570
  %v1572 = vpop.f32.mrb[0].mxu0
  %v1573 = vadd.f32 0.0, %v1572
  %1574 = vmatprep.mubr.f32.mxu0 0.0
  %1575 = vmatmul.mubr.f32.gmra.mrb[0].mxu0 %v883
  %v1576 = vpop.f32.mrb[0].mxu0
  %v1577 = vadd.f32 0.0, %v1576
  %v1578 = vpop.f32.mrb[0].mxu0
  %v1579 = vadd.f32 0.0, %v1578
  %1580 = vmatprep.mubr.f32.mxu0 0.0
  %1581 = vmatmul.mubr.f32.gmra.mrb[0].mxu0 %v886
  %v1582 = vpop.f32.mrb[0].mxu0
  %v1583 = vadd.f32 0.0, %v1582
  %v1584 = vpop.f32.mrb[0].mxu0
  %v1585 = vadd.f32 0.0, %v1584
  %1586 = vmatprep.mubr.f32.mxu0 0.0
  %1587 = vmatmul.mubr.f32.gmra.mrb[0].mxu0 %v889
  %v1588 = vpop.f32.mrb[0].mxu0
  %v1589 = vadd.f32 0.0, %v1588
  %v1590 = vpop.f32.mrb[0].mxu0
  %v1591 = vadd.f32 0.0, %v1590
  %1592 = vmatprep.mubr.f32.mxu0 0.0
  %1593 = vmatmul.mubr.f32.gmra.mrb[0].mxu0 %v892
  %v1594 = vpop.f32.mrb[0].mxu0
  %v1595 = vadd.f32 0.0, %v1594
  %v1596 = vpop.f32.mrb[0].mxu0
  %v1597 = vadd.f32 0.0, %v1596
  %1598 = vmatprep.mubr.f32.mxu0 0.0
  %1599 = vmatmul.mubr.f32.gmra.mrb[0].mxu0 %v895
  %v1600 = vpop.f32.mrb[0].mxu0
  %v1601 = vadd.f32 0.0, %v1600
  %v1602 = vpop.f32.mrb[0].mxu0
  %v1603 = vadd.f32 0.0, %v1602
  %1604 = vmatprep.mubr.f32.mxu0 0.0
  %1605 = vmatmul.mubr.f32.gmra.mrb[0].mxu0 %v898
  %v1606 = vpop.f32.mrb[0].mxu0
  %v1607 = vadd.f32 0.0, %v1606
  %v1608 = vpop.f32.mrb[0].mxu0
  %v1609 = vadd.f32 0.0, %v1608
  %1610 = vmatprep.mubr.f32.mxu0 0.0
  %1611 = vmatmul.mubr.f32.gmra.mrb[0].mxu0 %v901
  %v1612 = vpop.f32.mrb[0].mxu0
  %v1613 = vadd.f32 0.0, %v1612
  %v1614 = vpop.f32.mrb[0].mxu0
  %v1615 = vadd.f32 0.0, %v1614
  %1616 = vmatprep.mubr.f32.mxu0 0.0
  %1617 = vmatmul.mubr.f32.gmra.mrb[0].mxu0 %v904
  %v1618 = vpop.f32.mrb[0].mxu0
  %v1619 = vadd.f32 0.0, %v1618
  %v1620 = vpop.f32.mrb[0].mxu0
  %v1621 = vadd.f32 0.0, %v1620
  %1622 = vmatprep.mubr.f32.mxu0 0.0
  %1623 = vmatmul.mubr.f32.gmra.mrb[0].mxu0 %v907
  %v1624 = vpop.f32.mrb[0].mxu0
  %v1625 = vadd.f32 0.0, %v1624
  %v1626 = vpop.f32.mrb[0].mxu0
  %v1627 = vadd.f32 0.0, %v1626
  %1628 = vmatprep.mubr.f32.mxu0 0.0
  %1629 = vmatmul.mubr.f32.gmra.mrb[0].mxu0 %v910
  %v1630 = vpop.f32.mrb[0].mxu0
  %v1631 = vadd.f32 0.0, %v1630
  %v1632 = vpop.f32.mrb[0].mxu0
  %v1633 = vadd.f32 0.0, %v1632
  %1634 = vmatprep.mubr.f32.mxu0 0.0
  %1635 = vmatmul.mubr.f32.gmra.mrb[0].mxu0 %v913
  %v1636 = vpop.f32.mrb[0].mxu0
  %v1637 = vadd.f32 0.0, %v1636
  %v1638 = vpop.f32.mrb[0].mxu0
  %v1639 = vadd.f32 0.0, %v1638
  %1640 = vmatprep.mubr.f32.mxu0 0.0
  %1641 = vmatmul.mubr.f32.gmra.mrb[0].mxu0 %v916
  %v1642 = vpop.f32.mrb[0].mxu0
  %v1643 = vadd.f32 0.0, %v1642
  %v1644 = vpop.f32.mrb[0].mxu0
  %v1645 = vadd.f32 0.0, %v1644
  %1646 = vmatprep.mubr.f32.mxu0 0.0
  %1647 = vmatmul.mubr.f32.gmra.mrb[0].mxu0 %v919
  %v1648 = vpop.f32.mrb[0].mxu0
  %v1649 = vadd.f32 0.0, %v1648
  %v1650 = vpop.f32.mrb[0].mxu0
  %v1651 = vadd.f32 0.0, %v1650
  %1652 = vmatprep.mubr.f32.mxu0 0.0
  %1653 = vmatmul.mubr.f32.gmra.mrb[0].mxu0 %v922
  %v1654 = vpop.f32.mrb[0].mxu0
  %v1655 = vadd.f32 0.0, %v1654
  %v1656 = vpop.f32.mrb[0].mxu0
  %v1657 = vadd.f32 0.0, %v1656
  %1658 = vmatprep.mubr.f32.mxu0 0.0
  %1659 = vmatmul.mubr.f32.gmra.mrb[0].mxu0 %v925
  %v1660 = vpop.f32.mrb[0].mxu0
  %v1661 = vadd.f32 0.0, %v1660
  %v1662 = vpop.f32.mrb[0].mxu0
  %v1663 = vadd.f32 0.0, %v1662
  %1664 = vmatprep.mubr.f32.mxu0 0.0
  %1665 = vmatmul.mubr.f32.gmra.mrb[0].mxu0 %v928
  %v1666 = vpop.f32.mrb[0].mxu0
  %v1667 = vadd.f32 0.0, %v1666
  %v1668 = vpop.f32.mrb[0].mxu0
  %v1669 = vadd.f32 0.0, %v1668
  %1670 = vmatprep.mubr.f32.mxu0 0.0
  %1671 = vmatmul.mubr.f32.gmra.mrb[0].mxu0 %v931
  %v1672 = vpop.f32.mrb[0].mxu0
  %v1673 = vadd.f32 0.0, %v1672
  %v1674 = vpop.f32.mrb[0].mxu0
  %v1675 = vadd.f32 0.0, %v1674
  %1676 = vmatprep.mubr.f32.mxu0 0.0
  %1677 = vmatmul.mubr.f32.gmra.mrb[0].mxu0 %v934
  %v1678 = vpop.f32.mrb[0].mxu0
  %v1679 = vadd.f32 0.0, %v1678
  %v1680 = vpop.f32.mrb[0].mxu0
  %v1681 = vadd.f32 0.0, %v1680
  %1682 = vmatprep.mubr.f32.mxu0 0.0
  %1683 = vmatmul.mubr.f32.gmra.mrb[0].mxu0 %v937
  %v1684 = vpop.f32.mrb[0].mxu0
  %v1685 = vadd.f32 0.0, %v1684
  %v1686 = vpop.f32.mrb[0].mxu0
  %v1687 = vadd.f32 0.0, %v1686
  %1688 = vmatprep.mubr.f32.mxu0 0.0
  %1689 = vmatmul.mubr.f32.gmra.mrb[0].mxu0 %v940
  %v1690 = vpop.f32.mrb[0].mxu0
  %v1691 = vadd.f32 0.0, %v1690
  %v1692 = vpop.f32.mrb[0].mxu0
  %v1693 = vadd.f32 0.0, %v1692
  %1694 = vmatprep.mubr.f32.mxu0 0.0
  %1695 = vmatmul.mubr.f32.gmra.mrb[0].mxu0 %v943
  %v1696 = vpop.f32.mrb[0].mxu0
  %v1697 = vadd.f32 0.0, %v1696
  %v1698 = vpop.f32.mrb[0].mxu0
  %v1699 = vadd.f32 0.0, %v1698
  %1700 = vmatprep.mubr.f32.mxu0 0.0
  %1701 = vmatmul.mubr.f32.gmra.mrb[0].mxu0 %v946
  %v1702 = vpop.f32.mrb[0].mxu0
  %v1703 = vadd.f32 0.0, %v1702
  %v1704 = vpop.f32.mrb[0].mxu0
  %v1705 = vadd.f32 0.0, %v1704
  %1706 = vmatprep.mubr.f32.mxu0 0.0
  %1707 = vmatmul.mubr.f32.gmra.mrb[0].mxu0 %v949
  %v1708 = vpop.f32.mrb[0].mxu0
  %v1709 = vadd.f32 0.0, %v1708
  %v1710 = vpop.f32.mrb[0].mxu0
  %v1711 = vadd.f32 0.0, %v1710
  %1712 = vmatprep.mubr.f32.mxu0 0.0
  %1713 = vmatmul.mubr.f32.gmra.mrb[0].mxu0 %v952
  %v1714 = vpop.f32.mrb[0].mxu0
  %v1715 = vadd.f32 0.0, %v1714
  %v1716 = vpop.f32.mrb[0].mxu0
  %v1717 = vadd.f32 0.0, %v1716
  %1718 = vmatprep.mubr.f32.mxu0 0.0
  %1719 = vmatmul.mubr.f32.gmra.mrb[0].mxu0 %v955
  %v1720 = vpop.f32.mrb[0].mxu0
  %v1721 = vadd.f32 0.0, %v1720
  %v1722 = vpop.f32.mrb[0].mxu0
  %v1723 = vadd.f32 0.0, %v1722
  %1724 = vmatprep.mubr.f32.mxu0 0.0
  %1725 = vmatmul.mubr.f32.gmra.mrb[0].mxu0 %v958
  %v1726 = vpop.f32.mrb[0].mxu0
  %v1727 = vadd.f32 0.0, %v1726
  %v1728 = vpop.f32.mrb[0].mxu0
  %v1729 = vadd.f32 0.0, %v1728
  %1730 = vdwg.mxu0
  %1731 = vmatprep.subr.mxu0 0.0
  %1732 = vmatpush1.msra.mxu0 %v792
  %1733 = vmatprep.subr.mxu0 0.0
  %1734 = vmatpush1.msra.mxu0 %v799
  %1735 = vmatprep.subr.mxu0 0.0
  %1736 = vmatpush1.msra.mxu0 %v806
  %1737 = vmatprep.subr.mxu0 0.0
  %1738 = vmatpush1.msra.mxu0 %v813
  %1739 = vmatprep.subr.mxu0 0.0
  %1740 = vmatpush1.msra.mxu0 %v820
  %1741 = vmatprep.subr.mxu0 0.0
  %1742 = vmatpush1.msra.mxu0 %v827
  %1743 = vmatprep.subr.mxu0 0.0
  %1744 = vmatpush1.msra.mxu0 %v834
  %1745 = vmatprep.subr.mxu0 0.0
  %1746 = vmatpush1.msra.mxu0 %v841
  %1747 = vmatprep.subr.mxu0 0.0
  %1748 = vmatpush1.msra.mxu0 %v848
  %1749 = vmatprep.subr.mxu0 0.0
  %1750 = vmatpush1.msra.mxu0 %v855
  %1751 = vmatprep.subr.mxu0 0.0
  %1752 = vmatpush1.msra.mxu0 %v862
  %1753 = vmatprep.subr.mxu0 0.0
  %1754 = vmatpush1.msra.mxu0 0.0
  %1755 = vmatprep.subr.mxu0 0.0
  %1756 = vmatpush1.msra.mxu0 0.0
  %1757 = vmatprep.subr.mxu0 0.0
  %1758 = vmatpush1.msra.mxu0 0.0
  %1759 = vmatprep.subr.mxu0 0.0
  %1760 = vmatpush1.msra.mxu0 0.0
  %1761 = vmatprep.subr.mxu0 0.0
  %1762 = vmatpush1.msra.mxu0 0.0
  %1763 = vmatprep.subr.mxu0 0.0
  %1764 = vmatpush1.msra.mxu0 0.0
  %1765 = vmatprep.subr.mxu0 0.0
  %1766 = vmatpush1.msra.mxu0 0.0
  %1767 = vmatprep.subr.mxu0 0.0
  %1768 = vmatpush1.msra.mxu0 0.0
  %1769 = vmatprep.subr.mxu0 0.0
  %1770 = vmatpush1.msra.mxu0 0.0
  %1771 = vmatprep.subr.mxu0 0.0
  %1772 = vmatpush1.msra.mxu0 0.0
  %1773 = vmatprep.subr.mxu0 0.0
  %1774 = vmatpush1.msra.mxu0 0.0
  %1775 = vmatprep.subr.mxu0 0.0
  %1776 = vmatpush1.msra.mxu0 0.0
  %1777 = vmatprep.subr.mxu0 0.0
  %1778 = vmatpush1.msra.mxu0 0.0
  %1779 = vmatprep.subr.mxu0 0.0
  %1780 = vmatpush1.msra.mxu0 0.0
  %1781 = vmatprep.subr.mxu0 0.0
  %1782 = vmatpush1.msra.mxu0 0.0
  %1783 = vmatprep.subr.mxu0 0.0
  %1784 = vmatpush1.msra.mxu0 0.0
  %1785 = vmatprep.subr.mxu0 0.0
  %1786 = vmatpush1.msra.mxu0 0.0
  %1787 = vmatprep.subr.mxu0 0.0
  %1788 = vmatpush1.msra.mxu0 0.0
  %1789 = vmatprep.subr.mxu0 0.0
  %1790 = vmatpush1.msra.mxu0 0.0
  %1791 = vmatprep.subr.mxu0 0.0
  %1792 = vmatpush1.msra.mxu0 0.0
  %1793 = vmatprep.subr.mxu0 0.0
  %1794 = vmatpush1.msra.mxu0 0.0
  %1795 = vmatprep.mubr.f32.mxu0 0.0
  %1796 = vmatmul.mubr.f32.gmra.mrb[0].mxu0 %v865
  %v1797 = vpop.f32.mrb[0].mxu0
  %v1798 = vadd.f32 0.0, %v1797
  %v1799 = vpop.f32.mrb[0].mxu0
  %1800 = vmatprep.mubr.f32.mxu0 0.0
  %1801 = vmatmul.mubr.f32.gmra.mrb[0].mxu0 %v868
  %v1802 = vpop.f32.mrb[0].mxu0
  %v1803 = vadd.f32 0.0, %v1802
  %v1804 = vpop.f32.mrb[0].mxu0
  %1805 = vmatprep.mubr.f32.mxu0 0.0
  %1806 = vmatmul.mubr.f32.gmra.mrb[0].mxu0 %v871
  %v1807 = vpop.f32.mrb[0].mxu0
  %v1808 = vadd.f32 0.0, %v1807
  %v1809 = vpop.f32.mrb[0].mxu0
  %1810 = vmatprep.mubr.f32.mxu0 0.0
  %1811 = vmatmul.mubr.f32.gmra.mrb[0].mxu0 %v874
  %v1812 = vpop.f32.mrb[0].mxu0
  %v1813 = vadd.f32 0.0, %v1812
  %v1814 = vpop.f32.mrb[0].mxu0
  %1815 = vmatprep.mubr.f32.mxu0 0.0
  %1816 = vmatmul.mubr.f32.gmra.mrb[0].mxu0 %v877
  %v1817 = vpop.f32.mrb[0].mxu0
  %v1818 = vadd.f32 0.0, %v1817
  %v1819 = vpop.f32.mrb[0].mxu0
  %1820 = vmatprep.mubr.f32.mxu0 0.0
  %1821 = vmatmul.mubr.f32.gmra.mrb[0].mxu0 %v880
  %v1822 = vpop.f32.mrb[0].mxu0
  %v1823 = vadd.f32 0.0, %v1822
  %v1824 = vpop.f32.mrb[0].mxu0
  %1825 = vmatprep.mubr.f32.mxu0 0.0
  %1826 = vmatmul.mubr.f32.gmra.mrb[0].mxu0 %v883
  %v1827 = vpop.f32.mrb[0].mxu0
  %v1828 = vadd.f32 0.0, %v1827
  %v1829 = vpop.f32.mrb[0].mxu0
  %1830 = vmatprep.mubr.f32.mxu0 0.0
  %1831 = vmatmul.mubr.f32.gmra.mrb[0].mxu0 %v886
  %v1832 = vpop.f32.mrb[0].mxu0
  %v1833 = vadd.f32 0.0, %v1832
  %v1834 = vpop.f32.mrb[0].mxu0
  %1835 = vmatprep.mubr.f32.mxu0 0.0
  %1836 = vmatmul.mubr.f32.gmra.mrb[0].mxu0 %v889
  %v1837 = vpop.f32.mrb[0].mxu0
  %v1838 = vadd.f32 0.0, %v1837
  %v1839 = vpop.f32.mrb[0].mxu0
  %1840 = vmatprep.mubr.f32.mxu0 0.0
  %1841 = vmatmul.mubr.f32.gmra.mrb[0].mxu0 %v892
  %v1842 = vpop.f32.mrb[0].mxu0
  %v1843 = vadd.f32 0.0, %v1842
  %v1844 = vpop.f32.mrb[0].mxu0
  %1845 = vmatprep.mubr.f32.mxu0 0.0
  %1846 = vmatmul.mubr.f32.gmra.mrb[0].mxu0 %v895
  %v1847 = vpop.f32.mrb[0].mxu0
  %v1848 = vadd.f32 0.0, %v1847
  %v1849 = vpop.f32.mrb[0].mxu0
  %1850 = vmatprep.mubr.f32.mxu0 0.0
  %1851 = vmatmul.mubr.f32.gmra.mrb[0].mxu0 %v898
  %v1852 = vpop.f32.mrb[0].mxu0
  %v1853 = vadd.f32 0.0, %v1852
  %v1854 = vpop.f32.mrb[0].mxu0
  %1855 = vmatprep.mubr.f32.mxu0 0.0
  %1856 = vmatmul.mubr.f32.gmra.mrb[0].mxu0 %v901
  %v1857 = vpop.f32.mrb[0].mxu0
  %v1858 = vadd.f32 0.0, %v1857
  %v1859 = vpop.f32.mrb[0].mxu0
  %1860 = vmatprep.mubr.f32.mxu0 0.0
  %1861 = vmatmul.mubr.f32.gmra.mrb[0].mxu0 %v904
  %v1862 = vpop.f32.mrb[0].mxu0
  %v1863 = vadd.f32 0.0, %v1862
  %v1864 = vpop.f32.mrb[0].mxu0
  %1865 = vmatprep.mubr.f32.mxu0 0.0
  %1866 = vmatmul.mubr.f32.gmra.mrb[0].mxu0 %v907
  %v1867 = vpop.f32.mrb[0].mxu0
  %v1868 = vadd.f32 0.0, %v1867
  %v1869 = vpop.f32.mrb[0].mxu0
  %1870 = vmatprep.mubr.f32.mxu0 0.0
  %1871 = vmatmul.mubr.f32.gmra.mrb[0].mxu0 %v910
  %v1872 = vpop.f32.mrb[0].mxu0
  %v1873 = vadd.f32 0.0, %v1872
  %v1874 = vpop.f32.mrb[0].mxu0
  %1875 = vmatprep.mubr.f32.mxu0 0.0
  %1876 = vmatmul.mubr.f32.gmra.mrb[0].mxu0 %v913
  %v1877 = vpop.f32.mrb[0].mxu0
  %v1878 = vadd.f32 0.0, %v1877
  %v1879 = vpop.f32.mrb[0].mxu0
  %1880 = vmatprep.mubr.f32.mxu0 0.0
  %1881 = vmatmul.mubr.f32.gmra.mrb[0].mxu0 %v916
  %v1882 = vpop.f32.mrb[0].mxu0
  %v1883 = vadd.f32 0.0, %v1882
  %v1884 = vpop.f32.mrb[0].mxu0
  %1885 = vmatprep.mubr.f32.mxu0 0.0
  %1886 = vmatmul.mubr.f32.gmra.mrb[0].mxu0 %v919
  %v1887 = vpop.f32.mrb[0].mxu0
  %v1888 = vadd.f32 0.0, %v1887
  %v1889 = vpop.f32.mrb[0].mxu0
  %1890 = vmatprep.mubr.f32.mxu0 0.0
  %1891 = vmatmul.mubr.f32.gmra.mrb[0].mxu0 %v922
  %v1892 = vpop.f32.mrb[0].mxu0
  %v1893 = vadd.f32 0.0, %v1892
  %v1894 = vpop.f32.mrb[0].mxu0
  %1895 = vmatprep.mubr.f32.mxu0 0.0
  %1896 = vmatmul.mubr.f32.gmra.mrb[0].mxu0 %v925
  %v1897 = vpop.f32.mrb[0].mxu0
  %v1898 = vadd.f32 0.0, %v1897
  %v1899 = vpop.f32.mrb[0].mxu0
  %1900 = vmatprep.mubr.f32.mxu0 0.0
  %1901 = vmatmul.mubr.f32.gmra.mrb[0].mxu0 %v928
  %v1902 = vpop.f32.mrb[0].mxu0
  %v1903 = vadd.f32 0.0, %v1902
  %v1904 = vpop.f32.mrb[0].mxu0
  %1905 = vmatprep.mubr.f32.mxu0 0.0
  %1906 = vmatmul.mubr.f32.gmra.mrb[0].mxu0 %v931
  %v1907 = vpop.f32.mrb[0].mxu0
  %v1908 = vadd.f32 0.0, %v1907
  %v1909 = vpop.f32.mrb[0].mxu0
  %1910 = vmatprep.mubr.f32.mxu0 0.0
  %1911 = vmatmul.mubr.f32.gmra.mrb[0].mxu0 %v934
  %v1912 = vpop.f32.mrb[0].mxu0
  %v1913 = vadd.f32 0.0, %v1912
  %v1914 = vpop.f32.mrb[0].mxu0
  %1915 = vmatprep.mubr.f32.mxu0 0.0
  %1916 = vmatmul.mubr.f32.gmra.mrb[0].mxu0 %v937
  %v1917 = vpop.f32.mrb[0].mxu0
  %v1918 = vadd.f32 0.0, %v1917
  %v1919 = vpop.f32.mrb[0].mxu0
  %1920 = vmatprep.mubr.f32.mxu0 0.0
  %1921 = vmatmul.mubr.f32.gmra.mrb[0].mxu0 %v940
  %v1922 = vpop.f32.mrb[0].mxu0
  %v1923 = vadd.f32 0.0, %v1922
  %v1924 = vpop.f32.mrb[0].mxu0
  %1925 = vmatprep.mubr.f32.mxu0 0.0
  %1926 = vmatmul.mubr.f32.gmra.mrb[0].mxu0 %v943
  %v1927 = vpop.f32.mrb[0].mxu0
  %v1928 = vadd.f32 0.0, %v1927
  %v1929 = vpop.f32.mrb[0].mxu0
  %1930 = vmatprep.mubr.f32.mxu0 0.0
  %1931 = vmatmul.mubr.f32.gmra.mrb[0].mxu0 %v946
  %v1932 = vpop.f32.mrb[0].mxu0
  %v1933 = vadd.f32 0.0, %v1932
  %v1934 = vpop.f32.mrb[0].mxu0
  %1935 = vmatprep.mubr.f32.mxu0 0.0
  %1936 = vmatmul.mubr.f32.gmra.mrb[0].mxu0 %v949
  %v1937 = vpop.f32.mrb[0].mxu0
  %v1938 = vadd.f32 0.0, %v1937
  %v1939 = vpop.f32.mrb[0].mxu0
  %1940 = vmatprep.mubr.f32.mxu0 0.0
  %1941 = vmatmul.mubr.f32.gmra.mrb[0].mxu0 %v952
  %v1942 = vpop.f32.mrb[0].mxu0
  %v1943 = vadd.f32 0.0, %v1942
  %v1944 = vpop.f32.mrb[0].mxu0
  %1945 = vmatprep.mubr.f32.mxu0 0.0
  %1946 = vmatmul.mubr.f32.gmra.mrb[0].mxu0 %v955
  %v1947 = vpop.f32.mrb[0].mxu0
  %v1948 = vadd.f32 0.0, %v1947
  %v1949 = vpop.f32.mrb[0].mxu0
  %1950 = vmatprep.mubr.f32.mxu0 0.0
  %1951 = vmatmul.mubr.f32.gmra.mrb[0].mxu0 %v958
  %v1952 = vpop.f32.mrb[0].mxu0
  %v1953 = vadd.f32 0.0, %v1952
  %v1954 = vpop.f32.mrb[0].mxu0
  %1955 = vdwg.mxu0
  %1956 = vst [vmem:[#allocation2] sm:$0xff] %v1027
  %1957 = vst [vmem:[#allocation2 + $0x8] sm:$0xff] %v1029
  %1958 = vst [vmem:[#allocation2 + $0x10] sm:$0xff] %v1284
  %1959 = vst [vmem:[#allocation2 + $0x18] sm:$0xff] %v1286
  %1960 = vst [vmem:[#allocation2 + $0x20] sm:$0xff] %v1541
  %1961 = vst [vmem:[#allocation2 + $0x28] sm:$0xff] %v1543
  %vm1962 = vcmask 261120
  %1963 = vst.msk [vmem:[#allocation2 + $0x30] sm:$0xff] %vm1962, %v1798
  %1964 = vst [vmem:[#allocation2 + $0x38] sm:$0xff] %v1033
  %1965 = vst [vmem:[#allocation2 + $0x40] sm:$0xff] %v1035
  %1966 = vst [vmem:[#allocation2 + $0x48] sm:$0xff] %v1290
  %1967 = vst [vmem:[#allocation2 + $0x50] sm:$0xff] %v1292
  %1968 = vst [vmem:[#allocation2 + $0x58] sm:$0xff] %v1547
  %1969 = vst [vmem:[#allocation2 + $0x60] sm:$0xff] %v1549
  %1970 = vst.msk [vmem:[#allocation2 + $0x68] sm:$0xff] %vm1962, %v1803
  %1971 = vst [vmem:[#allocation2 + $0x70] sm:$0xff] %v1039
  %1972 = vst [vmem:[#allocation2 + $0x78] sm:$0xff] %v1041
  %1973 = vst [vmem:[#allocation2 + $0x80] sm:$0xff] %v1296
  %1974 = vst [vmem:[#allocation2 + $0x88] sm:$0xff] %v1298
  %1975 = vst [vmem:[#allocation2 + $0x90] sm:$0xff] %v1553
  %1976 = vst [vmem:[#allocation2 + $0x98] sm:$0xff] %v1555
  %1977 = vst.msk [vmem:[#allocation2 + $0xa0] sm:$0xff] %vm1962, %v1808
  %1978 = vst [vmem:[#allocation2 + $0xa8] sm:$0xff] %v1045
  %1979 = vst [vmem:[#allocation2 + $0xb0] sm:$0xff] %v1047
  %1980 = vst [vmem:[#allocation2 + $0xb8] sm:$0xff] %v1302
  %1981 = vst [vmem:[#allocation2 + $0xc0] sm:$0xff] %v1304
  %1982 = vst [vmem:[#allocation2 + $0xc8] sm:$0xff] %v1559
  %1983 = vst [vmem:[#allocation2 + $0xd0] sm:$0xff] %v1561
  %1984 = vst.msk [vmem:[#allocation2 + $0xd8] sm:$0xff] %vm1962, %v1813
  %1985 = vst [vmem:[#allocation2 + $0xe0] sm:$0xff] %v1051
  %1986 = vst [vmem:[#allocation2 + $0xe8] sm:$0xff] %v1053
  %1987 = vst [vmem:[#allocation2 + $0xf0] sm:$0xff] %v1308
  %1988 = vst [vmem:[#allocation2 + $0xf8] sm:$0xff] %v1310
  %1989 = vst [vmem:[#allocation2 + $0x100] sm:$0xff] %v1565
  %1990 = vst [vmem:[#allocation2 + $0x108] sm:$0xff] %v1567
  %1991 = vst.msk [vmem:[#allocation2 + $0x110] sm:$0xff] %vm1962, %v1818
  %1992 = vst [vmem:[#allocation2 + $0x118] sm:$0xff] %v1057
  %1993 = vst [vmem:[#allocation2 + $0x120] sm:$0xff] %v1059
  %1994 = vst [vmem:[#allocation2 + $0x128] sm:$0xff] %v1314
  %1995 = vst [vmem:[#allocation2 + $0x130] sm:$0xff] %v1316
  %1996 = vst [vmem:[#allocation2 + $0x138] sm:$0xff] %v1571
  %1997 = vst [vmem:[#allocation2 + $0x140] sm:$0xff] %v1573
  %1998 = vst.msk [vmem:[#allocation2 + $0x148] sm:$0xff] %vm1962, %v1823
  %1999 = vst [vmem:[#allocation2 + $0x150] sm:$0xff] %v1063
  %2000 = vst [vmem:[#allocation2 + $0x158] sm:$0xff] %v1065
  %2001 = vst [vmem:[#allocation2 + $0x160] sm:$0xff] %v1320
  %2002 = vst [vmem:[#allocation2 + $0x168] sm:$0xff] %v1322
  %2003 = vst [vmem:[#allocation2 + $0x170] sm:$0xff] %v1577
  %2004 = vst [vmem:[#allocation2 + $0x178] sm:$0xff] %v1579
  %2005 = vst.msk [vmem:[#allocation2 + $0x180] sm:$0xff] %vm1962, %v1828
  %2006 = vst [vmem:[#allocation2 + $0x188] sm:$0xff] %v1069
  %2007 = vst [vmem:[#allocation2 + $0x190] sm:$0xff] %v1071
  %2008 = vst [vmem:[#allocation2 + $0x198] sm:$0xff] %v1326
  %2009 = vst [vmem:[#allocation2 + $0x1a0] sm:$0xff] %v1328
  %2010 = vst [vmem:[#allocation2 + $0x1a8] sm:$0xff] %v1583
  %2011 = vst [vmem:[#allocation2 + $0x1b0] sm:$0xff] %v1585
  %2012 = vst.msk [vmem:[#allocation2 + $0x1b8] sm:$0xff] %vm1962, %v1833
  %2013 = vst [vmem:[#allocation2 + $0x1c0] sm:$0xff] %v1075
  %2014 = vst [vmem:[#allocation2 + $0x1c8] sm:$0xff] %v1077
  %2015 = vst [vmem:[#allocation2 + $0x1d0] sm:$0xff] %v1332
  %2016 = vst [vmem:[#allocation2 + $0x1d8] sm:$0xff] %v1334
  %2017 = vst [vmem:[#allocation2 + $0x1e0] sm:$0xff] %v1589
  %2018 = vst [vmem:[#allocation2 + $0x1e8] sm:$0xff] %v1591
  %2019 = vst.msk [vmem:[#allocation2 + $0x1f0] sm:$0xff] %vm1962, %v1838
  %2020 = vst [vmem:[#allocation2 + $0x1f8] sm:$0xff] %v1081
  %2021 = vst [vmem:[#allocation2 + $0x200] sm:$0xff] %v1083
  %2022 = vst [vmem:[#allocation2 + $0x208] sm:$0xff] %v1338
  %2023 = vst [vmem:[#allocation2 + $0x210] sm:$0xff] %v1340
  %2024 = vst [vmem:[#allocation2 + $0x218] sm:$0xff] %v1595
  %2025 = vst [vmem:[#allocation2 + $0x220] sm:$0xff] %v1597
  %2026 = vst.msk [vmem:[#allocation2 + $0x228] sm:$0xff] %vm1962, %v1843
  %2027 = vst [vmem:[#allocation2 + $0x230] sm:$0xff] %v1087
  %2028 = vst [vmem:[#allocation2 + $0x238] sm:$0xff] %v1089
  %2029 = vst [vmem:[#allocation2 + $0x240] sm:$0xff] %v1344
  %2030 = vst [vmem:[#allocation2 + $0x248] sm:$0xff] %v1346
  %2031 = vst [vmem:[#allocation2 + $0x250] sm:$0xff] %v1601
  %2032 = vst [vmem:[#allocation2 + $0x258] sm:$0xff] %v1603
  %2033 = vst.msk [vmem:[#allocation2 + $0x260] sm:$0xff] %vm1962, %v1848
  %2034 = vst [vmem:[#allocation2 + $0x268] sm:$0xff] %v1093
  %2035 = vst [vmem:[#allocation2 + $0x270] sm:$0xff] %v1095
  %2036 = vst [vmem:[#allocation2 + $0x278] sm:$0xff] %v1350
  %2037 = vst [vmem:[#allocation2 + $0x280] sm:$0xff] %v1352
  %2038 = vst [vmem:[#allocation2 + $0x288] sm:$0xff] %v1607
  %2039 = vst [vmem:[#allocation2 + $0x290] sm:$0xff] %v1609
  %2040 = vst.msk [vmem:[#allocation2 + $0x298] sm:$0xff] %vm1962, %v1853
  %2041 = vst [vmem:[#allocation2 + $0x2a0] sm:$0xff] %v1099
  %2042 = vst [vmem:[#allocation2 + $0x2a8] sm:$0xff] %v1101
  %2043 = vst [vmem:[#allocation2 + $0x2b0] sm:$0xff] %v1356
  %2044 = vst [vmem:[#allocation2 + $0x2b8] sm:$0xff] %v1358
  %2045 = vst [vmem:[#allocation2 + $0x2c0] sm:$0xff] %v1613
  %2046 = vst [vmem:[#allocation2 + $0x2c8] sm:$0xff] %v1615
  %2047 = vst.msk [vmem:[#allocation2 + $0x2d0] sm:$0xff] %vm1962, %v1858
  %2048 = vst [vmem:[#allocation2 + $0x2d8] sm:$0xff] %v1105
  %2049 = vst [vmem:[#allocation2 + $0x2e0] sm:$0xff] %v1107
  %2050 = vst [vmem:[#allocation2 + $0x2e8] sm:$0xff] %v1362
  %2051 = vst [vmem:[#allocation2 + $0x2f0] sm:$0xff] %v1364
  %2052 = vst [vmem:[#allocation2 + $0x2f8] sm:$0xff] %v1619
  %2053 = vst [vmem:[#allocation2 + $0x300] sm:$0xff] %v1621
  %2054 = vst.msk [vmem:[#allocation2 + $0x308] sm:$0xff] %vm1962, %v1863
  %2055 = vst [vmem:[#allocation2 + $0x310] sm:$0xff] %v1111
  %2056 = vst [vmem:[#allocation2 + $0x318] sm:$0xff] %v1113
  %2057 = vst [vmem:[#allocation2 + $0x320] sm:$0xff] %v1368
  %2058 = vst [vmem:[#allocation2 + $0x328] sm:$0xff] %v1370
  %2059 = vst [vmem:[#allocation2 + $0x330] sm:$0xff] %v1625
  %2060 = vst [vmem:[#allocation2 + $0x338] sm:$0xff] %v1627
  %2061 = vst.msk [vmem:[#allocation2 + $0x340] sm:$0xff] %vm1962, %v1868
  %2062 = vst [vmem:[#allocation2 + $0x348] sm:$0xff] %v1117
  %2063 = vst [vmem:[#allocation2 + $0x350] sm:$0xff] %v1119
  %2064 = vst [vmem:[#allocation2 + $0x358] sm:$0xff] %v1374
  %2065 = vst [vmem:[#allocation2 + $0x360] sm:$0xff] %v1376
  %2066 = vst [vmem:[#allocation2 + $0x368] sm:$0xff] %v1631
  %2067 = vst [vmem:[#allocation2 + $0x370] sm:$0xff] %v1633
  %2068 = vst.msk [vmem:[#allocation2 + $0x378] sm:$0xff] %vm1962, %v1873
  %2069 = vst [vmem:[#allocation2 + $0x380] sm:$0xff] %v1123
  %2070 = vst [vmem:[#allocation2 + $0x388] sm:$0xff] %v1125
  %2071 = vst [vmem:[#allocation2 + $0x390] sm:$0xff] %v1380
  %2072 = vst [vmem:[#allocation2 + $0x398] sm:$0xff] %v1382
  %2073 = vst [vmem:[#allocation2 + $0x3a0] sm:$0xff] %v1637
  %2074 = vst [vmem:[#allocation2 + $0x3a8] sm:$0xff] %v1639
  %2075 = vst.msk [vmem:[#allocation2 + $0x3b0] sm:$0xff] %vm1962, %v1878
  %2076 = vst [vmem:[#allocation2 + $0x3b8] sm:$0xff] %v1129
  %2077 = vst [vmem:[#allocation2 + $0x3c0] sm:$0xff] %v1131
  %2078 = vst [vmem:[#allocation2 + $0x3c8] sm:$0xff] %v1386
  %2079 = vst [vmem:[#allocation2 + $0x3d0] sm:$0xff] %v1388
  %2080 = vst [vmem:[#allocation2 + $0x3d8] sm:$0xff] %v1643
  %2081 = vst [vmem:[#allocation2 + $0x3e0] sm:$0xff] %v1645
  %2082 = vst.msk [vmem:[#allocation2 + $0x3e8] sm:$0xff] %vm1962, %v1883
  %2083 = vst [vmem:[#allocation2 + $0x3f0] sm:$0xff] %v1135
  %2084 = vst [vmem:[#allocation2 + $0x3f8] sm:$0xff] %v1137
  %2085 = vst [vmem:[#allocation2 + $0x400] sm:$0xff] %v1392
  %2086 = vst [vmem:[#allocation2 + $0x408] sm:$0xff] %v1394
  %2087 = vst [vmem:[#allocation2 + $0x410] sm:$0xff] %v1649
  %2088 = vst [vmem:[#allocation2 + $0x418] sm:$0xff] %v1651
  %2089 = vst.msk [vmem:[#allocation2 + $0x420] sm:$0xff] %vm1962, %v1888
  %2090 = vst [vmem:[#allocation2 + $0x428] sm:$0xff] %v1141
  %2091 = vst [vmem:[#allocation2 + $0x430] sm:$0xff] %v1143
  %2092 = vst [vmem:[#allocation2 + $0x438] sm:$0xff] %v1398
  %2093 = vst [vmem:[#allocation2 + $0x440] sm:$0xff] %v1400
  %2094 = vst [vmem:[#allocation2 + $0x448] sm:$0xff] %v1655
  %2095 = vst [vmem:[#allocation2 + $0x450] sm:$0xff] %v1657
  %2096 = vst.msk [vmem:[#allocation2 + $0x458] sm:$0xff] %vm1962, %v1893
  %2097 = vst [vmem:[#allocation2 + $0x460] sm:$0xff] %v1147
  %2098 = vst [vmem:[#allocation2 + $0x468] sm:$0xff] %v1149
  %2099 = vst [vmem:[#allocation2 + $0x470] sm:$0xff] %v1404
  %2100 = vst [vmem:[#allocation2 + $0x478] sm:$0xff] %v1406
  %2101 = vst [vmem:[#allocation2 + $0x480] sm:$0xff] %v1661
  %2102 = vst [vmem:[#allocation2 + $0x488] sm:$0xff] %v1663
  %2103 = vst.msk [vmem:[#allocation2 + $0x490] sm:$0xff] %vm1962, %v1898
  %2104 = vst [vmem:[#allocation2 + $0x498] sm:$0xff] %v1153
  %2105 = vst [vmem:[#allocation2 + $0x4a0] sm:$0xff] %v1155
  %2106 = vst [vmem:[#allocation2 + $0x4a8] sm:$0xff] %v1410
  %2107 = vst [vmem:[#allocation2 + $0x4b0] sm:$0xff] %v1412
  %2108 = vst [vmem:[#allocation2 + $0x4b8] sm:$0xff] %v1667
  %2109 = vst [vmem:[#allocation2 + $0x4c0] sm:$0xff] %v1669
  %2110 = vst.msk [vmem:[#allocation2 + $0x4c8] sm:$0xff] %vm1962, %v1903
  %2111 = vst [vmem:[#allocation2 + $0x4d0] sm:$0xff] %v1159
  %2112 = vst [vmem:[#allocation2 + $0x4d8] sm:$0xff] %v1161
  %2113 = vst [vmem:[#allocation2 + $0x4e0] sm:$0xff] %v1416
  %2114 = vst [vmem:[#allocation2 + $0x4e8] sm:$0xff] %v1418
  %2115 = vst [vmem:[#allocation2 + $0x4f0] sm:$0xff] %v1673
  %2116 = vst [vmem:[#allocation2 + $0x4f8] sm:$0xff] %v1675
  %2117 = vst.msk [vmem:[#allocation2 + $0x500] sm:$0xff] %vm1962, %v1908
  %2118 = vst [vmem:[#allocation2 + $0x508] sm:$0xff] %v1165
  %2119 = vst [vmem:[#allocation2 + $0x510] sm:$0xff] %v1167
  %2120 = vst [vmem:[#allocation2 + $0x518] sm:$0xff] %v1422
  %2121 = vst [vmem:[#allocation2 + $0x520] sm:$0xff] %v1424
  %2122 = vst [vmem:[#allocation2 + $0x528] sm:$0xff] %v1679
  %2123 = vst [vmem:[#allocation2 + $0x530] sm:$0xff] %v1681
  %2124 = vst.msk [vmem:[#allocation2 + $0x538] sm:$0xff] %vm1962, %v1913
  %2125 = vst [vmem:[#allocation2 + $0x540] sm:$0xff] %v1171
  %2126 = vst [vmem:[#allocation2 + $0x548] sm:$0xff] %v1173
  %2127 = vst [vmem:[#allocation2 + $0x550] sm:$0xff] %v1428
  %2128 = vst [vmem:[#allocation2 + $0x558] sm:$0xff] %v1430
  %2129 = vst [vmem:[#allocation2 + $0x560] sm:$0xff] %v1685
  %2130 = vst [vmem:[#allocation2 + $0x568] sm:$0xff] %v1687
  %2131 = vst.msk [vmem:[#allocation2 + $0x570] sm:$0xff] %vm1962, %v1918
  %2132 = vst [vmem:[#allocation2 + $0x578] sm:$0xff] %v1177
  %2133 = vst [vmem:[#allocation2 + $0x580] sm:$0xff] %v1179
  %2134 = vst [vmem:[#allocation2 + $0x588] sm:$0xff] %v1434
  %2135 = vst [vmem:[#allocation2 + $0x590] sm:$0xff] %v1436
  %2136 = vst [vmem:[#allocation2 + $0x598] sm:$0xff] %v1691
  %2137 = vst [vmem:[#allocation2 + $0x5a0] sm:$0xff] %v1693
  %2138 = vst.msk [vmem:[#allocation2 + $0x5a8] sm:$0xff] %vm1962, %v1923
  %2139 = vst [vmem:[#allocation2 + $0x5b0] sm:$0xff] %v1183
  %2140 = vst [vmem:[#allocation2 + $0x5b8] sm:$0xff] %v1185
  %2141 = vst [vmem:[#allocation2 + $0x5c0] sm:$0xff] %v1440
  %2142 = vst [vmem:[#allocation2 + $0x5c8] sm:$0xff] %v1442
  %2143 = vst [vmem:[#allocation2 + $0x5d0] sm:$0xff] %v1697
  %2144 = vst [vmem:[#allocation2 + $0x5d8] sm:$0xff] %v1699
  %2145 = vst.msk [vmem:[#allocation2 + $0x5e0] sm:$0xff] %vm1962, %v1928
  %2146 = vst [vmem:[#allocation2 + $0x5e8] sm:$0xff] %v1189
  %2147 = vst [vmem:[#allocation2 + $0x5f0] sm:$0xff] %v1191
  %2148 = vst [vmem:[#allocation2 + $0x5f8] sm:$0xff] %v1446
  %2149 = vst [vmem:[#allocation2 + $0x600] sm:$0xff] %v1448
  %2150 = vst [vmem:[#allocation2 + $0x608] sm:$0xff] %v1703
  %2151 = vst [vmem:[#allocation2 + $0x610] sm:$0xff] %v1705
  %2152 = vst.msk [vmem:[#allocation2 + $0x618] sm:$0xff] %vm1962, %v1933
  %2153 = vst [vmem:[#allocation2 + $0x620] sm:$0xff] %v1195
  %2154 = vst [vmem:[#allocation2 + $0x628] sm:$0xff] %v1197
  %2155 = vst [vmem:[#allocation2 + $0x630] sm:$0xff] %v1452
  %2156 = vst [vmem:[#allocation2 + $0x638] sm:$0xff] %v1454
  %2157 = vst [vmem:[#allocation2 + $0x640] sm:$0xff] %v1709
  %2158 = vst [vmem:[#allocation2 + $0x648] sm:$0xff] %v1711
  %2159 = vst.msk [vmem:[#allocation2 + $0x650] sm:$0xff] %vm1962, %v1938
  %2160 = vst [vmem:[#allocation2 + $0x658] sm:$0xff] %v1201
  %2161 = vst [vmem:[#allocation2 + $0x660] sm:$0xff] %v1203
  %2162 = vst [vmem:[#allocation2 + $0x668] sm:$0xff] %v1458
  %2163 = vst [vmem:[#allocation2 + $0x670] sm:$0xff] %v1460
  %2164 = vst [vmem:[#allocation2 + $0x678] sm:$0xff] %v1715
  %2165 = vst [vmem:[#allocation2 + $0x680] sm:$0xff] %v1717
  %2166 = vst.msk [vmem:[#allocation2 + $0x688] sm:$0xff] %vm1962, %v1943
  %2167 = vst [vmem:[#allocation2 + $0x690] sm:$0xff] %v1207
  %2168 = vst [vmem:[#allocation2 + $0x698] sm:$0xff] %v1209
  %2169 = vst [vmem:[#allocation2 + $0x6a0] sm:$0xff] %v1464
  %2170 = vst [vmem:[#allocation2 + $0x6a8] sm:$0xff] %v1466
  %2171 = vst [vmem:[#allocation2 + $0x6b0] sm:$0xff] %v1721
  %2172 = vst [vmem:[#allocation2 + $0x6b8] sm:$0xff] %v1723
  %2173 = vst.msk [vmem:[#allocation2 + $0x6c0] sm:$0xff] %vm1962, %v1948
  %2174 = vst [vmem:[#allocation2 + $0x6c8] sm:$0xff] %v1213
  %2175 = vst [vmem:[#allocation2 + $0x6d0] sm:$0xff] %v1215
  %2176 = vst [vmem:[#allocation2 + $0x6d8] sm:$0xff] %v1470
  %2177 = vst [vmem:[#allocation2 + $0x6e0] sm:$0xff] %v1472
  %2178 = vst [vmem:[#allocation2 + $0x6e8] sm:$0xff] %v1727
  %2179 = vst [vmem:[#allocation2 + $0x6f0] sm:$0xff] %v1729
  %2180 = vst.msk [vmem:[#allocation2 + $0x6f8] sm:$0xff] %vm1962, %v1953
  %v2181 = vld [vmem:[%s6] sm:$0x1]
  %s2182 = scalar_lea.vmem [#allocation2], 112
  %v2183 = vld [vmem:[%s2182 + $0x8] sm:$0xfe]
  %v2184 = vld [vmem:[%s2182 + $0x40] sm:$0x3f]
  %v2185 = vld [vmem:[%s2182 + $0x78] sm:$0xfe]
  %v2186 = vld [vmem:[%s2182 + $0xb0] sm:$0x3f]
  %v2187 = vld [vmem:[%s2182 + $0xe8] sm:$0xfe]
  %v2188 = vld [vmem:[%s2182 + $0x120] sm:$0x3f]
  %v2189 = vld [vmem:[%s2182 + $0x158] sm:$0xfe]
  %v2190 = vld [vmem:[%s2182 + $0x190] sm:$0x3f]
  %v2191 = vld [vmem:[%s2182 + $0x1c8] sm:$0xfe]
  %v2192 = vld [vmem:[%s2182 + $0x200] sm:$0x3f]
  %v2193 = vld [vmem:[%s2182 + $0x238] sm:$0xfe]
  %v2194 = vld [vmem:[%s2182 + $0x270] sm:$0x3f]
  %v2195 = vld [vmem:[%s2182 + $0x2a8] sm:$0xfe]
  %v2196 = vld [vmem:[%s2182 + $0x2e0] sm:$0x3f]
  %v2197 = vld [vmem:[%s2182 + $0x318] sm:$0xfe]
  %v2198 = vld [vmem:[%s2182 + $0x350] sm:$0x3f]
  %v2199 = vld [vmem:[%s2182 + $0x388] sm:$0xfe]
  %v2200 = vld [vmem:[%s2182 + $0x3c0] sm:$0x3f]
  %v2201 = vld [vmem:[%s2182 + $0x3f8] sm:$0xfe]
  %v2202 = vld [vmem:[%s2182 + $0x430] sm:$0x3f]
  %v2203 = vld [vmem:[%s2182 + $0x468] sm:$0xfe]
  %v2204 = vld [vmem:[%s2182 + $0x4a0] sm:$0x3f]
  %v2205 = vld [vmem:[%s2182 + $0x4d8] sm:$0xfe]
  %v2206 = vld [vmem:[%s2182 + $0x510] sm:$0x3f]
  %v2207 = vld [vmem:[%s2182 + $0x548] sm:$0xfe]
  %v2208 = vld [vmem:[%s2182 + $0x580] sm:$0x3f]
  %v2209 = vld [vmem:[%s2182 + $0x10] sm:$0xff]
  %v2210 = vld [vmem:[%s2182 + $0x48] sm:$0x1f]
  %v2211 = vld [vmem:[%s2182 + $0x80] sm:$0xff]
  %v2212 = vld [vmem:[%s2182 + $0xb8] sm:$0x1f]
  %v2213 = vld [vmem:[%s2182 + $0xf0] sm:$0xff]
  %v2214 = vld [vmem:[%s2182 + $0x128] sm:$0x1f]
  %v2215 = vld [vmem:[%s2182 + $0x160] sm:$0xff]
  %v2216 = vld [vmem:[%s2182 + $0x198] sm:$0x1f]
  %v2217 = vld [vmem:[%s2182 + $0x1d0] sm:$0xff]
  %v2218 = vld [vmem:[%s2182 + $0x208] sm:$0x1f]
  %v2219 = vld [vmem:[%s2182 + $0x240] sm:$0xff]
  %v2220 = vld [vmem:[%s2182 + $0x278] sm:$0x1f]
  %v2221 = vld [vmem:[%s2182 + $0x2b0] sm:$0xff]
  %v2222 = vld [vmem:[%s2182 + $0x2e8] sm:$0x1f]
  %v2223 = vld [vmem:[%s2182 + $0x320] sm:$0xff]
  %v2224 = vld [vmem:[%s2182 + $0x358] sm:$0x1f]
  %v2225 = vld [vmem:[%s2182 + $0x390] sm:$0xff]
  %v2226 = vld [vmem:[%s2182 + $0x3c8] sm:$0x1f]
  %v2227 = vld [vmem:[%s2182 + $0x400] sm:$0xff]
  %v2228 = vld [vmem:[%s2182 + $0x438] sm:$0x1f]
  %v2229 = vld [vmem:[%s2182 + $0x470] sm:$0xff]
  %v2230 = vld [vmem:[%s2182 + $0x4a8] sm:$0x1f]
  %v2231 = vld [vmem:[%s2182 + $0x4e0] sm:$0xff]
  %v2232 = vld [vmem:[%s2182 + $0x518] sm:$0x1f]
  %v2233 = vld [vmem:[%s2182 + $0x550] sm:$0xff]
  %v2234 = vld [vmem:[%s2182 + $0x588] sm:$0x1f]
  %vm2261 = vcmask 1040384
  %v2262 = vrot.slane %v2209, 7
  %v2263 = vrot.slane %v2210, 7
  %v2264 = vsel %vm2261, %v2262, %v2263
  %v2265 = vrot.slane %v2211, 7
  %v2266 = vrot.slane %v2212, 7
  %v2267 = vsel %vm2261, %v2265, %v2266
  %v2268 = vrot.slane %v2213, 7
  %v2269 = vrot.slane %v2214, 7
  %v2270 = vsel %vm2261, %v2268, %v2269
  %v2271 = vrot.slane %v2215, 7
  %v2272 = vrot.slane %v2216, 7
  %v2273 = vsel %vm2261, %v2271, %v2272
  %v2274 = vrot.slane %v2217, 7
  %v2275 = vrot.slane %v2218, 7
  %v2276 = vsel %vm2261, %v2274, %v2275
  %v2277 = vrot.slane %v2219, 7
  %v2278 = vrot.slane %v2220, 7
  %v2279 = vsel %vm2261, %v2277, %v2278
  %v2280 = vrot.slane %v2221, 7
  %v2281 = vrot.slane %v2222, 7
  %v2282 = vsel %vm2261, %v2280, %v2281
  %v2283 = vrot.slane %v2223, 7
  %v2284 = vrot.slane %v2224, 7
  %v2285 = vsel %vm2261, %v2283, %v2284
  %v2286 = vrot.slane %v2225, 7
  %v2287 = vrot.slane %v2226, 7
  %v2288 = vsel %vm2261, %v2286, %v2287
  %v2289 = vrot.slane %v2227, 7
  %v2290 = vrot.slane %v2228, 7
  %v2291 = vsel %vm2261, %v2289, %v2290
  %v2292 = vrot.slane %v2229, 7
  %v2293 = vrot.slane %v2230, 7
  %v2294 = vsel %vm2261, %v2292, %v2293
  %v2295 = vrot.slane %v2231, 7
  %v2296 = vrot.slane %v2232, 7
  %v2297 = vsel %vm2261, %v2295, %v2296
  %v2298 = vrot.slane %v2233, 7
  %v2299 = vrot.slane %v2234, 7
  %v2300 = vsel %vm2261, %v2298, %v2299
  %2301 = vrot.lane.b32.xlu0 %v2262, 64
  %v2302 = vpop.permute.xlu0 %2301
  %2303 = vrot.lane.b32.xlu0 %v2264, 64
  %v2304 = vpop.permute.xlu0 %2303
  %2305 = vrot.lane.b32.xlu0 %v2265, 64
  %v2306 = vpop.permute.xlu0 %2305
  %2307 = vrot.lane.b32.xlu0 %v2267, 64
  %v2308 = vpop.permute.xlu0 %2307
  %2309 = vrot.lane.b32.xlu0 %v2268, 64
  %v2310 = vpop.permute.xlu0 %2309
  %2311 = vrot.lane.b32.xlu0 %v2270, 64
  %v2312 = vpop.permute.xlu0 %2311
  %2313 = vrot.lane.b32.xlu0 %v2271, 64
  %v2314 = vpop.permute.xlu0 %2313
  %2315 = vrot.lane.b32.xlu0 %v2273, 64
  %v2316 = vpop.permute.xlu0 %2315
  %2317 = vrot.lane.b32.xlu0 %v2274, 64
  %v2318 = vpop.permute.xlu0 %2317
  %2319 = vrot.lane.b32.xlu0 %v2276, 64
  %v2320 = vpop.permute.xlu0 %2319
  %2321 = vrot.lane.b32.xlu0 %v2277, 64
  %v2322 = vpop.permute.xlu0 %2321
  %2323 = vrot.lane.b32.xlu0 %v2279, 64
  %v2324 = vpop.permute.xlu0 %2323
  %2325 = vrot.lane.b32.xlu0 %v2280, 64
  %v2326 = vpop.permute.xlu0 %2325
  %2327 = vrot.lane.b32.xlu0 %v2282, 64
  %v2328 = vpop.permute.xlu0 %2327
  %2329 = vrot.lane.b32.xlu0 %v2283, 64
  %v2330 = vpop.permute.xlu0 %2329
  %2331 = vrot.lane.b32.xlu0 %v2285, 64
  %v2332 = vpop.permute.xlu0 %2331
  %2333 = vrot.lane.b32.xlu0 %v2286, 64
  %v2334 = vpop.permute.xlu0 %2333
  %2335 = vrot.lane.b32.xlu0 %v2288, 64
  %v2336 = vpop.permute.xlu0 %2335
  %2337 = vrot.lane.b32.xlu0 %v2289, 64
  %v2338 = vpop.permute.xlu0 %2337
  %2339 = vrot.lane.b32.xlu0 %v2291, 64
  %v2340 = vpop.permute.xlu0 %2339
  %2341 = vrot.lane.b32.xlu0 %v2292, 64
  %v2342 = vpop.permute.xlu0 %2341
  %2343 = vrot.lane.b32.xlu0 %v2294, 64
  %v2344 = vpop.permute.xlu0 %2343
  %2345 = vrot.lane.b32.xlu0 %v2295, 64
  %v2346 = vpop.permute.xlu0 %2345
  %2347 = vrot.lane.b32.xlu0 %v2297, 64
  %v2348 = vpop.permute.xlu0 %2347
  %2349 = vrot.lane.b32.xlu0 %v2298, 64
  %v2350 = vpop.permute.xlu0 %2349
  %2351 = vrot.lane.b32.xlu0 %v2300, 64
  %v2352 = vpop.permute.xlu0 %2351
  %v2379 = vadd.f32 %v2183, %v2302
  %v2380 = vadd.f32 %v2184, %v2304
  %v2381 = vadd.f32 %v2185, %v2306
  %v2382 = vadd.f32 %v2186, %v2308
  %v2383 = vadd.f32 %v2187, %v2310
  %v2384 = vadd.f32 %v2188, %v2312
  %v2385 = vadd.f32 %v2189, %v2314
  %v2386 = vadd.f32 %v2190, %v2316
  %v2387 = vadd.f32 %v2191, %v2318
  %v2388 = vadd.f32 %v2192, %v2320
  %v2389 = vadd.f32 %v2193, %v2322
  %v2390 = vadd.f32 %v2194, %v2324
  %v2391 = vadd.f32 %v2195, %v2326
  %v2392 = vadd.f32 %v2196, %v2328
  %v2393 = vadd.f32 %v2197, %v2330
  %v2394 = vadd.f32 %v2198, %v2332
  %v2395 = vadd.f32 %v2199, %v2334
  %v2396 = vadd.f32 %v2200, %v2336
  %v2397 = vadd.f32 %v2201, %v2338
  %v2398 = vadd.f32 %v2202, %v2340
  %v2399 = vadd.f32 %v2203, %v2342
  %v2400 = vadd.f32 %v2204, %v2344
  %v2401 = vadd.f32 %v2205, %v2346
  %v2402 = vadd.f32 %v2206, %v2348
  %v2403 = vadd.f32 %v2207, %v2350
  %v2404 = vadd.f32 %v2208, %v2352
  %v2405 = vld [vmem:[#allocation2 + $0x20] sm:$0xfe]
  %v2406 = vld [vmem:[#allocation2 + $0x58] sm:$0x3f]
  %v2407 = vld [vmem:[#allocation2 + $0x90] sm:$0xfe]
  %v2408 = vld [vmem:[#allocation2 + $0xc8] sm:$0x3f]
  %v2409 = vld [vmem:[#allocation2 + $0x100] sm:$0xfe]
  %v2410 = vld [vmem:[#allocation2 + $0x138] sm:$0x3f]
  %v2411 = vld [vmem:[#allocation2 + $0x170] sm:$0xfe]
  %v2412 = vld [vmem:[#allocation2 + $0x1a8] sm:$0x3f]
  %v2413 = vld [vmem:[#allocation2 + $0x1e0] sm:$0xfe]
  %v2414 = vld [vmem:[#allocation2 + $0x218] sm:$0x3f]
  %v2415 = vld [vmem:[#allocation2 + $0x250] sm:$0xfe]
  %v2416 = vld [vmem:[#allocation2 + $0x288] sm:$0x3f]
  %v2417 = vld [vmem:[#allocation2 + $0x2c0] sm:$0xfe]
  %v2418 = vld [vmem:[#allocation2 + $0x2f8] sm:$0x3f]
  %v2419 = vld [vmem:[#allocation2 + $0x330] sm:$0xfe]
  %v2420 = vld [vmem:[#allocation2 + $0x368] sm:$0x3f]
  %v2421 = vld [vmem:[#allocation2 + $0x3a0] sm:$0xfe]
  %v2422 = vld [vmem:[#allocation2 + $0x3d8] sm:$0x3f]
  %v2423 = vld [vmem:[#allocation2 + $0x410] sm:$0xfe]
  %v2424 = vld [vmem:[#allocation2 + $0x448] sm:$0x3f]
  %v2425 = vld [vmem:[#allocation2 + $0x480] sm:$0xfe]
  %v2426 = vld [vmem:[#allocation2 + $0x4b8] sm:$0x3f]
  %v2427 = vld [vmem:[#allocation2 + $0x4f0] sm:$0xfe]
  %v2428 = vld [vmem:[#allocation2 + $0x528] sm:$0x3f]
  %v2429 = vld [vmem:[#allocation2 + $0x560] sm:$0xfe]
  %v2430 = vld [vmem:[#allocation2 + $0x598] sm:$0x3f]
  %2457 = vrot.lane.b32.xlu0 %v2405, 64
  %v2458 = vpop.permute.xlu0 %2457
  %2459 = vrot.lane.b32.xlu0 %v2406, 64
  %v2460 = vpop.permute.xlu0 %2459
  %2461 = vrot.lane.b32.xlu0 %v2407, 64
  %v2462 = vpop.permute.xlu0 %2461
  %2463 = vrot.lane.b32.xlu0 %v2408, 64
  %v2464 = vpop.permute.xlu0 %2463
  %2465 = vrot.lane.b32.xlu0 %v2409, 64
  %v2466 = vpop.permute.xlu0 %2465
  %2467 = vrot.lane.b32.xlu0 %v2410, 64
  %v2468 = vpop.permute.xlu0 %2467
  %2469 = vrot.lane.b32.xlu0 %v2411, 64
  %v2470 = vpop.permute.xlu0 %2469
  %2471 = vrot.lane.b32.xlu0 %v2412, 64
  %v2472 = vpop.permute.xlu0 %2471
  %2473 = vrot.lane.b32.xlu0 %v2413, 64
  %v2474 = vpop.permute.xlu0 %2473
  %2475 = vrot.lane.b32.xlu0 %v2414, 64
  %v2476 = vpop.permute.xlu0 %2475
  %2477 = vrot.lane.b32.xlu0 %v2415, 64
  %v2478 = vpop.permute.xlu0 %2477
  %2479 = vrot.lane.b32.xlu0 %v2416, 64
  %v2480 = vpop.permute.xlu0 %2479
  %2481 = vrot.lane.b32.xlu0 %v2417, 64
  %v2482 = vpop.permute.xlu0 %2481
  %2483 = vrot.lane.b32.xlu0 %v2418, 64
  %v2484 = vpop.permute.xlu0 %2483
  %2485 = vrot.lane.b32.xlu0 %v2419, 64
  %v2486 = vpop.permute.xlu0 %2485
  %2487 = vrot.lane.b32.xlu0 %v2420, 64
  %v2488 = vpop.permute.xlu0 %2487
  %2489 = vrot.lane.b32.xlu0 %v2421, 64
  %v2490 = vpop.permute.xlu0 %2489
  %2491 = vrot.lane.b32.xlu0 %v2422, 64
  %v2492 = vpop.permute.xlu0 %2491
  %2493 = vrot.lane.b32.xlu0 %v2423, 64
  %v2494 = vpop.permute.xlu0 %2493
  %2495 = vrot.lane.b32.xlu0 %v2424, 64
  %v2496 = vpop.permute.xlu0 %2495
  %2497 = vrot.lane.b32.xlu0 %v2425, 64
  %v2498 = vpop.permute.xlu0 %2497
  %2499 = vrot.lane.b32.xlu0 %v2426, 64
  %v2500 = vpop.permute.xlu0 %2499
  %2501 = vrot.lane.b32.xlu0 %v2427, 64
  %v2502 = vpop.permute.xlu0 %2501
  %2503 = vrot.lane.b32.xlu0 %v2428, 64
  %v2504 = vpop.permute.xlu0 %2503
  %2505 = vrot.lane.b32.xlu0 %v2429, 64
  %v2506 = vpop.permute.xlu0 %2505
  %2507 = vrot.lane.b32.xlu0 %v2430, 64
  %v2508 = vpop.permute.xlu0 %2507
  %v2535 = vadd.f32 %v2379, %v2458
  %v2536 = vadd.f32 %v2380, %v2460
  %v2537 = vadd.f32 %v2381, %v2462
  %v2538 = vadd.f32 %v2382, %v2464
  %v2539 = vadd.f32 %v2383, %v2466
  %v2540 = vadd.f32 %v2384, %v2468
  %v2541 = vadd.f32 %v2385, %v2470
  %v2542 = vadd.f32 %v2386, %v2472
  %v2543 = vadd.f32 %v2387, %v2474
  %v2544 = vadd.f32 %v2388, %v2476
  %v2545 = vadd.f32 %v2389, %v2478
  %v2546 = vadd.f32 %v2390, %v2480
  %v2547 = vadd.f32 %v2391, %v2482
  %v2548 = vadd.f32 %v2392, %v2484
  %v2549 = vadd.f32 %v2393, %v2486
  %v2550 = vadd.f32 %v2394, %v2488
  %v2551 = vadd.f32 %v2395, %v2490
  %v2552 = vadd.f32 %v2396, %v2492
  %v2553 = vadd.f32 %v2397, %v2494
  %v2554 = vadd.f32 %v2398, %v2496
  %v2555 = vadd.f32 %v2399, %v2498
  %v2556 = vadd.f32 %v2400, %v2500
  %v2557 = vadd.f32 %v2401, %v2502
  %v2558 = vadd.f32 %v2402, %v2504
  %v2559 = vadd.f32 %v2403, %v2506
  %v2560 = vadd.f32 %v2404, %v2508
  %v2561 = vld [vmem:[#allocation2 + $0x20] sm:$0xff]
  %v2562 = vld [vmem:[#allocation2 + $0x58] sm:$0x1f]
  %v2563 = vld [vmem:[#allocation2 + $0x90] sm:$0xff]
  %v2564 = vld [vmem:[#allocation2 + $0xc8] sm:$0x1f]
  %v2565 = vld [vmem:[#allocation2 + $0x100] sm:$0xff]
  %v2566 = vld [vmem:[#allocation2 + $0x138] sm:$0x1f]
  %v2567 = vld [vmem:[#allocation2 + $0x170] sm:$0xff]
  %v2568 = vld [vmem:[#allocation2 + $0x1a8] sm:$0x1f]
  %v2569 = vld [vmem:[#allocation2 + $0x1e0] sm:$0xff]
  %v2570 = vld [vmem:[#allocation2 + $0x218] sm:$0x1f]
  %v2571 = vld [vmem:[#allocation2 + $0x250] sm:$0xff]
  %v2572 = vld [vmem:[#allocation2 + $0x288] sm:$0x1f]
  %v2573 = vld [vmem:[#allocation2 + $0x2c0] sm:$0xff]
  %v2574 = vld [vmem:[#allocation2 + $0x2f8] sm:$0x1f]
  %v2575 = vld [vmem:[#allocation2 + $0x330] sm:$0xff]
  %v2576 = vld [vmem:[#allocation2 + $0x368] sm:$0x1f]
  %v2577 = vld [vmem:[#allocation2 + $0x3a0] sm:$0xff]
  %v2578 = vld [vmem:[#allocation2 + $0x3d8] sm:$0x1f]
  %v2579 = vld [vmem:[#allocation2 + $0x410] sm:$0xff]
  %v2580 = vld [vmem:[#allocation2 + $0x448] sm:$0x1f]
  %v2581 = vld [vmem:[#allocation2 + $0x480] sm:$0xff]
  %v2582 = vld [vmem:[#allocation2 + $0x4b8] sm:$0x1f]
  %v2583 = vld [vmem:[#allocation2 + $0x4f0] sm:$0xff]
  %v2584 = vld [vmem:[#allocation2 + $0x528] sm:$0x1f]
  %v2585 = vld [vmem:[#allocation2 + $0x560] sm:$0xff]
  %v2586 = vld [vmem:[#allocation2 + $0x598] sm:$0x1f]
  %v2613 = vrot.slane %v2561, 7
  %v2614 = vrot.slane %v2562, 7
  %v2615 = vsel %vm2261, %v2613, %v2614
  %v2616 = vrot.slane %v2563, 7
  %v2617 = vrot.slane %v2564, 7
  %v2618 = vsel %vm2261, %v2616, %v2617
  %v2619 = vrot.slane %v2565, 7
  %v2620 = vrot.slane %v2566, 7
  %v2621 = vsel %vm2261, %v2619, %v2620
  %v2622 = vrot.slane %v2567, 7
  %v2623 = vrot.slane %v2568, 7
  %v2624 = vsel %vm2261, %v2622, %v2623
  %v2625 = vrot.slane %v2569, 7
  %v2626 = vrot.slane %v2570, 7
  %v2627 = vsel %vm2261, %v2625, %v2626
  %v2628 = vrot.slane %v2571, 7
  %v2629 = vrot.slane %v2572, 7
  %v2630 = vsel %vm2261, %v2628, %v2629
  %v2631 = vrot.slane %v2573, 7
  %v2632 = vrot.slane %v2574, 7
  %v2633 = vsel %vm2261, %v2631, %v2632
  %v2634 = vrot.slane %v2575, 7
  %v2635 = vrot.slane %v2576, 7
  %v2636 = vsel %vm2261, %v2634, %v2635
  %v2637 = vrot.slane %v2577, 7
  %v2638 = vrot.slane %v2578, 7
  %v2639 = vsel %vm2261, %v2637, %v2638
  %v2640 = vrot.slane %v2579, 7
  %v2641 = vrot.slane %v2580, 7
  %v2642 = vsel %vm2261, %v2640, %v2641
  %v2643 = vrot.slane %v2581, 7
  %v2644 = vrot.slane %v2582, 7
  %v2645 = vsel %vm2261, %v2643, %v2644
  %v2646 = vrot.slane %v2583, 7
  %v2647 = vrot.slane %v2584, 7
  %v2648 = vsel %vm2261, %v2646, %v2647
  %v2649 = vrot.slane %v2585, 7
  %v2650 = vrot.slane %v2586, 7
  %v2651 = vsel %vm2261, %v2649, %v2650
  %v2678 = vadd.f32 %v2535, %v2613
  %v2679 = vadd.f32 %v2536, %v2615
  %v2680 = vadd.f32 %v2537, %v2616
  %v2681 = vadd.f32 %v2538, %v2618
  %v2682 = vadd.f32 %v2539, %v2619
  %v2683 = vadd.f32 %v2540, %v2621
  %v2684 = vadd.f32 %v2541, %v2622
  %v2685 = vadd.f32 %v2542, %v2624
  %v2686 = vadd.f32 %v2543, %v2625
  %v2687 = vadd.f32 %v2544, %v2627
  %v2688 = vadd.f32 %v2545, %v2628
  %v2689 = vadd.f32 %v2546, %v2630
  %v2690 = vadd.f32 %v2547, %v2631
  %v2691 = vadd.f32 %v2548, %v2633
  %v2692 = vadd.f32 %v2549, %v2634
  %v2693 = vadd.f32 %v2550, %v2636
  %v2694 = vadd.f32 %v2551, %v2637
  %v2695 = vadd.f32 %v2552, %v2639
  %v2696 = vadd.f32 %v2553, %v2640
  %v2697 = vadd.f32 %v2554, %v2642
  %v2698 = vadd.f32 %v2555, %v2643
  %v2699 = vadd.f32 %v2556, %v2645
  %v2700 = vadd.f32 %v2557, %v2646
  %v2701 = vadd.f32 %v2558, %v2648
  %v2702 = vadd.f32 %v2559, %v2649
  %v2703 = vadd.f32 %v2560, %v2651
  %v2705 = vlaneseq
  %v2706 = vshrl.u32 %v2705, 7
  %v2707 = vsub.s32 0, %v2706
  %v2708 = vrot.slane %v2181, %v2707
  %2710 = vrot.lane.b32.xlu0 %v2708, 64
  %v2711 = vpop.permute.xlu0 %2710
  %v2713 = vadd.f32 %v2678, %v2711
  %v2714 = vadd.f32 %v2679, %v2711
  %v2715 = vadd.f32 %v2680, %v2711
  %v2716 = vadd.f32 %v2681, %v2711
  %v2717 = vadd.f32 %v2682, %v2711
  %v2718 = vadd.f32 %v2683, %v2711
  %v2719 = vadd.f32 %v2684, %v2711
  %v2720 = vadd.f32 %v2685, %v2711
  %v2721 = vadd.f32 %v2686, %v2711
  %v2722 = vadd.f32 %v2687, %v2711
  %v2723 = vadd.f32 %v2688, %v2711
  %v2724 = vadd.f32 %v2689, %v2711
  %v2725 = vadd.f32 %v2690, %v2711
  %v2726 = vadd.f32 %v2691, %v2711
  %v2727 = vadd.f32 %v2692, %v2711
  %v2728 = vadd.f32 %v2693, %v2711
  %v2729 = vadd.f32 %v2694, %v2711
  %v2730 = vadd.f32 %v2695, %v2711
  %v2731 = vadd.f32 %v2696, %v2711
  %v2732 = vadd.f32 %v2697, %v2711
  %v2733 = vadd.f32 %v2698, %v2711
  %v2734 = vadd.f32 %v2699, %v2711
  %v2735 = vadd.f32 %v2700, %v2711
  %v2736 = vadd.f32 %v2701, %v2711
  %v2737 = vadd.f32 %v2702, %v2711
  %v2738 = vadd.f32 %v2703, %v2711
  %v2739 = vmul.f32 %v2713, 0.5
  %v2740 = vmul.f32 %v2714, 0.5
  %v2741 = vmul.f32 %v2715, 0.5
  %v2742 = vmul.f32 %v2716, 0.5
  %v2743 = vmul.f32 %v2717, 0.5
  %v2744 = vmul.f32 %v2718, 0.5
  %v2745 = vmul.f32 %v2719, 0.5
  %v2746 = vmul.f32 %v2720, 0.5
  %v2747 = vmul.f32 %v2721, 0.5
  %v2748 = vmul.f32 %v2722, 0.5
  %v2749 = vmul.f32 %v2723, 0.5
  %v2750 = vmul.f32 %v2724, 0.5
  %v2751 = vmul.f32 %v2725, 0.5
  %v2752 = vmul.f32 %v2726, 0.5
  %v2753 = vmul.f32 %v2727, 0.5
  %v2754 = vmul.f32 %v2728, 0.5
  %v2755 = vmul.f32 %v2729, 0.5
  %v2756 = vmul.f32 %v2730, 0.5
  %v2757 = vmul.f32 %v2731, 0.5
  %v2758 = vmul.f32 %v2732, 0.5
  %v2759 = vmul.f32 %v2733, 0.5
  %v2760 = vmul.f32 %v2734, 0.5
  %v2761 = vmul.f32 %v2735, 0.5
  %v2762 = vmul.f32 %v2736, 0.5
  %v2763 = vmul.f32 %v2737, 0.5
  %v2764 = vmul.f32 %v2738, 0.5
  %v2765 = vmul.f32 %v2713, 0.70710677
  %v2766 = vmul.f32 %v2714, 0.70710677
  %v2767 = vmul.f32 %v2715, 0.70710677
  %v2768 = vmul.f32 %v2716, 0.70710677
  %v2769 = vmul.f32 %v2717, 0.70710677
  %v2770 = vmul.f32 %v2718, 0.70710677
  %v2771 = vmul.f32 %v2719, 0.70710677
  %v2772 = vmul.f32 %v2720, 0.70710677
  %v2773 = vmul.f32 %v2721, 0.70710677
  %v2774 = vmul.f32 %v2722, 0.70710677
  %v2775 = vmul.f32 %v2723, 0.70710677
  %v2776 = vmul.f32 %v2724, 0.70710677
  %v2777 = vmul.f32 %v2725, 0.70710677
  %v2778 = vmul.f32 %v2726, 0.70710677
  %v2779 = vmul.f32 %v2727, 0.70710677
  %v2780 = vmul.f32 %v2728, 0.70710677
  %v2781 = vmul.f32 %v2729, 0.70710677
  %v2782 = vmul.f32 %v2730, 0.70710677
  %v2783 = vmul.f32 %v2731, 0.70710677
  %v2784 = vmul.f32 %v2732, 0.70710677
  %v2785 = vmul.f32 %v2733, 0.70710677
  %v2786 = vmul.f32 %v2734, 0.70710677
  %v2787 = vmul.f32 %v2735, 0.70710677
  %v2788 = vmul.f32 %v2736, 0.70710677
  %v2789 = vmul.f32 %v2737, 0.70710677
  %v2790 = vmul.f32 %v2738, 0.70710677
  %vm2791 = vcmp.ge.f32.partialorder %v2765, 0.0
  %vm2792 = vcmp.ge.f32.partialorder %v2766, 0.0
  %vm2793 = vcmp.ge.f32.partialorder %v2767, 0.0
  %vm2794 = vcmp.ge.f32.partialorder %v2768, 0.0
  %vm2795 = vcmp.ge.f32.partialorder %v2769, 0.0
  %vm2796 = vcmp.ge.f32.partialorder %v2770, 0.0
  %vm2797 = vcmp.ge.f32.partialorder %v2771, 0.0
  %vm2798 = vcmp.ge.f32.partialorder %v2772, 0.0
  %vm2799 = vcmp.ge.f32.partialorder %v2773, 0.0
  %vm2800 = vcmp.ge.f32.partialorder %v2774, 0.0
  %vm2801 = vcmp.ge.f32.partialorder %v2775, 0.0
  %vm2802 = vcmp.ge.f32.partialorder %v2776, 0.0
  %vm2803 = vcmp.ge.f32.partialorder %v2777, 0.0
  %vm2804 = vcmp.ge.f32.partialorder %v2778, 0.0
  %vm2805 = vcmp.ge.f32.partialorder %v2779, 0.0
  %vm2806 = vcmp.ge.f32.partialorder %v2780, 0.0
  %vm2807 = vcmp.ge.f32.partialorder %v2781, 0.0
  %vm2808 = vcmp.ge.f32.partialorder %v2782, 0.0
  %vm2809 = vcmp.ge.f32.partialorder %v2783, 0.0
  %vm2810 = vcmp.ge.f32.partialorder %v2784, 0.0
  %vm2811 = vcmp.ge.f32.partialorder %v2785, 0.0
  %vm2812 = vcmp.ge.f32.partialorder %v2786, 0.0
  %vm2813 = vcmp.ge.f32.partialorder %v2787, 0.0
  %vm2814 = vcmp.ge.f32.partialorder %v2788, 0.0
  %vm2815 = vcmp.ge.f32.partialorder %v2789, 0.0
  %vm2816 = vcmp.ge.f32.partialorder %v2790, 0.0
  %v2817 = vsel %vm2791, 1.0, -1.0
  %v2818 = vsel %vm2792, 1.0, -1.0
  %v2819 = vsel %vm2793, 1.0, -1.0
  %v2820 = vsel %vm2794, 1.0, -1.0
  %v2821 = vsel %vm2795, 1.0, -1.0
  %v2822 = vsel %vm2796, 1.0, -1.0
  %v2823 = vsel %vm2797, 1.0, -1.0
  %v2824 = vsel %vm2798, 1.0, -1.0
  %v2825 = vsel %vm2799, 1.0, -1.0
  %v2826 = vsel %vm2800, 1.0, -1.0
  %v2827 = vsel %vm2801, 1.0, -1.0
  %v2828 = vsel %vm2802, 1.0, -1.0
  %v2829 = vsel %vm2803, 1.0, -1.0
  %v2830 = vsel %vm2804, 1.0, -1.0
  %v2831 = vsel %vm2805, 1.0, -1.0
  %v2832 = vsel %vm2806, 1.0, -1.0
  %v2833 = vsel %vm2807, 1.0, -1.0
  %v2834 = vsel %vm2808, 1.0, -1.0
  %v2835 = vsel %vm2809, 1.0, -1.0
  %v2836 = vsel %vm2810, 1.0, -1.0
  %v2837 = vsel %vm2811, 1.0, -1.0
  %v2838 = vsel %vm2812, 1.0, -1.0
  %v2839 = vsel %vm2813, 1.0, -1.0
  %v2840 = vsel %vm2814, 1.0, -1.0
  %v2841 = vsel %vm2815, 1.0, -1.0
  %v2842 = vsel %vm2816, 1.0, -1.0
  %v2843 = vand.u32 2147483647, %v2765
  %v2844 = vand.u32 2147483647, %v2766
  %v2845 = vand.u32 2147483647, %v2767
  %v2846 = vand.u32 2147483647, %v2768
  %v2847 = vand.u32 2147483647, %v2769
  %v2848 = vand.u32 2147483647, %v2770
  %v2849 = vand.u32 2147483647, %v2771
  %v2850 = vand.u32 2147483647, %v2772
  %v2851 = vand.u32 2147483647, %v2773
  %v2852 = vand.u32 2147483647, %v2774
  %v2853 = vand.u32 2147483647, %v2775
  %v2854 = vand.u32 2147483647, %v2776
  %v2855 = vand.u32 2147483647, %v2777
  %v2856 = vand.u32 2147483647, %v2778
  %v2857 = vand.u32 2147483647, %v2779
  %v2858 = vand.u32 2147483647, %v2780
  %v2859 = vand.u32 2147483647, %v2781
  %v2860 = vand.u32 2147483647, %v2782
  %v2861 = vand.u32 2147483647, %v2783
  %v2862 = vand.u32 2147483647, %v2784
  %v2863 = vand.u32 2147483647, %v2785
  %v2864 = vand.u32 2147483647, %v2786
  %v2865 = vand.u32 2147483647, %v2787
  %v2866 = vand.u32 2147483647, %v2788
  %v2867 = vand.u32 2147483647, %v2789
  %v2868 = vand.u32 2147483647, %v2790
  %v2869 = vmul.f32 %v2843, 0.3275911
  %v2870 = vmul.f32 %v2844, 0.3275911
  %v2871 = vmul.f32 %v2845, 0.3275911
  %v2872 = vmul.f32 %v2846, 0.3275911
  %v2873 = vmul.f32 %v2847, 0.3275911
  %v2874 = vmul.f32 %v2848, 0.3275911
  %v2875 = vmul.f32 %v2849, 0.3275911
  %v2876 = vmul.f32 %v2850, 0.3275911
  %v2877 = vmul.f32 %v2851, 0.3275911
  %v2878 = vmul.f32 %v2852, 0.3275911
  %v2879 = vmul.f32 %v2853, 0.3275911
  %v2880 = vmul.f32 %v2854, 0.3275911
  %v2881 = vmul.f32 %v2855, 0.3275911
  %v2882 = vmul.f32 %v2856, 0.3275911
  %v2883 = vmul.f32 %v2857, 0.3275911
  %v2884 = vmul.f32 %v2858, 0.3275911
  %v2885 = vmul.f32 %v2859, 0.3275911
  %v2886 = vmul.f32 %v2860, 0.3275911
  %v2887 = vmul.f32 %v2861, 0.3275911
  %v2888 = vmul.f32 %v2862, 0.3275911
  %v2889 = vmul.f32 %v2863, 0.3275911
  %v2890 = vmul.f32 %v2864, 0.3275911
  %v2891 = vmul.f32 %v2865, 0.3275911
  %v2892 = vmul.f32 %v2866, 0.3275911
  %v2893 = vmul.f32 %v2867, 0.3275911
  %v2894 = vmul.f32 %v2868, 0.3275911
  %v2895 = vadd.f32 %v2869, 1.0
  %v2896 = vadd.f32 %v2870, 1.0
  %v2897 = vadd.f32 %v2871, 1.0
  %v2898 = vadd.f32 %v2872, 1.0
  %v2899 = vadd.f32 %v2873, 1.0
  %v2900 = vadd.f32 %v2874, 1.0
  %v2901 = vadd.f32 %v2875, 1.0
  %v2902 = vadd.f32 %v2876, 1.0
  %v2903 = vadd.f32 %v2877, 1.0
  %v2904 = vadd.f32 %v2878, 1.0
  %v2905 = vadd.f32 %v2879, 1.0
  %v2906 = vadd.f32 %v2880, 1.0
  %v2907 = vadd.f32 %v2881, 1.0
  %v2908 = vadd.f32 %v2882, 1.0
  %v2909 = vadd.f32 %v2883, 1.0
  %v2910 = vadd.f32 %v2884, 1.0
  %v2911 = vadd.f32 %v2885, 1.0
  %v2912 = vadd.f32 %v2886, 1.0
  %v2913 = vadd.f32 %v2887, 1.0
  %v2914 = vadd.f32 %v2888, 1.0
  %v2915 = vadd.f32 %v2889, 1.0
  %v2916 = vadd.f32 %v2890, 1.0
  %v2917 = vadd.f32 %v2891, 1.0
  %v2918 = vadd.f32 %v2892, 1.0
  %v2919 = vadd.f32 %v2893, 1.0
  %v2920 = vadd.f32 %v2894, 1.0
  %v2921 = vrcp.pop %v2895
  %v2922 = vrcp.pop %v2896
  %v2923 = vrcp.pop %v2897
  %v2924 = vrcp.pop %v2898
  %v2925 = vrcp.pop %v2899
  %v2926 = vrcp.pop %v2900
  %v2927 = vrcp.pop %v2901
  %v2928 = vrcp.pop %v2902
  %v2929 = vrcp.pop %v2903
  %v2930 = vrcp.pop %v2904
  %v2931 = vrcp.pop %v2905
  %v2932 = vrcp.pop %v2906
  %v2933 = vrcp.pop %v2907
  %v2934 = vrcp.pop %v2908
  %v2935 = vrcp.pop %v2909
  %v2936 = vrcp.pop %v2910
  %v2937 = vrcp.pop %v2911
  %v2938 = vrcp.pop %v2912
  %v2939 = vrcp.pop %v2913
  %v2940 = vrcp.pop %v2914
  %v2941 = vrcp.pop %v2915
  %v2942 = vrcp.pop %v2916
  %v2943 = vrcp.pop %v2917
  %v2944 = vrcp.pop %v2918
  %v2945 = vrcp.pop %v2919
  %v2946 = vrcp.pop %v2920
  %v2947 = vmul.f32 %v2921, 1.0614054
  %v2948 = vmul.f32 %v2922, 1.0614054
  %v2949 = vmul.f32 %v2923, 1.0614054
  %v2950 = vmul.f32 %v2924, 1.0614054
  %v2951 = vmul.f32 %v2925, 1.0614054
  %v2952 = vmul.f32 %v2926, 1.0614054
  %v2953 = vmul.f32 %v2927, 1.0614054
  %v2954 = vmul.f32 %v2928, 1.0614054
  %v2955 = vmul.f32 %v2929, 1.0614054
  %v2956 = vmul.f32 %v2930, 1.0614054
  %v2957 = vmul.f32 %v2931, 1.0614054
  %v2958 = vmul.f32 %v2932, 1.0614054
  %v2959 = vmul.f32 %v2933, 1.0614054
  %v2960 = vmul.f32 %v2934, 1.0614054
  %v2961 = vmul.f32 %v2935, 1.0614054
  %v2962 = vmul.f32 %v2936, 1.0614054
  %v2963 = vmul.f32 %v2937, 1.0614054
  %v2964 = vmul.f32 %v2938, 1.0614054
  %v2965 = vmul.f32 %v2939, 1.0614054
  %v2966 = vmul.f32 %v2940, 1.0614054
  %v2967 = vmul.f32 %v2941, 1.0614054
  %v2968 = vmul.f32 %v2942, 1.0614054
  %v2969 = vmul.f32 %v2943, 1.0614054
  %v2970 = vmul.f32 %v2944, 1.0614054
  %v2971 = vmul.f32 %v2945, 1.0614054
  %v2972 = vmul.f32 %v2946, 1.0614054
  %v2973 = vadd.f32 %v2947, -1.4531521
  %v2974 = vadd.f32 %v2948, -1.4531521
  %v2975 = vadd.f32 %v2949, -1.4531521
  %v2976 = vadd.f32 %v2950, -1.4531521
  %v2977 = vadd.f32 %v2951, -1.4531521
  %v2978 = vadd.f32 %v2952, -1.4531521
  %v2979 = vadd.f32 %v2953, -1.4531521
  %v2980 = vadd.f32 %v2954, -1.4531521
  %v2981 = vadd.f32 %v2955, -1.4531521
  %v2982 = vadd.f32 %v2956, -1.4531521
  %v2983 = vadd.f32 %v2957, -1.4531521
  %v2984 = vadd.f32 %v2958, -1.4531521
  %v2985 = vadd.f32 %v2959, -1.4531521
  %v2986 = vadd.f32 %v2960, -1.4531521
  %v2987 = vadd.f32 %v2961, -1.4531521
  %v2988 = vadd.f32 %v2962, -1.4531521
  %v2989 = vadd.f32 %v2963, -1.4531521
  %v2990 = vadd.f32 %v2964, -1.4531521
  %v2991 = vadd.f32 %v2965, -1.4531521
  %v2992 = vadd.f32 %v2966, -1.4531521
  %v2993 = vadd.f32 %v2967, -1.4531521
  %v2994 = vadd.f32 %v2968, -1.4531521
  %v2995 = vadd.f32 %v2969, -1.4531521
  %v2996 = vadd.f32 %v2970, -1.4531521
  %v2997 = vadd.f32 %v2971, -1.4531521
  %v2998 = vadd.f32 %v2972, -1.4531521
  %v2999 = vmul.f32 %v2921, %v2973
  %v3000 = vmul.f32 %v2922, %v2974
  %v3001 = vmul.f32 %v2923, %v2975
  %v3002 = vmul.f32 %v2924, %v2976
  %v3003 = vmul.f32 %v2925, %v2977
  %v3004 = vmul.f32 %v2926, %v2978
  %v3005 = vmul.f32 %v2927, %v2979
  %v3006 = vmul.f32 %v2928, %v2980
  %v3007 = vmul.f32 %v2929, %v2981
  %v3008 = vmul.f32 %v2930, %v2982
  %v3009 = vmul.f32 %v2931, %v2983
  %v3010 = vmul.f32 %v2932, %v2984
  %v3011 = vmul.f32 %v2933, %v2985
  %v3012 = vmul.f32 %v2934, %v2986
  %v3013 = vmul.f32 %v2935, %v2987
  %v3014 = vmul.f32 %v2936, %v2988
  %v3015 = vmul.f32 %v2937, %v2989
  %v3016 = vmul.f32 %v2938, %v2990
  %v3017 = vmul.f32 %v2939, %v2991
  %v3018 = vmul.f32 %v2940, %v2992
  %v3019 = vmul.f32 %v2941, %v2993
  %v3020 = vmul.f32 %v2942, %v2994
  %v3021 = vmul.f32 %v2943, %v2995
  %v3022 = vmul.f32 %v2944, %v2996
  %v3023 = vmul.f32 %v2945, %v2997
  %v3024 = vmul.f32 %v2946, %v2998
  %v3025 = vadd.f32 %v2999, 1.4214138
  %v3026 = vadd.f32 %v3000, 1.4214138
  %v3027 = vadd.f32 %v3001, 1.4214138
  %v3028 = vadd.f32 %v3002, 1.4214138
  %v3029 = vadd.f32 %v3003, 1.4214138
  %v3030 = vadd.f32 %v3004, 1.4214138
  %v3031 = vadd.f32 %v3005, 1.4214138
  %v3032 = vadd.f32 %v3006, 1.4214138
  %v3033 = vadd.f32 %v3007, 1.4214138
  %v3034 = vadd.f32 %v3008, 1.4214138
  %v3035 = vadd.f32 %v3009, 1.4214138
  %v3036 = vadd.f32 %v3010, 1.4214138
  %v3037 = vadd.f32 %v3011, 1.4214138
  %v3038 = vadd.f32 %v3012, 1.4214138
  %v3039 = vadd.f32 %v3013, 1.4214138
  %v3040 = vadd.f32 %v3014, 1.4214138
  %v3041 = vadd.f32 %v3015, 1.4214138
  %v3042 = vadd.f32 %v3016, 1.4214138
  %v3043 = vadd.f32 %v3017, 1.4214138
  %v3044 = vadd.f32 %v3018, 1.4214138
  %v3045 = vadd.f32 %v3019, 1.4214138
  %v3046 = vadd.f32 %v3020, 1.4214138
  %v3047 = vadd.f32 %v3021, 1.4214138
  %v3048 = vadd.f32 %v3022, 1.4214138
  %v3049 = vadd.f32 %v3023, 1.4214138
  %v3050 = vadd.f32 %v3024, 1.4214138
  %v3051 = vmul.f32 %v2921, %v3025
  %v3052 = vmul.f32 %v2922, %v3026
  %v3053 = vmul.f32 %v2923, %v3027
  %v3054 = vmul.f32 %v2924, %v3028
  %v3055 = vmul.f32 %v2925, %v3029
  %v3056 = vmul.f32 %v2926, %v3030
  %v3057 = vmul.f32 %v2927, %v3031
  %v3058 = vmul.f32 %v2928, %v3032
  %v3059 = vmul.f32 %v2929, %v3033
  %v3060 = vmul.f32 %v2930, %v3034
  %v3061 = vmul.f32 %v2931, %v3035
  %v3062 = vmul.f32 %v2932, %v3036
  %v3063 = vmul.f32 %v2933, %v3037
  %v3064 = vmul.f32 %v2934, %v3038
  %v3065 = vmul.f32 %v2935, %v3039
  %v3066 = vmul.f32 %v2936, %v3040
  %v3067 = vmul.f32 %v2937, %v3041
  %v3068 = vmul.f32 %v2938, %v3042
  %v3069 = vmul.f32 %v2939, %v3043
  %v3070 = vmul.f32 %v2940, %v3044
  %v3071 = vmul.f32 %v2941, %v3045
  %v3072 = vmul.f32 %v2942, %v3046
  %v3073 = vmul.f32 %v2943, %v3047
  %v3074 = vmul.f32 %v2944, %v3048
  %v3075 = vmul.f32 %v2945, %v3049
  %v3076 = vmul.f32 %v2946, %v3050
  %v3077 = vadd.f32 %v3051, -0.28449672
  %v3078 = vadd.f32 %v3052, -0.28449672
  %v3079 = vadd.f32 %v3053, -0.28449672
  %v3080 = vadd.f32 %v3054, -0.28449672
  %v3081 = vadd.f32 %v3055, -0.28449672
  %v3082 = vadd.f32 %v3056, -0.28449672
  %v3083 = vadd.f32 %v3057, -0.28449672
  %v3084 = vadd.f32 %v3058, -0.28449672
  %v3085 = vadd.f32 %v3059, -0.28449672
  %v3086 = vadd.f32 %v3060, -0.28449672
  %v3087 = vadd.f32 %v3061, -0.28449672
  %v3088 = vadd.f32 %v3062, -0.28449672
  %v3089 = vadd.f32 %v3063, -0.28449672
  %v3090 = vadd.f32 %v3064, -0.28449672
  %v3091 = vadd.f32 %v3065, -0.28449672
  %v3092 = vadd.f32 %v3066, -0.28449672
  %v3093 = vadd.f32 %v3067, -0.28449672
  %v3094 = vadd.f32 %v3068, -0.28449672
  %v3095 = vadd.f32 %v3069, -0.28449672
  %v3096 = vadd.f32 %v3070, -0.28449672
  %v3097 = vadd.f32 %v3071, -0.28449672
  %v3098 = vadd.f32 %v3072, -0.28449672
  %v3099 = vadd.f32 %v3073, -0.28449672
  %v3100 = vadd.f32 %v3074, -0.28449672
  %v3101 = vadd.f32 %v3075, -0.28449672
  %v3102 = vadd.f32 %v3076, -0.28449672
  %v3103 = vmul.f32 %v2921, %v3077
  %v3104 = vmul.f32 %v2922, %v3078
  %v3105 = vmul.f32 %v2923, %v3079
  %v3106 = vmul.f32 %v2924, %v3080
  %v3107 = vmul.f32 %v2925, %v3081
  %v3108 = vmul.f32 %v2926, %v3082
  %v3109 = vmul.f32 %v2927, %v3083
  %v3110 = vmul.f32 %v2928, %v3084
  %v3111 = vmul.f32 %v2929, %v3085
  %v3112 = vmul.f32 %v2930, %v3086
  %v3113 = vmul.f32 %v2931, %v3087
  %v3114 = vmul.f32 %v2932, %v3088
  %v3115 = vmul.f32 %v2933, %v3089
  %v3116 = vmul.f32 %v2934, %v3090
  %v3117 = vmul.f32 %v2935, %v3091
  %v3118 = vmul.f32 %v2936, %v3092
  %v3119 = vmul.f32 %v2937, %v3093
  %v3120 = vmul.f32 %v2938, %v3094
  %v3121 = vmul.f32 %v2939, %v3095
  %v3122 = vmul.f32 %v2940, %v3096
  %v3123 = vmul.f32 %v2941, %v3097
  %v3124 = vmul.f32 %v2942, %v3098
  %v3125 = vmul.f32 %v2943, %v3099
  %v3126 = vmul.f32 %v2944, %v3100
  %v3127 = vmul.f32 %v2945, %v3101
  %v3128 = vmul.f32 %v2946, %v3102
  %v3129 = vadd.f32 %v3103, 0.2548296
  %v3130 = vadd.f32 %v3104, 0.2548296
  %v3131 = vadd.f32 %v3105, 0.2548296
  %v3132 = vadd.f32 %v3106, 0.2548296
  %v3133 = vadd.f32 %v3107, 0.2548296
  %v3134 = vadd.f32 %v3108, 0.2548296
  %v3135 = vadd.f32 %v3109, 0.2548296
  %v3136 = vadd.f32 %v3110, 0.2548296
  %v3137 = vadd.f32 %v3111, 0.2548296
  %v3138 = vadd.f32 %v3112, 0.2548296
  %v3139 = vadd.f32 %v3113, 0.2548296
  %v3140 = vadd.f32 %v3114, 0.2548296
  %v3141 = vadd.f32 %v3115, 0.2548296
  %v3142 = vadd.f32 %v3116, 0.2548296
  %v3143 = vadd.f32 %v3117, 0.2548296
  %v3144 = vadd.f32 %v3118, 0.2548296
  %v3145 = vadd.f32 %v3119, 0.2548296
  %v3146 = vadd.f32 %v3120, 0.2548296
  %v3147 = vadd.f32 %v3121, 0.2548296
  %v3148 = vadd.f32 %v3122, 0.2548296
  %v3149 = vadd.f32 %v3123, 0.2548296
  %v3150 = vadd.f32 %v3124, 0.2548296
  %v3151 = vadd.f32 %v3125, 0.2548296
  %v3152 = vadd.f32 %v3126, 0.2548296
  %v3153 = vadd.f32 %v3127, 0.2548296
  %v3154 = vadd.f32 %v3128, 0.2548296
  %v3155 = vmul.f32 %v2921, %v3129
  %v3156 = vmul.f32 %v2922, %v3130
  %v3157 = vmul.f32 %v2923, %v3131
  %v3158 = vmul.f32 %v2924, %v3132
  %v3159 = vmul.f32 %v2925, %v3133
  %v3160 = vmul.f32 %v2926, %v3134
  %v3161 = vmul.f32 %v2927, %v3135
  %v3162 = vmul.f32 %v2928, %v3136
  %v3163 = vmul.f32 %v2929, %v3137
  %v3164 = vmul.f32 %v2930, %v3138
  %v3165 = vmul.f32 %v2931, %v3139
  %v3166 = vmul.f32 %v2932, %v3140
  %v3167 = vmul.f32 %v2933, %v3141
  %v3168 = vmul.f32 %v2934, %v3142
  %v3169 = vmul.f32 %v2935, %v3143
  %v3170 = vmul.f32 %v2936, %v3144
  %v3171 = vmul.f32 %v2937, %v3145
  %v3172 = vmul.f32 %v2938, %v3146
  %v3173 = vmul.f32 %v2939, %v3147
  %v3174 = vmul.f32 %v2940, %v3148
  %v3175 = vmul.f32 %v2941, %v3149
  %v3176 = vmul.f32 %v2942, %v3150
  %v3177 = vmul.f32 %v2943, %v3151
  %v3178 = vmul.f32 %v2944, %v3152
  %v3179 = vmul.f32 %v2945, %v3153
  %v3180 = vmul.f32 %v2946, %v3154
  %v3181 = vsub.f32 0.0, %v2843
  %v3182 = vsub.f32 0.0, %v2844
  %v3183 = vsub.f32 0.0, %v2845
  %v3184 = vsub.f32 0.0, %v2846
  %v3185 = vsub.f32 0.0, %v2847
  %v3186 = vsub.f32 0.0, %v2848
  %v3187 = vsub.f32 0.0, %v2849
  %v3188 = vsub.f32 0.0, %v2850
  %v3189 = vsub.f32 0.0, %v2851
  %v3190 = vsub.f32 0.0, %v2852
  %v3191 = vsub.f32 0.0, %v2853
  %v3192 = vsub.f32 0.0, %v2854
  %v3193 = vsub.f32 0.0, %v2855
  %v3194 = vsub.f32 0.0, %v2856
  %v3195 = vsub.f32 0.0, %v2857
  %v3196 = vsub.f32 0.0, %v2858
  %v3197 = vsub.f32 0.0, %v2859
  %v3198 = vsub.f32 0.0, %v2860
  %v3199 = vsub.f32 0.0, %v2861
  %v3200 = vsub.f32 0.0, %v2862
  %v3201 = vsub.f32 0.0, %v2863
  %v3202 = vsub.f32 0.0, %v2864
  %v3203 = vsub.f32 0.0, %v2865
  %v3204 = vsub.f32 0.0, %v2866
  %v3205 = vsub.f32 0.0, %v2867
  %v3206 = vsub.f32 0.0, %v2868
  %v3207 = vmul.f32 %v3181, %v2843
  %v3208 = vmul.f32 %v3182, %v2844
  %v3209 = vmul.f32 %v3183, %v2845
  %v3210 = vmul.f32 %v3184, %v2846
  %v3211 = vmul.f32 %v3185, %v2847
  %v3212 = vmul.f32 %v3186, %v2848
  %v3213 = vmul.f32 %v3187, %v2849
  %v3214 = vmul.f32 %v3188, %v2850
  %v3215 = vmul.f32 %v3189, %v2851
  %v3216 = vmul.f32 %v3190, %v2852
  %v3217 = vmul.f32 %v3191, %v2853
  %v3218 = vmul.f32 %v3192, %v2854
  %v3219 = vmul.f32 %v3193, %v2855
  %v3220 = vmul.f32 %v3194, %v2856
  %v3221 = vmul.f32 %v3195, %v2857
  %v3222 = vmul.f32 %v3196, %v2858
  %v3223 = vmul.f32 %v3197, %v2859
  %v3224 = vmul.f32 %v3198, %v2860
  %v3225 = vmul.f32 %v3199, %v2861
  %v3226 = vmul.f32 %v3200, %v2862
  %v3227 = vmul.f32 %v3201, %v2863
  %v3228 = vmul.f32 %v3202, %v2864
  %v3229 = vmul.f32 %v3203, %v2865
  %v3230 = vmul.f32 %v3204, %v2866
  %v3231 = vmul.f32 %v3205, %v2867
  %v3232 = vmul.f32 %v3206, %v2868
  %v3233 = vmul.f32 %v3207, 1.442695
  %v3234 = vpow.pop %v3233
  %v3235 = vmul.f32 %v3208, 1.442695
  %v3236 = vpow.pop %v3235
  %v3237 = vmul.f32 %v3209, 1.442695
  %v3238 = vpow.pop %v3237
  %v3239 = vmul.f32 %v3210, 1.442695
  %v3240 = vpow.pop %v3239
  %v3241 = vmul.f32 %v3211, 1.442695
  %v3242 = vpow.pop %v3241
  %v3243 = vmul.f32 %v3212, 1.442695
  %v3244 = vpow.pop %v3243
  %v3245 = vmul.f32 %v3213, 1.442695
  %v3246 = vpow.pop %v3245
  %v3247 = vmul.f32 %v3214, 1.442695
  %v3248 = vpow.pop %v3247
  %v3249 = vmul.f32 %v3215, 1.442695
  %v3250 = vpow.pop %v3249
  %v3251 = vmul.f32 %v3216, 1.442695
  %v3252 = vpow.pop %v3251
  %v3253 = vmul.f32 %v3217, 1.442695
  %v3254 = vpow.pop %v3253
  %v3255 = vmul.f32 %v3218, 1.442695
  %v3256 = vpow.pop %v3255
  %v3257 = vmul.f32 %v3219, 1.442695
  %v3258 = vpow.pop %v3257
  %v3259 = vmul.f32 %v3220, 1.442695
  %v3260 = vpow.pop %v3259
  %v3261 = vmul.f32 %v3221, 1.442695
  %v3262 = vpow.pop %v3261
  %v3263 = vmul.f32 %v3222, 1.442695
  %v3264 = vpow.pop %v3263
  %v3265 = vmul.f32 %v3223, 1.442695
  %v3266 = vpow.pop %v3265
  %v3267 = vmul.f32 %v3224, 1.442695
  %v3268 = vpow.pop %v3267
  %v3269 = vmul.f32 %v3225, 1.442695
  %v3270 = vpow.pop %v3269
  %v3271 = vmul.f32 %v3226, 1.442695
  %v3272 = vpow.pop %v3271
  %v3273 = vmul.f32 %v3227, 1.442695
  %v3274 = vpow.pop %v3273
  %v3275 = vmul.f32 %v3228, 1.442695
  %v3276 = vpow.pop %v3275
  %v3277 = vmul.f32 %v3229, 1.442695
  %v3278 = vpow.pop %v3277
  %v3279 = vmul.f32 %v3230, 1.442695
  %v3280 = vpow.pop %v3279
  %v3281 = vmul.f32 %v3231, 1.442695
  %v3282 = vpow.pop %v3281
  %v3283 = vmul.f32 %v3232, 1.442695
  %v3284 = vpow.pop %v3283
  %v3285 = vmul.f32 %v3155, %v3234
  %v3286 = vmul.f32 %v3156, %v3236
  %v3287 = vmul.f32 %v3157, %v3238
  %v3288 = vmul.f32 %v3158, %v3240
  %v3289 = vmul.f32 %v3159, %v3242
  %v3290 = vmul.f32 %v3160, %v3244
  %v3291 = vmul.f32 %v3161, %v3246
  %v3292 = vmul.f32 %v3162, %v3248
  %v3293 = vmul.f32 %v3163, %v3250
  %v3294 = vmul.f32 %v3164, %v3252
  %v3295 = vmul.f32 %v3165, %v3254
  %v3296 = vmul.f32 %v3166, %v3256
  %v3297 = vmul.f32 %v3167, %v3258
  %v3298 = vmul.f32 %v3168, %v3260
  %v3299 = vmul.f32 %v3169, %v3262
  %v3300 = vmul.f32 %v3170, %v3264
  %v3301 = vmul.f32 %v3171, %v3266
  %v3302 = vmul.f32 %v3172, %v3268
  %v3303 = vmul.f32 %v3173, %v3270
  %v3304 = vmul.f32 %v3174, %v3272
  %v3305 = vmul.f32 %v3175, %v3274
  %v3306 = vmul.f32 %v3176, %v3276
  %v3307 = vmul.f32 %v3177, %v3278
  %v3308 = vmul.f32 %v3178, %v3280
  %v3309 = vmul.f32 %v3179, %v3282
  %v3310 = vmul.f32 %v3180, %v3284
  %v3311 = vsub.f32 1.0, %v3285
  %v3312 = vsub.f32 1.0, %v3286
  %v3313 = vsub.f32 1.0, %v3287
  %v3314 = vsub.f32 1.0, %v3288
  %v3315 = vsub.f32 1.0, %v3289
  %v3316 = vsub.f32 1.0, %v3290
  %v3317 = vsub.f32 1.0, %v3291
  %v3318 = vsub.f32 1.0, %v3292
  %v3319 = vsub.f32 1.0, %v3293
  %v3320 = vsub.f32 1.0, %v3294
  %v3321 = vsub.f32 1.0, %v3295
  %v3322 = vsub.f32 1.0, %v3296
  %v3323 = vsub.f32 1.0, %v3297
  %v3324 = vsub.f32 1.0, %v3298
  %v3325 = vsub.f32 1.0, %v3299
  %v3326 = vsub.f32 1.0, %v3300
  %v3327 = vsub.f32 1.0, %v3301
  %v3328 = vsub.f32 1.0, %v3302
  %v3329 = vsub.f32 1.0, %v3303
  %v3330 = vsub.f32 1.0, %v3304
  %v3331 = vsub.f32 1.0, %v3305
  %v3332 = vsub.f32 1.0, %v3306
  %v3333 = vsub.f32 1.0, %v3307
  %v3334 = vsub.f32 1.0, %v3308
  %v3335 = vsub.f32 1.0, %v3309
  %v3336 = vsub.f32 1.0, %v3310
  %v3337 = vmul.f32 %v2817, %v3311
  %v3338 = vmul.f32 %v2818, %v3312
  %v3339 = vmul.f32 %v2819, %v3313
  %v3340 = vmul.f32 %v2820, %v3314
  %v3341 = vmul.f32 %v2821, %v3315
  %v3342 = vmul.f32 %v2822, %v3316
  %v3343 = vmul.f32 %v2823, %v3317
  %v3344 = vmul.f32 %v2824, %v3318
  %v3345 = vmul.f32 %v2825, %v3319
  %v3346 = vmul.f32 %v2826, %v3320
  %v3347 = vmul.f32 %v2827, %v3321
  %v3348 = vmul.f32 %v2828, %v3322
  %v3349 = vmul.f32 %v2829, %v3323
  %v3350 = vmul.f32 %v2830, %v3324
  %v3351 = vmul.f32 %v2831, %v3325
  %v3352 = vmul.f32 %v2832, %v3326
  %v3353 = vmul.f32 %v2833, %v3327
  %v3354 = vmul.f32 %v2834, %v3328
  %v3355 = vmul.f32 %v2835, %v3329
  %v3356 = vmul.f32 %v2836, %v3330
  %v3357 = vmul.f32 %v2837, %v3331
  %v3358 = vmul.f32 %v2838, %v3332
  %v3359 = vmul.f32 %v2839, %v3333
  %v3360 = vmul.f32 %v2840, %v3334
  %v3361 = vmul.f32 %v2841, %v3335
  %v3362 = vmul.f32 %v2842, %v3336
  %v3363 = vadd.f32 %v3337, 1.0
  %v3364 = vadd.f32 %v3338, 1.0
  %v3365 = vadd.f32 %v3339, 1.0
  %v3366 = vadd.f32 %v3340, 1.0
  %v3367 = vadd.f32 %v3341, 1.0
  %v3368 = vadd.f32 %v3342, 1.0
  %v3369 = vadd.f32 %v3343, 1.0
  %v3370 = vadd.f32 %v3344, 1.0
  %v3371 = vadd.f32 %v3345, 1.0
  %v3372 = vadd.f32 %v3346, 1.0
  %v3373 = vadd.f32 %v3347, 1.0
  %v3374 = vadd.f32 %v3348, 1.0
  %v3375 = vadd.f32 %v3349, 1.0
  %v3376 = vadd.f32 %v3350, 1.0
  %v3377 = vadd.f32 %v3351, 1.0
  %v3378 = vadd.f32 %v3352, 1.0
  %v3379 = vadd.f32 %v3353, 1.0
  %v3380 = vadd.f32 %v3354, 1.0
  %v3381 = vadd.f32 %v3355, 1.0
  %v3382 = vadd.f32 %v3356, 1.0
  %v3383 = vadd.f32 %v3357, 1.0
  %v3384 = vadd.f32 %v3358, 1.0
  %v3385 = vadd.f32 %v3359, 1.0
  %v3386 = vadd.f32 %v3360, 1.0
  %v3387 = vadd.f32 %v3361, 1.0
  %v3388 = vadd.f32 %v3362, 1.0
  %v3389 = vmul.f32 %v2739, %v3363
  %v3390 = vmul.f32 %v2740, %v3364
  %v3391 = vmul.f32 %v2741, %v3365
  %v3392 = vmul.f32 %v2742, %v3366
  %v3393 = vmul.f32 %v2743, %v3367
  %v3394 = vmul.f32 %v2744, %v3368
  %v3395 = vmul.f32 %v2745, %v3369
  %v3396 = vmul.f32 %v2746, %v3370
  %v3397 = vmul.f32 %v2747, %v3371
  %v3398 = vmul.f32 %v2748, %v3372
  %v3399 = vmul.f32 %v2749, %v3373
  %v3400 = vmul.f32 %v2750, %v3374
  %v3401 = vmul.f32 %v2751, %v3375
  %v3402 = vmul.f32 %v2752, %v3376
  %v3403 = vmul.f32 %v2753, %v3377
  %v3404 = vmul.f32 %v2754, %v3378
  %v3405 = vmul.f32 %v2755, %v3379
  %v3406 = vmul.f32 %v2756, %v3380
  %v3407 = vmul.f32 %v2757, %v3381
  %v3408 = vmul.f32 %v2758, %v3382
  %v3409 = vmul.f32 %v2759, %v3383
  %v3410 = vmul.f32 %v2760, %v3384
  %v3411 = vmul.f32 %v2761, %v3385
  %v3412 = vmul.f32 %v2762, %v3386
  %v3413 = vmul.f32 %v2763, %v3387
  %v3414 = vmul.f32 %v2764, %v3388
  %3441 = vrot.lane.b32.xlu0 %v3389, 64
  %v3442 = vpop.permute.xlu0 %3441
  %3443 = vrot.lane.b32.xlu0 %v3390, 64
  %v3444 = vpop.permute.xlu0 %3443
  %3445 = vrot.lane.b32.xlu0 %v3391, 64
  %v3446 = vpop.permute.xlu0 %3445
  %3447 = vrot.lane.b32.xlu0 %v3392, 64
  %v3448 = vpop.permute.xlu0 %3447
  %3449 = vrot.lane.b32.xlu0 %v3393, 64
  %v3450 = vpop.permute.xlu0 %3449
  %3451 = vrot.lane.b32.xlu0 %v3394, 64
  %v3452 = vpop.permute.xlu0 %3451
  %3453 = vrot.lane.b32.xlu0 %v3395, 64
  %v3454 = vpop.permute.xlu0 %3453
  %3455 = vrot.lane.b32.xlu0 %v3396, 64
  %v3456 = vpop.permute.xlu0 %3455
  %3457 = vrot.lane.b32.xlu0 %v3397, 64
  %v3458 = vpop.permute.xlu0 %3457
  %3459 = vrot.lane.b32.xlu0 %v3398, 64
  %v3460 = vpop.permute.xlu0 %3459
  %3461 = vrot.lane.b32.xlu0 %v3399, 64
  %v3462 = vpop.permute.xlu0 %3461
  %3463 = vrot.lane.b32.xlu0 %v3400, 64
  %v3464 = vpop.permute.xlu0 %3463
  %3465 = vrot.lane.b32.xlu0 %v3401, 64
  %v3466 = vpop.permute.xlu0 %3465
  %3467 = vrot.lane.b32.xlu0 %v3402, 64
  %v3468 = vpop.permute.xlu0 %3467
  %3469 = vrot.lane.b32.xlu0 %v3403, 64
  %v3470 = vpop.permute.xlu0 %3469
  %3471 = vrot.lane.b32.xlu0 %v3404, 64
  %v3472 = vpop.permute.xlu0 %3471
  %3473 = vrot.lane.b32.xlu0 %v3405, 64
  %v3474 = vpop.permute.xlu0 %3473
  %3475 = vrot.lane.b32.xlu0 %v3406, 64
  %v3476 = vpop.permute.xlu0 %3475
  %3477 = vrot.lane.b32.xlu0 %v3407, 64
  %v3478 = vpop.permute.xlu0 %3477
  %3479 = vrot.lane.b32.xlu0 %v3408, 64
  %v3480 = vpop.permute.xlu0 %3479
  %3481 = vrot.lane.b32.xlu0 %v3409, 64
  %v3482 = vpop.permute.xlu0 %3481
  %3483 = vrot.lane.b32.xlu0 %v3410, 64
  %v3484 = vpop.permute.xlu0 %3483
  %3485 = vrot.lane.b32.xlu0 %v3411, 64
  %v3486 = vpop.permute.xlu0 %3485
  %3487 = vrot.lane.b32.xlu0 %v3412, 64
  %v3488 = vpop.permute.xlu0 %3487
  %3489 = vrot.lane.b32.xlu0 %v3413, 64
  %v3490 = vpop.permute.xlu0 %3489
  %3491 = vrot.lane.b32.xlu0 %v3414, 64
  %v3492 = vpop.permute.xlu0 %3491
  %vm3519 = vcmask 195585
  %3520 = vst.msk [vmem:[%s7 - $0x1] sm:$0xfe] %vm3519, %v3442
  %vm3521 = vcmask 193536
  %3522 = vst.msk [vmem:[%s7 + $0x7] sm:$0x3f] %vm3521, %v3444
  %3523 = vst.msk [vmem:[%s7 + $0xf] sm:$0xfe] %vm3519, %v3446
  %3524 = vst.msk [vmem:[%s7 + $0x17] sm:$0x3f] %vm3521, %v3448
  %3525 = vst.msk [vmem:[%s7 + $0x1f] sm:$0xfe] %vm3519, %v3450
  %3526 = vst.msk [vmem:[%s7 + $0x27] sm:$0x3f] %vm3521, %v3452
  %3527 = vst.msk [vmem:[%s7 + $0x2f] sm:$0xfe] %vm3519, %v3454
  %3528 = vst.msk [vmem:[%s7 + $0x37] sm:$0x3f] %vm3521, %v3456
  %3529 = vst.msk [vmem:[%s7 + $0x3f] sm:$0xfe] %vm3519, %v3458
  %3530 = vst.msk [vmem:[%s7 + $0x47] sm:$0x3f] %vm3521, %v3460
  %3531 = vst.msk [vmem:[%s7 + $0x4f] sm:$0xfe] %vm3519, %v3462
  %3532 = vst.msk [vmem:[%s7 + $0x57] sm:$0x3f] %vm3521, %v3464
  %3533 = vst.msk [vmem:[%s7 + $0x5f] sm:$0xfe] %vm3519, %v3466
  %3534 = vst.msk [vmem:[%s7 + $0x67] sm:$0x3f] %vm3521, %v3468
  %3535 = vst.msk [vmem:[%s7 + $0x6f] sm:$0xfe] %vm3519, %v3470
  %3536 = vst.msk [vmem:[%s7 + $0x77] sm:$0x3f] %vm3521, %v3472
  %3537 = vst.msk [vmem:[%s7 + $0x7f] sm:$0xfe] %vm3519, %v3474
  %3538 = vst.msk [vmem:[%s7 + $0x87] sm:$0x3f] %vm3521, %v3476
  %3539 = vst.msk [vmem:[%s7 + $0x8f] sm:$0xfe] %vm3519, %v3478
  %3540 = vst.msk [vmem:[%s7 + $0x97] sm:$0x3f] %vm3521, %v3480
  %3541 = vst.msk [vmem:[%s7 + $0x9f] sm:$0xfe] %vm3519, %v3482
  %3542 = vst.msk [vmem:[%s7 + $0xa7] sm:$0x3f] %vm3521, %v3484
  %3543 = vst.msk [vmem:[%s7 + $0xaf] sm:$0xfe] %vm3519, %v3486
  %3544 = vst.msk [vmem:[%s7 + $0xb7] sm:$0x3f] %vm3521, %v3488
  %3545 = vst.msk [vmem:[%s7 + $0xbf] sm:$0xfe] %vm3519, %v3490
  %3546 = vst.msk [vmem:[%s7 + $0xc7] sm:$0x3f] %vm3521, %v3492
  %v3547 = vld [vmem:[%s2182 + $0x8] sm:$0xfc]
  %v3548 = vld [vmem:[%s2182 + $0x40] sm:$0x7f]
  %v3549 = vld [vmem:[%s2182 + $0x78] sm:$0xfc]
  %v3550 = vld [vmem:[%s2182 + $0xb0] sm:$0x7f]
  %v3551 = vld [vmem:[%s2182 + $0xe8] sm:$0xfc]
  %v3552 = vld [vmem:[%s2182 + $0x120] sm:$0x7f]
  %v3553 = vld [vmem:[%s2182 + $0x158] sm:$0xfc]
  %v3554 = vld [vmem:[%s2182 + $0x190] sm:$0x7f]
  %v3555 = vld [vmem:[%s2182 + $0x1c8] sm:$0xfc]
  %v3556 = vld [vmem:[%s2182 + $0x200] sm:$0x7f]
  %v3557 = vld [vmem:[%s2182 + $0x238] sm:$0xfc]
  %v3558 = vld [vmem:[%s2182 + $0x270] sm:$0x7f]
  %v3559 = vld [vmem:[%s2182 + $0x2a8] sm:$0xfc]
  %v3560 = vld [vmem:[%s2182 + $0x2e0] sm:$0x7f]
  %v3561 = vld [vmem:[%s2182 + $0x318] sm:$0xfc]
  %v3562 = vld [vmem:[%s2182 + $0x350] sm:$0x7f]
  %v3563 = vld [vmem:[%s2182 + $0x388] sm:$0xfc]
  %v3564 = vld [vmem:[%s2182 + $0x3c0] sm:$0x7f]
  %v3565 = vld [vmem:[%s2182 + $0x3f8] sm:$0xfc]
  %v3566 = vld [vmem:[%s2182 + $0x430] sm:$0x7f]
  %v3567 = vld [vmem:[%s2182 + $0x468] sm:$0xfc]
  %v3568 = vld [vmem:[%s2182 + $0x4a0] sm:$0x7f]
  %v3569 = vld [vmem:[%s2182 + $0x4d8] sm:$0xfc]
  %v3570 = vld [vmem:[%s2182 + $0x510] sm:$0x7f]
  %v3571 = vld [vmem:[%s2182 + $0x548] sm:$0xfc]
  %v3572 = vld [vmem:[%s2182 + $0x580] sm:$0x7f]
  %v3573 = vld [vmem:[%s2182 + $0x8] sm:$0xfe]
  %v3574 = vld [vmem:[%s2182 + $0x40] sm:$0x3f]
  %v3575 = vld [vmem:[%s2182 + $0x78] sm:$0xfe]
  %v3576 = vld [vmem:[%s2182 + $0xb0] sm:$0x3f]
  %v3577 = vld [vmem:[%s2182 + $0xe8] sm:$0xfe]
  %v3578 = vld [vmem:[%s2182 + $0x120] sm:$0x3f]
  %v3579 = vld [vmem:[%s2182 + $0x158] sm:$0xfe]
  %v3580 = vld [vmem:[%s2182 + $0x190] sm:$0x3f]
  %v3581 = vld [vmem:[%s2182 + $0x1c8] sm:$0xfe]
  %v3582 = vld [vmem:[%s2182 + $0x200] sm:$0x3f]
  %v3583 = vld [vmem:[%s2182 + $0x238] sm:$0xfe]
  %v3584 = vld [vmem:[%s2182 + $0x270] sm:$0x3f]
  %v3585 = vld [vmem:[%s2182 + $0x2a8] sm:$0xfe]
  %v3586 = vld [vmem:[%s2182 + $0x2e0] sm:$0x3f]
  %v3587 = vld [vmem:[%s2182 + $0x318] sm:$0xfe]
  %v3588 = vld [vmem:[%s2182 + $0x350] sm:$0x3f]
  %v3589 = vld [vmem:[%s2182 + $0x388] sm:$0xfe]
  %v3590 = vld [vmem:[%s2182 + $0x3c0] sm:$0x3f]
  %v3591 = vld [vmem:[%s2182 + $0x3f8] sm:$0xfe]
  %v3592 = vld [vmem:[%s2182 + $0x430] sm:$0x3f]
  %v3593 = vld [vmem:[%s2182 + $0x468] sm:$0xfe]
  %v3594 = vld [vmem:[%s2182 + $0x4a0] sm:$0x3f]
  %v3595 = vld [vmem:[%s2182 + $0x4d8] sm:$0xfe]
  %v3596 = vld [vmem:[%s2182 + $0x510] sm:$0x3f]
  %v3597 = vld [vmem:[%s2182 + $0x548] sm:$0xfe]
  %v3598 = vld [vmem:[%s2182 + $0x580] sm:$0x3f]
  %v3625 = vrot.slane %v3573, 7
  %v3626 = vrot.slane %v3574, 7
  %v3627 = vsel %vm2261, %v3625, %v3626
  %v3628 = vrot.slane %v3575, 7
  %v3629 = vrot.slane %v3576, 7
  %v3630 = vsel %vm2261, %v3628, %v3629
  %v3631 = vrot.slane %v3577, 7
  %v3632 = vrot.slane %v3578, 7
  %v3633 = vsel %vm2261, %v3631, %v3632
  %v3634 = vrot.slane %v3579, 7
  %v3635 = vrot.slane %v3580, 7
  %v3636 = vsel %vm2261, %v3634, %v3635
  %v3637 = vrot.slane %v3581, 7
  %v3638 = vrot.slane %v3582, 7
  %v3639 = vsel %vm2261, %v3637, %v3638
  %v3640 = vrot.slane %v3583, 7
  %v3641 = vrot.slane %v3584, 7
  %v3642 = vsel %vm2261, %v3640, %v3641
  %v3643 = vrot.slane %v3585, 7
  %v3644 = vrot.slane %v3586, 7
  %v3645 = vsel %vm2261, %v3643, %v3644
  %v3646 = vrot.slane %v3587, 7
  %v3647 = vrot.slane %v3588, 7
  %v3648 = vsel %vm2261, %v3646, %v3647
  %v3649 = vrot.slane %v3589, 7
  %v3650 = vrot.slane %v3590, 7
  %v3651 = vsel %vm2261, %v3649, %v3650
  %v3652 = vrot.slane %v3591, 7
  %v3653 = vrot.slane %v3592, 7
  %v3654 = vsel %vm2261, %v3652, %v3653
  %v3655 = vrot.slane %v3593, 7
  %v3656 = vrot.slane %v3594, 7
  %v3657 = vsel %vm2261, %v3655, %v3656
  %v3658 = vrot.slane %v3595, 7
  %v3659 = vrot.slane %v3596, 7
  %v3660 = vsel %vm2261, %v3658, %v3659
  %v3661 = vrot.slane %v3597, 7
  %v3662 = vrot.slane %v3598, 7
  %v3663 = vsel %vm2261, %v3661, %v3662
  %3664 = vrot.lane.b32.xlu0 %v3625, 64
  %v3665 = vpop.permute.xlu0 %3664
  %3666 = vrot.lane.b32.xlu0 %v3627, 64
  %v3667 = vpop.permute.xlu0 %3666
  %3668 = vrot.lane.b32.xlu0 %v3628, 64
  %v3669 = vpop.permute.xlu0 %3668
  %3670 = vrot.lane.b32.xlu0 %v3630, 64
  %v3671 = vpop.permute.xlu0 %3670
  %3672 = vrot.lane.b32.xlu0 %v3631, 64
  %v3673 = vpop.permute.xlu0 %3672
  %3674 = vrot.lane.b32.xlu0 %v3633, 64
  %v3675 = vpop.permute.xlu0 %3674
  %3676 = vrot.lane.b32.xlu0 %v3634, 64
  %v3677 = vpop.permute.xlu0 %3676
  %3678 = vrot.lane.b32.xlu0 %v3636, 64
  %v3679 = vpop.permute.xlu0 %3678
  %3680 = vrot.lane.b32.xlu0 %v3637, 64
  %v3681 = vpop.permute.xlu0 %3680
  %3682 = vrot.lane.b32.xlu0 %v3639, 64
  %v3683 = vpop.permute.xlu0 %3682
  %3684 = vrot.lane.b32.xlu0 %v3640, 64
  %v3685 = vpop.permute.xlu0 %3684
  %3686 = vrot.lane.b32.xlu0 %v3642, 64
  %v3687 = vpop.permute.xlu0 %3686
  %3688 = vrot.lane.b32.xlu0 %v3643, 64
  %v3689 = vpop.permute.xlu0 %3688
  %3690 = vrot.lane.b32.xlu0 %v3645, 64
  %v3691 = vpop.permute.xlu0 %3690
  %3692 = vrot.lane.b32.xlu0 %v3646, 64
  %v3693 = vpop.permute.xlu0 %3692
  %3694 = vrot.lane.b32.xlu0 %v3648, 64
  %v3695 = vpop.permute.xlu0 %3694
  %3696 = vrot.lane.b32.xlu0 %v3649, 64
  %v3697 = vpop.permute.xlu0 %3696
  %3698 = vrot.lane.b32.xlu0 %v3651, 64
  %v3699 = vpop.permute.xlu0 %3698
  %3700 = vrot.lane.b32.xlu0 %v3652, 64
  %v3701 = vpop.permute.xlu0 %3700
  %3702 = vrot.lane.b32.xlu0 %v3654, 64
  %v3703 = vpop.permute.xlu0 %3702
  %3704 = vrot.lane.b32.xlu0 %v3655, 64
  %v3705 = vpop.permute.xlu0 %3704
  %3706 = vrot.lane.b32.xlu0 %v3657, 64
  %v3707 = vpop.permute.xlu0 %3706
  %3708 = vrot.lane.b32.xlu0 %v3658, 64
  %v3709 = vpop.permute.xlu0 %3708
  %3710 = vrot.lane.b32.xlu0 %v3660, 64
  %v3711 = vpop.permute.xlu0 %3710
  %3712 = vrot.lane.b32.xlu0 %v3661, 64
  %v3713 = vpop.permute.xlu0 %3712
  %3714 = vrot.lane.b32.xlu0 %v3663, 64
  %v3715 = vpop.permute.xlu0 %3714
  %v3742 = vadd.f32 %v3547, %v3665
  %v3743 = vadd.f32 %v3548, %v3667
  %v3744 = vadd.f32 %v3549, %v3669
  %v3745 = vadd.f32 %v3550, %v3671
  %v3746 = vadd.f32 %v3551, %v3673
  %v3747 = vadd.f32 %v3552, %v3675
  %v3748 = vadd.f32 %v3553, %v3677
  %v3749 = vadd.f32 %v3554, %v3679
  %v3750 = vadd.f32 %v3555, %v3681
  %v3751 = vadd.f32 %v3556, %v3683
  %v3752 = vadd.f32 %v3557, %v3685
  %v3753 = vadd.f32 %v3558, %v3687
  %v3754 = vadd.f32 %v3559, %v3689
  %v3755 = vadd.f32 %v3560, %v3691
  %v3756 = vadd.f32 %v3561, %v3693
  %v3757 = vadd.f32 %v3562, %v3695
  %v3758 = vadd.f32 %v3563, %v3697
  %v3759 = vadd.f32 %v3564, %v3699
  %v3760 = vadd.f32 %v3565, %v3701
  %v3761 = vadd.f32 %v3566, %v3703
  %v3762 = vadd.f32 %v3567, %v3705
  %v3763 = vadd.f32 %v3568, %v3707
  %v3764 = vadd.f32 %v3569, %v3709
  %v3765 = vadd.f32 %v3570, %v3711
  %v3766 = vadd.f32 %v3571, %v3713
  %v3767 = vadd.f32 %v3572, %v3715
  %v3768 = vld [vmem:[%s2182 + $0x10] sm:$0xff]
  %v3769 = vld [vmem:[%s2182 + $0x48] sm:$0x1f]
  %v3770 = vld [vmem:[%s2182 + $0x80] sm:$0xff]
  %v3771 = vld [vmem:[%s2182 + $0xb8] sm:$0x1f]
  %v3772 = vld [vmem:[%s2182 + $0xf0] sm:$0xff]
  %v3773 = vld [vmem:[%s2182 + $0x128] sm:$0x1f]
  %v3774 = vld [vmem:[%s2182 + $0x160] sm:$0xff]
  %v3775 = vld [vmem:[%s2182 + $0x198] sm:$0x1f]
  %v3776 = vld [vmem:[%s2182 + $0x1d0] sm:$0xff]
  %v3777 = vld [vmem:[%s2182 + $0x208] sm:$0x1f]
  %v3778 = vld [vmem:[%s2182 + $0x240] sm:$0xff]
  %v3779 = vld [vmem:[%s2182 + $0x278] sm:$0x1f]
  %v3780 = vld [vmem:[%s2182 + $0x2b0] sm:$0xff]
  %v3781 = vld [vmem:[%s2182 + $0x2e8] sm:$0x1f]
  %v3782 = vld [vmem:[%s2182 + $0x320] sm:$0xff]
  %v3783 = vld [vmem:[%s2182 + $0x358] sm:$0x1f]
  %v3784 = vld [vmem:[%s2182 + $0x390] sm:$0xff]
  %v3785 = vld [vmem:[%s2182 + $0x3c8] sm:$0x1f]
  %v3786 = vld [vmem:[%s2182 + $0x400] sm:$0xff]
  %v3787 = vld [vmem:[%s2182 + $0x438] sm:$0x1f]
  %v3788 = vld [vmem:[%s2182 + $0x470] sm:$0xff]
  %v3789 = vld [vmem:[%s2182 + $0x4a8] sm:$0x1f]
  %v3790 = vld [vmem:[%s2182 + $0x4e0] sm:$0xff]
  %v3791 = vld [vmem:[%s2182 + $0x518] sm:$0x1f]
  %v3792 = vld [vmem:[%s2182 + $0x550] sm:$0xff]
  %v3793 = vld [vmem:[%s2182 + $0x588] sm:$0x1f]
  %vm3820 = vcmask 1041408
  %v3821 = vrot.slane %v3768, 6
  %v3822 = vrot.slane %v3769, 6
  %v3823 = vsel %vm3820, %v3821, %v3822
  %v3824 = vrot.slane %v3770, 6
  %v3825 = vrot.slane %v3771, 6
  %v3826 = vsel %vm3820, %v3824, %v3825
  %v3827 = vrot.slane %v3772, 6
  %v3828 = vrot.slane %v3773, 6
  %v3829 = vsel %vm3820, %v3827, %v3828
  %v3830 = vrot.slane %v3774, 6
  %v3831 = vrot.slane %v3775, 6
  %v3832 = vsel %vm3820, %v3830, %v3831
  %v3833 = vrot.slane %v3776, 6
  %v3834 = vrot.slane %v3777, 6
  %v3835 = vsel %vm3820, %v3833, %v3834
  %v3836 = vrot.slane %v3778, 6
  %v3837 = vrot.slane %v3779, 6
  %v3838 = vsel %vm3820, %v3836, %v3837
  %v3839 = vrot.slane %v3780, 6
  %v3840 = vrot.slane %v3781, 6
  %v3841 = vsel %vm3820, %v3839, %v3840
  %v3842 = vrot.slane %v3782, 6
  %v3843 = vrot.slane %v3783, 6
  %v3844 = vsel %vm3820, %v3842, %v3843
  %v3845 = vrot.slane %v3784, 6
  %v3846 = vrot.slane %v3785, 6
  %v3847 = vsel %vm3820, %v3845, %v3846
  %v3848 = vrot.slane %v3786, 6
  %v3849 = vrot.slane %v3787, 6
  %v3850 = vsel %vm3820, %v3848, %v3849
  %v3851 = vrot.slane %v3788, 6
  %v3852 = vrot.slane %v3789, 6
  %v3853 = vsel %vm3820, %v3851, %v3852
  %v3854 = vrot.slane %v3790, 6
  %v3855 = vrot.slane %v3791, 6
  %v3856 = vsel %vm3820, %v3854, %v3855
  %v3857 = vrot.slane %v3792, 6
  %v3858 = vrot.slane %v3793, 6
  %v3859 = vsel %vm3820, %v3857, %v3858
  %v3886 = vadd.f32 %v3742, %v3821
  %v3887 = vadd.f32 %v3743, %v3823
  %v3888 = vadd.f32 %v3744, %v3824
  %v3889 = vadd.f32 %v3745, %v3826
  %v3890 = vadd.f32 %v3746, %v3827
  %v3891 = vadd.f32 %v3747, %v3829
  %v3892 = vadd.f32 %v3748, %v3830
  %v3893 = vadd.f32 %v3749, %v3832
  %v3894 = vadd.f32 %v3750, %v3833
  %v3895 = vadd.f32 %v3751, %v3835
  %v3896 = vadd.f32 %v3752, %v3836
  %v3897 = vadd.f32 %v3753, %v3838
  %v3898 = vadd.f32 %v3754, %v3839
  %v3899 = vadd.f32 %v3755, %v3841
  %v3900 = vadd.f32 %v3756, %v3842
  %v3901 = vadd.f32 %v3757, %v3844
  %v3902 = vadd.f32 %v3758, %v3845
  %v3903 = vadd.f32 %v3759, %v3847
  %v3904 = vadd.f32 %v3760, %v3848
  %v3905 = vadd.f32 %v3761, %v3850
  %v3906 = vadd.f32 %v3762, %v3851
  %v3907 = vadd.f32 %v3763, %v3853
  %v3908 = vadd.f32 %v3764, %v3854
  %v3909 = vadd.f32 %v3765, %v3856
  %v3910 = vadd.f32 %v3766, %v3857
  %v3911 = vadd.f32 %v3767, %v3859
  %v3912 = vld [vmem:[#allocation2 + $0x18] sm:$0xfc]
  %v3913 = vld [vmem:[#allocation2 + $0x50] sm:$0x7f]
  %v3914 = vld [vmem:[#allocation2 + $0x88] sm:$0xfc]
  %v3915 = vld [vmem:[#allocation2 + $0xc0] sm:$0x7f]
  %v3916 = vld [vmem:[#allocation2 + $0xf8] sm:$0xfc]
  %v3917 = vld [vmem:[#allocation2 + $0x130] sm:$0x7f]
  %v3918 = vld [vmem:[#allocation2 + $0x168] sm:$0xfc]
  %v3919 = vld [vmem:[#allocation2 + $0x1a0] sm:$0x7f]
  %v3920 = vld [vmem:[#allocation2 + $0x1d8] sm:$0xfc]
  %v3921 = vld [vmem:[#allocation2 + $0x210] sm:$0x7f]
  %v3922 = vld [vmem:[#allocation2 + $0x248] sm:$0xfc]
  %v3923 = vld [vmem:[#allocation2 + $0x280] sm:$0x7f]
  %v3924 = vld [vmem:[#allocation2 + $0x2b8] sm:$0xfc]
  %v3925 = vld [vmem:[#allocation2 + $0x2f0] sm:$0x7f]
  %v3926 = vld [vmem:[#allocation2 + $0x328] sm:$0xfc]
  %v3927 = vld [vmem:[#allocation2 + $0x360] sm:$0x7f]
  %v3928 = vld [vmem:[#allocation2 + $0x398] sm:$0xfc]
  %v3929 = vld [vmem:[#allocation2 + $0x3d0] sm:$0x7f]
  %v3930 = vld [vmem:[#allocation2 + $0x408] sm:$0xfc]
  %v3931 = vld [vmem:[#allocation2 + $0x440] sm:$0x7f]
  %v3932 = vld [vmem:[#allocation2 + $0x478] sm:$0xfc]
  %v3933 = vld [vmem:[#allocation2 + $0x4b0] sm:$0x7f]
  %v3934 = vld [vmem:[#allocation2 + $0x4e8] sm:$0xfc]
  %v3935 = vld [vmem:[#allocation2 + $0x520] sm:$0x7f]
  %v3936 = vld [vmem:[#allocation2 + $0x558] sm:$0xfc]
  %v3937 = vld [vmem:[#allocation2 + $0x590] sm:$0x7f]
  %3964 = vrot.lane.b32.xlu0 %v3912, 64
  %v3965 = vpop.permute.xlu0 %3964
  %3966 = vrot.lane.b32.xlu0 %v3913, 64
  %v3967 = vpop.permute.xlu0 %3966
  %3968 = vrot.lane.b32.xlu0 %v3914, 64
  %v3969 = vpop.permute.xlu0 %3968
  %3970 = vrot.lane.b32.xlu0 %v3915, 64
  %v3971 = vpop.permute.xlu0 %3970
  %3972 = vrot.lane.b32.xlu0 %v3916, 64
  %v3973 = vpop.permute.xlu0 %3972
  %3974 = vrot.lane.b32.xlu0 %v3917, 64
  %v3975 = vpop.permute.xlu0 %3974
  %3976 = vrot.lane.b32.xlu0 %v3918, 64
  %v3977 = vpop.permute.xlu0 %3976
  %3978 = vrot.lane.b32.xlu0 %v3919, 64
  %v3979 = vpop.permute.xlu0 %3978
  %3980 = vrot.lane.b32.xlu0 %v3920, 64
  %v3981 = vpop.permute.xlu0 %3980
  %3982 = vrot.lane.b32.xlu0 %v3921, 64
  %v3983 = vpop.permute.xlu0 %3982
  %3984 = vrot.lane.b32.xlu0 %v3922, 64
  %v3985 = vpop.permute.xlu0 %3984
  %3986 = vrot.lane.b32.xlu0 %v3923, 64
  %v3987 = vpop.permute.xlu0 %3986
  %3988 = vrot.lane.b32.xlu0 %v3924, 64
  %v3989 = vpop.permute.xlu0 %3988
  %3990 = vrot.lane.b32.xlu0 %v3925, 64
  %v3991 = vpop.permute.xlu0 %3990
  %3992 = vrot.lane.b32.xlu0 %v3926, 64
  %v3993 = vpop.permute.xlu0 %3992
  %3994 = vrot.lane.b32.xlu0 %v3927, 64
  %v3995 = vpop.permute.xlu0 %3994
  %3996 = vrot.lane.b32.xlu0 %v3928, 64
  %v3997 = vpop.permute.xlu0 %3996
  %3998 = vrot.lane.b32.xlu0 %v3929, 64
  %v3999 = vpop.permute.xlu0 %3998
  %4000 = vrot.lane.b32.xlu0 %v3930, 64
  %v4001 = vpop.permute.xlu0 %4000
  %4002 = vrot.lane.b32.xlu0 %v3931, 64
  %v4003 = vpop.permute.xlu0 %4002
  %4004 = vrot.lane.b32.xlu0 %v3932, 64
  %v4005 = vpop.permute.xlu0 %4004
  %4006 = vrot.lane.b32.xlu0 %v3933, 64
  %v4007 = vpop.permute.xlu0 %4006
  %4008 = vrot.lane.b32.xlu0 %v3934, 64
  %v4009 = vpop.permute.xlu0 %4008
  %4010 = vrot.lane.b32.xlu0 %v3935, 64
  %v4011 = vpop.permute.xlu0 %4010
  %4012 = vrot.lane.b32.xlu0 %v3936, 64
  %v4013 = vpop.permute.xlu0 %4012
  %4014 = vrot.lane.b32.xlu0 %v3937, 64
  %v4015 = vpop.permute.xlu0 %4014
  %v4042 = vadd.f32 %v3886, %v3965
  %v4043 = vadd.f32 %v3887, %v3967
  %v4044 = vadd.f32 %v3888, %v3969
  %v4045 = vadd.f32 %v3889, %v3971
  %v4046 = vadd.f32 %v3890, %v3973
  %v4047 = vadd.f32 %v3891, %v3975
  %v4048 = vadd.f32 %v3892, %v3977
  %v4049 = vadd.f32 %v3893, %v3979
  %v4050 = vadd.f32 %v3894, %v3981
  %v4051 = vadd.f32 %v3895, %v3983
  %v4052 = vadd.f32 %v3896, %v3985
  %v4053 = vadd.f32 %v3897, %v3987
  %v4054 = vadd.f32 %v3898, %v3989
  %v4055 = vadd.f32 %v3899, %v3991
  %v4056 = vadd.f32 %v3900, %v3993
  %v4057 = vadd.f32 %v3901, %v3995
  %v4058 = vadd.f32 %v3902, %v3997
  %v4059 = vadd.f32 %v3903, %v3999
  %v4060 = vadd.f32 %v3904, %v4001
  %v4061 = vadd.f32 %v3905, %v4003
  %v4062 = vadd.f32 %v3906, %v4005
  %v4063 = vadd.f32 %v3907, %v4007
  %v4064 = vadd.f32 %v3908, %v4009
  %v4065 = vadd.f32 %v3909, %v4011
  %v4066 = vadd.f32 %v3910, %v4013
  %v4067 = vadd.f32 %v3911, %v4015
  %v4068 = vld [vmem:[#allocation2 + $0x20] sm:$0xfe]
  %v4069 = vld [vmem:[#allocation2 + $0x58] sm:$0x3f]
  %v4070 = vld [vmem:[#allocation2 + $0x90] sm:$0xfe]
  %v4071 = vld [vmem:[#allocation2 + $0xc8] sm:$0x3f]
  %v4072 = vld [vmem:[#allocation2 + $0x100] sm:$0xfe]
  %v4073 = vld [vmem:[#allocation2 + $0x138] sm:$0x3f]
  %v4074 = vld [vmem:[#allocation2 + $0x170] sm:$0xfe]
  %v4075 = vld [vmem:[#allocation2 + $0x1a8] sm:$0x3f]
  %v4076 = vld [vmem:[#allocation2 + $0x1e0] sm:$0xfe]
  %v4077 = vld [vmem:[#allocation2 + $0x218] sm:$0x3f]
  %v4078 = vld [vmem:[#allocation2 + $0x250] sm:$0xfe]
  %v4079 = vld [vmem:[#allocation2 + $0x288] sm:$0x3f]
  %v4080 = vld [vmem:[#allocation2 + $0x2c0] sm:$0xfe]
  %v4081 = vld [vmem:[#allocation2 + $0x2f8] sm:$0x3f]
  %v4082 = vld [vmem:[#allocation2 + $0x330] sm:$0xfe]
  %v4083 = vld [vmem:[#allocation2 + $0x368] sm:$0x3f]
  %v4084 = vld [vmem:[#allocation2 + $0x3a0] sm:$0xfe]
  %v4085 = vld [vmem:[#allocation2 + $0x3d8] sm:$0x3f]
  %v4086 = vld [vmem:[#allocation2 + $0x410] sm:$0xfe]
  %v4087 = vld [vmem:[#allocation2 + $0x448] sm:$0x3f]
  %v4088 = vld [vmem:[#allocation2 + $0x480] sm:$0xfe]
  %v4089 = vld [vmem:[#allocation2 + $0x4b8] sm:$0x3f]
  %v4090 = vld [vmem:[#allocation2 + $0x4f0] sm:$0xfe]
  %v4091 = vld [vmem:[#allocation2 + $0x528] sm:$0x3f]
  %v4092 = vld [vmem:[#allocation2 + $0x560] sm:$0xfe]
  %v4093 = vld [vmem:[#allocation2 + $0x598] sm:$0x3f]
  %v4120 = vrot.slane %v4068, 7
  %v4121 = vrot.slane %v4069, 7
  %v4122 = vsel %vm2261, %v4120, %v4121
  %v4123 = vrot.slane %v4070, 7
  %v4124 = vrot.slane %v4071, 7
  %v4125 = vsel %vm2261, %v4123, %v4124
  %v4126 = vrot.slane %v4072, 7
  %v4127 = vrot.slane %v4073, 7
  %v4128 = vsel %vm2261, %v4126, %v4127
  %v4129 = vrot.slane %v4074, 7
  %v4130 = vrot.slane %v4075, 7
  %v4131 = vsel %vm2261, %v4129, %v4130
  %v4132 = vrot.slane %v4076, 7
  %v4133 = vrot.slane %v4077, 7
  %v4134 = vsel %vm2261, %v4132, %v4133
  %v4135 = vrot.slane %v4078, 7
  %v4136 = vrot.slane %v4079, 7
  %v4137 = vsel %vm2261, %v4135, %v4136
  %v4138 = vrot.slane %v4080, 7
  %v4139 = vrot.slane %v4081, 7
  %v4140 = vsel %vm2261, %v4138, %v4139
  %v4141 = vrot.slane %v4082, 7
  %v4142 = vrot.slane %v4083, 7
  %v4143 = vsel %vm2261, %v4141, %v4142
  %v4144 = vrot.slane %v4084, 7
  %v4145 = vrot.slane %v4085, 7
  %v4146 = vsel %vm2261, %v4144, %v4145
  %v4147 = vrot.slane %v4086, 7
  %v4148 = vrot.slane %v4087, 7
  %v4149 = vsel %vm2261, %v4147, %v4148
  %v4150 = vrot.slane %v4088, 7
  %v4151 = vrot.slane %v4089, 7
  %v4152 = vsel %vm2261, %v4150, %v4151
  %v4153 = vrot.slane %v4090, 7
  %v4154 = vrot.slane %v4091, 7
  %v4155 = vsel %vm2261, %v4153, %v4154
  %v4156 = vrot.slane %v4092, 7
  %v4157 = vrot.slane %v4093, 7
  %v4158 = vsel %vm2261, %v4156, %v4157
  %v4185 = vadd.f32 %v4042, %v4120
  %v4186 = vadd.f32 %v4043, %v4122
  %v4187 = vadd.f32 %v4044, %v4123
  %v4188 = vadd.f32 %v4045, %v4125
  %v4189 = vadd.f32 %v4046, %v4126
  %v4190 = vadd.f32 %v4047, %v4128
  %v4191 = vadd.f32 %v4048, %v4129
  %v4192 = vadd.f32 %v4049, %v4131
  %v4193 = vadd.f32 %v4050, %v4132
  %v4194 = vadd.f32 %v4051, %v4134
  %v4195 = vadd.f32 %v4052, %v4135
  %v4196 = vadd.f32 %v4053, %v4137
  %v4197 = vadd.f32 %v4054, %v4138
  %v4198 = vadd.f32 %v4055, %v4140
  %v4199 = vadd.f32 %v4056, %v4141
  %v4200 = vadd.f32 %v4057, %v4143
  %v4201 = vadd.f32 %v4058, %v4144
  %v4202 = vadd.f32 %v4059, %v4146
  %v4203 = vadd.f32 %v4060, %v4147
  %v4204 = vadd.f32 %v4061, %v4149
  %v4205 = vadd.f32 %v4062, %v4150
  %v4206 = vadd.f32 %v4063, %v4152
  %v4207 = vadd.f32 %v4064, %v4153
  %v4208 = vadd.f32 %v4065, %v4155
  %v4209 = vadd.f32 %v4066, %v4156
  %v4210 = vadd.f32 %v4067, %v4158
  %v4211 = vld [vmem:[#allocation2 + $0x20] sm:$0xff]
  %v4212 = vld [vmem:[#allocation2 + $0x58] sm:$0x1f]
  %v4213 = vld [vmem:[#allocation2 + $0x90] sm:$0xff]
  %v4214 = vld [vmem:[#allocation2 + $0xc8] sm:$0x1f]
  %v4215 = vld [vmem:[#allocation2 + $0x100] sm:$0xff]
  %v4216 = vld [vmem:[#allocation2 + $0x138] sm:$0x1f]
  %v4217 = vld [vmem:[#allocation2 + $0x170] sm:$0xff]
  %v4218 = vld [vmem:[#allocation2 + $0x1a8] sm:$0x1f]
  %v4219 = vld [vmem:[#allocation2 + $0x1e0] sm:$0xff]
  %v4220 = vld [vmem:[#allocation2 + $0x218] sm:$0x1f]
  %v4221 = vld [vmem:[#allocation2 + $0x250] sm:$0xff]
  %v4222 = vld [vmem:[#allocation2 + $0x288] sm:$0x1f]
  %v4223 = vld [vmem:[#allocation2 + $0x2c0] sm:$0xff]
  %v4224 = vld [vmem:[#allocation2 + $0x2f8] sm:$0x1f]
  %v4225 = vld [vmem:[#allocation2 + $0x330] sm:$0xff]
  %v4226 = vld [vmem:[#allocation2 + $0x368] sm:$0x1f]
  %v4227 = vld [vmem:[#allocation2 + $0x3a0] sm:$0xff]
  %v4228 = vld [vmem:[#allocation2 + $0x3d8] sm:$0x1f]
  %v4229 = vld [vmem:[#allocation2 + $0x410] sm:$0xff]
  %v4230 = vld [vmem:[#allocation2 + $0x448] sm:$0x1f]
  %v4231 = vld [vmem:[#allocation2 + $0x480] sm:$0xff]
  %v4232 = vld [vmem:[#allocation2 + $0x4b8] sm:$0x1f]
  %v4233 = vld [vmem:[#allocation2 + $0x4f0] sm:$0xff]
  %v4234 = vld [vmem:[#allocation2 + $0x528] sm:$0x1f]
  %v4235 = vld [vmem:[#allocation2 + $0x560] sm:$0xff]
  %v4236 = vld [vmem:[#allocation2 + $0x598] sm:$0x1f]
  %v4263 = vrot.slane %v4211, 6
  %v4264 = vrot.slane %v4212, 6
  %v4265 = vsel %vm3820, %v4263, %v4264
  %v4266 = vrot.slane %v4213, 6
  %v4267 = vrot.slane %v4214, 6
  %v4268 = vsel %vm3820, %v4266, %v4267
  %v4269 = vrot.slane %v4215, 6
  %v4270 = vrot.slane %v4216, 6
  %v4271 = vsel %vm3820, %v4269, %v4270
  %v4272 = vrot.slane %v4217, 6
  %v4273 = vrot.slane %v4218, 6
  %v4274 = vsel %vm3820, %v4272, %v4273
  %v4275 = vrot.slane %v4219, 6
  %v4276 = vrot.slane %v4220, 6
  %v4277 = vsel %vm3820, %v4275, %v4276
  %v4278 = vrot.slane %v4221, 6
  %v4279 = vrot.slane %v4222, 6
  %v4280 = vsel %vm3820, %v4278, %v4279
  %v4281 = vrot.slane %v4223, 6
  %v4282 = vrot.slane %v4224, 6
  %v4283 = vsel %vm3820, %v4281, %v4282
  %v4284 = vrot.slane %v4225, 6
  %v4285 = vrot.slane %v4226, 6
  %v4286 = vsel %vm3820, %v4284, %v4285
  %v4287 = vrot.slane %v4227, 6
  %v4288 = vrot.slane %v4228, 6
  %v4289 = vsel %vm3820, %v4287, %v4288
  %v4290 = vrot.slane %v4229, 6
  %v4291 = vrot.slane %v4230, 6
  %v4292 = vsel %vm3820, %v4290, %v4291
  %v4293 = vrot.slane %v4231, 6
  %v4294 = vrot.slane %v4232, 6
  %v4295 = vsel %vm3820, %v4293, %v4294
  %v4296 = vrot.slane %v4233, 6
  %v4297 = vrot.slane %v4234, 6
  %v4298 = vsel %vm3820, %v4296, %v4297
  %v4299 = vrot.slane %v4235, 6
  %v4300 = vrot.slane %v4236, 6
  %v4301 = vsel %vm3820, %v4299, %v4300
  %4302 = vrot.lane.b32.xlu0 %v4263, 64
  %v4303 = vpop.permute.xlu0 %4302
  %4304 = vrot.lane.b32.xlu0 %v4265, 64
  %v4305 = vpop.permute.xlu0 %4304
  %4306 = vrot.lane.b32.xlu0 %v4266, 64
  %v4307 = vpop.permute.xlu0 %4306
  %4308 = vrot.lane.b32.xlu0 %v4268, 64
  %v4309 = vpop.permute.xlu0 %4308
  %4310 = vrot.lane.b32.xlu0 %v4269, 64
  %v4311 = vpop.permute.xlu0 %4310
  %4312 = vrot.lane.b32.xlu0 %v4271, 64
  %v4313 = vpop.permute.xlu0 %4312
  %4314 = vrot.lane.b32.xlu0 %v4272, 64
  %v4315 = vpop.permute.xlu0 %4314
  %4316 = vrot.lane.b32.xlu0 %v4274, 64
  %v4317 = vpop.permute.xlu0 %4316
  %4318 = vrot.lane.b32.xlu0 %v4275, 64
  %v4319 = vpop.permute.xlu0 %4318
  %4320 = vrot.lane.b32.xlu0 %v4277, 64
  %v4321 = vpop.permute.xlu0 %4320
  %4322 = vrot.lane.b32.xlu0 %v4278, 64
  %v4323 = vpop.permute.xlu0 %4322
  %4324 = vrot.lane.b32.xlu0 %v4280, 64
  %v4325 = vpop.permute.xlu0 %4324
  %4326 = vrot.lane.b32.xlu0 %v4281, 64
  %v4327 = vpop.permute.xlu0 %4326
  %4328 = vrot.lane.b32.xlu0 %v4283, 64
  %v4329 = vpop.permute.xlu0 %4328
  %4330 = vrot.lane.b32.xlu0 %v4284, 64
  %v4331 = vpop.permute.xlu0 %4330
  %4332 = vrot.lane.b32.xlu0 %v4286, 64
  %v4333 = vpop.permute.xlu0 %4332
  %4334 = vrot.lane.b32.xlu0 %v4287, 64
  %v4335 = vpop.permute.xlu0 %4334
  %4336 = vrot.lane.b32.xlu0 %v4289, 64
  %v4337 = vpop.permute.xlu0 %4336
  %4338 = vrot.lane.b32.xlu0 %v4290, 64
  %v4339 = vpop.permute.xlu0 %4338
  %4340 = vrot.lane.b32.xlu0 %v4292, 64
  %v4341 = vpop.permute.xlu0 %4340
  %4342 = vrot.lane.b32.xlu0 %v4293, 64
  %v4343 = vpop.permute.xlu0 %4342
  %4344 = vrot.lane.b32.xlu0 %v4295, 64
  %v4345 = vpop.permute.xlu0 %4344
  %4346 = vrot.lane.b32.xlu0 %v4296, 64
  %v4347 = vpop.permute.xlu0 %4346
  %4348 = vrot.lane.b32.xlu0 %v4298, 64
  %v4349 = vpop.permute.xlu0 %4348
  %4350 = vrot.lane.b32.xlu0 %v4299, 64
  %v4351 = vpop.permute.xlu0 %4350
  %4352 = vrot.lane.b32.xlu0 %v4301, 64
  %v4353 = vpop.permute.xlu0 %4352
  %v4380 = vadd.f32 %v4185, %v4303
  %v4381 = vadd.f32 %v4186, %v4305
  %v4382 = vadd.f32 %v4187, %v4307
  %v4383 = vadd.f32 %v4188, %v4309
  %v4384 = vadd.f32 %v4189, %v4311
  %v4385 = vadd.f32 %v4190, %v4313
  %v4386 = vadd.f32 %v4191, %v4315
  %v4387 = vadd.f32 %v4192, %v4317
  %v4388 = vadd.f32 %v4193, %v4319
  %v4389 = vadd.f32 %v4194, %v4321
  %v4390 = vadd.f32 %v4195, %v4323
  %v4391 = vadd.f32 %v4196, %v4325
  %v4392 = vadd.f32 %v4197, %v4327
  %v4393 = vadd.f32 %v4198, %v4329
  %v4394 = vadd.f32 %v4199, %v4331
  %v4395 = vadd.f32 %v4200, %v4333
  %v4396 = vadd.f32 %v4201, %v4335
  %v4397 = vadd.f32 %v4202, %v4337
  %v4398 = vadd.f32 %v4203, %v4339
  %v4399 = vadd.f32 %v4204, %v4341
  %v4400 = vadd.f32 %v4205, %v4343
  %v4401 = vadd.f32 %v4206, %v4345
  %v4402 = vadd.f32 %v4207, %v4347
  %v4403 = vadd.f32 %v4208, %v4349
  %v4404 = vadd.f32 %v4209, %v4351
  %v4405 = vadd.f32 %v4210, %v4353
  %4406 = vrot.lane.b32.xlu0 %v2708, 32
  %v4407 = vpop.permute.xlu0 %4406
  %v4409 = vadd.f32 %v4380, %v4407
  %v4410 = vadd.f32 %v4381, %v4407
  %v4411 = vadd.f32 %v4382, %v4407
  %v4412 = vadd.f32 %v4383, %v4407
  %v4413 = vadd.f32 %v4384, %v4407
  %v4414 = vadd.f32 %v4385, %v4407
  %v4415 = vadd.f32 %v4386, %v4407
  %v4416 = vadd.f32 %v4387, %v4407
  %v4417 = vadd.f32 %v4388, %v4407
  %v4418 = vadd.f32 %v4389, %v4407
  %v4419 = vadd.f32 %v4390, %v4407
  %v4420 = vadd.f32 %v4391, %v4407
  %v4421 = vadd.f32 %v4392, %v4407
  %v4422 = vadd.f32 %v4393, %v4407
  %v4423 = vadd.f32 %v4394, %v4407
  %v4424 = vadd.f32 %v4395, %v4407
  %v4425 = vadd.f32 %v4396, %v4407
  %v4426 = vadd.f32 %v4397, %v4407
  %v4427 = vadd.f32 %v4398, %v4407
  %v4428 = vadd.f32 %v4399, %v4407
  %v4429 = vadd.f32 %v4400, %v4407
  %v4430 = vadd.f32 %v4401, %v4407
  %v4431 = vadd.f32 %v4402, %v4407
  %v4432 = vadd.f32 %v4403, %v4407
  %v4433 = vadd.f32 %v4404, %v4407
  %v4434 = vadd.f32 %v4405, %v4407
  %v4435 = vmul.f32 %v4409, 0.5
  %v4436 = vmul.f32 %v4410, 0.5
  %v4437 = vmul.f32 %v4411, 0.5
  %v4438 = vmul.f32 %v4412, 0.5
  %v4439 = vmul.f32 %v4413, 0.5
  %v4440 = vmul.f32 %v4414, 0.5
  %v4441 = vmul.f32 %v4415, 0.5
  %v4442 = vmul.f32 %v4416, 0.5
  %v4443 = vmul.f32 %v4417, 0.5
  %v4444 = vmul.f32 %v4418, 0.5
  %v4445 = vmul.f32 %v4419, 0.5
  %v4446 = vmul.f32 %v4420, 0.5
  %v4447 = vmul.f32 %v4421, 0.5
  %v4448 = vmul.f32 %v4422, 0.5
  %v4449 = vmul.f32 %v4423, 0.5
  %v4450 = vmul.f32 %v4424, 0.5
  %v4451 = vmul.f32 %v4425, 0.5
  %v4452 = vmul.f32 %v4426, 0.5
  %v4453 = vmul.f32 %v4427, 0.5
  %v4454 = vmul.f32 %v4428, 0.5
  %v4455 = vmul.f32 %v4429, 0.5
  %v4456 = vmul.f32 %v4430, 0.5
  %v4457 = vmul.f32 %v4431, 0.5
  %v4458 = vmul.f32 %v4432, 0.5
  %v4459 = vmul.f32 %v4433, 0.5
  %v4460 = vmul.f32 %v4434, 0.5
  %v4461 = vmul.f32 %v4409, 0.70710677
  %v4462 = vmul.f32 %v4410, 0.70710677
  %v4463 = vmul.f32 %v4411, 0.70710677
  %v4464 = vmul.f32 %v4412, 0.70710677
  %v4465 = vmul.f32 %v4413, 0.70710677
  %v4466 = vmul.f32 %v4414, 0.70710677
  %v4467 = vmul.f32 %v4415, 0.70710677
  %v4468 = vmul.f32 %v4416, 0.70710677
  %v4469 = vmul.f32 %v4417, 0.70710677
  %v4470 = vmul.f32 %v4418, 0.70710677
  %v4471 = vmul.f32 %v4419, 0.70710677
  %v4472 = vmul.f32 %v4420, 0.70710677
  %v4473 = vmul.f32 %v4421, 0.70710677
  %v4474 = vmul.f32 %v4422, 0.70710677
  %v4475 = vmul.f32 %v4423, 0.70710677
  %v4476 = vmul.f32 %v4424, 0.70710677
  %v4477 = vmul.f32 %v4425, 0.70710677
  %v4478 = vmul.f32 %v4426, 0.70710677
  %v4479 = vmul.f32 %v4427, 0.70710677
  %v4480 = vmul.f32 %v4428, 0.70710677
  %v4481 = vmul.f32 %v4429, 0.70710677
  %v4482 = vmul.f32 %v4430, 0.70710677
  %v4483 = vmul.f32 %v4431, 0.70710677
  %v4484 = vmul.f32 %v4432, 0.70710677
  %v4485 = vmul.f32 %v4433, 0.70710677
  %v4486 = vmul.f32 %v4434, 0.70710677
  %vm4487 = vcmp.ge.f32.partialorder %v4461, 0.0
  %vm4488 = vcmp.ge.f32.partialorder %v4462, 0.0
  %vm4489 = vcmp.ge.f32.partialorder %v4463, 0.0
  %vm4490 = vcmp.ge.f32.partialorder %v4464, 0.0
  %vm4491 = vcmp.ge.f32.partialorder %v4465, 0.0
  %vm4492 = vcmp.ge.f32.partialorder %v4466, 0.0
  %vm4493 = vcmp.ge.f32.partialorder %v4467, 0.0
  %vm4494 = vcmp.ge.f32.partialorder %v4468, 0.0
  %vm4495 = vcmp.ge.f32.partialorder %v4469, 0.0
  %vm4496 = vcmp.ge.f32.partialorder %v4470, 0.0
  %vm4497 = vcmp.ge.f32.partialorder %v4471, 0.0
  %vm4498 = vcmp.ge.f32.partialorder %v4472, 0.0
  %vm4499 = vcmp.ge.f32.partialorder %v4473, 0.0
  %vm4500 = vcmp.ge.f32.partialorder %v4474, 0.0
  %vm4501 = vcmp.ge.f32.partialorder %v4475, 0.0
  %vm4502 = vcmp.ge.f32.partialorder %v4476, 0.0
  %vm4503 = vcmp.ge.f32.partialorder %v4477, 0.0
  %vm4504 = vcmp.ge.f32.partialorder %v4478, 0.0
  %vm4505 = vcmp.ge.f32.partialorder %v4479, 0.0
  %vm4506 = vcmp.ge.f32.partialorder %v4480, 0.0
  %vm4507 = vcmp.ge.f32.partialorder %v4481, 0.0
  %vm4508 = vcmp.ge.f32.partialorder %v4482, 0.0
  %vm4509 = vcmp.ge.f32.partialorder %v4483, 0.0
  %vm4510 = vcmp.ge.f32.partialorder %v4484, 0.0
  %vm4511 = vcmp.ge.f32.partialorder %v4485, 0.0
  %vm4512 = vcmp.ge.f32.partialorder %v4486, 0.0
  %v4513 = vsel %vm4487, 1.0, -1.0
  %v4514 = vsel %vm4488, 1.0, -1.0
  %v4515 = vsel %vm4489, 1.0, -1.0
  %v4516 = vsel %vm4490, 1.0, -1.0
  %v4517 = vsel %vm4491, 1.0, -1.0
  %v4518 = vsel %vm4492, 1.0, -1.0
  %v4519 = vsel %vm4493, 1.0, -1.0
  %v4520 = vsel %vm4494, 1.0, -1.0
  %v4521 = vsel %vm4495, 1.0, -1.0
  %v4522 = vsel %vm4496, 1.0, -1.0
  %v4523 = vsel %vm4497, 1.0, -1.0
  %v4524 = vsel %vm4498, 1.0, -1.0
  %v4525 = vsel %vm4499, 1.0, -1.0
  %v4526 = vsel %vm4500, 1.0, -1.0
  %v4527 = vsel %vm4501, 1.0, -1.0
  %v4528 = vsel %vm4502, 1.0, -1.0
  %v4529 = vsel %vm4503, 1.0, -1.0
  %v4530 = vsel %vm4504, 1.0, -1.0
  %v4531 = vsel %vm4505, 1.0, -1.0
  %v4532 = vsel %vm4506, 1.0, -1.0
  %v4533 = vsel %vm4507, 1.0, -1.0
  %v4534 = vsel %vm4508, 1.0, -1.0
  %v4535 = vsel %vm4509, 1.0, -1.0
  %v4536 = vsel %vm4510, 1.0, -1.0
  %v4537 = vsel %vm4511, 1.0, -1.0
  %v4538 = vsel %vm4512, 1.0, -1.0
  %v4539 = vand.u32 2147483647, %v4461
  %v4540 = vand.u32 2147483647, %v4462
  %v4541 = vand.u32 2147483647, %v4463
  %v4542 = vand.u32 2147483647, %v4464
  %v4543 = vand.u32 2147483647, %v4465
  %v4544 = vand.u32 2147483647, %v4466
  %v4545 = vand.u32 2147483647, %v4467
  %v4546 = vand.u32 2147483647, %v4468
  %v4547 = vand.u32 2147483647, %v4469
  %v4548 = vand.u32 2147483647, %v4470
  %v4549 = vand.u32 2147483647, %v4471
  %v4550 = vand.u32 2147483647, %v4472
  %v4551 = vand.u32 2147483647, %v4473
  %v4552 = vand.u32 2147483647, %v4474
  %v4553 = vand.u32 2147483647, %v4475
  %v4554 = vand.u32 2147483647, %v4476
  %v4555 = vand.u32 2147483647, %v4477
  %v4556 = vand.u32 2147483647, %v4478
  %v4557 = vand.u32 2147483647, %v4479
  %v4558 = vand.u32 2147483647, %v4480
  %v4559 = vand.u32 2147483647, %v4481
  %v4560 = vand.u32 2147483647, %v4482
  %v4561 = vand.u32 2147483647, %v4483
  %v4562 = vand.u32 2147483647, %v4484
  %v4563 = vand.u32 2147483647, %v4485
  %v4564 = vand.u32 2147483647, %v4486
  %v4565 = vmul.f32 %v4539, 0.3275911
  %v4566 = vmul.f32 %v4540, 0.3275911
  %v4567 = vmul.f32 %v4541, 0.3275911
  %v4568 = vmul.f32 %v4542, 0.3275911
  %v4569 = vmul.f32 %v4543, 0.3275911
  %v4570 = vmul.f32 %v4544, 0.3275911
  %v4571 = vmul.f32 %v4545, 0.3275911
  %v4572 = vmul.f32 %v4546, 0.3275911
  %v4573 = vmul.f32 %v4547, 0.3275911
  %v4574 = vmul.f32 %v4548, 0.3275911
  %v4575 = vmul.f32 %v4549, 0.3275911
  %v4576 = vmul.f32 %v4550, 0.3275911
  %v4577 = vmul.f32 %v4551, 0.3275911
  %v4578 = vmul.f32 %v4552, 0.3275911
  %v4579 = vmul.f32 %v4553, 0.3275911
  %v4580 = vmul.f32 %v4554, 0.3275911
  %v4581 = vmul.f32 %v4555, 0.3275911
  %v4582 = vmul.f32 %v4556, 0.3275911
  %v4583 = vmul.f32 %v4557, 0.3275911
  %v4584 = vmul.f32 %v4558, 0.3275911
  %v4585 = vmul.f32 %v4559, 0.3275911
  %v4586 = vmul.f32 %v4560, 0.3275911
  %v4587 = vmul.f32 %v4561, 0.3275911
  %v4588 = vmul.f32 %v4562, 0.3275911
  %v4589 = vmul.f32 %v4563, 0.3275911
  %v4590 = vmul.f32 %v4564, 0.3275911
  %v4591 = vadd.f32 %v4565, 1.0
  %v4592 = vadd.f32 %v4566, 1.0
  %v4593 = vadd.f32 %v4567, 1.0
  %v4594 = vadd.f32 %v4568, 1.0
  %v4595 = vadd.f32 %v4569, 1.0
  %v4596 = vadd.f32 %v4570, 1.0
  %v4597 = vadd.f32 %v4571, 1.0
  %v4598 = vadd.f32 %v4572, 1.0
  %v4599 = vadd.f32 %v4573, 1.0
  %v4600 = vadd.f32 %v4574, 1.0
  %v4601 = vadd.f32 %v4575, 1.0
  %v4602 = vadd.f32 %v4576, 1.0
  %v4603 = vadd.f32 %v4577, 1.0
  %v4604 = vadd.f32 %v4578, 1.0
  %v4605 = vadd.f32 %v4579, 1.0
  %v4606 = vadd.f32 %v4580, 1.0
  %v4607 = vadd.f32 %v4581, 1.0
  %v4608 = vadd.f32 %v4582, 1.0
  %v4609 = vadd.f32 %v4583, 1.0
  %v4610 = vadd.f32 %v4584, 1.0
  %v4611 = vadd.f32 %v4585, 1.0
  %v4612 = vadd.f32 %v4586, 1.0
  %v4613 = vadd.f32 %v4587, 1.0
  %v4614 = vadd.f32 %v4588, 1.0
  %v4615 = vadd.f32 %v4589, 1.0
  %v4616 = vadd.f32 %v4590, 1.0
  %v4617 = vrcp.pop %v4591
  %v4618 = vrcp.pop %v4592
  %v4619 = vrcp.pop %v4593
  %v4620 = vrcp.pop %v4594
  %v4621 = vrcp.pop %v4595
  %v4622 = vrcp.pop %v4596
  %v4623 = vrcp.pop %v4597
  %v4624 = vrcp.pop %v4598
  %v4625 = vrcp.pop %v4599
  %v4626 = vrcp.pop %v4600
  %v4627 = vrcp.pop %v4601
  %v4628 = vrcp.pop %v4602
  %v4629 = vrcp.pop %v4603
  %v4630 = vrcp.pop %v4604
  %v4631 = vrcp.pop %v4605
  %v4632 = vrcp.pop %v4606
  %v4633 = vrcp.pop %v4607
  %v4634 = vrcp.pop %v4608
  %v4635 = vrcp.pop %v4609
  %v4636 = vrcp.pop %v4610
  %v4637 = vrcp.pop %v4611
  %v4638 = vrcp.pop %v4612
  %v4639 = vrcp.pop %v4613
  %v4640 = vrcp.pop %v4614
  %v4641 = vrcp.pop %v4615
  %v4642 = vrcp.pop %v4616
  %v4643 = vmul.f32 %v4617, 1.0614054
  %v4644 = vmul.f32 %v4618, 1.0614054
  %v4645 = vmul.f32 %v4619, 1.0614054
  %v4646 = vmul.f32 %v4620, 1.0614054
  %v4647 = vmul.f32 %v4621, 1.0614054
  %v4648 = vmul.f32 %v4622, 1.0614054
  %v4649 = vmul.f32 %v4623, 1.0614054
  %v4650 = vmul.f32 %v4624, 1.0614054
  %v4651 = vmul.f32 %v4625, 1.0614054
  %v4652 = vmul.f32 %v4626, 1.0614054
  %v4653 = vmul.f32 %v4627, 1.0614054
  %v4654 = vmul.f32 %v4628, 1.0614054
  %v4655 = vmul.f32 %v4629, 1.0614054
  %v4656 = vmul.f32 %v4630, 1.0614054
  %v4657 = vmul.f32 %v4631, 1.0614054
  %v4658 = vmul.f32 %v4632, 1.0614054
  %v4659 = vmul.f32 %v4633, 1.0614054
  %v4660 = vmul.f32 %v4634, 1.0614054
  %v4661 = vmul.f32 %v4635, 1.0614054
  %v4662 = vmul.f32 %v4636, 1.0614054
  %v4663 = vmul.f32 %v4637, 1.0614054
  %v4664 = vmul.f32 %v4638, 1.0614054
  %v4665 = vmul.f32 %v4639, 1.0614054
  %v4666 = vmul.f32 %v4640, 1.0614054
  %v4667 = vmul.f32 %v4641, 1.0614054
  %v4668 = vmul.f32 %v4642, 1.0614054
  %v4669 = vadd.f32 %v4643, -1.4531521
  %v4670 = vadd.f32 %v4644, -1.4531521
  %v4671 = vadd.f32 %v4645, -1.4531521
  %v4672 = vadd.f32 %v4646, -1.4531521
  %v4673 = vadd.f32 %v4647, -1.4531521
  %v4674 = vadd.f32 %v4648, -1.4531521
  %v4675 = vadd.f32 %v4649, -1.4531521
  %v4676 = vadd.f32 %v4650, -1.4531521
  %v4677 = vadd.f32 %v4651, -1.4531521
  %v4678 = vadd.f32 %v4652, -1.4531521
  %v4679 = vadd.f32 %v4653, -1.4531521
  %v4680 = vadd.f32 %v4654, -1.4531521
  %v4681 = vadd.f32 %v4655, -1.4531521
  %v4682 = vadd.f32 %v4656, -1.4531521
  %v4683 = vadd.f32 %v4657, -1.4531521
  %v4684 = vadd.f32 %v4658, -1.4531521
  %v4685 = vadd.f32 %v4659, -1.4531521
  %v4686 = vadd.f32 %v4660, -1.4531521
  %v4687 = vadd.f32 %v4661, -1.4531521
  %v4688 = vadd.f32 %v4662, -1.4531521
  %v4689 = vadd.f32 %v4663, -1.4531521
  %v4690 = vadd.f32 %v4664, -1.4531521
  %v4691 = vadd.f32 %v4665, -1.4531521
  %v4692 = vadd.f32 %v4666, -1.4531521
  %v4693 = vadd.f32 %v4667, -1.4531521
  %v4694 = vadd.f32 %v4668, -1.4531521
  %v4695 = vmul.f32 %v4617, %v4669
  %v4696 = vmul.f32 %v4618, %v4670
  %v4697 = vmul.f32 %v4619, %v4671
  %v4698 = vmul.f32 %v4620, %v4672
  %v4699 = vmul.f32 %v4621, %v4673
  %v4700 = vmul.f32 %v4622, %v4674
  %v4701 = vmul.f32 %v4623, %v4675
  %v4702 = vmul.f32 %v4624, %v4676
  %v4703 = vmul.f32 %v4625, %v4677
  %v4704 = vmul.f32 %v4626, %v4678
  %v4705 = vmul.f32 %v4627, %v4679
  %v4706 = vmul.f32 %v4628, %v4680
  %v4707 = vmul.f32 %v4629, %v4681
  %v4708 = vmul.f32 %v4630, %v4682
  %v4709 = vmul.f32 %v4631, %v4683
  %v4710 = vmul.f32 %v4632, %v4684
  %v4711 = vmul.f32 %v4633, %v4685
  %v4712 = vmul.f32 %v4634, %v4686
  %v4713 = vmul.f32 %v4635, %v4687
  %v4714 = vmul.f32 %v4636, %v4688
  %v4715 = vmul.f32 %v4637, %v4689
  %v4716 = vmul.f32 %v4638, %v4690
  %v4717 = vmul.f32 %v4639, %v4691
  %v4718 = vmul.f32 %v4640, %v4692
  %v4719 = vmul.f32 %v4641, %v4693
  %v4720 = vmul.f32 %v4642, %v4694
  %v4721 = vadd.f32 %v4695, 1.4214138
  %v4722 = vadd.f32 %v4696, 1.4214138
  %v4723 = vadd.f32 %v4697, 1.4214138
  %v4724 = vadd.f32 %v4698, 1.4214138
  %v4725 = vadd.f32 %v4699, 1.4214138
  %v4726 = vadd.f32 %v4700, 1.4214138
  %v4727 = vadd.f32 %v4701, 1.4214138
  %v4728 = vadd.f32 %v4702, 1.4214138
  %v4729 = vadd.f32 %v4703, 1.4214138
  %v4730 = vadd.f32 %v4704, 1.4214138
  %v4731 = vadd.f32 %v4705, 1.4214138
  %v4732 = vadd.f32 %v4706, 1.4214138
  %v4733 = vadd.f32 %v4707, 1.4214138
  %v4734 = vadd.f32 %v4708, 1.4214138
  %v4735 = vadd.f32 %v4709, 1.4214138
  %v4736 = vadd.f32 %v4710, 1.4214138
  %v4737 = vadd.f32 %v4711, 1.4214138
  %v4738 = vadd.f32 %v4712, 1.4214138
  %v4739 = vadd.f32 %v4713, 1.4214138
  %v4740 = vadd.f32 %v4714, 1.4214138
  %v4741 = vadd.f32 %v4715, 1.4214138
  %v4742 = vadd.f32 %v4716, 1.4214138
  %v4743 = vadd.f32 %v4717, 1.4214138
  %v4744 = vadd.f32 %v4718, 1.4214138
  %v4745 = vadd.f32 %v4719, 1.4214138
  %v4746 = vadd.f32 %v4720, 1.4214138
  %v4747 = vmul.f32 %v4617, %v4721
  %v4748 = vmul.f32 %v4618, %v4722
  %v4749 = vmul.f32 %v4619, %v4723
  %v4750 = vmul.f32 %v4620, %v4724
  %v4751 = vmul.f32 %v4621, %v4725
  %v4752 = vmul.f32 %v4622, %v4726
  %v4753 = vmul.f32 %v4623, %v4727
  %v4754 = vmul.f32 %v4624, %v4728
  %v4755 = vmul.f32 %v4625, %v4729
  %v4756 = vmul.f32 %v4626, %v4730
  %v4757 = vmul.f32 %v4627, %v4731
  %v4758 = vmul.f32 %v4628, %v4732
  %v4759 = vmul.f32 %v4629, %v4733
  %v4760 = vmul.f32 %v4630, %v4734
  %v4761 = vmul.f32 %v4631, %v4735
  %v4762 = vmul.f32 %v4632, %v4736
  %v4763 = vmul.f32 %v4633, %v4737
  %v4764 = vmul.f32 %v4634, %v4738
  %v4765 = vmul.f32 %v4635, %v4739
  %v4766 = vmul.f32 %v4636, %v4740
  %v4767 = vmul.f32 %v4637, %v4741
  %v4768 = vmul.f32 %v4638, %v4742
  %v4769 = vmul.f32 %v4639, %v4743
  %v4770 = vmul.f32 %v4640, %v4744
  %v4771 = vmul.f32 %v4641, %v4745
  %v4772 = vmul.f32 %v4642, %v4746
  %v4773 = vadd.f32 %v4747, -0.28449672
  %v4774 = vadd.f32 %v4748, -0.28449672
  %v4775 = vadd.f32 %v4749, -0.28449672
  %v4776 = vadd.f32 %v4750, -0.28449672
  %v4777 = vadd.f32 %v4751, -0.28449672
  %v4778 = vadd.f32 %v4752, -0.28449672
  %v4779 = vadd.f32 %v4753, -0.28449672
  %v4780 = vadd.f32 %v4754, -0.28449672
  %v4781 = vadd.f32 %v4755, -0.28449672
  %v4782 = vadd.f32 %v4756, -0.28449672
  %v4783 = vadd.f32 %v4757, -0.28449672
  %v4784 = vadd.f32 %v4758, -0.28449672
  %v4785 = vadd.f32 %v4759, -0.28449672
  %v4786 = vadd.f32 %v4760, -0.28449672
  %v4787 = vadd.f32 %v4761, -0.28449672
  %v4788 = vadd.f32 %v4762, -0.28449672
  %v4789 = vadd.f32 %v4763, -0.28449672
  %v4790 = vadd.f32 %v4764, -0.28449672
  %v4791 = vadd.f32 %v4765, -0.28449672
  %v4792 = vadd.f32 %v4766, -0.28449672
  %v4793 = vadd.f32 %v4767, -0.28449672
  %v4794 = vadd.f32 %v4768, -0.28449672
  %v4795 = vadd.f32 %v4769, -0.28449672
  %v4796 = vadd.f32 %v4770, -0.28449672
  %v4797 = vadd.f32 %v4771, -0.28449672
  %v4798 = vadd.f32 %v4772, -0.28449672
  %v4799 = vmul.f32 %v4617, %v4773
  %v4800 = vmul.f32 %v4618, %v4774
  %v4801 = vmul.f32 %v4619, %v4775
  %v4802 = vmul.f32 %v4620, %v4776
  %v4803 = vmul.f32 %v4621, %v4777
  %v4804 = vmul.f32 %v4622, %v4778
  %v4805 = vmul.f32 %v4623, %v4779
  %v4806 = vmul.f32 %v4624, %v4780
  %v4807 = vmul.f32 %v4625, %v4781
  %v4808 = vmul.f32 %v4626, %v4782
  %v4809 = vmul.f32 %v4627, %v4783
  %v4810 = vmul.f32 %v4628, %v4784
  %v4811 = vmul.f32 %v4629, %v4785
  %v4812 = vmul.f32 %v4630, %v4786
  %v4813 = vmul.f32 %v4631, %v4787
  %v4814 = vmul.f32 %v4632, %v4788
  %v4815 = vmul.f32 %v4633, %v4789
  %v4816 = vmul.f32 %v4634, %v4790
  %v4817 = vmul.f32 %v4635, %v4791
  %v4818 = vmul.f32 %v4636, %v4792
  %v4819 = vmul.f32 %v4637, %v4793
  %v4820 = vmul.f32 %v4638, %v4794
  %v4821 = vmul.f32 %v4639, %v4795
  %v4822 = vmul.f32 %v4640, %v4796
  %v4823 = vmul.f32 %v4641, %v4797
  %v4824 = vmul.f32 %v4642, %v4798
  %v4825 = vadd.f32 %v4799, 0.2548296
  %v4826 = vadd.f32 %v4800, 0.2548296
  %v4827 = vadd.f32 %v4801, 0.2548296
  %v4828 = vadd.f32 %v4802, 0.2548296
  %v4829 = vadd.f32 %v4803, 0.2548296
  %v4830 = vadd.f32 %v4804, 0.2548296
  %v4831 = vadd.f32 %v4805, 0.2548296
  %v4832 = vadd.f32 %v4806, 0.2548296
  %v4833 = vadd.f32 %v4807, 0.2548296
  %v4834 = vadd.f32 %v4808, 0.2548296
  %v4835 = vadd.f32 %v4809, 0.2548296
  %v4836 = vadd.f32 %v4810, 0.2548296
  %v4837 = vadd.f32 %v4811, 0.2548296
  %v4838 = vadd.f32 %v4812, 0.2548296
  %v4839 = vadd.f32 %v4813, 0.2548296
  %v4840 = vadd.f32 %v4814, 0.2548296
  %v4841 = vadd.f32 %v4815, 0.2548296
  %v4842 = vadd.f32 %v4816, 0.2548296
  %v4843 = vadd.f32 %v4817, 0.2548296
  %v4844 = vadd.f32 %v4818, 0.2548296
  %v4845 = vadd.f32 %v4819, 0.2548296
  %v4846 = vadd.f32 %v4820, 0.2548296
  %v4847 = vadd.f32 %v4821, 0.2548296
  %v4848 = vadd.f32 %v4822, 0.2548296
  %v4849 = vadd.f32 %v4823, 0.2548296
  %v4850 = vadd.f32 %v4824, 0.2548296
  %v4851 = vmul.f32 %v4617, %v4825
  %v4852 = vmul.f32 %v4618, %v4826
  %v4853 = vmul.f32 %v4619, %v4827
  %v4854 = vmul.f32 %v4620, %v4828
  %v4855 = vmul.f32 %v4621, %v4829
  %v4856 = vmul.f32 %v4622, %v4830
  %v4857 = vmul.f32 %v4623, %v4831
  %v4858 = vmul.f32 %v4624, %v4832
  %v4859 = vmul.f32 %v4625, %v4833
  %v4860 = vmul.f32 %v4626, %v4834
  %v4861 = vmul.f32 %v4627, %v4835
  %v4862 = vmul.f32 %v4628, %v4836
  %v4863 = vmul.f32 %v4629, %v4837
  %v4864 = vmul.f32 %v4630, %v4838
  %v4865 = vmul.f32 %v4631, %v4839
  %v4866 = vmul.f32 %v4632, %v4840
  %v4867 = vmul.f32 %v4633, %v4841
  %v4868 = vmul.f32 %v4634, %v4842
  %v4869 = vmul.f32 %v4635, %v4843
  %v4870 = vmul.f32 %v4636, %v4844
  %v4871 = vmul.f32 %v4637, %v4845
  %v4872 = vmul.f32 %v4638, %v4846
  %v4873 = vmul.f32 %v4639, %v4847
  %v4874 = vmul.f32 %v4640, %v4848
  %v4875 = vmul.f32 %v4641, %v4849
  %v4876 = vmul.f32 %v4642, %v4850
  %v4877 = vsub.f32 0.0, %v4539
  %v4878 = vsub.f32 0.0, %v4540
  %v4879 = vsub.f32 0.0, %v4541
  %v4880 = vsub.f32 0.0, %v4542
  %v4881 = vsub.f32 0.0, %v4543
  %v4882 = vsub.f32 0.0, %v4544
  %v4883 = vsub.f32 0.0, %v4545
  %v4884 = vsub.f32 0.0, %v4546
  %v4885 = vsub.f32 0.0, %v4547
  %v4886 = vsub.f32 0.0, %v4548
  %v4887 = vsub.f32 0.0, %v4549
  %v4888 = vsub.f32 0.0, %v4550
  %v4889 = vsub.f32 0.0, %v4551
  %v4890 = vsub.f32 0.0, %v4552
  %v4891 = vsub.f32 0.0, %v4553
  %v4892 = vsub.f32 0.0, %v4554
  %v4893 = vsub.f32 0.0, %v4555
  %v4894 = vsub.f32 0.0, %v4556
  %v4895 = vsub.f32 0.0, %v4557
  %v4896 = vsub.f32 0.0, %v4558
  %v4897 = vsub.f32 0.0, %v4559
  %v4898 = vsub.f32 0.0, %v4560
  %v4899 = vsub.f32 0.0, %v4561
  %v4900 = vsub.f32 0.0, %v4562
  %v4901 = vsub.f32 0.0, %v4563
  %v4902 = vsub.f32 0.0, %v4564
  %v4903 = vmul.f32 %v4877, %v4539
  %v4904 = vmul.f32 %v4878, %v4540
  %v4905 = vmul.f32 %v4879, %v4541
  %v4906 = vmul.f32 %v4880, %v4542
  %v4907 = vmul.f32 %v4881, %v4543
  %v4908 = vmul.f32 %v4882, %v4544
  %v4909 = vmul.f32 %v4883, %v4545
  %v4910 = vmul.f32 %v4884, %v4546
  %v4911 = vmul.f32 %v4885, %v4547
  %v4912 = vmul.f32 %v4886, %v4548
  %v4913 = vmul.f32 %v4887, %v4549
  %v4914 = vmul.f32 %v4888, %v4550
  %v4915 = vmul.f32 %v4889, %v4551
  %v4916 = vmul.f32 %v4890, %v4552
  %v4917 = vmul.f32 %v4891, %v4553
  %v4918 = vmul.f32 %v4892, %v4554
  %v4919 = vmul.f32 %v4893, %v4555
  %v4920 = vmul.f32 %v4894, %v4556
  %v4921 = vmul.f32 %v4895, %v4557
  %v4922 = vmul.f32 %v4896, %v4558
  %v4923 = vmul.f32 %v4897, %v4559
  %v4924 = vmul.f32 %v4898, %v4560
  %v4925 = vmul.f32 %v4899, %v4561
  %v4926 = vmul.f32 %v4900, %v4562
  %v4927 = vmul.f32 %v4901, %v4563
  %v4928 = vmul.f32 %v4902, %v4564
  %v4929 = vmul.f32 %v4903, 1.442695
  %v4930 = vpow.pop %v4929
  %v4931 = vmul.f32 %v4904, 1.442695
  %v4932 = vpow.pop %v4931
  %v4933 = vmul.f32 %v4905, 1.442695
  %v4934 = vpow.pop %v4933
  %v4935 = vmul.f32 %v4906, 1.442695
  %v4936 = vpow.pop %v4935
  %v4937 = vmul.f32 %v4907, 1.442695
  %v4938 = vpow.pop %v4937
  %v4939 = vmul.f32 %v4908, 1.442695
  %v4940 = vpow.pop %v4939
  %v4941 = vmul.f32 %v4909, 1.442695
  %v4942 = vpow.pop %v4941
  %v4943 = vmul.f32 %v4910, 1.442695
  %v4944 = vpow.pop %v4943
  %v4945 = vmul.f32 %v4911, 1.442695
  %v4946 = vpow.pop %v4945
  %v4947 = vmul.f32 %v4912, 1.442695
  %v4948 = vpow.pop %v4947
  %v4949 = vmul.f32 %v4913, 1.442695
  %v4950 = vpow.pop %v4949
  %v4951 = vmul.f32 %v4914, 1.442695
  %v4952 = vpow.pop %v4951
  %v4953 = vmul.f32 %v4915, 1.442695
  %v4954 = vpow.pop %v4953
  %v4955 = vmul.f32 %v4916, 1.442695
  %v4956 = vpow.pop %v4955
  %v4957 = vmul.f32 %v4917, 1.442695
  %v4958 = vpow.pop %v4957
  %v4959 = vmul.f32 %v4918, 1.442695
  %v4960 = vpow.pop %v4959
  %v4961 = vmul.f32 %v4919, 1.442695
  %v4962 = vpow.pop %v4961
  %v4963 = vmul.f32 %v4920, 1.442695
  %v4964 = vpow.pop %v4963
  %v4965 = vmul.f32 %v4921, 1.442695
  %v4966 = vpow.pop %v4965
  %v4967 = vmul.f32 %v4922, 1.442695
  %v4968 = vpow.pop %v4967
  %v4969 = vmul.f32 %v4923, 1.442695
  %v4970 = vpow.pop %v4969
  %v4971 = vmul.f32 %v4924, 1.442695
  %v4972 = vpow.pop %v4971
  %v4973 = vmul.f32 %v4925, 1.442695
  %v4974 = vpow.pop %v4973
  %v4975 = vmul.f32 %v4926, 1.442695
  %v4976 = vpow.pop %v4975
  %v4977 = vmul.f32 %v4927, 1.442695
  %v4978 = vpow.pop %v4977
  %v4979 = vmul.f32 %v4928, 1.442695
  %v4980 = vpow.pop %v4979
  %v4981 = vmul.f32 %v4851, %v4930
  %v4982 = vmul.f32 %v4852, %v4932
  %v4983 = vmul.f32 %v4853, %v4934
  %v4984 = vmul.f32 %v4854, %v4936
  %v4985 = vmul.f32 %v4855, %v4938
  %v4986 = vmul.f32 %v4856, %v4940
  %v4987 = vmul.f32 %v4857, %v4942
  %v4988 = vmul.f32 %v4858, %v4944
  %v4989 = vmul.f32 %v4859, %v4946
  %v4990 = vmul.f32 %v4860, %v4948
  %v4991 = vmul.f32 %v4861, %v4950
  %v4992 = vmul.f32 %v4862, %v4952
  %v4993 = vmul.f32 %v4863, %v4954
  %v4994 = vmul.f32 %v4864, %v4956
  %v4995 = vmul.f32 %v4865, %v4958
  %v4996 = vmul.f32 %v4866, %v4960
  %v4997 = vmul.f32 %v4867, %v4962
  %v4998 = vmul.f32 %v4868, %v4964
  %v4999 = vmul.f32 %v4869, %v4966
  %v5000 = vmul.f32 %v4870, %v4968
  %v5001 = vmul.f32 %v4871, %v4970
  %v5002 = vmul.f32 %v4872, %v4972
  %v5003 = vmul.f32 %v4873, %v4974
  %v5004 = vmul.f32 %v4874, %v4976
  %v5005 = vmul.f32 %v4875, %v4978
  %v5006 = vmul.f32 %v4876, %v4980
  %v5007 = vsub.f32 1.0, %v4981
  %v5008 = vsub.f32 1.0, %v4982
  %v5009 = vsub.f32 1.0, %v4983
  %v5010 = vsub.f32 1.0, %v4984
  %v5011 = vsub.f32 1.0, %v4985
  %v5012 = vsub.f32 1.0, %v4986
  %v5013 = vsub.f32 1.0, %v4987
  %v5014 = vsub.f32 1.0, %v4988
  %v5015 = vsub.f32 1.0, %v4989
  %v5016 = vsub.f32 1.0, %v4990
  %v5017 = vsub.f32 1.0, %v4991
  %v5018 = vsub.f32 1.0, %v4992
  %v5019 = vsub.f32 1.0, %v4993
  %v5020 = vsub.f32 1.0, %v4994
  %v5021 = vsub.f32 1.0, %v4995
  %v5022 = vsub.f32 1.0, %v4996
  %v5023 = vsub.f32 1.0, %v4997
  %v5024 = vsub.f32 1.0, %v4998
  %v5025 = vsub.f32 1.0, %v4999
  %v5026 = vsub.f32 1.0, %v5000
  %v5027 = vsub.f32 1.0, %v5001
  %v5028 = vsub.f32 1.0, %v5002
  %v5029 = vsub.f32 1.0, %v5003
  %v5030 = vsub.f32 1.0, %v5004
  %v5031 = vsub.f32 1.0, %v5005
  %v5032 = vsub.f32 1.0, %v5006
  %v5033 = vmul.f32 %v4513, %v5007
  %v5034 = vmul.f32 %v4514, %v5008
  %v5035 = vmul.f32 %v4515, %v5009
  %v5036 = vmul.f32 %v4516, %v5010
  %v5037 = vmul.f32 %v4517, %v5011
  %v5038 = vmul.f32 %v4518, %v5012
  %v5039 = vmul.f32 %v4519, %v5013
  %v5040 = vmul.f32 %v4520, %v5014
  %v5041 = vmul.f32 %v4521, %v5015
  %v5042 = vmul.f32 %v4522, %v5016
  %v5043 = vmul.f32 %v4523, %v5017
  %v5044 = vmul.f32 %v4524, %v5018
  %v5045 = vmul.f32 %v4525, %v5019
  %v5046 = vmul.f32 %v4526, %v5020
  %v5047 = vmul.f32 %v4527, %v5021
  %v5048 = vmul.f32 %v4528, %v5022
  %v5049 = vmul.f32 %v4529, %v5023
  %v5050 = vmul.f32 %v4530, %v5024
  %v5051 = vmul.f32 %v4531, %v5025
  %v5052 = vmul.f32 %v4532, %v5026
  %v5053 = vmul.f32 %v4533, %v5027
  %v5054 = vmul.f32 %v4534, %v5028
  %v5055 = vmul.f32 %v4535, %v5029
  %v5056 = vmul.f32 %v4536, %v5030
  %v5057 = vmul.f32 %v4537, %v5031
  %v5058 = vmul.f32 %v4538, %v5032
  %v5059 = vadd.f32 %v5033, 1.0
  %v5060 = vadd.f32 %v5034, 1.0
  %v5061 = vadd.f32 %v5035, 1.0
  %v5062 = vadd.f32 %v5036, 1.0
  %v5063 = vadd.f32 %v5037, 1.0
  %v5064 = vadd.f32 %v5038, 1.0
  %v5065 = vadd.f32 %v5039, 1.0
  %v5066 = vadd.f32 %v5040, 1.0
  %v5067 = vadd.f32 %v5041, 1.0
  %v5068 = vadd.f32 %v5042, 1.0
  %v5069 = vadd.f32 %v5043, 1.0
  %v5070 = vadd.f32 %v5044, 1.0
  %v5071 = vadd.f32 %v5045, 1.0
  %v5072 = vadd.f32 %v5046, 1.0
  %v5073 = vadd.f32 %v5047, 1.0
  %v5074 = vadd.f32 %v5048, 1.0
  %v5075 = vadd.f32 %v5049, 1.0
  %v5076 = vadd.f32 %v5050, 1.0
  %v5077 = vadd.f32 %v5051, 1.0
  %v5078 = vadd.f32 %v5052, 1.0
  %v5079 = vadd.f32 %v5053, 1.0
  %v5080 = vadd.f32 %v5054, 1.0
  %v5081 = vadd.f32 %v5055, 1.0
  %v5082 = vadd.f32 %v5056, 1.0
  %v5083 = vadd.f32 %v5057, 1.0
  %v5084 = vadd.f32 %v5058, 1.0
  %v5085 = vmul.f32 %v4435, %v5059
  %v5086 = vmul.f32 %v4436, %v5060
  %v5087 = vmul.f32 %v4437, %v5061
  %v5088 = vmul.f32 %v4438, %v5062
  %v5089 = vmul.f32 %v4439, %v5063
  %v5090 = vmul.f32 %v4440, %v5064
  %v5091 = vmul.f32 %v4441, %v5065
  %v5092 = vmul.f32 %v4442, %v5066
  %v5093 = vmul.f32 %v4443, %v5067
  %v5094 = vmul.f32 %v4444, %v5068
  %v5095 = vmul.f32 %v4445, %v5069
  %v5096 = vmul.f32 %v4446, %v5070
  %v5097 = vmul.f32 %v4447, %v5071
  %v5098 = vmul.f32 %v4448, %v5072
  %v5099 = vmul.f32 %v4449, %v5073
  %v5100 = vmul.f32 %v4450, %v5074
  %v5101 = vmul.f32 %v4451, %v5075
  %v5102 = vmul.f32 %v4452, %v5076
  %v5103 = vmul.f32 %v4453, %v5077
  %v5104 = vmul.f32 %v4454, %v5078
  %v5105 = vmul.f32 %v4455, %v5079
  %v5106 = vmul.f32 %v4456, %v5080
  %v5107 = vmul.f32 %v4457, %v5081
  %v5108 = vmul.f32 %v4458, %v5082
  %v5109 = vmul.f32 %v4459, %v5083
  %v5110 = vmul.f32 %v4460, %v5084
  %5137 = vrot.lane.b32.xlu0 %v5085, 96
  %v5138 = vpop.permute.xlu0 %5137
  %5139 = vrot.lane.b32.xlu0 %v5086, 96
  %v5140 = vpop.permute.xlu0 %5139
  %5141 = vrot.lane.b32.xlu0 %v5087, 96
  %v5142 = vpop.permute.xlu0 %5141
  %5143 = vrot.lane.b32.xlu0 %v5088, 96
  %v5144 = vpop.permute.xlu0 %5143
  %5145 = vrot.lane.b32.xlu0 %v5089, 96
  %v5146 = vpop.permute.xlu0 %5145
  %5147 = vrot.lane.b32.xlu0 %v5090, 96
  %v5148 = vpop.permute.xlu0 %5147
  %5149 = vrot.lane.b32.xlu0 %v5091, 96
  %v5150 = vpop.permute.xlu0 %5149
  %5151 = vrot.lane.b32.xlu0 %v5092, 96
  %v5152 = vpop.permute.xlu0 %5151
  %5153 = vrot.lane.b32.xlu0 %v5093, 96
  %v5154 = vpop.permute.xlu0 %5153
  %5155 = vrot.lane.b32.xlu0 %v5094, 96
  %v5156 = vpop.permute.xlu0 %5155
  %5157 = vrot.lane.b32.xlu0 %v5095, 96
  %v5158 = vpop.permute.xlu0 %5157
  %5159 = vrot.lane.b32.xlu0 %v5096, 96
  %v5160 = vpop.permute.xlu0 %5159
  %5161 = vrot.lane.b32.xlu0 %v5097, 96
  %v5162 = vpop.permute.xlu0 %5161
  %5163 = vrot.lane.b32.xlu0 %v5098, 96
  %v5164 = vpop.permute.xlu0 %5163
  %5165 = vrot.lane.b32.xlu0 %v5099, 96
  %v5166 = vpop.permute.xlu0 %5165
  %5167 = vrot.lane.b32.xlu0 %v5100, 96
  %v5168 = vpop.permute.xlu0 %5167
  %5169 = vrot.lane.b32.xlu0 %v5101, 96
  %v5170 = vpop.permute.xlu0 %5169
  %5171 = vrot.lane.b32.xlu0 %v5102, 96
  %v5172 = vpop.permute.xlu0 %5171
  %5173 = vrot.lane.b32.xlu0 %v5103, 96
  %v5174 = vpop.permute.xlu0 %5173
  %5175 = vrot.lane.b32.xlu0 %v5104, 96
  %v5176 = vpop.permute.xlu0 %5175
  %5177 = vrot.lane.b32.xlu0 %v5105, 96
  %v5178 = vpop.permute.xlu0 %5177
  %5179 = vrot.lane.b32.xlu0 %v5106, 96
  %v5180 = vpop.permute.xlu0 %5179
  %5181 = vrot.lane.b32.xlu0 %v5107, 96
  %v5182 = vpop.permute.xlu0 %5181
  %5183 = vrot.lane.b32.xlu0 %v5108, 96
  %v5184 = vpop.permute.xlu0 %5183
  %5185 = vrot.lane.b32.xlu0 %v5109, 96
  %v5186 = vpop.permute.xlu0 %5185
  %5187 = vrot.lane.b32.xlu0 %v5110, 96
  %v5188 = vpop.permute.xlu0 %5187
  %s5215 = scalar_lea.vmem %s7, 208
  %vm5216 = vcmask 195586
  %5217 = vst.msk [vmem:[%s5215 - $0x2] sm:$0xfc] %vm5216, %v5138
  %vm5218 = vcmask 194560
  %5219 = vst.msk [vmem:[%s5215 + $0x6] sm:$0x7f] %vm5218, %v5140
  %5220 = vst.msk [vmem:[%s5215 + $0xe] sm:$0xfc] %vm5216, %v5142
  %5221 = vst.msk [vmem:[%s5215 + $0x16] sm:$0x7f] %vm5218, %v5144
  %5222 = vst.msk [vmem:[%s5215 + $0x1e] sm:$0xfc] %vm5216, %v5146
  %5223 = vst.msk [vmem:[%s5215 + $0x26] sm:$0x7f] %vm5218, %v5148
  %5224 = vst.msk [vmem:[%s5215 + $0x2e] sm:$0xfc] %vm5216, %v5150
  %5225 = vst.msk [vmem:[%s5215 + $0x36] sm:$0x7f] %vm5218, %v5152
  %5226 = vst.msk [vmem:[%s5215 + $0x3e] sm:$0xfc] %vm5216, %v5154
  %5227 = vst.msk [vmem:[%s5215 + $0x46] sm:$0x7f] %vm5218, %v5156
  %5228 = vst.msk [vmem:[%s5215 + $0x4e] sm:$0xfc] %vm5216, %v5158
  %5229 = vst.msk [vmem:[%s5215 + $0x56] sm:$0x7f] %vm5218, %v5160
  %5230 = vst.msk [vmem:[%s5215 + $0x5e] sm:$0xfc] %vm5216, %v5162
  %5231 = vst.msk [vmem:[%s5215 + $0x66] sm:$0x7f] %vm5218, %v5164
  %5232 = vst.msk [vmem:[%s5215 + $0x6e] sm:$0xfc] %vm5216, %v5166
  %5233 = vst.msk [vmem:[%s5215 + $0x76] sm:$0x7f] %vm5218, %v5168
  %5234 = vst.msk [vmem:[%s5215 + $0x7e] sm:$0xfc] %vm5216, %v5170
  %5235 = vst.msk [vmem:[%s5215 + $0x86] sm:$0x7f] %vm5218, %v5172
  %5236 = vst.msk [vmem:[%s5215 + $0x8e] sm:$0xfc] %vm5216, %v5174
  %5237 = vst.msk [vmem:[%s5215 + $0x96] sm:$0x7f] %vm5218, %v5176
  %5238 = vst.msk [vmem:[%s5215 + $0x9e] sm:$0xfc] %vm5216, %v5178
  %5239 = vst.msk [vmem:[%s5215 + $0xa6] sm:$0x7f] %vm5218, %v5180
  %5240 = vst.msk [vmem:[%s5215 + $0xae] sm:$0xfc] %vm5216, %v5182
  %5241 = vst.msk [vmem:[%s5215 + $0xb6] sm:$0x7f] %vm5218, %v5184
  %5242 = vst.msk [vmem:[%s5215 + $0xbe] sm:$0xfc] %vm5216, %v5186
  %5243 = vst.msk [vmem:[%s5215 + $0xc6] sm:$0x7f] %vm5218, %v5188
  %s5244 = scalar_lea.vmem [#allocation2], 224
  %v5245 = vld [vmem:[%s5244] sm:$0xfe]
  %v5246 = vld [vmem:[%s5244 + $0x38] sm:$0x3f]
  %v5247 = vld [vmem:[%s5244 + $0x70] sm:$0xfe]
  %v5248 = vld [vmem:[%s5244 + $0xa8] sm:$0x3f]
  %v5249 = vld [vmem:[%s5244 + $0xe0] sm:$0xfe]
  %v5250 = vld [vmem:[%s5244 + $0x118] sm:$0x3f]
  %v5251 = vld [vmem:[%s5244 + $0x150] sm:$0xfe]
  %v5252 = vld [vmem:[%s5244 + $0x188] sm:$0x3f]
  %v5253 = vld [vmem:[%s5244 + $0x1c0] sm:$0xfe]
  %v5254 = vld [vmem:[%s5244 + $0x1f8] sm:$0x3f]
  %v5255 = vld [vmem:[%s5244 + $0x230] sm:$0xfe]
  %v5256 = vld [vmem:[%s5244 + $0x268] sm:$0x3f]
  %v5257 = vld [vmem:[%s5244 + $0x2a0] sm:$0xfe]
  %v5258 = vld [vmem:[%s5244 + $0x2d8] sm:$0x3f]
  %v5259 = vld [vmem:[%s5244 + $0x310] sm:$0xfe]
  %v5260 = vld [vmem:[%s5244 + $0x348] sm:$0x3f]
  %v5261 = vld [vmem:[%s5244 + $0x380] sm:$0xfe]
  %v5262 = vld [vmem:[%s5244 + $0x3b8] sm:$0x3f]
  %v5263 = vld [vmem:[%s5244 + $0x3f0] sm:$0xfe]
  %v5264 = vld [vmem:[%s5244 + $0x428] sm:$0x3f]
  %v5265 = vld [vmem:[%s5244 + $0x460] sm:$0xfe]
  %v5266 = vld [vmem:[%s5244 + $0x498] sm:$0x3f]
  %v5267 = vld [vmem:[%s5244 + $0x4d0] sm:$0xfe]
  %v5268 = vld [vmem:[%s5244 + $0x508] sm:$0x3f]
  %v5269 = vld [vmem:[%s5244 + $0x540] sm:$0xfe]
  %v5270 = vld [vmem:[%s5244 + $0x578] sm:$0x3f]
  %v5271 = vld [vmem:[%s5244] sm:$0xff]
  %v5272 = vld [vmem:[%s5244 + $0x38] sm:$0x1f]
  %v5273 = vld [vmem:[%s5244 + $0x70] sm:$0xff]
  %v5274 = vld [vmem:[%s5244 + $0xa8] sm:$0x1f]
  %v5275 = vld [vmem:[%s5244 + $0xe0] sm:$0xff]
  %v5276 = vld [vmem:[%s5244 + $0x118] sm:$0x1f]
  %v5277 = vld [vmem:[%s5244 + $0x150] sm:$0xff]
  %v5278 = vld [vmem:[%s5244 + $0x188] sm:$0x1f]
  %v5279 = vld [vmem:[%s5244 + $0x1c0] sm:$0xff]
  %v5280 = vld [vmem:[%s5244 + $0x1f8] sm:$0x1f]
  %v5281 = vld [vmem:[%s5244 + $0x230] sm:$0xff]
  %v5282 = vld [vmem:[%s5244 + $0x268] sm:$0x1f]
  %v5283 = vld [vmem:[%s5244 + $0x2a0] sm:$0xff]
  %v5284 = vld [vmem:[%s5244 + $0x2d8] sm:$0x1f]
  %v5285 = vld [vmem:[%s5244 + $0x310] sm:$0xff]
  %v5286 = vld [vmem:[%s5244 + $0x348] sm:$0x1f]
  %v5287 = vld [vmem:[%s5244 + $0x380] sm:$0xff]
  %v5288 = vld [vmem:[%s5244 + $0x3b8] sm:$0x1f]
  %v5289 = vld [vmem:[%s5244 + $0x3f0] sm:$0xff]
  %v5290 = vld [vmem:[%s5244 + $0x428] sm:$0x1f]
  %v5291 = vld [vmem:[%s5244 + $0x460] sm:$0xff]
  %v5292 = vld [vmem:[%s5244 + $0x498] sm:$0x1f]
  %v5293 = vld [vmem:[%s5244 + $0x4d0] sm:$0xff]
  %v5294 = vld [vmem:[%s5244 + $0x508] sm:$0x1f]
  %v5295 = vld [vmem:[%s5244 + $0x540] sm:$0xff]
  %v5296 = vld [vmem:[%s5244 + $0x578] sm:$0x1f]
  %v5323 = vrot.slane %v5271, 7
  %v5324 = vrot.slane %v5272, 7
  %v5325 = vsel %vm2261, %v5323, %v5324
  %v5326 = vrot.slane %v5273, 7
  %v5327 = vrot.slane %v5274, 7
  %v5328 = vsel %vm2261, %v5326, %v5327
  %v5329 = vrot.slane %v5275, 7
  %v5330 = vrot.slane %v5276, 7
  %v5331 = vsel %vm2261, %v5329, %v5330
  %v5332 = vrot.slane %v5277, 7
  %v5333 = vrot.slane %v5278, 7
  %v5334 = vsel %vm2261, %v5332, %v5333
  %v5335 = vrot.slane %v5279, 7
  %v5336 = vrot.slane %v5280, 7
  %v5337 = vsel %vm2261, %v5335, %v5336
  %v5338 = vrot.slane %v5281, 7
  %v5339 = vrot.slane %v5282, 7
  %v5340 = vsel %vm2261, %v5338, %v5339
  %v5341 = vrot.slane %v5283, 7
  %v5342 = vrot.slane %v5284, 7
  %v5343 = vsel %vm2261, %v5341, %v5342
  %v5344 = vrot.slane %v5285, 7
  %v5345 = vrot.slane %v5286, 7
  %v5346 = vsel %vm2261, %v5344, %v5345
  %v5347 = vrot.slane %v5287, 7
  %v5348 = vrot.slane %v5288, 7
  %v5349 = vsel %vm2261, %v5347, %v5348
  %v5350 = vrot.slane %v5289, 7
  %v5351 = vrot.slane %v5290, 7
  %v5352 = vsel %vm2261, %v5350, %v5351
  %v5353 = vrot.slane %v5291, 7
  %v5354 = vrot.slane %v5292, 7
  %v5355 = vsel %vm2261, %v5353, %v5354
  %v5356 = vrot.slane %v5293, 7
  %v5357 = vrot.slane %v5294, 7
  %v5358 = vsel %vm2261, %v5356, %v5357
  %v5359 = vrot.slane %v5295, 7
  %v5360 = vrot.slane %v5296, 7
  %v5361 = vsel %vm2261, %v5359, %v5360
  %5362 = vrot.lane.b32.xlu0 %v5323, 64
  %v5363 = vpop.permute.xlu0 %5362
  %5364 = vrot.lane.b32.xlu0 %v5325, 64
  %v5365 = vpop.permute.xlu0 %5364
  %5366 = vrot.lane.b32.xlu0 %v5326, 64
  %v5367 = vpop.permute.xlu0 %5366
  %5368 = vrot.lane.b32.xlu0 %v5328, 64
  %v5369 = vpop.permute.xlu0 %5368
  %5370 = vrot.lane.b32.xlu0 %v5329, 64
  %v5371 = vpop.permute.xlu0 %5370
  %5372 = vrot.lane.b32.xlu0 %v5331, 64
  %v5373 = vpop.permute.xlu0 %5372
  %5374 = vrot.lane.b32.xlu0 %v5332, 64
  %v5375 = vpop.permute.xlu0 %5374
  %5376 = vrot.lane.b32.xlu0 %v5334, 64
  %v5377 = vpop.permute.xlu0 %5376
  %5378 = vrot.lane.b32.xlu0 %v5335, 64
  %v5379 = vpop.permute.xlu0 %5378
  %5380 = vrot.lane.b32.xlu0 %v5337, 64
  %v5381 = vpop.permute.xlu0 %5380
  %5382 = vrot.lane.b32.xlu0 %v5338, 64
  %v5383 = vpop.permute.xlu0 %5382
  %5384 = vrot.lane.b32.xlu0 %v5340, 64
  %v5385 = vpop.permute.xlu0 %5384
  %5386 = vrot.lane.b32.xlu0 %v5341, 64
  %v5387 = vpop.permute.xlu0 %5386
  %5388 = vrot.lane.b32.xlu0 %v5343, 64
  %v5389 = vpop.permute.xlu0 %5388
  %5390 = vrot.lane.b32.xlu0 %v5344, 64
  %v5391 = vpop.permute.xlu0 %5390
  %5392 = vrot.lane.b32.xlu0 %v5346, 64
  %v5393 = vpop.permute.xlu0 %5392
  %5394 = vrot.lane.b32.xlu0 %v5347, 64
  %v5395 = vpop.permute.xlu0 %5394
  %5396 = vrot.lane.b32.xlu0 %v5349, 64
  %v5397 = vpop.permute.xlu0 %5396
  %5398 = vrot.lane.b32.xlu0 %v5350, 64
  %v5399 = vpop.permute.xlu0 %5398
  %5400 = vrot.lane.b32.xlu0 %v5352, 64
  %v5401 = vpop.permute.xlu0 %5400
  %5402 = vrot.lane.b32.xlu0 %v5353, 64
  %v5403 = vpop.permute.xlu0 %5402
  %5404 = vrot.lane.b32.xlu0 %v5355, 64
  %v5405 = vpop.permute.xlu0 %5404
  %5406 = vrot.lane.b32.xlu0 %v5356, 64
  %v5407 = vpop.permute.xlu0 %5406
  %5408 = vrot.lane.b32.xlu0 %v5358, 64
  %v5409 = vpop.permute.xlu0 %5408
  %5410 = vrot.lane.b32.xlu0 %v5359, 64
  %v5411 = vpop.permute.xlu0 %5410
  %5412 = vrot.lane.b32.xlu0 %v5361, 64
  %v5413 = vpop.permute.xlu0 %5412
  %v5440 = vadd.f32 %v5245, %v5363
  %v5441 = vadd.f32 %v5246, %v5365
  %v5442 = vadd.f32 %v5247, %v5367
  %v5443 = vadd.f32 %v5248, %v5369
  %v5444 = vadd.f32 %v5249, %v5371
  %v5445 = vadd.f32 %v5250, %v5373
  %v5446 = vadd.f32 %v5251, %v5375
  %v5447 = vadd.f32 %v5252, %v5377
  %v5448 = vadd.f32 %v5253, %v5379
  %v5449 = vadd.f32 %v5254, %v5381
  %v5450 = vadd.f32 %v5255, %v5383
  %v5451 = vadd.f32 %v5256, %v5385
  %v5452 = vadd.f32 %v5257, %v5387
  %v5453 = vadd.f32 %v5258, %v5389
  %v5454 = vadd.f32 %v5259, %v5391
  %v5455 = vadd.f32 %v5260, %v5393
  %v5456 = vadd.f32 %v5261, %v5395
  %v5457 = vadd.f32 %v5262, %v5397
  %v5458 = vadd.f32 %v5263, %v5399
  %v5459 = vadd.f32 %v5264, %v5401
  %v5460 = vadd.f32 %v5265, %v5403
  %v5461 = vadd.f32 %v5266, %v5405
  %v5462 = vadd.f32 %v5267, %v5407
  %v5463 = vadd.f32 %v5268, %v5409
  %v5464 = vadd.f32 %v5269, %v5411
  %v5465 = vadd.f32 %v5270, %v5413
  %v5466 = vld [vmem:[%s2182 + $0x10] sm:$0xfe]
  %v5467 = vld [vmem:[%s2182 + $0x48] sm:$0x3f]
  %v5468 = vld [vmem:[%s2182 + $0x80] sm:$0xfe]
  %v5469 = vld [vmem:[%s2182 + $0xb8] sm:$0x3f]
  %v5470 = vld [vmem:[%s2182 + $0xf0] sm:$0xfe]
  %v5471 = vld [vmem:[%s2182 + $0x128] sm:$0x3f]
  %v5472 = vld [vmem:[%s2182 + $0x160] sm:$0xfe]
  %v5473 = vld [vmem:[%s2182 + $0x198] sm:$0x3f]
  %v5474 = vld [vmem:[%s2182 + $0x1d0] sm:$0xfe]
  %v5475 = vld [vmem:[%s2182 + $0x208] sm:$0x3f]
  %v5476 = vld [vmem:[%s2182 + $0x240] sm:$0xfe]
  %v5477 = vld [vmem:[%s2182 + $0x278] sm:$0x3f]
  %v5478 = vld [vmem:[%s2182 + $0x2b0] sm:$0xfe]
  %v5479 = vld [vmem:[%s2182 + $0x2e8] sm:$0x3f]
  %v5480 = vld [vmem:[%s2182 + $0x320] sm:$0xfe]
  %v5481 = vld [vmem:[%s2182 + $0x358] sm:$0x3f]
  %v5482 = vld [vmem:[%s2182 + $0x390] sm:$0xfe]
  %v5483 = vld [vmem:[%s2182 + $0x3c8] sm:$0x3f]
  %v5484 = vld [vmem:[%s2182 + $0x400] sm:$0xfe]
  %v5485 = vld [vmem:[%s2182 + $0x438] sm:$0x3f]
  %v5486 = vld [vmem:[%s2182 + $0x470] sm:$0xfe]
  %v5487 = vld [vmem:[%s2182 + $0x4a8] sm:$0x3f]
  %v5488 = vld [vmem:[%s2182 + $0x4e0] sm:$0xfe]
  %v5489 = vld [vmem:[%s2182 + $0x518] sm:$0x3f]
  %v5490 = vld [vmem:[%s2182 + $0x550] sm:$0xfe]
  %v5491 = vld [vmem:[%s2182 + $0x588] sm:$0x3f]
  %5518 = vrot.lane.b32.xlu0 %v5466, 64
  %v5519 = vpop.permute.xlu0 %5518
  %5520 = vrot.lane.b32.xlu0 %v5467, 64
  %v5521 = vpop.permute.xlu0 %5520
  %5522 = vrot.lane.b32.xlu0 %v5468, 64
  %v5523 = vpop.permute.xlu0 %5522
  %5524 = vrot.lane.b32.xlu0 %v5469, 64
  %v5525 = vpop.permute.xlu0 %5524
  %5526 = vrot.lane.b32.xlu0 %v5470, 64
  %v5527 = vpop.permute.xlu0 %5526
  %5528 = vrot.lane.b32.xlu0 %v5471, 64
  %v5529 = vpop.permute.xlu0 %5528
  %5530 = vrot.lane.b32.xlu0 %v5472, 64
  %v5531 = vpop.permute.xlu0 %5530
  %5532 = vrot.lane.b32.xlu0 %v5473, 64
  %v5533 = vpop.permute.xlu0 %5532
  %5534 = vrot.lane.b32.xlu0 %v5474, 64
  %v5535 = vpop.permute.xlu0 %5534
  %5536 = vrot.lane.b32.xlu0 %v5475, 64
  %v5537 = vpop.permute.xlu0 %5536
  %5538 = vrot.lane.b32.xlu0 %v5476, 64
  %v5539 = vpop.permute.xlu0 %5538
  %5540 = vrot.lane.b32.xlu0 %v5477, 64
  %v5541 = vpop.permute.xlu0 %5540
  %5542 = vrot.lane.b32.xlu0 %v5478, 64
  %v5543 = vpop.permute.xlu0 %5542
  %5544 = vrot.lane.b32.xlu0 %v5479, 64
  %v5545 = vpop.permute.xlu0 %5544
  %5546 = vrot.lane.b32.xlu0 %v5480, 64
  %v5547 = vpop.permute.xlu0 %5546
  %5548 = vrot.lane.b32.xlu0 %v5481, 64
  %v5549 = vpop.permute.xlu0 %5548
  %5550 = vrot.lane.b32.xlu0 %v5482, 64
  %v5551 = vpop.permute.xlu0 %5550
  %5552 = vrot.lane.b32.xlu0 %v5483, 64
  %v5553 = vpop.permute.xlu0 %5552
  %5554 = vrot.lane.b32.xlu0 %v5484, 64
  %v5555 = vpop.permute.xlu0 %5554
  %5556 = vrot.lane.b32.xlu0 %v5485, 64
  %v5557 = vpop.permute.xlu0 %5556
  %5558 = vrot.lane.b32.xlu0 %v5486, 64
  %v5559 = vpop.permute.xlu0 %5558
  %5560 = vrot.lane.b32.xlu0 %v5487, 64
  %v5561 = vpop.permute.xlu0 %5560
  %5562 = vrot.lane.b32.xlu0 %v5488, 64
  %v5563 = vpop.permute.xlu0 %5562
  %5564 = vrot.lane.b32.xlu0 %v5489, 64
  %v5565 = vpop.permute.xlu0 %5564
  %5566 = vrot.lane.b32.xlu0 %v5490, 64
  %v5567 = vpop.permute.xlu0 %5566
  %5568 = vrot.lane.b32.xlu0 %v5491, 64
  %v5569 = vpop.permute.xlu0 %5568
  %v5596 = vadd.f32 %v5440, %v5519
  %v5597 = vadd.f32 %v5441, %v5521
  %v5598 = vadd.f32 %v5442, %v5523
  %v5599 = vadd.f32 %v5443, %v5525
  %v5600 = vadd.f32 %v5444, %v5527
  %v5601 = vadd.f32 %v5445, %v5529
  %v5602 = vadd.f32 %v5446, %v5531
  %v5603 = vadd.f32 %v5447, %v5533
  %v5604 = vadd.f32 %v5448, %v5535
  %v5605 = vadd.f32 %v5449, %v5537
  %v5606 = vadd.f32 %v5450, %v5539
  %v5607 = vadd.f32 %v5451, %v5541
  %v5608 = vadd.f32 %v5452, %v5543
  %v5609 = vadd.f32 %v5453, %v5545
  %v5610 = vadd.f32 %v5454, %v5547
  %v5611 = vadd.f32 %v5455, %v5549
  %v5612 = vadd.f32 %v5456, %v5551
  %v5613 = vadd.f32 %v5457, %v5553
  %v5614 = vadd.f32 %v5458, %v5555
  %v5615 = vadd.f32 %v5459, %v5557
  %v5616 = vadd.f32 %v5460, %v5559
  %v5617 = vadd.f32 %v5461, %v5561
  %v5618 = vadd.f32 %v5462, %v5563
  %v5619 = vadd.f32 %v5463, %v5565
  %v5620 = vadd.f32 %v5464, %v5567
  %v5621 = vadd.f32 %v5465, %v5569
  %v5622 = vld [vmem:[%s2182 + $0x18] sm:$0xff]
  %v5623 = vld [vmem:[%s2182 + $0x50] sm:$0x1f]
  %v5624 = vld [vmem:[%s2182 + $0x88] sm:$0xff]
  %v5625 = vld [vmem:[%s2182 + $0xc0] sm:$0x1f]
  %v5626 = vld [vmem:[%s2182 + $0xf8] sm:$0xff]
  %v5627 = vld [vmem:[%s2182 + $0x130] sm:$0x1f]
  %v5628 = vld [vmem:[%s2182 + $0x168] sm:$0xff]
  %v5629 = vld [vmem:[%s2182 + $0x1a0] sm:$0x1f]
  %v5630 = vld [vmem:[%s2182 + $0x1d8] sm:$0xff]
  %v5631 = vld [vmem:[%s2182 + $0x210] sm:$0x1f]
  %v5632 = vld [vmem:[%s2182 + $0x248] sm:$0xff]
  %v5633 = vld [vmem:[%s2182 + $0x280] sm:$0x1f]
  %v5634 = vld [vmem:[%s2182 + $0x2b8] sm:$0xff]
  %v5635 = vld [vmem:[%s2182 + $0x2f0] sm:$0x1f]
  %v5636 = vld [vmem:[%s2182 + $0x328] sm:$0xff]
  %v5637 = vld [vmem:[%s2182 + $0x360] sm:$0x1f]
  %v5638 = vld [vmem:[%s2182 + $0x398] sm:$0xff]
  %v5639 = vld [vmem:[%s2182 + $0x3d0] sm:$0x1f]
  %v5640 = vld [vmem:[%s2182 + $0x408] sm:$0xff]
  %v5641 = vld [vmem:[%s2182 + $0x440] sm:$0x1f]
  %v5642 = vld [vmem:[%s2182 + $0x478] sm:$0xff]
  %v5643 = vld [vmem:[%s2182 + $0x4b0] sm:$0x1f]
  %v5644 = vld [vmem:[%s2182 + $0x4e8] sm:$0xff]
  %v5645 = vld [vmem:[%s2182 + $0x520] sm:$0x1f]
  %v5646 = vld [vmem:[%s2182 + $0x558] sm:$0xff]
  %v5647 = vld [vmem:[%s2182 + $0x590] sm:$0x1f]
  %v5674 = vrot.slane %v5622, 7
  %v5675 = vrot.slane %v5623, 7
  %v5676 = vsel %vm2261, %v5674, %v5675
  %v5677 = vrot.slane %v5624, 7
  %v5678 = vrot.slane %v5625, 7
  %v5679 = vsel %vm2261, %v5677, %v5678
  %v5680 = vrot.slane %v5626, 7
  %v5681 = vrot.slane %v5627, 7
  %v5682 = vsel %vm2261, %v5680, %v5681
  %v5683 = vrot.slane %v5628, 7
  %v5684 = vrot.slane %v5629, 7
  %v5685 = vsel %vm2261, %v5683, %v5684
  %v5686 = vrot.slane %v5630, 7
  %v5687 = vrot.slane %v5631, 7
  %v5688 = vsel %vm2261, %v5686, %v5687
  %v5689 = vrot.slane %v5632, 7
  %v5690 = vrot.slane %v5633, 7
  %v5691 = vsel %vm2261, %v5689, %v5690
  %v5692 = vrot.slane %v5634, 7
  %v5693 = vrot.slane %v5635, 7
  %v5694 = vsel %vm2261, %v5692, %v5693
  %v5695 = vrot.slane %v5636, 7
  %v5696 = vrot.slane %v5637, 7
  %v5697 = vsel %vm2261, %v5695, %v5696
  %v5698 = vrot.slane %v5638, 7
  %v5699 = vrot.slane %v5639, 7
  %v5700 = vsel %vm2261, %v5698, %v5699
  %v5701 = vrot.slane %v5640, 7
  %v5702 = vrot.slane %v5641, 7
  %v5703 = vsel %vm2261, %v5701, %v5702
  %v5704 = vrot.slane %v5642, 7
  %v5705 = vrot.slane %v5643, 7
  %v5706 = vsel %vm2261, %v5704, %v5705
  %v5707 = vrot.slane %v5644, 7
  %v5708 = vrot.slane %v5645, 7
  %v5709 = vsel %vm2261, %v5707, %v5708
  %v5710 = vrot.slane %v5646, 7
  %v5711 = vrot.slane %v5647, 7
  %v5712 = vsel %vm2261, %v5710, %v5711
  %v5739 = vadd.f32 %v5596, %v5674
  %v5740 = vadd.f32 %v5597, %v5676
  %v5741 = vadd.f32 %v5598, %v5677
  %v5742 = vadd.f32 %v5599, %v5679
  %v5743 = vadd.f32 %v5600, %v5680
  %v5744 = vadd.f32 %v5601, %v5682
  %v5745 = vadd.f32 %v5602, %v5683
  %v5746 = vadd.f32 %v5603, %v5685
  %v5747 = vadd.f32 %v5604, %v5686
  %v5748 = vadd.f32 %v5605, %v5688
  %v5749 = vadd.f32 %v5606, %v5689
  %v5750 = vadd.f32 %v5607, %v5691
  %v5751 = vadd.f32 %v5608, %v5692
  %v5752 = vadd.f32 %v5609, %v5694
  %v5753 = vadd.f32 %v5610, %v5695
  %v5754 = vadd.f32 %v5611, %v5697
  %v5755 = vadd.f32 %v5612, %v5698
  %v5756 = vadd.f32 %v5613, %v5700
  %v5757 = vadd.f32 %v5614, %v5701
  %v5758 = vadd.f32 %v5615, %v5703
  %v5759 = vadd.f32 %v5616, %v5704
  %v5760 = vadd.f32 %v5617, %v5706
  %v5761 = vadd.f32 %v5618, %v5707
  %v5762 = vadd.f32 %v5619, %v5709
  %v5763 = vadd.f32 %v5620, %v5710
  %v5764 = vadd.f32 %v5621, %v5712
  %v5765 = vld [vmem:[#allocation2 + $0x28] sm:$0xfe]
  %v5766 = vld [vmem:[#allocation2 + $0x60] sm:$0x3f]
  %v5767 = vld [vmem:[#allocation2 + $0x98] sm:$0xfe]
  %v5768 = vld [vmem:[#allocation2 + $0xd0] sm:$0x3f]
  %v5769 = vld [vmem:[#allocation2 + $0x108] sm:$0xfe]
  %v5770 = vld [vmem:[#allocation2 + $0x140] sm:$0x3f]
  %v5771 = vld [vmem:[#allocation2 + $0x178] sm:$0xfe]
  %v5772 = vld [vmem:[#allocation2 + $0x1b0] sm:$0x3f]
  %v5773 = vld [vmem:[#allocation2 + $0x1e8] sm:$0xfe]
  %v5774 = vld [vmem:[#allocation2 + $0x220] sm:$0x3f]
  %v5775 = vld [vmem:[#allocation2 + $0x258] sm:$0xfe]
  %v5776 = vld [vmem:[#allocation2 + $0x290] sm:$0x3f]
  %v5777 = vld [vmem:[#allocation2 + $0x2c8] sm:$0xfe]
  %v5778 = vld [vmem:[#allocation2 + $0x300] sm:$0x3f]
  %v5779 = vld [vmem:[#allocation2 + $0x338] sm:$0xfe]
  %v5780 = vld [vmem:[#allocation2 + $0x370] sm:$0x3f]
  %v5781 = vld [vmem:[#allocation2 + $0x3a8] sm:$0xfe]
  %v5782 = vld [vmem:[#allocation2 + $0x3e0] sm:$0x3f]
  %v5783 = vld [vmem:[#allocation2 + $0x418] sm:$0xfe]
  %v5784 = vld [vmem:[#allocation2 + $0x450] sm:$0x3f]
  %v5785 = vld [vmem:[#allocation2 + $0x488] sm:$0xfe]
  %v5786 = vld [vmem:[#allocation2 + $0x4c0] sm:$0x3f]
  %v5787 = vld [vmem:[#allocation2 + $0x4f8] sm:$0xfe]
  %v5788 = vld [vmem:[#allocation2 + $0x530] sm:$0x3f]
  %v5789 = vld [vmem:[#allocation2 + $0x568] sm:$0xfe]
  %v5790 = vld [vmem:[#allocation2 + $0x5a0] sm:$0x3f]
  %v5791 = vadd.f32 %v5739, %v5765
  %v5792 = vadd.f32 %v5740, %v5766
  %v5793 = vadd.f32 %v5741, %v5767
  %v5794 = vadd.f32 %v5742, %v5768
  %v5795 = vadd.f32 %v5743, %v5769
  %v5796 = vadd.f32 %v5744, %v5770
  %v5797 = vadd.f32 %v5745, %v5771
  %v5798 = vadd.f32 %v5746, %v5772
  %v5799 = vadd.f32 %v5747, %v5773
  %v5800 = vadd.f32 %v5748, %v5774
  %v5801 = vadd.f32 %v5749, %v5775
  %v5802 = vadd.f32 %v5750, %v5776
  %v5803 = vadd.f32 %v5751, %v5777
  %v5804 = vadd.f32 %v5752, %v5778
  %v5805 = vadd.f32 %v5753, %v5779
  %v5806 = vadd.f32 %v5754, %v5780
  %v5807 = vadd.f32 %v5755, %v5781
  %v5808 = vadd.f32 %v5756, %v5782
  %v5809 = vadd.f32 %v5757, %v5783
  %v5810 = vadd.f32 %v5758, %v5784
  %v5811 = vadd.f32 %v5759, %v5785
  %v5812 = vadd.f32 %v5760, %v5786
  %v5813 = vadd.f32 %v5761, %v5787
  %v5814 = vadd.f32 %v5762, %v5788
  %v5815 = vadd.f32 %v5763, %v5789
  %v5816 = vadd.f32 %v5764, %v5790
  %v5817 = vld [vmem:[#allocation2 + $0x28] sm:$0xff]
  %v5818 = vld [vmem:[#allocation2 + $0x60] sm:$0x1f]
  %v5819 = vld [vmem:[#allocation2 + $0x98] sm:$0xff]
  %v5820 = vld [vmem:[#allocation2 + $0xd0] sm:$0x1f]
  %v5821 = vld [vmem:[#allocation2 + $0x108] sm:$0xff]
  %v5822 = vld [vmem:[#allocation2 + $0x140] sm:$0x1f]
  %v5823 = vld [vmem:[#allocation2 + $0x178] sm:$0xff]
  %v5824 = vld [vmem:[#allocation2 + $0x1b0] sm:$0x1f]
  %v5825 = vld [vmem:[#allocation2 + $0x1e8] sm:$0xff]
  %v5826 = vld [vmem:[#allocation2 + $0x220] sm:$0x1f]
  %v5827 = vld [vmem:[#allocation2 + $0x258] sm:$0xff]
  %v5828 = vld [vmem:[#allocation2 + $0x290] sm:$0x1f]
  %v5829 = vld [vmem:[#allocation2 + $0x2c8] sm:$0xff]
  %v5830 = vld [vmem:[#allocation2 + $0x300] sm:$0x1f]
  %v5831 = vld [vmem:[#allocation2 + $0x338] sm:$0xff]
  %v5832 = vld [vmem:[#allocation2 + $0x370] sm:$0x1f]
  %v5833 = vld [vmem:[#allocation2 + $0x3a8] sm:$0xff]
  %v5834 = vld [vmem:[#allocation2 + $0x3e0] sm:$0x1f]
  %v5835 = vld [vmem:[#allocation2 + $0x418] sm:$0xff]
  %v5836 = vld [vmem:[#allocation2 + $0x450] sm:$0x1f]
  %v5837 = vld [vmem:[#allocation2 + $0x488] sm:$0xff]
  %v5838 = vld [vmem:[#allocation2 + $0x4c0] sm:$0x1f]
  %v5839 = vld [vmem:[#allocation2 + $0x4f8] sm:$0xff]
  %v5840 = vld [vmem:[#allocation2 + $0x530] sm:$0x1f]
  %v5841 = vld [vmem:[#allocation2 + $0x568] sm:$0xff]
  %v5842 = vld [vmem:[#allocation2 + $0x5a0] sm:$0x1f]
  %v5869 = vrot.slane %v5817, 7
  %v5870 = vrot.slane %v5818, 7
  %v5871 = vsel %vm2261, %v5869, %v5870
  %v5872 = vrot.slane %v5819, 7
  %v5873 = vrot.slane %v5820, 7
  %v5874 = vsel %vm2261, %v5872, %v5873
  %v5875 = vrot.slane %v5821, 7
  %v5876 = vrot.slane %v5822, 7
  %v5877 = vsel %vm2261, %v5875, %v5876
  %v5878 = vrot.slane %v5823, 7
  %v5879 = vrot.slane %v5824, 7
  %v5880 = vsel %vm2261, %v5878, %v5879
  %v5881 = vrot.slane %v5825, 7
  %v5882 = vrot.slane %v5826, 7
  %v5883 = vsel %vm2261, %v5881, %v5882
  %v5884 = vrot.slane %v5827, 7
  %v5885 = vrot.slane %v5828, 7
  %v5886 = vsel %vm2261, %v5884, %v5885
  %v5887 = vrot.slane %v5829, 7
  %v5888 = vrot.slane %v5830, 7
  %v5889 = vsel %vm2261, %v5887, %v5888
  %v5890 = vrot.slane %v5831, 7
  %v5891 = vrot.slane %v5832, 7
  %v5892 = vsel %vm2261, %v5890, %v5891
  %v5893 = vrot.slane %v5833, 7
  %v5894 = vrot.slane %v5834, 7
  %v5895 = vsel %vm2261, %v5893, %v5894
  %v5896 = vrot.slane %v5835, 7
  %v5897 = vrot.slane %v5836, 7
  %v5898 = vsel %vm2261, %v5896, %v5897
  %v5899 = vrot.slane %v5837, 7
  %v5900 = vrot.slane %v5838, 7
  %v5901 = vsel %vm2261, %v5899, %v5900
  %v5902 = vrot.slane %v5839, 7
  %v5903 = vrot.slane %v5840, 7
  %v5904 = vsel %vm2261, %v5902, %v5903
  %v5905 = vrot.slane %v5841, 7
  %v5906 = vrot.slane %v5842, 7
  %v5907 = vsel %vm2261, %v5905, %v5906
  %5908 = vrot.lane.b32.xlu0 %v5869, 64
  %v5909 = vpop.permute.xlu0 %5908
  %5910 = vrot.lane.b32.xlu0 %v5871, 64
  %v5911 = vpop.permute.xlu0 %5910
  %5912 = vrot.lane.b32.xlu0 %v5872, 64
  %v5913 = vpop.permute.xlu0 %5912
  %5914 = vrot.lane.b32.xlu0 %v5874, 64
  %v5915 = vpop.permute.xlu0 %5914
  %5916 = vrot.lane.b32.xlu0 %v5875, 64
  %v5917 = vpop.permute.xlu0 %5916
  %5918 = vrot.lane.b32.xlu0 %v5877, 64
  %v5919 = vpop.permute.xlu0 %5918
  %5920 = vrot.lane.b32.xlu0 %v5878, 64
  %v5921 = vpop.permute.xlu0 %5920
  %5922 = vrot.lane.b32.xlu0 %v5880, 64
  %v5923 = vpop.permute.xlu0 %5922
  %5924 = vrot.lane.b32.xlu0 %v5881, 64
  %v5925 = vpop.permute.xlu0 %5924
  %5926 = vrot.lane.b32.xlu0 %v5883, 64
  %v5927 = vpop.permute.xlu0 %5926
  %5928 = vrot.lane.b32.xlu0 %v5884, 64
  %v5929 = vpop.permute.xlu0 %5928
  %5930 = vrot.lane.b32.xlu0 %v5886, 64
  %v5931 = vpop.permute.xlu0 %5930
  %5932 = vrot.lane.b32.xlu0 %v5887, 64
  %v5933 = vpop.permute.xlu0 %5932
  %5934 = vrot.lane.b32.xlu0 %v5889, 64
  %v5935 = vpop.permute.xlu0 %5934
  %5936 = vrot.lane.b32.xlu0 %v5890, 64
  %v5937 = vpop.permute.xlu0 %5936
  %5938 = vrot.lane.b32.xlu0 %v5892, 64
  %v5939 = vpop.permute.xlu0 %5938
  %5940 = vrot.lane.b32.xlu0 %v5893, 64
  %v5941 = vpop.permute.xlu0 %5940
  %5942 = vrot.lane.b32.xlu0 %v5895, 64
  %v5943 = vpop.permute.xlu0 %5942
  %5944 = vrot.lane.b32.xlu0 %v5896, 64
  %v5945 = vpop.permute.xlu0 %5944
  %5946 = vrot.lane.b32.xlu0 %v5898, 64
  %v5947 = vpop.permute.xlu0 %5946
  %5948 = vrot.lane.b32.xlu0 %v5899, 64
  %v5949 = vpop.permute.xlu0 %5948
  %5950 = vrot.lane.b32.xlu0 %v5901, 64
  %v5951 = vpop.permute.xlu0 %5950
  %5952 = vrot.lane.b32.xlu0 %v5902, 64
  %v5953 = vpop.permute.xlu0 %5952
  %5954 = vrot.lane.b32.xlu0 %v5904, 64
  %v5955 = vpop.permute.xlu0 %5954
  %5956 = vrot.lane.b32.xlu0 %v5905, 64
  %v5957 = vpop.permute.xlu0 %5956
  %5958 = vrot.lane.b32.xlu0 %v5907, 64
  %v5959 = vpop.permute.xlu0 %5958
  %v5986 = vadd.f32 %v5791, %v5909
  %v5987 = vadd.f32 %v5792, %v5911
  %v5988 = vadd.f32 %v5793, %v5913
  %v5989 = vadd.f32 %v5794, %v5915
  %v5990 = vadd.f32 %v5795, %v5917
  %v5991 = vadd.f32 %v5796, %v5919
  %v5992 = vadd.f32 %v5797, %v5921
  %v5993 = vadd.f32 %v5798, %v5923
  %v5994 = vadd.f32 %v5799, %v5925
  %v5995 = vadd.f32 %v5800, %v5927
  %v5996 = vadd.f32 %v5801, %v5929
  %v5997 = vadd.f32 %v5802, %v5931
  %v5998 = vadd.f32 %v5803, %v5933
  %v5999 = vadd.f32 %v5804, %v5935
  %v6000 = vadd.f32 %v5805, %v5937
  %v6001 = vadd.f32 %v5806, %v5939
  %v6002 = vadd.f32 %v5807, %v5941
  %v6003 = vadd.f32 %v5808, %v5943
  %v6004 = vadd.f32 %v5809, %v5945
  %v6005 = vadd.f32 %v5810, %v5947
  %v6006 = vadd.f32 %v5811, %v5949
  %v6007 = vadd.f32 %v5812, %v5951
  %v6008 = vadd.f32 %v5813, %v5953
  %v6009 = vadd.f32 %v5814, %v5955
  %v6010 = vadd.f32 %v5815, %v5957
  %v6011 = vadd.f32 %v5816, %v5959
  %v6012 = vadd.f32 %v5986, %v4407
  %v6013 = vadd.f32 %v5987, %v4407
  %v6014 = vadd.f32 %v5988, %v4407
  %v6015 = vadd.f32 %v5989, %v4407
  %v6016 = vadd.f32 %v5990, %v4407
  %v6017 = vadd.f32 %v5991, %v4407
  %v6018 = vadd.f32 %v5992, %v4407
  %v6019 = vadd.f32 %v5993, %v4407
  %v6020 = vadd.f32 %v5994, %v4407
  %v6021 = vadd.f32 %v5995, %v4407
  %v6022 = vadd.f32 %v5996, %v4407
  %v6023 = vadd.f32 %v5997, %v4407
  %v6024 = vadd.f32 %v5998, %v4407
  %v6025 = vadd.f32 %v5999, %v4407
  %v6026 = vadd.f32 %v6000, %v4407
  %v6027 = vadd.f32 %v6001, %v4407
  %v6028 = vadd.f32 %v6002, %v4407
  %v6029 = vadd.f32 %v6003, %v4407
  %v6030 = vadd.f32 %v6004, %v4407
  %v6031 = vadd.f32 %v6005, %v4407
  %v6032 = vadd.f32 %v6006, %v4407
  %v6033 = vadd.f32 %v6007, %v4407
  %v6034 = vadd.f32 %v6008, %v4407
  %v6035 = vadd.f32 %v6009, %v4407
  %v6036 = vadd.f32 %v6010, %v4407
  %v6037 = vadd.f32 %v6011, %v4407
  %v6038 = vmul.f32 %v6012, 0.5
  %v6039 = vmul.f32 %v6013, 0.5
  %v6040 = vmul.f32 %v6014, 0.5
  %v6041 = vmul.f32 %v6015, 0.5
  %v6042 = vmul.f32 %v6016, 0.5
  %v6043 = vmul.f32 %v6017, 0.5
  %v6044 = vmul.f32 %v6018, 0.5
  %v6045 = vmul.f32 %v6019, 0.5
  %v6046 = vmul.f32 %v6020, 0.5
  %v6047 = vmul.f32 %v6021, 0.5
  %v6048 = vmul.f32 %v6022, 0.5
  %v6049 = vmul.f32 %v6023, 0.5
  %v6050 = vmul.f32 %v6024, 0.5
  %v6051 = vmul.f32 %v6025, 0.5
  %v6052 = vmul.f32 %v6026, 0.5
  %v6053 = vmul.f32 %v6027, 0.5
  %v6054 = vmul.f32 %v6028, 0.5
  %v6055 = vmul.f32 %v6029, 0.5
  %v6056 = vmul.f32 %v6030, 0.5
  %v6057 = vmul.f32 %v6031, 0.5
  %v6058 = vmul.f32 %v6032, 0.5
  %v6059 = vmul.f32 %v6033, 0.5
  %v6060 = vmul.f32 %v6034, 0.5
  %v6061 = vmul.f32 %v6035, 0.5
  %v6062 = vmul.f32 %v6036, 0.5
  %v6063 = vmul.f32 %v6037, 0.5
  %v6064 = vmul.f32 %v6012, 0.70710677
  %v6065 = vmul.f32 %v6013, 0.70710677
  %v6066 = vmul.f32 %v6014, 0.70710677
  %v6067 = vmul.f32 %v6015, 0.70710677
  %v6068 = vmul.f32 %v6016, 0.70710677
  %v6069 = vmul.f32 %v6017, 0.70710677
  %v6070 = vmul.f32 %v6018, 0.70710677
  %v6071 = vmul.f32 %v6019, 0.70710677
  %v6072 = vmul.f32 %v6020, 0.70710677
  %v6073 = vmul.f32 %v6021, 0.70710677
  %v6074 = vmul.f32 %v6022, 0.70710677
  %v6075 = vmul.f32 %v6023, 0.70710677
  %v6076 = vmul.f32 %v6024, 0.70710677
  %v6077 = vmul.f32 %v6025, 0.70710677
  %v6078 = vmul.f32 %v6026, 0.70710677
  %v6079 = vmul.f32 %v6027, 0.70710677
  %v6080 = vmul.f32 %v6028, 0.70710677
  %v6081 = vmul.f32 %v6029, 0.70710677
  %v6082 = vmul.f32 %v6030, 0.70710677
  %v6083 = vmul.f32 %v6031, 0.70710677
  %v6084 = vmul.f32 %v6032, 0.70710677
  %v6085 = vmul.f32 %v6033, 0.70710677
  %v6086 = vmul.f32 %v6034, 0.70710677
  %v6087 = vmul.f32 %v6035, 0.70710677
  %v6088 = vmul.f32 %v6036, 0.70710677
  %v6089 = vmul.f32 %v6037, 0.70710677
  %vm6090 = vcmp.ge.f32.partialorder %v6064, 0.0
  %vm6091 = vcmp.ge.f32.partialorder %v6065, 0.0
  %vm6092 = vcmp.ge.f32.partialorder %v6066, 0.0
  %vm6093 = vcmp.ge.f32.partialorder %v6067, 0.0
  %vm6094 = vcmp.ge.f32.partialorder %v6068, 0.0
  %vm6095 = vcmp.ge.f32.partialorder %v6069, 0.0
  %vm6096 = vcmp.ge.f32.partialorder %v6070, 0.0
  %vm6097 = vcmp.ge.f32.partialorder %v6071, 0.0
  %vm6098 = vcmp.ge.f32.partialorder %v6072, 0.0
  %vm6099 = vcmp.ge.f32.partialorder %v6073, 0.0
  %vm6100 = vcmp.ge.f32.partialorder %v6074, 0.0
  %vm6101 = vcmp.ge.f32.partialorder %v6075, 0.0
  %vm6102 = vcmp.ge.f32.partialorder %v6076, 0.0
  %vm6103 = vcmp.ge.f32.partialorder %v6077, 0.0
  %vm6104 = vcmp.ge.f32.partialorder %v6078, 0.0
  %vm6105 = vcmp.ge.f32.partialorder %v6079, 0.0
  %vm6106 = vcmp.ge.f32.partialorder %v6080, 0.0
  %vm6107 = vcmp.ge.f32.partialorder %v6081, 0.0
  %vm6108 = vcmp.ge.f32.partialorder %v6082, 0.0
  %vm6109 = vcmp.ge.f32.partialorder %v6083, 0.0
  %vm6110 = vcmp.ge.f32.partialorder %v6084, 0.0
  %vm6111 = vcmp.ge.f32.partialorder %v6085, 0.0
  %vm6112 = vcmp.ge.f32.partialorder %v6086, 0.0
  %vm6113 = vcmp.ge.f32.partialorder %v6087, 0.0
  %vm6114 = vcmp.ge.f32.partialorder %v6088, 0.0
  %vm6115 = vcmp.ge.f32.partialorder %v6089, 0.0
  %v6116 = vsel %vm6090, 1.0, -1.0
  %v6117 = vsel %vm6091, 1.0, -1.0
  %v6118 = vsel %vm6092, 1.0, -1.0
  %v6119 = vsel %vm6093, 1.0, -1.0
  %v6120 = vsel %vm6094, 1.0, -1.0
  %v6121 = vsel %vm6095, 1.0, -1.0
  %v6122 = vsel %vm6096, 1.0, -1.0
  %v6123 = vsel %vm6097, 1.0, -1.0
  %v6124 = vsel %vm6098, 1.0, -1.0
  %v6125 = vsel %vm6099, 1.0, -1.0
  %v6126 = vsel %vm6100, 1.0, -1.0
  %v6127 = vsel %vm6101, 1.0, -1.0
  %v6128 = vsel %vm6102, 1.0, -1.0
  %v6129 = vsel %vm6103, 1.0, -1.0
  %v6130 = vsel %vm6104, 1.0, -1.0
  %v6131 = vsel %vm6105, 1.0, -1.0
  %v6132 = vsel %vm6106, 1.0, -1.0
  %v6133 = vsel %vm6107, 1.0, -1.0
  %v6134 = vsel %vm6108, 1.0, -1.0
  %v6135 = vsel %vm6109, 1.0, -1.0
  %v6136 = vsel %vm6110, 1.0, -1.0
  %v6137 = vsel %vm6111, 1.0, -1.0
  %v6138 = vsel %vm6112, 1.0, -1.0
  %v6139 = vsel %vm6113, 1.0, -1.0
  %v6140 = vsel %vm6114, 1.0, -1.0
  %v6141 = vsel %vm6115, 1.0, -1.0
  %v6142 = vand.u32 2147483647, %v6064
  %v6143 = vand.u32 2147483647, %v6065
  %v6144 = vand.u32 2147483647, %v6066
  %v6145 = vand.u32 2147483647, %v6067
  %v6146 = vand.u32 2147483647, %v6068
  %v6147 = vand.u32 2147483647, %v6069
  %v6148 = vand.u32 2147483647, %v6070
  %v6149 = vand.u32 2147483647, %v6071
  %v6150 = vand.u32 2147483647, %v6072
  %v6151 = vand.u32 2147483647, %v6073
  %v6152 = vand.u32 2147483647, %v6074
  %v6153 = vand.u32 2147483647, %v6075
  %v6154 = vand.u32 2147483647, %v6076
  %v6155 = vand.u32 2147483647, %v6077
  %v6156 = vand.u32 2147483647, %v6078
  %v6157 = vand.u32 2147483647, %v6079
  %v6158 = vand.u32 2147483647, %v6080
  %v6159 = vand.u32 2147483647, %v6081
  %v6160 = vand.u32 2147483647, %v6082
  %v6161 = vand.u32 2147483647, %v6083
  %v6162 = vand.u32 2147483647, %v6084
  %v6163 = vand.u32 2147483647, %v6085
  %v6164 = vand.u32 2147483647, %v6086
  %v6165 = vand.u32 2147483647, %v6087
  %v6166 = vand.u32 2147483647, %v6088
  %v6167 = vand.u32 2147483647, %v6089
  %v6168 = vmul.f32 %v6142, 0.3275911
  %v6169 = vmul.f32 %v6143, 0.3275911
  %v6170 = vmul.f32 %v6144, 0.3275911
  %v6171 = vmul.f32 %v6145, 0.3275911
  %v6172 = vmul.f32 %v6146, 0.3275911
  %v6173 = vmul.f32 %v6147, 0.3275911
  %v6174 = vmul.f32 %v6148, 0.3275911
  %v6175 = vmul.f32 %v6149, 0.3275911
  %v6176 = vmul.f32 %v6150, 0.3275911
  %v6177 = vmul.f32 %v6151, 0.3275911
  %v6178 = vmul.f32 %v6152, 0.3275911
  %v6179 = vmul.f32 %v6153, 0.3275911
  %v6180 = vmul.f32 %v6154, 0.3275911
  %v6181 = vmul.f32 %v6155, 0.3275911
  %v6182 = vmul.f32 %v6156, 0.3275911
  %v6183 = vmul.f32 %v6157, 0.3275911
  %v6184 = vmul.f32 %v6158, 0.3275911
  %v6185 = vmul.f32 %v6159, 0.3275911
  %v6186 = vmul.f32 %v6160, 0.3275911
  %v6187 = vmul.f32 %v6161, 0.3275911
  %v6188 = vmul.f32 %v6162, 0.3275911
  %v6189 = vmul.f32 %v6163, 0.3275911
  %v6190 = vmul.f32 %v6164, 0.3275911
  %v6191 = vmul.f32 %v6165, 0.3275911
  %v6192 = vmul.f32 %v6166, 0.3275911
  %v6193 = vmul.f32 %v6167, 0.3275911
  %v6194 = vadd.f32 %v6168, 1.0
  %v6195 = vadd.f32 %v6169, 1.0
  %v6196 = vadd.f32 %v6170, 1.0
  %v6197 = vadd.f32 %v6171, 1.0
  %v6198 = vadd.f32 %v6172, 1.0
  %v6199 = vadd.f32 %v6173, 1.0
  %v6200 = vadd.f32 %v6174, 1.0
  %v6201 = vadd.f32 %v6175, 1.0
  %v6202 = vadd.f32 %v6176, 1.0
  %v6203 = vadd.f32 %v6177, 1.0
  %v6204 = vadd.f32 %v6178, 1.0
  %v6205 = vadd.f32 %v6179, 1.0
  %v6206 = vadd.f32 %v6180, 1.0
  %v6207 = vadd.f32 %v6181, 1.0
  %v6208 = vadd.f32 %v6182, 1.0
  %v6209 = vadd.f32 %v6183, 1.0
  %v6210 = vadd.f32 %v6184, 1.0
  %v6211 = vadd.f32 %v6185, 1.0
  %v6212 = vadd.f32 %v6186, 1.0
  %v6213 = vadd.f32 %v6187, 1.0
  %v6214 = vadd.f32 %v6188, 1.0
  %v6215 = vadd.f32 %v6189, 1.0
  %v6216 = vadd.f32 %v6190, 1.0
  %v6217 = vadd.f32 %v6191, 1.0
  %v6218 = vadd.f32 %v6192, 1.0
  %v6219 = vadd.f32 %v6193, 1.0
  %v6220 = vrcp.pop %v6194
  %v6221 = vrcp.pop %v6195
  %v6222 = vrcp.pop %v6196
  %v6223 = vrcp.pop %v6197
  %v6224 = vrcp.pop %v6198
  %v6225 = vrcp.pop %v6199
  %v6226 = vrcp.pop %v6200
  %v6227 = vrcp.pop %v6201
  %v6228 = vrcp.pop %v6202
  %v6229 = vrcp.pop %v6203
  %v6230 = vrcp.pop %v6204
  %v6231 = vrcp.pop %v6205
  %v6232 = vrcp.pop %v6206
  %v6233 = vrcp.pop %v6207
  %v6234 = vrcp.pop %v6208
  %v6235 = vrcp.pop %v6209
  %v6236 = vrcp.pop %v6210
  %v6237 = vrcp.pop %v6211
  %v6238 = vrcp.pop %v6212
  %v6239 = vrcp.pop %v6213
  %v6240 = vrcp.pop %v6214
  %v6241 = vrcp.pop %v6215
  %v6242 = vrcp.pop %v6216
  %v6243 = vrcp.pop %v6217
  %v6244 = vrcp.pop %v6218
  %v6245 = vrcp.pop %v6219
  %v6246 = vmul.f32 %v6220, 1.0614054
  %v6247 = vmul.f32 %v6221, 1.0614054
  %v6248 = vmul.f32 %v6222, 1.0614054
  %v6249 = vmul.f32 %v6223, 1.0614054
  %v6250 = vmul.f32 %v6224, 1.0614054
  %v6251 = vmul.f32 %v6225, 1.0614054
  %v6252 = vmul.f32 %v6226, 1.0614054
  %v6253 = vmul.f32 %v6227, 1.0614054
  %v6254 = vmul.f32 %v6228, 1.0614054
  %v6255 = vmul.f32 %v6229, 1.0614054
  %v6256 = vmul.f32 %v6230, 1.0614054
  %v6257 = vmul.f32 %v6231, 1.0614054
  %v6258 = vmul.f32 %v6232, 1.0614054
  %v6259 = vmul.f32 %v6233, 1.0614054
  %v6260 = vmul.f32 %v6234, 1.0614054
  %v6261 = vmul.f32 %v6235, 1.0614054
  %v6262 = vmul.f32 %v6236, 1.0614054
  %v6263 = vmul.f32 %v6237, 1.0614054
  %v6264 = vmul.f32 %v6238, 1.0614054
  %v6265 = vmul.f32 %v6239, 1.0614054
  %v6266 = vmul.f32 %v6240, 1.0614054
  %v6267 = vmul.f32 %v6241, 1.0614054
  %v6268 = vmul.f32 %v6242, 1.0614054
  %v6269 = vmul.f32 %v6243, 1.0614054
  %v6270 = vmul.f32 %v6244, 1.0614054
  %v6271 = vmul.f32 %v6245, 1.0614054
  %v6272 = vadd.f32 %v6246, -1.4531521
  %v6273 = vadd.f32 %v6247, -1.4531521
  %v6274 = vadd.f32 %v6248, -1.4531521
  %v6275 = vadd.f32 %v6249, -1.4531521
  %v6276 = vadd.f32 %v6250, -1.4531521
  %v6277 = vadd.f32 %v6251, -1.4531521
  %v6278 = vadd.f32 %v6252, -1.4531521
  %v6279 = vadd.f32 %v6253, -1.4531521
  %v6280 = vadd.f32 %v6254, -1.4531521
  %v6281 = vadd.f32 %v6255, -1.4531521
  %v6282 = vadd.f32 %v6256, -1.4531521
  %v6283 = vadd.f32 %v6257, -1.4531521
  %v6284 = vadd.f32 %v6258, -1.4531521
  %v6285 = vadd.f32 %v6259, -1.4531521
  %v6286 = vadd.f32 %v6260, -1.4531521
  %v6287 = vadd.f32 %v6261, -1.4531521
  %v6288 = vadd.f32 %v6262, -1.4531521
  %v6289 = vadd.f32 %v6263, -1.4531521
  %v6290 = vadd.f32 %v6264, -1.4531521
  %v6291 = vadd.f32 %v6265, -1.4531521
  %v6292 = vadd.f32 %v6266, -1.4531521
  %v6293 = vadd.f32 %v6267, -1.4531521
  %v6294 = vadd.f32 %v6268, -1.4531521
  %v6295 = vadd.f32 %v6269, -1.4531521
  %v6296 = vadd.f32 %v6270, -1.4531521
  %v6297 = vadd.f32 %v6271, -1.4531521
  %v6298 = vmul.f32 %v6220, %v6272
  %v6299 = vmul.f32 %v6221, %v6273
  %v6300 = vmul.f32 %v6222, %v6274
  %v6301 = vmul.f32 %v6223, %v6275
  %v6302 = vmul.f32 %v6224, %v6276
  %v6303 = vmul.f32 %v6225, %v6277
  %v6304 = vmul.f32 %v6226, %v6278
  %v6305 = vmul.f32 %v6227, %v6279
  %v6306 = vmul.f32 %v6228, %v6280
  %v6307 = vmul.f32 %v6229, %v6281
  %v6308 = vmul.f32 %v6230, %v6282
  %v6309 = vmul.f32 %v6231, %v6283
  %v6310 = vmul.f32 %v6232, %v6284
  %v6311 = vmul.f32 %v6233, %v6285
  %v6312 = vmul.f32 %v6234, %v6286
  %v6313 = vmul.f32 %v6235, %v6287
  %v6314 = vmul.f32 %v6236, %v6288
  %v6315 = vmul.f32 %v6237, %v6289
  %v6316 = vmul.f32 %v6238, %v6290
  %v6317 = vmul.f32 %v6239, %v6291
  %v6318 = vmul.f32 %v6240, %v6292
  %v6319 = vmul.f32 %v6241, %v6293
  %v6320 = vmul.f32 %v6242, %v6294
  %v6321 = vmul.f32 %v6243, %v6295
  %v6322 = vmul.f32 %v6244, %v6296
  %v6323 = vmul.f32 %v6245, %v6297
  %v6324 = vadd.f32 %v6298, 1.4214138
  %v6325 = vadd.f32 %v6299, 1.4214138
  %v6326 = vadd.f32 %v6300, 1.4214138
  %v6327 = vadd.f32 %v6301, 1.4214138
  %v6328 = vadd.f32 %v6302, 1.4214138
  %v6329 = vadd.f32 %v6303, 1.4214138
  %v6330 = vadd.f32 %v6304, 1.4214138
  %v6331 = vadd.f32 %v6305, 1.4214138
  %v6332 = vadd.f32 %v6306, 1.4214138
  %v6333 = vadd.f32 %v6307, 1.4214138
  %v6334 = vadd.f32 %v6308, 1.4214138
  %v6335 = vadd.f32 %v6309, 1.4214138
  %v6336 = vadd.f32 %v6310, 1.4214138
  %v6337 = vadd.f32 %v6311, 1.4214138
  %v6338 = vadd.f32 %v6312, 1.4214138
  %v6339 = vadd.f32 %v6313, 1.4214138
  %v6340 = vadd.f32 %v6314, 1.4214138
  %v6341 = vadd.f32 %v6315, 1.4214138
  %v6342 = vadd.f32 %v6316, 1.4214138
  %v6343 = vadd.f32 %v6317, 1.4214138
  %v6344 = vadd.f32 %v6318, 1.4214138
  %v6345 = vadd.f32 %v6319, 1.4214138
  %v6346 = vadd.f32 %v6320, 1.4214138
  %v6347 = vadd.f32 %v6321, 1.4214138
  %v6348 = vadd.f32 %v6322, 1.4214138
  %v6349 = vadd.f32 %v6323, 1.4214138
  %v6350 = vmul.f32 %v6220, %v6324
  %v6351 = vmul.f32 %v6221, %v6325
  %v6352 = vmul.f32 %v6222, %v6326
  %v6353 = vmul.f32 %v6223, %v6327
  %v6354 = vmul.f32 %v6224, %v6328
  %v6355 = vmul.f32 %v6225, %v6329
  %v6356 = vmul.f32 %v6226, %v6330
  %v6357 = vmul.f32 %v6227, %v6331
  %v6358 = vmul.f32 %v6228, %v6332
  %v6359 = vmul.f32 %v6229, %v6333
  %v6360 = vmul.f32 %v6230, %v6334
  %v6361 = vmul.f32 %v6231, %v6335
  %v6362 = vmul.f32 %v6232, %v6336
  %v6363 = vmul.f32 %v6233, %v6337
  %v6364 = vmul.f32 %v6234, %v6338
  %v6365 = vmul.f32 %v6235, %v6339
  %v6366 = vmul.f32 %v6236, %v6340
  %v6367 = vmul.f32 %v6237, %v6341
  %v6368 = vmul.f32 %v6238, %v6342
  %v6369 = vmul.f32 %v6239, %v6343
  %v6370 = vmul.f32 %v6240, %v6344
  %v6371 = vmul.f32 %v6241, %v6345
  %v6372 = vmul.f32 %v6242, %v6346
  %v6373 = vmul.f32 %v6243, %v6347
  %v6374 = vmul.f32 %v6244, %v6348
  %v6375 = vmul.f32 %v6245, %v6349
  %v6376 = vadd.f32 %v6350, -0.28449672
  %v6377 = vadd.f32 %v6351, -0.28449672
  %v6378 = vadd.f32 %v6352, -0.28449672
  %v6379 = vadd.f32 %v6353, -0.28449672
  %v6380 = vadd.f32 %v6354, -0.28449672
  %v6381 = vadd.f32 %v6355, -0.28449672
  %v6382 = vadd.f32 %v6356, -0.28449672
  %v6383 = vadd.f32 %v6357, -0.28449672
  %v6384 = vadd.f32 %v6358, -0.28449672
  %v6385 = vadd.f32 %v6359, -0.28449672
  %v6386 = vadd.f32 %v6360, -0.28449672
  %v6387 = vadd.f32 %v6361, -0.28449672
  %v6388 = vadd.f32 %v6362, -0.28449672
  %v6389 = vadd.f32 %v6363, -0.28449672
  %v6390 = vadd.f32 %v6364, -0.28449672
  %v6391 = vadd.f32 %v6365, -0.28449672
  %v6392 = vadd.f32 %v6366, -0.28449672
  %v6393 = vadd.f32 %v6367, -0.28449672
  %v6394 = vadd.f32 %v6368, -0.28449672
  %v6395 = vadd.f32 %v6369, -0.28449672
  %v6396 = vadd.f32 %v6370, -0.28449672
  %v6397 = vadd.f32 %v6371, -0.28449672
  %v6398 = vadd.f32 %v6372, -0.28449672
  %v6399 = vadd.f32 %v6373, -0.28449672
  %v6400 = vadd.f32 %v6374, -0.28449672
  %v6401 = vadd.f32 %v6375, -0.28449672
  %v6402 = vmul.f32 %v6220, %v6376
  %v6403 = vmul.f32 %v6221, %v6377
  %v6404 = vmul.f32 %v6222, %v6378
  %v6405 = vmul.f32 %v6223, %v6379
  %v6406 = vmul.f32 %v6224, %v6380
  %v6407 = vmul.f32 %v6225, %v6381
  %v6408 = vmul.f32 %v6226, %v6382
  %v6409 = vmul.f32 %v6227, %v6383
  %v6410 = vmul.f32 %v6228, %v6384
  %v6411 = vmul.f32 %v6229, %v6385
  %v6412 = vmul.f32 %v6230, %v6386
  %v6413 = vmul.f32 %v6231, %v6387
  %v6414 = vmul.f32 %v6232, %v6388
  %v6415 = vmul.f32 %v6233, %v6389
  %v6416 = vmul.f32 %v6234, %v6390
  %v6417 = vmul.f32 %v6235, %v6391
  %v6418 = vmul.f32 %v6236, %v6392
  %v6419 = vmul.f32 %v6237, %v6393
  %v6420 = vmul.f32 %v6238, %v6394
  %v6421 = vmul.f32 %v6239, %v6395
  %v6422 = vmul.f32 %v6240, %v6396
  %v6423 = vmul.f32 %v6241, %v6397
  %v6424 = vmul.f32 %v6242, %v6398
  %v6425 = vmul.f32 %v6243, %v6399
  %v6426 = vmul.f32 %v6244, %v6400
  %v6427 = vmul.f32 %v6245, %v6401
  %v6428 = vadd.f32 %v6402, 0.2548296
  %v6429 = vadd.f32 %v6403, 0.2548296
  %v6430 = vadd.f32 %v6404, 0.2548296
  %v6431 = vadd.f32 %v6405, 0.2548296
  %v6432 = vadd.f32 %v6406, 0.2548296
  %v6433 = vadd.f32 %v6407, 0.2548296
  %v6434 = vadd.f32 %v6408, 0.2548296
  %v6435 = vadd.f32 %v6409, 0.2548296
  %v6436 = vadd.f32 %v6410, 0.2548296
  %v6437 = vadd.f32 %v6411, 0.2548296
  %v6438 = vadd.f32 %v6412, 0.2548296
  %v6439 = vadd.f32 %v6413, 0.2548296
  %v6440 = vadd.f32 %v6414, 0.2548296
  %v6441 = vadd.f32 %v6415, 0.2548296
  %v6442 = vadd.f32 %v6416, 0.2548296
  %v6443 = vadd.f32 %v6417, 0.2548296
  %v6444 = vadd.f32 %v6418, 0.2548296
  %v6445 = vadd.f32 %v6419, 0.2548296
  %v6446 = vadd.f32 %v6420, 0.2548296
  %v6447 = vadd.f32 %v6421, 0.2548296
  %v6448 = vadd.f32 %v6422, 0.2548296
  %v6449 = vadd.f32 %v6423, 0.2548296
  %v6450 = vadd.f32 %v6424, 0.2548296
  %v6451 = vadd.f32 %v6425, 0.2548296
  %v6452 = vadd.f32 %v6426, 0.2548296
  %v6453 = vadd.f32 %v6427, 0.2548296
  %v6454 = vmul.f32 %v6220, %v6428
  %v6455 = vmul.f32 %v6221, %v6429
  %v6456 = vmul.f32 %v6222, %v6430
  %v6457 = vmul.f32 %v6223, %v6431
  %v6458 = vmul.f32 %v6224, %v6432
  %v6459 = vmul.f32 %v6225, %v6433
  %v6460 = vmul.f32 %v6226, %v6434
  %v6461 = vmul.f32 %v6227, %v6435
  %v6462 = vmul.f32 %v6228, %v6436
  %v6463 = vmul.f32 %v6229, %v6437
  %v6464 = vmul.f32 %v6230, %v6438
  %v6465 = vmul.f32 %v6231, %v6439
  %v6466 = vmul.f32 %v6232, %v6440
  %v6467 = vmul.f32 %v6233, %v6441
  %v6468 = vmul.f32 %v6234, %v6442
  %v6469 = vmul.f32 %v6235, %v6443
  %v6470 = vmul.f32 %v6236, %v6444
  %v6471 = vmul.f32 %v6237, %v6445
  %v6472 = vmul.f32 %v6238, %v6446
  %v6473 = vmul.f32 %v6239, %v6447
  %v6474 = vmul.f32 %v6240, %v6448
  %v6475 = vmul.f32 %v6241, %v6449
  %v6476 = vmul.f32 %v6242, %v6450
  %v6477 = vmul.f32 %v6243, %v6451
  %v6478 = vmul.f32 %v6244, %v6452
  %v6479 = vmul.f32 %v6245, %v6453
  %v6480 = vsub.f32 0.0, %v6142
  %v6481 = vsub.f32 0.0, %v6143
  %v6482 = vsub.f32 0.0, %v6144
  %v6483 = vsub.f32 0.0, %v6145
  %v6484 = vsub.f32 0.0, %v6146
  %v6485 = vsub.f32 0.0, %v6147
  %v6486 = vsub.f32 0.0, %v6148
  %v6487 = vsub.f32 0.0, %v6149
  %v6488 = vsub.f32 0.0, %v6150
  %v6489 = vsub.f32 0.0, %v6151
  %v6490 = vsub.f32 0.0, %v6152
  %v6491 = vsub.f32 0.0, %v6153
  %v6492 = vsub.f32 0.0, %v6154
  %v6493 = vsub.f32 0.0, %v6155
  %v6494 = vsub.f32 0.0, %v6156
  %v6495 = vsub.f32 0.0, %v6157
  %v6496 = vsub.f32 0.0, %v6158
  %v6497 = vsub.f32 0.0, %v6159
  %v6498 = vsub.f32 0.0, %v6160
  %v6499 = vsub.f32 0.0, %v6161
  %v6500 = vsub.f32 0.0, %v6162
  %v6501 = vsub.f32 0.0, %v6163
  %v6502 = vsub.f32 0.0, %v6164
  %v6503 = vsub.f32 0.0, %v6165
  %v6504 = vsub.f32 0.0, %v6166
  %v6505 = vsub.f32 0.0, %v6167
  %v6506 = vmul.f32 %v6480, %v6142
  %v6507 = vmul.f32 %v6481, %v6143
  %v6508 = vmul.f32 %v6482, %v6144
  %v6509 = vmul.f32 %v6483, %v6145
  %v6510 = vmul.f32 %v6484, %v6146
  %v6511 = vmul.f32 %v6485, %v6147
  %v6512 = vmul.f32 %v6486, %v6148
  %v6513 = vmul.f32 %v6487, %v6149
  %v6514 = vmul.f32 %v6488, %v6150
  %v6515 = vmul.f32 %v6489, %v6151
  %v6516 = vmul.f32 %v6490, %v6152
  %v6517 = vmul.f32 %v6491, %v6153
  %v6518 = vmul.f32 %v6492, %v6154
  %v6519 = vmul.f32 %v6493, %v6155
  %v6520 = vmul.f32 %v6494, %v6156
  %v6521 = vmul.f32 %v6495, %v6157
  %v6522 = vmul.f32 %v6496, %v6158
  %v6523 = vmul.f32 %v6497, %v6159
  %v6524 = vmul.f32 %v6498, %v6160
  %v6525 = vmul.f32 %v6499, %v6161
  %v6526 = vmul.f32 %v6500, %v6162
  %v6527 = vmul.f32 %v6501, %v6163
  %v6528 = vmul.f32 %v6502, %v6164
  %v6529 = vmul.f32 %v6503, %v6165
  %v6530 = vmul.f32 %v6504, %v6166
  %v6531 = vmul.f32 %v6505, %v6167
  %v6532 = vmul.f32 %v6506, 1.442695
  %v6533 = vpow.pop %v6532
  %v6534 = vmul.f32 %v6507, 1.442695
  %v6535 = vpow.pop %v6534
  %v6536 = vmul.f32 %v6508, 1.442695
  %v6537 = vpow.pop %v6536
  %v6538 = vmul.f32 %v6509, 1.442695
  %v6539 = vpow.pop %v6538
  %v6540 = vmul.f32 %v6510, 1.442695
  %v6541 = vpow.pop %v6540
  %v6542 = vmul.f32 %v6511, 1.442695
  %v6543 = vpow.pop %v6542
  %v6544 = vmul.f32 %v6512, 1.442695
  %v6545 = vpow.pop %v6544
  %v6546 = vmul.f32 %v6513, 1.442695
  %v6547 = vpow.pop %v6546
  %v6548 = vmul.f32 %v6514, 1.442695
  %v6549 = vpow.pop %v6548
  %v6550 = vmul.f32 %v6515, 1.442695
  %v6551 = vpow.pop %v6550
  %v6552 = vmul.f32 %v6516, 1.442695
  %v6553 = vpow.pop %v6552
  %v6554 = vmul.f32 %v6517, 1.442695
  %v6555 = vpow.pop %v6554
  %v6556 = vmul.f32 %v6518, 1.442695
  %v6557 = vpow.pop %v6556
  %v6558 = vmul.f32 %v6519, 1.442695
  %v6559 = vpow.pop %v6558
  %v6560 = vmul.f32 %v6520, 1.442695
  %v6561 = vpow.pop %v6560
  %v6562 = vmul.f32 %v6521, 1.442695
  %v6563 = vpow.pop %v6562
  %v6564 = vmul.f32 %v6522, 1.442695
  %v6565 = vpow.pop %v6564
  %v6566 = vmul.f32 %v6523, 1.442695
  %v6567 = vpow.pop %v6566
  %v6568 = vmul.f32 %v6524, 1.442695
  %v6569 = vpow.pop %v6568
  %v6570 = vmul.f32 %v6525, 1.442695
  %v6571 = vpow.pop %v6570
  %v6572 = vmul.f32 %v6526, 1.442695
  %v6573 = vpow.pop %v6572
  %v6574 = vmul.f32 %v6527, 1.442695
  %v6575 = vpow.pop %v6574
  %v6576 = vmul.f32 %v6528, 1.442695
  %v6577 = vpow.pop %v6576
  %v6578 = vmul.f32 %v6529, 1.442695
  %v6579 = vpow.pop %v6578
  %v6580 = vmul.f32 %v6530, 1.442695
  %v6581 = vpow.pop %v6580
  %v6582 = vmul.f32 %v6531, 1.442695
  %v6583 = vpow.pop %v6582
  %v6584 = vmul.f32 %v6454, %v6533
  %v6585 = vmul.f32 %v6455, %v6535
  %v6586 = vmul.f32 %v6456, %v6537
  %v6587 = vmul.f32 %v6457, %v6539
  %v6588 = vmul.f32 %v6458, %v6541
  %v6589 = vmul.f32 %v6459, %v6543
  %v6590 = vmul.f32 %v6460, %v6545
  %v6591 = vmul.f32 %v6461, %v6547
  %v6592 = vmul.f32 %v6462, %v6549
  %v6593 = vmul.f32 %v6463, %v6551
  %v6594 = vmul.f32 %v6464, %v6553
  %v6595 = vmul.f32 %v6465, %v6555
  %v6596 = vmul.f32 %v6466, %v6557
  %v6597 = vmul.f32 %v6467, %v6559
  %v6598 = vmul.f32 %v6468, %v6561
  %v6599 = vmul.f32 %v6469, %v6563
  %v6600 = vmul.f32 %v6470, %v6565
  %v6601 = vmul.f32 %v6471, %v6567
  %v6602 = vmul.f32 %v6472, %v6569
  %v6603 = vmul.f32 %v6473, %v6571
  %v6604 = vmul.f32 %v6474, %v6573
  %v6605 = vmul.f32 %v6475, %v6575
  %v6606 = vmul.f32 %v6476, %v6577
  %v6607 = vmul.f32 %v6477, %v6579
  %v6608 = vmul.f32 %v6478, %v6581
  %v6609 = vmul.f32 %v6479, %v6583
  %v6610 = vsub.f32 1.0, %v6584
  %v6611 = vsub.f32 1.0, %v6585
  %v6612 = vsub.f32 1.0, %v6586
  %v6613 = vsub.f32 1.0, %v6587
  %v6614 = vsub.f32 1.0, %v6588
  %v6615 = vsub.f32 1.0, %v6589
  %v6616 = vsub.f32 1.0, %v6590
  %v6617 = vsub.f32 1.0, %v6591
  %v6618 = vsub.f32 1.0, %v6592
  %v6619 = vsub.f32 1.0, %v6593
  %v6620 = vsub.f32 1.0, %v6594
  %v6621 = vsub.f32 1.0, %v6595
  %v6622 = vsub.f32 1.0, %v6596
  %v6623 = vsub.f32 1.0, %v6597
  %v6624 = vsub.f32 1.0, %v6598
  %v6625 = vsub.f32 1.0, %v6599
  %v6626 = vsub.f32 1.0, %v6600
  %v6627 = vsub.f32 1.0, %v6601
  %v6628 = vsub.f32 1.0, %v6602
  %v6629 = vsub.f32 1.0, %v6603
  %v6630 = vsub.f32 1.0, %v6604
  %v6631 = vsub.f32 1.0, %v6605
  %v6632 = vsub.f32 1.0, %v6606
  %v6633 = vsub.f32 1.0, %v6607
  %v6634 = vsub.f32 1.0, %v6608
  %v6635 = vsub.f32 1.0, %v6609
  %v6636 = vmul.f32 %v6116, %v6610
  %v6637 = vmul.f32 %v6117, %v6611
  %v6638 = vmul.f32 %v6118, %v6612
  %v6639 = vmul.f32 %v6119, %v6613
  %v6640 = vmul.f32 %v6120, %v6614
  %v6641 = vmul.f32 %v6121, %v6615
  %v6642 = vmul.f32 %v6122, %v6616
  %v6643 = vmul.f32 %v6123, %v6617
  %v6644 = vmul.f32 %v6124, %v6618
  %v6645 = vmul.f32 %v6125, %v6619
  %v6646 = vmul.f32 %v6126, %v6620
  %v6647 = vmul.f32 %v6127, %v6621
  %v6648 = vmul.f32 %v6128, %v6622
  %v6649 = vmul.f32 %v6129, %v6623
  %v6650 = vmul.f32 %v6130, %v6624
  %v6651 = vmul.f32 %v6131, %v6625
  %v6652 = vmul.f32 %v6132, %v6626
  %v6653 = vmul.f32 %v6133, %v6627
  %v6654 = vmul.f32 %v6134, %v6628
  %v6655 = vmul.f32 %v6135, %v6629
  %v6656 = vmul.f32 %v6136, %v6630
  %v6657 = vmul.f32 %v6137, %v6631
  %v6658 = vmul.f32 %v6138, %v6632
  %v6659 = vmul.f32 %v6139, %v6633
  %v6660 = vmul.f32 %v6140, %v6634
  %v6661 = vmul.f32 %v6141, %v6635
  %v6662 = vadd.f32 %v6636, 1.0
  %v6663 = vadd.f32 %v6637, 1.0
  %v6664 = vadd.f32 %v6638, 1.0
  %v6665 = vadd.f32 %v6639, 1.0
  %v6666 = vadd.f32 %v6640, 1.0
  %v6667 = vadd.f32 %v6641, 1.0
  %v6668 = vadd.f32 %v6642, 1.0
  %v6669 = vadd.f32 %v6643, 1.0
  %v6670 = vadd.f32 %v6644, 1.0
  %v6671 = vadd.f32 %v6645, 1.0
  %v6672 = vadd.f32 %v6646, 1.0
  %v6673 = vadd.f32 %v6647, 1.0
  %v6674 = vadd.f32 %v6648, 1.0
  %v6675 = vadd.f32 %v6649, 1.0
  %v6676 = vadd.f32 %v6650, 1.0
  %v6677 = vadd.f32 %v6651, 1.0
  %v6678 = vadd.f32 %v6652, 1.0
  %v6679 = vadd.f32 %v6653, 1.0
  %v6680 = vadd.f32 %v6654, 1.0
  %v6681 = vadd.f32 %v6655, 1.0
  %v6682 = vadd.f32 %v6656, 1.0
  %v6683 = vadd.f32 %v6657, 1.0
  %v6684 = vadd.f32 %v6658, 1.0
  %v6685 = vadd.f32 %v6659, 1.0
  %v6686 = vadd.f32 %v6660, 1.0
  %v6687 = vadd.f32 %v6661, 1.0
  %v6688 = vmul.f32 %v6038, %v6662
  %v6689 = vmul.f32 %v6039, %v6663
  %v6690 = vmul.f32 %v6040, %v6664
  %v6691 = vmul.f32 %v6041, %v6665
  %v6692 = vmul.f32 %v6042, %v6666
  %v6693 = vmul.f32 %v6043, %v6667
  %v6694 = vmul.f32 %v6044, %v6668
  %v6695 = vmul.f32 %v6045, %v6669
  %v6696 = vmul.f32 %v6046, %v6670
  %v6697 = vmul.f32 %v6047, %v6671
  %v6698 = vmul.f32 %v6048, %v6672
  %v6699 = vmul.f32 %v6049, %v6673
  %v6700 = vmul.f32 %v6050, %v6674
  %v6701 = vmul.f32 %v6051, %v6675
  %v6702 = vmul.f32 %v6052, %v6676
  %v6703 = vmul.f32 %v6053, %v6677
  %v6704 = vmul.f32 %v6054, %v6678
  %v6705 = vmul.f32 %v6055, %v6679
  %v6706 = vmul.f32 %v6056, %v6680
  %v6707 = vmul.f32 %v6057, %v6681
  %v6708 = vmul.f32 %v6058, %v6682
  %v6709 = vmul.f32 %v6059, %v6683
  %v6710 = vmul.f32 %v6060, %v6684
  %v6711 = vmul.f32 %v6061, %v6685
  %v6712 = vmul.f32 %v6062, %v6686
  %v6713 = vmul.f32 %v6063, %v6687
  %6740 = vrot.lane.b32.xlu0 %v6688, 96
  %v6741 = vpop.permute.xlu0 %6740
  %6742 = vrot.lane.b32.xlu0 %v6689, 96
  %v6743 = vpop.permute.xlu0 %6742
  %6744 = vrot.lane.b32.xlu0 %v6690, 96
  %v6745 = vpop.permute.xlu0 %6744
  %6746 = vrot.lane.b32.xlu0 %v6691, 96
  %v6747 = vpop.permute.xlu0 %6746
  %6748 = vrot.lane.b32.xlu0 %v6692, 96
  %v6749 = vpop.permute.xlu0 %6748
  %6750 = vrot.lane.b32.xlu0 %v6693, 96
  %v6751 = vpop.permute.xlu0 %6750
  %6752 = vrot.lane.b32.xlu0 %v6694, 96
  %v6753 = vpop.permute.xlu0 %6752
  %6754 = vrot.lane.b32.xlu0 %v6695, 96
  %v6755 = vpop.permute.xlu0 %6754
  %6756 = vrot.lane.b32.xlu0 %v6696, 96
  %v6757 = vpop.permute.xlu0 %6756
  %6758 = vrot.lane.b32.xlu0 %v6697, 96
  %v6759 = vpop.permute.xlu0 %6758
  %6760 = vrot.lane.b32.xlu0 %v6698, 96
  %v6761 = vpop.permute.xlu0 %6760
  %6762 = vrot.lane.b32.xlu0 %v6699, 96
  %v6763 = vpop.permute.xlu0 %6762
  %6764 = vrot.lane.b32.xlu0 %v6700, 96
  %v6765 = vpop.permute.xlu0 %6764
  %6766 = vrot.lane.b32.xlu0 %v6701, 96
  %v6767 = vpop.permute.xlu0 %6766
  %6768 = vrot.lane.b32.xlu0 %v6702, 96
  %v6769 = vpop.permute.xlu0 %6768
  %6770 = vrot.lane.b32.xlu0 %v6703, 96
  %v6771 = vpop.permute.xlu0 %6770
  %6772 = vrot.lane.b32.xlu0 %v6704, 96
  %v6773 = vpop.permute.xlu0 %6772
  %6774 = vrot.lane.b32.xlu0 %v6705, 96
  %v6775 = vpop.permute.xlu0 %6774
  %6776 = vrot.lane.b32.xlu0 %v6706, 96
  %v6777 = vpop.permute.xlu0 %6776
  %6778 = vrot.lane.b32.xlu0 %v6707, 96
  %v6779 = vpop.permute.xlu0 %6778
  %6780 = vrot.lane.b32.xlu0 %v6708, 96
  %v6781 = vpop.permute.xlu0 %6780
  %6782 = vrot.lane.b32.xlu0 %v6709, 96
  %v6783 = vpop.permute.xlu0 %6782
  %6784 = vrot.lane.b32.xlu0 %v6710, 96
  %v6785 = vpop.permute.xlu0 %6784
  %6786 = vrot.lane.b32.xlu0 %v6711, 96
  %v6787 = vpop.permute.xlu0 %6786
  %6788 = vrot.lane.b32.xlu0 %v6712, 96
  %v6789 = vpop.permute.xlu0 %6788
  %6790 = vrot.lane.b32.xlu0 %v6713, 96
  %v6791 = vpop.permute.xlu0 %6790
  %s6818 = scalar_lea.vmem %s7, 416
  %6819 = vst.msk [vmem:[%s6818 - $0x1] sm:$0xfe] %vm3519, %v6741
  %6820 = vst.msk [vmem:[%s6818 + $0x7] sm:$0x3f] %vm3521, %v6743
  %6821 = vst.msk [vmem:[%s6818 + $0xf] sm:$0xfe] %vm3519, %v6745
  %6822 = vst.msk [vmem:[%s6818 + $0x17] sm:$0x3f] %vm3521, %v6747
  %6823 = vst.msk [vmem:[%s6818 + $0x1f] sm:$0xfe] %vm3519, %v6749
  %6824 = vst.msk [vmem:[%s6818 + $0x27] sm:$0x3f] %vm3521, %v6751
  %6825 = vst.msk [vmem:[%s6818 + $0x2f] sm:$0xfe] %vm3519, %v6753
  %6826 = vst.msk [vmem:[%s6818 + $0x37] sm:$0x3f] %vm3521, %v6755
  %6827 = vst.msk [vmem:[%s6818 + $0x3f] sm:$0xfe] %vm3519, %v6757
  %6828 = vst.msk [vmem:[%s6818 + $0x47] sm:$0x3f] %vm3521, %v6759
  %6829 = vst.msk [vmem:[%s6818 + $0x4f] sm:$0xfe] %vm3519, %v6761
  %6830 = vst.msk [vmem:[%s6818 + $0x57] sm:$0x3f] %vm3521, %v6763
  %6831 = vst.msk [vmem:[%s6818 + $0x5f] sm:$0xfe] %vm3519, %v6765
  %6832 = vst.msk [vmem:[%s6818 + $0x67] sm:$0x3f] %vm3521, %v6767
  %6833 = vst.msk [vmem:[%s6818 + $0x6f] sm:$0xfe] %vm3519, %v6769
  %6834 = vst.msk [vmem:[%s6818 + $0x77] sm:$0x3f] %vm3521, %v6771
  %6835 = vst.msk [vmem:[%s6818 + $0x7f] sm:$0xfe] %vm3519, %v6773
  %6836 = vst.msk [vmem:[%s6818 + $0x87] sm:$0x3f] %vm3521, %v6775
  %6837 = vst.msk [vmem:[%s6818 + $0x8f] sm:$0xfe] %vm3519, %v6777
  %6838 = vst.msk [vmem:[%s6818 + $0x97] sm:$0x3f] %vm3521, %v6779
  %6839 = vst.msk [vmem:[%s6818 + $0x9f] sm:$0xfe] %vm3519, %v6781
  %6840 = vst.msk [vmem:[%s6818 + $0xa7] sm:$0x3f] %vm3521, %v6783
  %6841 = vst.msk [vmem:[%s6818 + $0xaf] sm:$0xfe] %vm3519, %v6785
  %6842 = vst.msk [vmem:[%s6818 + $0xb7] sm:$0x3f] %vm3521, %v6787
  %6843 = vst.msk [vmem:[%s6818 + $0xbf] sm:$0xfe] %vm3519, %v6789
  %6844 = vst.msk [vmem:[%s6818 + $0xc7] sm:$0x3f] %vm3521, %v6791
  %v6845 = vld [vmem:[%s5244] sm:$0xfc]
  %v6846 = vld [vmem:[%s5244 + $0x38] sm:$0x7f]
  %v6847 = vld [vmem:[%s5244 + $0x70] sm:$0xfc]
  %v6848 = vld [vmem:[%s5244 + $0xa8] sm:$0x7f]
  %v6849 = vld [vmem:[%s5244 + $0xe0] sm:$0xfc]
  %v6850 = vld [vmem:[%s5244 + $0x118] sm:$0x7f]
  %v6851 = vld [vmem:[%s5244 + $0x150] sm:$0xfc]
  %v6852 = vld [vmem:[%s5244 + $0x188] sm:$0x7f]
  %v6853 = vld [vmem:[%s5244 + $0x1c0] sm:$0xfc]
  %v6854 = vld [vmem:[%s5244 + $0x1f8] sm:$0x7f]
  %v6855 = vld [vmem:[%s5244 + $0x230] sm:$0xfc]
  %v6856 = vld [vmem:[%s5244 + $0x268] sm:$0x7f]
  %v6857 = vld [vmem:[%s5244 + $0x2a0] sm:$0xfc]
  %v6858 = vld [vmem:[%s5244 + $0x2d8] sm:$0x7f]
  %v6859 = vld [vmem:[%s5244 + $0x310] sm:$0xfc]
  %v6860 = vld [vmem:[%s5244 + $0x348] sm:$0x7f]
  %v6861 = vld [vmem:[%s5244 + $0x380] sm:$0xfc]
  %v6862 = vld [vmem:[%s5244 + $0x3b8] sm:$0x7f]
  %v6863 = vld [vmem:[%s5244 + $0x3f0] sm:$0xfc]
  %v6864 = vld [vmem:[%s5244 + $0x428] sm:$0x7f]
  %v6865 = vld [vmem:[%s5244 + $0x460] sm:$0xfc]
  %v6866 = vld [vmem:[%s5244 + $0x498] sm:$0x7f]
  %v6867 = vld [vmem:[%s5244 + $0x4d0] sm:$0xfc]
  %v6868 = vld [vmem:[%s5244 + $0x508] sm:$0x7f]
  %v6869 = vld [vmem:[%s5244 + $0x540] sm:$0xfc]
  %v6870 = vld [vmem:[%s5244 + $0x578] sm:$0x7f]
  %v6871 = vld [vmem:[%s5244] sm:$0xfe]
  %v6872 = vld [vmem:[%s5244 + $0x38] sm:$0x3f]
  %v6873 = vld [vmem:[%s5244 + $0x70] sm:$0xfe]
  %v6874 = vld [vmem:[%s5244 + $0xa8] sm:$0x3f]
  %v6875 = vld [vmem:[%s5244 + $0xe0] sm:$0xfe]
  %v6876 = vld [vmem:[%s5244 + $0x118] sm:$0x3f]
  %v6877 = vld [vmem:[%s5244 + $0x150] sm:$0xfe]
  %v6878 = vld [vmem:[%s5244 + $0x188] sm:$0x3f]
  %v6879 = vld [vmem:[%s5244 + $0x1c0] sm:$0xfe]
  %v6880 = vld [vmem:[%s5244 + $0x1f8] sm:$0x3f]
  %v6881 = vld [vmem:[%s5244 + $0x230] sm:$0xfe]
  %v6882 = vld [vmem:[%s5244 + $0x268] sm:$0x3f]
  %v6883 = vld [vmem:[%s5244 + $0x2a0] sm:$0xfe]
  %v6884 = vld [vmem:[%s5244 + $0x2d8] sm:$0x3f]
  %v6885 = vld [vmem:[%s5244 + $0x310] sm:$0xfe]
  %v6886 = vld [vmem:[%s5244 + $0x348] sm:$0x3f]
  %v6887 = vld [vmem:[%s5244 + $0x380] sm:$0xfe]
  %v6888 = vld [vmem:[%s5244 + $0x3b8] sm:$0x3f]
  %v6889 = vld [vmem:[%s5244 + $0x3f0] sm:$0xfe]
  %v6890 = vld [vmem:[%s5244 + $0x428] sm:$0x3f]
  %v6891 = vld [vmem:[%s5244 + $0x460] sm:$0xfe]
  %v6892 = vld [vmem:[%s5244 + $0x498] sm:$0x3f]
  %v6893 = vld [vmem:[%s5244 + $0x4d0] sm:$0xfe]
  %v6894 = vld [vmem:[%s5244 + $0x508] sm:$0x3f]
  %v6895 = vld [vmem:[%s5244 + $0x540] sm:$0xfe]
  %v6896 = vld [vmem:[%s5244 + $0x578] sm:$0x3f]
  %v6923 = vrot.slane %v6871, 7
  %v6924 = vrot.slane %v6872, 7
  %v6925 = vsel %vm2261, %v6923, %v6924
  %v6926 = vrot.slane %v6873, 7
  %v6927 = vrot.slane %v6874, 7
  %v6928 = vsel %vm2261, %v6926, %v6927
  %v6929 = vrot.slane %v6875, 7
  %v6930 = vrot.slane %v6876, 7
  %v6931 = vsel %vm2261, %v6929, %v6930
  %v6932 = vrot.slane %v6877, 7
  %v6933 = vrot.slane %v6878, 7
  %v6934 = vsel %vm2261, %v6932, %v6933
  %v6935 = vrot.slane %v6879, 7
  %v6936 = vrot.slane %v6880, 7
  %v6937 = vsel %vm2261, %v6935, %v6936
  %v6938 = vrot.slane %v6881, 7
  %v6939 = vrot.slane %v6882, 7
  %v6940 = vsel %vm2261, %v6938, %v6939
  %v6941 = vrot.slane %v6883, 7
  %v6942 = vrot.slane %v6884, 7
  %v6943 = vsel %vm2261, %v6941, %v6942
  %v6944 = vrot.slane %v6885, 7
  %v6945 = vrot.slane %v6886, 7
  %v6946 = vsel %vm2261, %v6944, %v6945
  %v6947 = vrot.slane %v6887, 7
  %v6948 = vrot.slane %v6888, 7
  %v6949 = vsel %vm2261, %v6947, %v6948
  %v6950 = vrot.slane %v6889, 7
  %v6951 = vrot.slane %v6890, 7
  %v6952 = vsel %vm2261, %v6950, %v6951
  %v6953 = vrot.slane %v6891, 7
  %v6954 = vrot.slane %v6892, 7
  %v6955 = vsel %vm2261, %v6953, %v6954
  %v6956 = vrot.slane %v6893, 7
  %v6957 = vrot.slane %v6894, 7
  %v6958 = vsel %vm2261, %v6956, %v6957
  %v6959 = vrot.slane %v6895, 7
  %v6960 = vrot.slane %v6896, 7
  %v6961 = vsel %vm2261, %v6959, %v6960
  %6962 = vrot.lane.b32.xlu0 %v6923, 64
  %v6963 = vpop.permute.xlu0 %6962
  %6964 = vrot.lane.b32.xlu0 %v6925, 64
  %v6965 = vpop.permute.xlu0 %6964
  %6966 = vrot.lane.b32.xlu0 %v6926, 64
  %v6967 = vpop.permute.xlu0 %6966
  %6968 = vrot.lane.b32.xlu0 %v6928, 64
  %v6969 = vpop.permute.xlu0 %6968
  %6970 = vrot.lane.b32.xlu0 %v6929, 64
  %v6971 = vpop.permute.xlu0 %6970
  %6972 = vrot.lane.b32.xlu0 %v6931, 64
  %v6973 = vpop.permute.xlu0 %6972
  %6974 = vrot.lane.b32.xlu0 %v6932, 64
  %v6975 = vpop.permute.xlu0 %6974
  %6976 = vrot.lane.b32.xlu0 %v6934, 64
  %v6977 = vpop.permute.xlu0 %6976
  %6978 = vrot.lane.b32.xlu0 %v6935, 64
  %v6979 = vpop.permute.xlu0 %6978
  %6980 = vrot.lane.b32.xlu0 %v6937, 64
  %v6981 = vpop.permute.xlu0 %6980
  %6982 = vrot.lane.b32.xlu0 %v6938, 64
  %v6983 = vpop.permute.xlu0 %6982
  %6984 = vrot.lane.b32.xlu0 %v6940, 64
  %v6985 = vpop.permute.xlu0 %6984
  %6986 = vrot.lane.b32.xlu0 %v6941, 64
  %v6987 = vpop.permute.xlu0 %6986
  %6988 = vrot.lane.b32.xlu0 %v6943, 64
  %v6989 = vpop.permute.xlu0 %6988
  %6990 = vrot.lane.b32.xlu0 %v6944, 64
  %v6991 = vpop.permute.xlu0 %6990
  %6992 = vrot.lane.b32.xlu0 %v6946, 64
  %v6993 = vpop.permute.xlu0 %6992
  %6994 = vrot.lane.b32.xlu0 %v6947, 64
  %v6995 = vpop.permute.xlu0 %6994
  %6996 = vrot.lane.b32.xlu0 %v6949, 64
  %v6997 = vpop.permute.xlu0 %6996
  %6998 = vrot.lane.b32.xlu0 %v6950, 64
  %v6999 = vpop.permute.xlu0 %6998
  %7000 = vrot.lane.b32.xlu0 %v6952, 64
  %v7001 = vpop.permute.xlu0 %7000
  %7002 = vrot.lane.b32.xlu0 %v6953, 64
  %v7003 = vpop.permute.xlu0 %7002
  %7004 = vrot.lane.b32.xlu0 %v6955, 64
  %v7005 = vpop.permute.xlu0 %7004
  %7006 = vrot.lane.b32.xlu0 %v6956, 64
  %v7007 = vpop.permute.xlu0 %7006
  %7008 = vrot.lane.b32.xlu0 %v6958, 64
  %v7009 = vpop.permute.xlu0 %7008
  %7010 = vrot.lane.b32.xlu0 %v6959, 64
  %v7011 = vpop.permute.xlu0 %7010
  %7012 = vrot.lane.b32.xlu0 %v6961, 64
  %v7013 = vpop.permute.xlu0 %7012
  %v7040 = vadd.f32 %v6845, %v6963
  %v7041 = vadd.f32 %v6846, %v6965
  %v7042 = vadd.f32 %v6847, %v6967
  %v7043 = vadd.f32 %v6848, %v6969
  %v7044 = vadd.f32 %v6849, %v6971
  %v7045 = vadd.f32 %v6850, %v6973
  %v7046 = vadd.f32 %v6851, %v6975
  %v7047 = vadd.f32 %v6852, %v6977
  %v7048 = vadd.f32 %v6853, %v6979
  %v7049 = vadd.f32 %v6854, %v6981
  %v7050 = vadd.f32 %v6855, %v6983
  %v7051 = vadd.f32 %v6856, %v6985
  %v7052 = vadd.f32 %v6857, %v6987
  %v7053 = vadd.f32 %v6858, %v6989
  %v7054 = vadd.f32 %v6859, %v6991
  %v7055 = vadd.f32 %v6860, %v6993
  %v7056 = vadd.f32 %v6861, %v6995
  %v7057 = vadd.f32 %v6862, %v6997
  %v7058 = vadd.f32 %v6863, %v6999
  %v7059 = vadd.f32 %v6864, %v7001
  %v7060 = vadd.f32 %v6865, %v7003
  %v7061 = vadd.f32 %v6866, %v7005
  %v7062 = vadd.f32 %v6867, %v7007
  %v7063 = vadd.f32 %v6868, %v7009
  %v7064 = vadd.f32 %v6869, %v7011
  %v7065 = vadd.f32 %v6870, %v7013
  %v7066 = vld [vmem:[%s5244 + $0x8] sm:$0xff]
  %v7067 = vld [vmem:[%s5244 + $0x40] sm:$0x1f]
  %v7068 = vld [vmem:[%s5244 + $0x78] sm:$0xff]
  %v7069 = vld [vmem:[%s5244 + $0xb0] sm:$0x1f]
  %v7070 = vld [vmem:[%s5244 + $0xe8] sm:$0xff]
  %v7071 = vld [vmem:[%s5244 + $0x120] sm:$0x1f]
  %v7072 = vld [vmem:[%s5244 + $0x158] sm:$0xff]
  %v7073 = vld [vmem:[%s5244 + $0x190] sm:$0x1f]
  %v7074 = vld [vmem:[%s5244 + $0x1c8] sm:$0xff]
  %v7075 = vld [vmem:[%s5244 + $0x200] sm:$0x1f]
  %v7076 = vld [vmem:[%s5244 + $0x238] sm:$0xff]
  %v7077 = vld [vmem:[%s5244 + $0x270] sm:$0x1f]
  %v7078 = vld [vmem:[%s5244 + $0x2a8] sm:$0xff]
  %v7079 = vld [vmem:[%s5244 + $0x2e0] sm:$0x1f]
  %v7080 = vld [vmem:[%s5244 + $0x318] sm:$0xff]
  %v7081 = vld [vmem:[%s5244 + $0x350] sm:$0x1f]
  %v7082 = vld [vmem:[%s5244 + $0x388] sm:$0xff]
  %v7083 = vld [vmem:[%s5244 + $0x3c0] sm:$0x1f]
  %v7084 = vld [vmem:[%s5244 + $0x3f8] sm:$0xff]
  %v7085 = vld [vmem:[%s5244 + $0x430] sm:$0x1f]
  %v7086 = vld [vmem:[%s5244 + $0x468] sm:$0xff]
  %v7087 = vld [vmem:[%s5244 + $0x4a0] sm:$0x1f]
  %v7088 = vld [vmem:[%s5244 + $0x4d8] sm:$0xff]
  %v7089 = vld [vmem:[%s5244 + $0x510] sm:$0x1f]
  %v7090 = vld [vmem:[%s5244 + $0x548] sm:$0xff]
  %v7091 = vld [vmem:[%s5244 + $0x580] sm:$0x1f]
  %v7118 = vrot.slane %v7066, 6
  %v7119 = vrot.slane %v7067, 6
  %v7120 = vsel %vm3820, %v7118, %v7119
  %v7121 = vrot.slane %v7068, 6
  %v7122 = vrot.slane %v7069, 6
  %v7123 = vsel %vm3820, %v7121, %v7122
  %v7124 = vrot.slane %v7070, 6
  %v7125 = vrot.slane %v7071, 6
  %v7126 = vsel %vm3820, %v7124, %v7125
  %v7127 = vrot.slane %v7072, 6
  %v7128 = vrot.slane %v7073, 6
  %v7129 = vsel %vm3820, %v7127, %v7128
  %v7130 = vrot.slane %v7074, 6
  %v7131 = vrot.slane %v7075, 6
  %v7132 = vsel %vm3820, %v7130, %v7131
  %v7133 = vrot.slane %v7076, 6
  %v7134 = vrot.slane %v7077, 6
  %v7135 = vsel %vm3820, %v7133, %v7134
  %v7136 = vrot.slane %v7078, 6
  %v7137 = vrot.slane %v7079, 6
  %v7138 = vsel %vm3820, %v7136, %v7137
  %v7139 = vrot.slane %v7080, 6
  %v7140 = vrot.slane %v7081, 6
  %v7141 = vsel %vm3820, %v7139, %v7140
  %v7142 = vrot.slane %v7082, 6
  %v7143 = vrot.slane %v7083, 6
  %v7144 = vsel %vm3820, %v7142, %v7143
  %v7145 = vrot.slane %v7084, 6
  %v7146 = vrot.slane %v7085, 6
  %v7147 = vsel %vm3820, %v7145, %v7146
  %v7148 = vrot.slane %v7086, 6
  %v7149 = vrot.slane %v7087, 6
  %v7150 = vsel %vm3820, %v7148, %v7149
  %v7151 = vrot.slane %v7088, 6
  %v7152 = vrot.slane %v7089, 6
  %v7153 = vsel %vm3820, %v7151, %v7152
  %v7154 = vrot.slane %v7090, 6
  %v7155 = vrot.slane %v7091, 6
  %v7156 = vsel %vm3820, %v7154, %v7155
  %v7183 = vadd.f32 %v7040, %v7118
  %v7184 = vadd.f32 %v7041, %v7120
  %v7185 = vadd.f32 %v7042, %v7121
  %v7186 = vadd.f32 %v7043, %v7123
  %v7187 = vadd.f32 %v7044, %v7124
  %v7188 = vadd.f32 %v7045, %v7126
  %v7189 = vadd.f32 %v7046, %v7127
  %v7190 = vadd.f32 %v7047, %v7129
  %v7191 = vadd.f32 %v7048, %v7130
  %v7192 = vadd.f32 %v7049, %v7132
  %v7193 = vadd.f32 %v7050, %v7133
  %v7194 = vadd.f32 %v7051, %v7135
  %v7195 = vadd.f32 %v7052, %v7136
  %v7196 = vadd.f32 %v7053, %v7138
  %v7197 = vadd.f32 %v7054, %v7139
  %v7198 = vadd.f32 %v7055, %v7141
  %v7199 = vadd.f32 %v7056, %v7142
  %v7200 = vadd.f32 %v7057, %v7144
  %v7201 = vadd.f32 %v7058, %v7145
  %v7202 = vadd.f32 %v7059, %v7147
  %v7203 = vadd.f32 %v7060, %v7148
  %v7204 = vadd.f32 %v7061, %v7150
  %v7205 = vadd.f32 %v7062, %v7151
  %v7206 = vadd.f32 %v7063, %v7153
  %v7207 = vadd.f32 %v7064, %v7154
  %v7208 = vadd.f32 %v7065, %v7156
  %v7209 = vld [vmem:[%s2182 + $0x10] sm:$0xfc]
  %v7210 = vld [vmem:[%s2182 + $0x48] sm:$0x7f]
  %v7211 = vld [vmem:[%s2182 + $0x80] sm:$0xfc]
  %v7212 = vld [vmem:[%s2182 + $0xb8] sm:$0x7f]
  %v7213 = vld [vmem:[%s2182 + $0xf0] sm:$0xfc]
  %v7214 = vld [vmem:[%s2182 + $0x128] sm:$0x7f]
  %v7215 = vld [vmem:[%s2182 + $0x160] sm:$0xfc]
  %v7216 = vld [vmem:[%s2182 + $0x198] sm:$0x7f]
  %v7217 = vld [vmem:[%s2182 + $0x1d0] sm:$0xfc]
  %v7218 = vld [vmem:[%s2182 + $0x208] sm:$0x7f]
  %v7219 = vld [vmem:[%s2182 + $0x240] sm:$0xfc]
  %v7220 = vld [vmem:[%s2182 + $0x278] sm:$0x7f]
  %v7221 = vld [vmem:[%s2182 + $0x2b0] sm:$0xfc]
  %v7222 = vld [vmem:[%s2182 + $0x2e8] sm:$0x7f]
  %v7223 = vld [vmem:[%s2182 + $0x320] sm:$0xfc]
  %v7224 = vld [vmem:[%s2182 + $0x358] sm:$0x7f]
  %v7225 = vld [vmem:[%s2182 + $0x390] sm:$0xfc]
  %v7226 = vld [vmem:[%s2182 + $0x3c8] sm:$0x7f]
  %v7227 = vld [vmem:[%s2182 + $0x400] sm:$0xfc]
  %v7228 = vld [vmem:[%s2182 + $0x438] sm:$0x7f]
  %v7229 = vld [vmem:[%s2182 + $0x470] sm:$0xfc]
  %v7230 = vld [vmem:[%s2182 + $0x4a8] sm:$0x7f]
  %v7231 = vld [vmem:[%s2182 + $0x4e0] sm:$0xfc]
  %v7232 = vld [vmem:[%s2182 + $0x518] sm:$0x7f]
  %v7233 = vld [vmem:[%s2182 + $0x550] sm:$0xfc]
  %v7234 = vld [vmem:[%s2182 + $0x588] sm:$0x7f]
  %7261 = vrot.lane.b32.xlu0 %v7209, 64
  %v7262 = vpop.permute.xlu0 %7261
  %7263 = vrot.lane.b32.xlu0 %v7210, 64
  %v7264 = vpop.permute.xlu0 %7263
  %7265 = vrot.lane.b32.xlu0 %v7211, 64
  %v7266 = vpop.permute.xlu0 %7265
  %7267 = vrot.lane.b32.xlu0 %v7212, 64
  %v7268 = vpop.permute.xlu0 %7267
  %7269 = vrot.lane.b32.xlu0 %v7213, 64
  %v7270 = vpop.permute.xlu0 %7269
  %7271 = vrot.lane.b32.xlu0 %v7214, 64
  %v7272 = vpop.permute.xlu0 %7271
  %7273 = vrot.lane.b32.xlu0 %v7215, 64
  %v7274 = vpop.permute.xlu0 %7273
  %7275 = vrot.lane.b32.xlu0 %v7216, 64
  %v7276 = vpop.permute.xlu0 %7275
  %7277 = vrot.lane.b32.xlu0 %v7217, 64
  %v7278 = vpop.permute.xlu0 %7277
  %7279 = vrot.lane.b32.xlu0 %v7218, 64
  %v7280 = vpop.permute.xlu0 %7279
  %7281 = vrot.lane.b32.xlu0 %v7219, 64
  %v7282 = vpop.permute.xlu0 %7281
  %7283 = vrot.lane.b32.xlu0 %v7220, 64
  %v7284 = vpop.permute.xlu0 %7283
  %7285 = vrot.lane.b32.xlu0 %v7221, 64
  %v7286 = vpop.permute.xlu0 %7285
  %7287 = vrot.lane.b32.xlu0 %v7222, 64
  %v7288 = vpop.permute.xlu0 %7287
  %7289 = vrot.lane.b32.xlu0 %v7223, 64
  %v7290 = vpop.permute.xlu0 %7289
  %7291 = vrot.lane.b32.xlu0 %v7224, 64
  %v7292 = vpop.permute.xlu0 %7291
  %7293 = vrot.lane.b32.xlu0 %v7225, 64
  %v7294 = vpop.permute.xlu0 %7293
  %7295 = vrot.lane.b32.xlu0 %v7226, 64
  %v7296 = vpop.permute.xlu0 %7295
  %7297 = vrot.lane.b32.xlu0 %v7227, 64
  %v7298 = vpop.permute.xlu0 %7297
  %7299 = vrot.lane.b32.xlu0 %v7228, 64
  %v7300 = vpop.permute.xlu0 %7299
  %7301 = vrot.lane.b32.xlu0 %v7229, 64
  %v7302 = vpop.permute.xlu0 %7301
  %7303 = vrot.lane.b32.xlu0 %v7230, 64
  %v7304 = vpop.permute.xlu0 %7303
  %7305 = vrot.lane.b32.xlu0 %v7231, 64
  %v7306 = vpop.permute.xlu0 %7305
  %7307 = vrot.lane.b32.xlu0 %v7232, 64
  %v7308 = vpop.permute.xlu0 %7307
  %7309 = vrot.lane.b32.xlu0 %v7233, 64
  %v7310 = vpop.permute.xlu0 %7309
  %7311 = vrot.lane.b32.xlu0 %v7234, 64
  %v7312 = vpop.permute.xlu0 %7311
  %v7339 = vadd.f32 %v7183, %v7262
  %v7340 = vadd.f32 %v7184, %v7264
  %v7341 = vadd.f32 %v7185, %v7266
  %v7342 = vadd.f32 %v7186, %v7268
  %v7343 = vadd.f32 %v7187, %v7270
  %v7344 = vadd.f32 %v7188, %v7272
  %v7345 = vadd.f32 %v7189, %v7274
  %v7346 = vadd.f32 %v7190, %v7276
  %v7347 = vadd.f32 %v7191, %v7278
  %v7348 = vadd.f32 %v7192, %v7280
  %v7349 = vadd.f32 %v7193, %v7282
  %v7350 = vadd.f32 %v7194, %v7284
  %v7351 = vadd.f32 %v7195, %v7286
  %v7352 = vadd.f32 %v7196, %v7288
  %v7353 = vadd.f32 %v7197, %v7290
  %v7354 = vadd.f32 %v7198, %v7292
  %v7355 = vadd.f32 %v7199, %v7294
  %v7356 = vadd.f32 %v7200, %v7296
  %v7357 = vadd.f32 %v7201, %v7298
  %v7358 = vadd.f32 %v7202, %v7300
  %v7359 = vadd.f32 %v7203, %v7302
  %v7360 = vadd.f32 %v7204, %v7304
  %v7361 = vadd.f32 %v7205, %v7306
  %v7362 = vadd.f32 %v7206, %v7308
  %v7363 = vadd.f32 %v7207, %v7310
  %v7364 = vadd.f32 %v7208, %v7312
  %v7365 = vld [vmem:[%s2182 + $0x18] sm:$0xfe]
  %v7366 = vld [vmem:[%s2182 + $0x50] sm:$0x3f]
  %v7367 = vld [vmem:[%s2182 + $0x88] sm:$0xfe]
  %v7368 = vld [vmem:[%s2182 + $0xc0] sm:$0x3f]
  %v7369 = vld [vmem:[%s2182 + $0xf8] sm:$0xfe]
  %v7370 = vld [vmem:[%s2182 + $0x130] sm:$0x3f]
  %v7371 = vld [vmem:[%s2182 + $0x168] sm:$0xfe]
  %v7372 = vld [vmem:[%s2182 + $0x1a0] sm:$0x3f]
  %v7373 = vld [vmem:[%s2182 + $0x1d8] sm:$0xfe]
  %v7374 = vld [vmem:[%s2182 + $0x210] sm:$0x3f]
  %v7375 = vld [vmem:[%s2182 + $0x248] sm:$0xfe]
  %v7376 = vld [vmem:[%s2182 + $0x280] sm:$0x3f]
  %v7377 = vld [vmem:[%s2182 + $0x2b8] sm:$0xfe]
  %v7378 = vld [vmem:[%s2182 + $0x2f0] sm:$0x3f]
  %v7379 = vld [vmem:[%s2182 + $0x328] sm:$0xfe]
  %v7380 = vld [vmem:[%s2182 + $0x360] sm:$0x3f]
  %v7381 = vld [vmem:[%s2182 + $0x398] sm:$0xfe]
  %v7382 = vld [vmem:[%s2182 + $0x3d0] sm:$0x3f]
  %v7383 = vld [vmem:[%s2182 + $0x408] sm:$0xfe]
  %v7384 = vld [vmem:[%s2182 + $0x440] sm:$0x3f]
  %v7385 = vld [vmem:[%s2182 + $0x478] sm:$0xfe]
  %v7386 = vld [vmem:[%s2182 + $0x4b0] sm:$0x3f]
  %v7387 = vld [vmem:[%s2182 + $0x4e8] sm:$0xfe]
  %v7388 = vld [vmem:[%s2182 + $0x520] sm:$0x3f]
  %v7389 = vld [vmem:[%s2182 + $0x558] sm:$0xfe]
  %v7390 = vld [vmem:[%s2182 + $0x590] sm:$0x3f]
  %v7417 = vrot.slane %v7365, 7
  %v7418 = vrot.slane %v7366, 7
  %v7419 = vsel %vm2261, %v7417, %v7418
  %v7420 = vrot.slane %v7367, 7
  %v7421 = vrot.slane %v7368, 7
  %v7422 = vsel %vm2261, %v7420, %v7421
  %v7423 = vrot.slane %v7369, 7
  %v7424 = vrot.slane %v7370, 7
  %v7425 = vsel %vm2261, %v7423, %v7424
  %v7426 = vrot.slane %v7371, 7
  %v7427 = vrot.slane %v7372, 7
  %v7428 = vsel %vm2261, %v7426, %v7427
  %v7429 = vrot.slane %v7373, 7
  %v7430 = vrot.slane %v7374, 7
  %v7431 = vsel %vm2261, %v7429, %v7430
  %v7432 = vrot.slane %v7375, 7
  %v7433 = vrot.slane %v7376, 7
  %v7434 = vsel %vm2261, %v7432, %v7433
  %v7435 = vrot.slane %v7377, 7
  %v7436 = vrot.slane %v7378, 7
  %v7437 = vsel %vm2261, %v7435, %v7436
  %v7438 = vrot.slane %v7379, 7
  %v7439 = vrot.slane %v7380, 7
  %v7440 = vsel %vm2261, %v7438, %v7439
  %v7441 = vrot.slane %v7381, 7
  %v7442 = vrot.slane %v7382, 7
  %v7443 = vsel %vm2261, %v7441, %v7442
  %v7444 = vrot.slane %v7383, 7
  %v7445 = vrot.slane %v7384, 7
  %v7446 = vsel %vm2261, %v7444, %v7445
  %v7447 = vrot.slane %v7385, 7
  %v7448 = vrot.slane %v7386, 7
  %v7449 = vsel %vm2261, %v7447, %v7448
  %v7450 = vrot.slane %v7387, 7
  %v7451 = vrot.slane %v7388, 7
  %v7452 = vsel %vm2261, %v7450, %v7451
  %v7453 = vrot.slane %v7389, 7
  %v7454 = vrot.slane %v7390, 7
  %v7455 = vsel %vm2261, %v7453, %v7454
  %v7482 = vadd.f32 %v7339, %v7417
  %v7483 = vadd.f32 %v7340, %v7419
  %v7484 = vadd.f32 %v7341, %v7420
  %v7485 = vadd.f32 %v7342, %v7422
  %v7486 = vadd.f32 %v7343, %v7423
  %v7487 = vadd.f32 %v7344, %v7425
  %v7488 = vadd.f32 %v7345, %v7426
  %v7489 = vadd.f32 %v7346, %v7428
  %v7490 = vadd.f32 %v7347, %v7429
  %v7491 = vadd.f32 %v7348, %v7431
  %v7492 = vadd.f32 %v7349, %v7432
  %v7493 = vadd.f32 %v7350, %v7434
  %v7494 = vadd.f32 %v7351, %v7435
  %v7495 = vadd.f32 %v7352, %v7437
  %v7496 = vadd.f32 %v7353, %v7438
  %v7497 = vadd.f32 %v7354, %v7440
  %v7498 = vadd.f32 %v7355, %v7441
  %v7499 = vadd.f32 %v7356, %v7443
  %v7500 = vadd.f32 %v7357, %v7444
  %v7501 = vadd.f32 %v7358, %v7446
  %v7502 = vadd.f32 %v7359, %v7447
  %v7503 = vadd.f32 %v7360, %v7449
  %v7504 = vadd.f32 %v7361, %v7450
  %v7505 = vadd.f32 %v7362, %v7452
  %v7506 = vadd.f32 %v7363, %v7453
  %v7507 = vadd.f32 %v7364, %v7455
  %v7508 = vld [vmem:[%s2182 + $0x18] sm:$0xff]
  %v7509 = vld [vmem:[%s2182 + $0x50] sm:$0x1f]
  %v7510 = vld [vmem:[%s2182 + $0x88] sm:$0xff]
  %v7511 = vld [vmem:[%s2182 + $0xc0] sm:$0x1f]
  %v7512 = vld [vmem:[%s2182 + $0xf8] sm:$0xff]
  %v7513 = vld [vmem:[%s2182 + $0x130] sm:$0x1f]
  %v7514 = vld [vmem:[%s2182 + $0x168] sm:$0xff]
  %v7515 = vld [vmem:[%s2182 + $0x1a0] sm:$0x1f]
  %v7516 = vld [vmem:[%s2182 + $0x1d8] sm:$0xff]
  %v7517 = vld [vmem:[%s2182 + $0x210] sm:$0x1f]
  %v7518 = vld [vmem:[%s2182 + $0x248] sm:$0xff]
  %v7519 = vld [vmem:[%s2182 + $0x280] sm:$0x1f]
  %v7520 = vld [vmem:[%s2182 + $0x2b8] sm:$0xff]
  %v7521 = vld [vmem:[%s2182 + $0x2f0] sm:$0x1f]
  %v7522 = vld [vmem:[%s2182 + $0x328] sm:$0xff]
  %v7523 = vld [vmem:[%s2182 + $0x360] sm:$0x1f]
  %v7524 = vld [vmem:[%s2182 + $0x398] sm:$0xff]
  %v7525 = vld [vmem:[%s2182 + $0x3d0] sm:$0x1f]
  %v7526 = vld [vmem:[%s2182 + $0x408] sm:$0xff]
  %v7527 = vld [vmem:[%s2182 + $0x440] sm:$0x1f]
  %v7528 = vld [vmem:[%s2182 + $0x478] sm:$0xff]
  %v7529 = vld [vmem:[%s2182 + $0x4b0] sm:$0x1f]
  %v7530 = vld [vmem:[%s2182 + $0x4e8] sm:$0xff]
  %v7531 = vld [vmem:[%s2182 + $0x520] sm:$0x1f]
  %v7532 = vld [vmem:[%s2182 + $0x558] sm:$0xff]
  %v7533 = vld [vmem:[%s2182 + $0x590] sm:$0x1f]
  %v7560 = vrot.slane %v7508, 6
  %v7561 = vrot.slane %v7509, 6
  %v7562 = vsel %vm3820, %v7560, %v7561
  %v7563 = vrot.slane %v7510, 6
  %v7564 = vrot.slane %v7511, 6
  %v7565 = vsel %vm3820, %v7563, %v7564
  %v7566 = vrot.slane %v7512, 6
  %v7567 = vrot.slane %v7513, 6
  %v7568 = vsel %vm3820, %v7566, %v7567
  %v7569 = vrot.slane %v7514, 6
  %v7570 = vrot.slane %v7515, 6
  %v7571 = vsel %vm3820, %v7569, %v7570
  %v7572 = vrot.slane %v7516, 6
  %v7573 = vrot.slane %v7517, 6
  %v7574 = vsel %vm3820, %v7572, %v7573
  %v7575 = vrot.slane %v7518, 6
  %v7576 = vrot.slane %v7519, 6
  %v7577 = vsel %vm3820, %v7575, %v7576
  %v7578 = vrot.slane %v7520, 6
  %v7579 = vrot.slane %v7521, 6
  %v7580 = vsel %vm3820, %v7578, %v7579
  %v7581 = vrot.slane %v7522, 6
  %v7582 = vrot.slane %v7523, 6
  %v7583 = vsel %vm3820, %v7581, %v7582
  %v7584 = vrot.slane %v7524, 6
  %v7585 = vrot.slane %v7525, 6
  %v7586 = vsel %vm3820, %v7584, %v7585
  %v7587 = vrot.slane %v7526, 6
  %v7588 = vrot.slane %v7527, 6
  %v7589 = vsel %vm3820, %v7587, %v7588
  %v7590 = vrot.slane %v7528, 6
  %v7591 = vrot.slane %v7529, 6
  %v7592 = vsel %vm3820, %v7590, %v7591
  %v7593 = vrot.slane %v7530, 6
  %v7594 = vrot.slane %v7531, 6
  %v7595 = vsel %vm3820, %v7593, %v7594
  %v7596 = vrot.slane %v7532, 6
  %v7597 = vrot.slane %v7533, 6
  %v7598 = vsel %vm3820, %v7596, %v7597
  %7599 = vrot.lane.b32.xlu0 %v7560, 64
  %v7600 = vpop.permute.xlu0 %7599
  %7601 = vrot.lane.b32.xlu0 %v7562, 64
  %v7602 = vpop.permute.xlu0 %7601
  %7603 = vrot.lane.b32.xlu0 %v7563, 64
  %v7604 = vpop.permute.xlu0 %7603
  %7605 = vrot.lane.b32.xlu0 %v7565, 64
  %v7606 = vpop.permute.xlu0 %7605
  %7607 = vrot.lane.b32.xlu0 %v7566, 64
  %v7608 = vpop.permute.xlu0 %7607
  %7609 = vrot.lane.b32.xlu0 %v7568, 64
  %v7610 = vpop.permute.xlu0 %7609
  %7611 = vrot.lane.b32.xlu0 %v7569, 64
  %v7612 = vpop.permute.xlu0 %7611
  %7613 = vrot.lane.b32.xlu0 %v7571, 64
  %v7614 = vpop.permute.xlu0 %7613
  %7615 = vrot.lane.b32.xlu0 %v7572, 64
  %v7616 = vpop.permute.xlu0 %7615
  %7617 = vrot.lane.b32.xlu0 %v7574, 64
  %v7618 = vpop.permute.xlu0 %7617
  %7619 = vrot.lane.b32.xlu0 %v7575, 64
  %v7620 = vpop.permute.xlu0 %7619
  %7621 = vrot.lane.b32.xlu0 %v7577, 64
  %v7622 = vpop.permute.xlu0 %7621
  %7623 = vrot.lane.b32.xlu0 %v7578, 64
  %v7624 = vpop.permute.xlu0 %7623
  %7625 = vrot.lane.b32.xlu0 %v7580, 64
  %v7626 = vpop.permute.xlu0 %7625
  %7627 = vrot.lane.b32.xlu0 %v7581, 64
  %v7628 = vpop.permute.xlu0 %7627
  %7629 = vrot.lane.b32.xlu0 %v7583, 64
  %v7630 = vpop.permute.xlu0 %7629
  %7631 = vrot.lane.b32.xlu0 %v7584, 64
  %v7632 = vpop.permute.xlu0 %7631
  %7633 = vrot.lane.b32.xlu0 %v7586, 64
  %v7634 = vpop.permute.xlu0 %7633
  %7635 = vrot.lane.b32.xlu0 %v7587, 64
  %v7636 = vpop.permute.xlu0 %7635
  %7637 = vrot.lane.b32.xlu0 %v7589, 64
  %v7638 = vpop.permute.xlu0 %7637
  %7639 = vrot.lane.b32.xlu0 %v7590, 64
  %v7640 = vpop.permute.xlu0 %7639
  %7641 = vrot.lane.b32.xlu0 %v7592, 64
  %v7642 = vpop.permute.xlu0 %7641
  %7643 = vrot.lane.b32.xlu0 %v7593, 64
  %v7644 = vpop.permute.xlu0 %7643
  %7645 = vrot.lane.b32.xlu0 %v7595, 64
  %v7646 = vpop.permute.xlu0 %7645
  %7647 = vrot.lane.b32.xlu0 %v7596, 64
  %v7648 = vpop.permute.xlu0 %7647
  %7649 = vrot.lane.b32.xlu0 %v7598, 64
  %v7650 = vpop.permute.xlu0 %7649
  %v7677 = vadd.f32 %v7482, %v7600
  %v7678 = vadd.f32 %v7483, %v7602
  %v7679 = vadd.f32 %v7484, %v7604
  %v7680 = vadd.f32 %v7485, %v7606
  %v7681 = vadd.f32 %v7486, %v7608
  %v7682 = vadd.f32 %v7487, %v7610
  %v7683 = vadd.f32 %v7488, %v7612
  %v7684 = vadd.f32 %v7489, %v7614
  %v7685 = vadd.f32 %v7490, %v7616
  %v7686 = vadd.f32 %v7491, %v7618
  %v7687 = vadd.f32 %v7492, %v7620
  %v7688 = vadd.f32 %v7493, %v7622
  %v7689 = vadd.f32 %v7494, %v7624
  %v7690 = vadd.f32 %v7495, %v7626
  %v7691 = vadd.f32 %v7496, %v7628
  %v7692 = vadd.f32 %v7497, %v7630
  %v7693 = vadd.f32 %v7498, %v7632
  %v7694 = vadd.f32 %v7499, %v7634
  %v7695 = vadd.f32 %v7500, %v7636
  %v7696 = vadd.f32 %v7501, %v7638
  %v7697 = vadd.f32 %v7502, %v7640
  %v7698 = vadd.f32 %v7503, %v7642
  %v7699 = vadd.f32 %v7504, %v7644
  %v7700 = vadd.f32 %v7505, %v7646
  %v7701 = vadd.f32 %v7506, %v7648
  %v7702 = vadd.f32 %v7507, %v7650
  %v7703 = vld [vmem:[#allocation2 + $0x28] sm:$0xfc]
  %v7704 = vld [vmem:[#allocation2 + $0x60] sm:$0x7f]
  %v7705 = vld [vmem:[#allocation2 + $0x98] sm:$0xfc]
  %v7706 = vld [vmem:[#allocation2 + $0xd0] sm:$0x7f]
  %v7707 = vld [vmem:[#allocation2 + $0x108] sm:$0xfc]
  %v7708 = vld [vmem:[#allocation2 + $0x140] sm:$0x7f]
  %v7709 = vld [vmem:[#allocation2 + $0x178] sm:$0xfc]
  %v7710 = vld [vmem:[#allocation2 + $0x1b0] sm:$0x7f]
  %v7711 = vld [vmem:[#allocation2 + $0x1e8] sm:$0xfc]
  %v7712 = vld [vmem:[#allocation2 + $0x220] sm:$0x7f]
  %v7713 = vld [vmem:[#allocation2 + $0x258] sm:$0xfc]
  %v7714 = vld [vmem:[#allocation2 + $0x290] sm:$0x7f]
  %v7715 = vld [vmem:[#allocation2 + $0x2c8] sm:$0xfc]
  %v7716 = vld [vmem:[#allocation2 + $0x300] sm:$0x7f]
  %v7717 = vld [vmem:[#allocation2 + $0x338] sm:$0xfc]
  %v7718 = vld [vmem:[#allocation2 + $0x370] sm:$0x7f]
  %v7719 = vld [vmem:[#allocation2 + $0x3a8] sm:$0xfc]
  %v7720 = vld [vmem:[#allocation2 + $0x3e0] sm:$0x7f]
  %v7721 = vld [vmem:[#allocation2 + $0x418] sm:$0xfc]
  %v7722 = vld [vmem:[#allocation2 + $0x450] sm:$0x7f]
  %v7723 = vld [vmem:[#allocation2 + $0x488] sm:$0xfc]
  %v7724 = vld [vmem:[#allocation2 + $0x4c0] sm:$0x7f]
  %v7725 = vld [vmem:[#allocation2 + $0x4f8] sm:$0xfc]
  %v7726 = vld [vmem:[#allocation2 + $0x530] sm:$0x7f]
  %v7727 = vld [vmem:[#allocation2 + $0x568] sm:$0xfc]
  %v7728 = vld [vmem:[#allocation2 + $0x5a0] sm:$0x7f]
  %v7729 = vadd.f32 %v7677, %v7703
  %v7730 = vadd.f32 %v7678, %v7704
  %v7731 = vadd.f32 %v7679, %v7705
  %v7732 = vadd.f32 %v7680, %v7706
  %v7733 = vadd.f32 %v7681, %v7707
  %v7734 = vadd.f32 %v7682, %v7708
  %v7735 = vadd.f32 %v7683, %v7709
  %v7736 = vadd.f32 %v7684, %v7710
  %v7737 = vadd.f32 %v7685, %v7711
  %v7738 = vadd.f32 %v7686, %v7712
  %v7739 = vadd.f32 %v7687, %v7713
  %v7740 = vadd.f32 %v7688, %v7714
  %v7741 = vadd.f32 %v7689, %v7715
  %v7742 = vadd.f32 %v7690, %v7716
  %v7743 = vadd.f32 %v7691, %v7717
  %v7744 = vadd.f32 %v7692, %v7718
  %v7745 = vadd.f32 %v7693, %v7719
  %v7746 = vadd.f32 %v7694, %v7720
  %v7747 = vadd.f32 %v7695, %v7721
  %v7748 = vadd.f32 %v7696, %v7722
  %v7749 = vadd.f32 %v7697, %v7723
  %v7750 = vadd.f32 %v7698, %v7724
  %v7751 = vadd.f32 %v7699, %v7725
  %v7752 = vadd.f32 %v7700, %v7726
  %v7753 = vadd.f32 %v7701, %v7727
  %v7754 = vadd.f32 %v7702, %v7728
  %v7755 = vld [vmem:[#allocation2 + $0x28] sm:$0xfe]
  %v7756 = vld [vmem:[#allocation2 + $0x60] sm:$0x3f]
  %v7757 = vld [vmem:[#allocation2 + $0x98] sm:$0xfe]
  %v7758 = vld [vmem:[#allocation2 + $0xd0] sm:$0x3f]
  %v7759 = vld [vmem:[#allocation2 + $0x108] sm:$0xfe]
  %v7760 = vld [vmem:[#allocation2 + $0x140] sm:$0x3f]
  %v7761 = vld [vmem:[#allocation2 + $0x178] sm:$0xfe]
  %v7762 = vld [vmem:[#allocation2 + $0x1b0] sm:$0x3f]
  %v7763 = vld [vmem:[#allocation2 + $0x1e8] sm:$0xfe]
  %v7764 = vld [vmem:[#allocation2 + $0x220] sm:$0x3f]
  %v7765 = vld [vmem:[#allocation2 + $0x258] sm:$0xfe]
  %v7766 = vld [vmem:[#allocation2 + $0x290] sm:$0x3f]
  %v7767 = vld [vmem:[#allocation2 + $0x2c8] sm:$0xfe]
  %v7768 = vld [vmem:[#allocation2 + $0x300] sm:$0x3f]
  %v7769 = vld [vmem:[#allocation2 + $0x338] sm:$0xfe]
  %v7770 = vld [vmem:[#allocation2 + $0x370] sm:$0x3f]
  %v7771 = vld [vmem:[#allocation2 + $0x3a8] sm:$0xfe]
  %v7772 = vld [vmem:[#allocation2 + $0x3e0] sm:$0x3f]
  %v7773 = vld [vmem:[#allocation2 + $0x418] sm:$0xfe]
  %v7774 = vld [vmem:[#allocation2 + $0x450] sm:$0x3f]
  %v7775 = vld [vmem:[#allocation2 + $0x488] sm:$0xfe]
  %v7776 = vld [vmem:[#allocation2 + $0x4c0] sm:$0x3f]
  %v7777 = vld [vmem:[#allocation2 + $0x4f8] sm:$0xfe]
  %v7778 = vld [vmem:[#allocation2 + $0x530] sm:$0x3f]
  %v7779 = vld [vmem:[#allocation2 + $0x568] sm:$0xfe]
  %v7780 = vld [vmem:[#allocation2 + $0x5a0] sm:$0x3f]
  %v7807 = vrot.slane %v7755, 7
  %v7808 = vrot.slane %v7756, 7
  %v7809 = vsel %vm2261, %v7807, %v7808
  %v7810 = vrot.slane %v7757, 7
  %v7811 = vrot.slane %v7758, 7
  %v7812 = vsel %vm2261, %v7810, %v7811
  %v7813 = vrot.slane %v7759, 7
  %v7814 = vrot.slane %v7760, 7
  %v7815 = vsel %vm2261, %v7813, %v7814
  %v7816 = vrot.slane %v7761, 7
  %v7817 = vrot.slane %v7762, 7
  %v7818 = vsel %vm2261, %v7816, %v7817
  %v7819 = vrot.slane %v7763, 7
  %v7820 = vrot.slane %v7764, 7
  %v7821 = vsel %vm2261, %v7819, %v7820
  %v7822 = vrot.slane %v7765, 7
  %v7823 = vrot.slane %v7766, 7
  %v7824 = vsel %vm2261, %v7822, %v7823
  %v7825 = vrot.slane %v7767, 7
  %v7826 = vrot.slane %v7768, 7
  %v7827 = vsel %vm2261, %v7825, %v7826
  %v7828 = vrot.slane %v7769, 7
  %v7829 = vrot.slane %v7770, 7
  %v7830 = vsel %vm2261, %v7828, %v7829
  %v7831 = vrot.slane %v7771, 7
  %v7832 = vrot.slane %v7772, 7
  %v7833 = vsel %vm2261, %v7831, %v7832
  %v7834 = vrot.slane %v7773, 7
  %v7835 = vrot.slane %v7774, 7
  %v7836 = vsel %vm2261, %v7834, %v7835
  %v7837 = vrot.slane %v7775, 7
  %v7838 = vrot.slane %v7776, 7
  %v7839 = vsel %vm2261, %v7837, %v7838
  %v7840 = vrot.slane %v7777, 7
  %v7841 = vrot.slane %v7778, 7
  %v7842 = vsel %vm2261, %v7840, %v7841
  %v7843 = vrot.slane %v7779, 7
  %v7844 = vrot.slane %v7780, 7
  %v7845 = vsel %vm2261, %v7843, %v7844
  %7846 = vrot.lane.b32.xlu0 %v7807, 64
  %v7847 = vpop.permute.xlu0 %7846
  %7848 = vrot.lane.b32.xlu0 %v7809, 64
  %v7849 = vpop.permute.xlu0 %7848
  %7850 = vrot.lane.b32.xlu0 %v7810, 64
  %v7851 = vpop.permute.xlu0 %7850
  %7852 = vrot.lane.b32.xlu0 %v7812, 64
  %v7853 = vpop.permute.xlu0 %7852
  %7854 = vrot.lane.b32.xlu0 %v7813, 64
  %v7855 = vpop.permute.xlu0 %7854
  %7856 = vrot.lane.b32.xlu0 %v7815, 64
  %v7857 = vpop.permute.xlu0 %7856
  %7858 = vrot.lane.b32.xlu0 %v7816, 64
  %v7859 = vpop.permute.xlu0 %7858
  %7860 = vrot.lane.b32.xlu0 %v7818, 64
  %v7861 = vpop.permute.xlu0 %7860
  %7862 = vrot.lane.b32.xlu0 %v7819, 64
  %v7863 = vpop.permute.xlu0 %7862
  %7864 = vrot.lane.b32.xlu0 %v7821, 64
  %v7865 = vpop.permute.xlu0 %7864
  %7866 = vrot.lane.b32.xlu0 %v7822, 64
  %v7867 = vpop.permute.xlu0 %7866
  %7868 = vrot.lane.b32.xlu0 %v7824, 64
  %v7869 = vpop.permute.xlu0 %7868
  %7870 = vrot.lane.b32.xlu0 %v7825, 64
  %v7871 = vpop.permute.xlu0 %7870
  %7872 = vrot.lane.b32.xlu0 %v7827, 64
  %v7873 = vpop.permute.xlu0 %7872
  %7874 = vrot.lane.b32.xlu0 %v7828, 64
  %v7875 = vpop.permute.xlu0 %7874
  %7876 = vrot.lane.b32.xlu0 %v7830, 64
  %v7877 = vpop.permute.xlu0 %7876
  %7878 = vrot.lane.b32.xlu0 %v7831, 64
  %v7879 = vpop.permute.xlu0 %7878
  %7880 = vrot.lane.b32.xlu0 %v7833, 64
  %v7881 = vpop.permute.xlu0 %7880
  %7882 = vrot.lane.b32.xlu0 %v7834, 64
  %v7883 = vpop.permute.xlu0 %7882
  %7884 = vrot.lane.b32.xlu0 %v7836, 64
  %v7885 = vpop.permute.xlu0 %7884
  %7886 = vrot.lane.b32.xlu0 %v7837, 64
  %v7887 = vpop.permute.xlu0 %7886
  %7888 = vrot.lane.b32.xlu0 %v7839, 64
  %v7889 = vpop.permute.xlu0 %7888
  %7890 = vrot.lane.b32.xlu0 %v7840, 64
  %v7891 = vpop.permute.xlu0 %7890
  %7892 = vrot.lane.b32.xlu0 %v7842, 64
  %v7893 = vpop.permute.xlu0 %7892
  %7894 = vrot.lane.b32.xlu0 %v7843, 64
  %v7895 = vpop.permute.xlu0 %7894
  %7896 = vrot.lane.b32.xlu0 %v7845, 64
  %v7897 = vpop.permute.xlu0 %7896
  %v7924 = vadd.f32 %v7729, %v7847
  %v7925 = vadd.f32 %v7730, %v7849
  %v7926 = vadd.f32 %v7731, %v7851
  %v7927 = vadd.f32 %v7732, %v7853
  %v7928 = vadd.f32 %v7733, %v7855
  %v7929 = vadd.f32 %v7734, %v7857
  %v7930 = vadd.f32 %v7735, %v7859
  %v7931 = vadd.f32 %v7736, %v7861
  %v7932 = vadd.f32 %v7737, %v7863
  %v7933 = vadd.f32 %v7738, %v7865
  %v7934 = vadd.f32 %v7739, %v7867
  %v7935 = vadd.f32 %v7740, %v7869
  %v7936 = vadd.f32 %v7741, %v7871
  %v7937 = vadd.f32 %v7742, %v7873
  %v7938 = vadd.f32 %v7743, %v7875
  %v7939 = vadd.f32 %v7744, %v7877
  %v7940 = vadd.f32 %v7745, %v7879
  %v7941 = vadd.f32 %v7746, %v7881
  %v7942 = vadd.f32 %v7747, %v7883
  %v7943 = vadd.f32 %v7748, %v7885
  %v7944 = vadd.f32 %v7749, %v7887
  %v7945 = vadd.f32 %v7750, %v7889
  %v7946 = vadd.f32 %v7751, %v7891
  %v7947 = vadd.f32 %v7752, %v7893
  %v7948 = vadd.f32 %v7753, %v7895
  %v7949 = vadd.f32 %v7754, %v7897
  %v7950 = vld [vmem:[#allocation2 + $0x30] sm:$0xff]
  %v7951 = vld [vmem:[#allocation2 + $0x68] sm:$0x1f]
  %v7952 = vld [vmem:[#allocation2 + $0xa0] sm:$0xff]
  %v7953 = vld [vmem:[#allocation2 + $0xd8] sm:$0x1f]
  %v7954 = vld [vmem:[#allocation2 + $0x110] sm:$0xff]
  %v7955 = vld [vmem:[#allocation2 + $0x148] sm:$0x1f]
  %v7956 = vld [vmem:[#allocation2 + $0x180] sm:$0xff]
  %v7957 = vld [vmem:[#allocation2 + $0x1b8] sm:$0x1f]
  %v7958 = vld [vmem:[#allocation2 + $0x1f0] sm:$0xff]
  %v7959 = vld [vmem:[#allocation2 + $0x228] sm:$0x1f]
  %v7960 = vld [vmem:[#allocation2 + $0x260] sm:$0xff]
  %v7961 = vld [vmem:[#allocation2 + $0x298] sm:$0x1f]
  %v7962 = vld [vmem:[#allocation2 + $0x2d0] sm:$0xff]
  %v7963 = vld [vmem:[#allocation2 + $0x308] sm:$0x1f]
  %v7964 = vld [vmem:[#allocation2 + $0x340] sm:$0xff]
  %v7965 = vld [vmem:[#allocation2 + $0x378] sm:$0x1f]
  %v7966 = vld [vmem:[#allocation2 + $0x3b0] sm:$0xff]
  %v7967 = vld [vmem:[#allocation2 + $0x3e8] sm:$0x1f]
  %v7968 = vld [vmem:[#allocation2 + $0x420] sm:$0xff]
  %v7969 = vld [vmem:[#allocation2 + $0x458] sm:$0x1f]
  %v7970 = vld [vmem:[#allocation2 + $0x490] sm:$0xff]
  %v7971 = vld [vmem:[#allocation2 + $0x4c8] sm:$0x1f]
  %v7972 = vld [vmem:[#allocation2 + $0x500] sm:$0xff]
  %v7973 = vld [vmem:[#allocation2 + $0x538] sm:$0x1f]
  %v7974 = vld [vmem:[#allocation2 + $0x570] sm:$0xff]
  %v7975 = vld [vmem:[#allocation2 + $0x5a8] sm:$0x1f]
  %v8002 = vrot.slane %v7950, 6
  %v8003 = vrot.slane %v7951, 6
  %v8004 = vsel %vm3820, %v8002, %v8003
  %v8005 = vrot.slane %v7952, 6
  %v8006 = vrot.slane %v7953, 6
  %v8007 = vsel %vm3820, %v8005, %v8006
  %v8008 = vrot.slane %v7954, 6
  %v8009 = vrot.slane %v7955, 6
  %v8010 = vsel %vm3820, %v8008, %v8009
  %v8011 = vrot.slane %v7956, 6
  %v8012 = vrot.slane %v7957, 6
  %v8013 = vsel %vm3820, %v8011, %v8012
  %v8014 = vrot.slane %v7958, 6
  %v8015 = vrot.slane %v7959, 6
  %v8016 = vsel %vm3820, %v8014, %v8015
  %v8017 = vrot.slane %v7960, 6
  %v8018 = vrot.slane %v7961, 6
  %v8019 = vsel %vm3820, %v8017, %v8018
  %v8020 = vrot.slane %v7962, 6
  %v8021 = vrot.slane %v7963, 6
  %v8022 = vsel %vm3820, %v8020, %v8021
  %v8023 = vrot.slane %v7964, 6
  %v8024 = vrot.slane %v7965, 6
  %v8025 = vsel %vm3820, %v8023, %v8024
  %v8026 = vrot.slane %v7966, 6
  %v8027 = vrot.slane %v7967, 6
  %v8028 = vsel %vm3820, %v8026, %v8027
  %v8029 = vrot.slane %v7968, 6
  %v8030 = vrot.slane %v7969, 6
  %v8031 = vsel %vm3820, %v8029, %v8030
  %v8032 = vrot.slane %v7970, 6
  %v8033 = vrot.slane %v7971, 6
  %v8034 = vsel %vm3820, %v8032, %v8033
  %v8035 = vrot.slane %v7972, 6
  %v8036 = vrot.slane %v7973, 6
  %v8037 = vsel %vm3820, %v8035, %v8036
  %v8038 = vrot.slane %v7974, 6
  %v8039 = vrot.slane %v7975, 6
  %v8040 = vsel %vm3820, %v8038, %v8039
  %v8067 = vadd.f32 %v7924, %v8002
  %v8068 = vadd.f32 %v7925, %v8004
  %v8069 = vadd.f32 %v7926, %v8005
  %v8070 = vadd.f32 %v7927, %v8007
  %v8071 = vadd.f32 %v7928, %v8008
  %v8072 = vadd.f32 %v7929, %v8010
  %v8073 = vadd.f32 %v7930, %v8011
  %v8074 = vadd.f32 %v7931, %v8013
  %v8075 = vadd.f32 %v7932, %v8014
  %v8076 = vadd.f32 %v7933, %v8016
  %v8077 = vadd.f32 %v7934, %v8017
  %v8078 = vadd.f32 %v7935, %v8019
  %v8079 = vadd.f32 %v7936, %v8020
  %v8080 = vadd.f32 %v7937, %v8022
  %v8081 = vadd.f32 %v7938, %v8023
  %v8082 = vadd.f32 %v7939, %v8025
  %v8083 = vadd.f32 %v7940, %v8026
  %v8084 = vadd.f32 %v7941, %v8028
  %v8085 = vadd.f32 %v7942, %v8029
  %v8086 = vadd.f32 %v7943, %v8031
  %v8087 = vadd.f32 %v7944, %v8032
  %v8088 = vadd.f32 %v7945, %v8034
  %v8089 = vadd.f32 %v7946, %v8035
  %v8090 = vadd.f32 %v7947, %v8037
  %v8091 = vadd.f32 %v7948, %v8038
  %v8092 = vadd.f32 %v7949, %v8040
  %v8093 = vadd.f32 %v8067, %v2708
  %v8094 = vadd.f32 %v8068, %v2708
  %v8095 = vadd.f32 %v8069, %v2708
  %v8096 = vadd.f32 %v8070, %v2708
  %v8097 = vadd.f32 %v8071, %v2708
  %v8098 = vadd.f32 %v8072, %v2708
  %v8099 = vadd.f32 %v8073, %v2708
  %v8100 = vadd.f32 %v8074, %v2708
  %v8101 = vadd.f32 %v8075, %v2708
  %v8102 = vadd.f32 %v8076, %v2708
  %v8103 = vadd.f32 %v8077, %v2708
  %v8104 = vadd.f32 %v8078, %v2708
  %v8105 = vadd.f32 %v8079, %v2708
  %v8106 = vadd.f32 %v8080, %v2708
  %v8107 = vadd.f32 %v8081, %v2708
  %v8108 = vadd.f32 %v8082, %v2708
  %v8109 = vadd.f32 %v8083, %v2708
  %v8110 = vadd.f32 %v8084, %v2708
  %v8111 = vadd.f32 %v8085, %v2708
  %v8112 = vadd.f32 %v8086, %v2708
  %v8113 = vadd.f32 %v8087, %v2708
  %v8114 = vadd.f32 %v8088, %v2708
  %v8115 = vadd.f32 %v8089, %v2708
  %v8116 = vadd.f32 %v8090, %v2708
  %v8117 = vadd.f32 %v8091, %v2708
  %v8118 = vadd.f32 %v8092, %v2708
  %v8119 = vmul.f32 %v8093, 0.5
  %v8120 = vmul.f32 %v8094, 0.5
  %v8121 = vmul.f32 %v8095, 0.5
  %v8122 = vmul.f32 %v8096, 0.5
  %v8123 = vmul.f32 %v8097, 0.5
  %v8124 = vmul.f32 %v8098, 0.5
  %v8125 = vmul.f32 %v8099, 0.5
  %v8126 = vmul.f32 %v8100, 0.5
  %v8127 = vmul.f32 %v8101, 0.5
  %v8128 = vmul.f32 %v8102, 0.5
  %v8129 = vmul.f32 %v8103, 0.5
  %v8130 = vmul.f32 %v8104, 0.5
  %v8131 = vmul.f32 %v8105, 0.5
  %v8132 = vmul.f32 %v8106, 0.5
  %v8133 = vmul.f32 %v8107, 0.5
  %v8134 = vmul.f32 %v8108, 0.5
  %v8135 = vmul.f32 %v8109, 0.5
  %v8136 = vmul.f32 %v8110, 0.5
  %v8137 = vmul.f32 %v8111, 0.5
  %v8138 = vmul.f32 %v8112, 0.5
  %v8139 = vmul.f32 %v8113, 0.5
  %v8140 = vmul.f32 %v8114, 0.5
  %v8141 = vmul.f32 %v8115, 0.5
  %v8142 = vmul.f32 %v8116, 0.5
  %v8143 = vmul.f32 %v8117, 0.5
  %v8144 = vmul.f32 %v8118, 0.5
  %v8145 = vmul.f32 %v8093, 0.70710677
  %v8146 = vmul.f32 %v8094, 0.70710677
  %v8147 = vmul.f32 %v8095, 0.70710677
  %v8148 = vmul.f32 %v8096, 0.70710677
  %v8149 = vmul.f32 %v8097, 0.70710677
  %v8150 = vmul.f32 %v8098, 0.70710677
  %v8151 = vmul.f32 %v8099, 0.70710677
  %v8152 = vmul.f32 %v8100, 0.70710677
  %v8153 = vmul.f32 %v8101, 0.70710677
  %v8154 = vmul.f32 %v8102, 0.70710677
  %v8155 = vmul.f32 %v8103, 0.70710677
  %v8156 = vmul.f32 %v8104, 0.70710677
  %v8157 = vmul.f32 %v8105, 0.70710677
  %v8158 = vmul.f32 %v8106, 0.70710677
  %v8159 = vmul.f32 %v8107, 0.70710677
  %v8160 = vmul.f32 %v8108, 0.70710677
  %v8161 = vmul.f32 %v8109, 0.70710677
  %v8162 = vmul.f32 %v8110, 0.70710677
  %v8163 = vmul.f32 %v8111, 0.70710677
  %v8164 = vmul.f32 %v8112, 0.70710677
  %v8165 = vmul.f32 %v8113, 0.70710677
  %v8166 = vmul.f32 %v8114, 0.70710677
  %v8167 = vmul.f32 %v8115, 0.70710677
  %v8168 = vmul.f32 %v8116, 0.70710677
  %v8169 = vmul.f32 %v8117, 0.70710677
  %v8170 = vmul.f32 %v8118, 0.70710677
  %vm8171 = vcmp.ge.f32.partialorder %v8145, 0.0
  %vm8172 = vcmp.ge.f32.partialorder %v8146, 0.0
  %vm8173 = vcmp.ge.f32.partialorder %v8147, 0.0
  %vm8174 = vcmp.ge.f32.partialorder %v8148, 0.0
  %vm8175 = vcmp.ge.f32.partialorder %v8149, 0.0
  %vm8176 = vcmp.ge.f32.partialorder %v8150, 0.0
  %vm8177 = vcmp.ge.f32.partialorder %v8151, 0.0
  %vm8178 = vcmp.ge.f32.partialorder %v8152, 0.0
  %vm8179 = vcmp.ge.f32.partialorder %v8153, 0.0
  %vm8180 = vcmp.ge.f32.partialorder %v8154, 0.0
  %vm8181 = vcmp.ge.f32.partialorder %v8155, 0.0
  %vm8182 = vcmp.ge.f32.partialorder %v8156, 0.0
  %vm8183 = vcmp.ge.f32.partialorder %v8157, 0.0
  %vm8184 = vcmp.ge.f32.partialorder %v8158, 0.0
  %vm8185 = vcmp.ge.f32.partialorder %v8159, 0.0
  %vm8186 = vcmp.ge.f32.partialorder %v8160, 0.0
  %vm8187 = vcmp.ge.f32.partialorder %v8161, 0.0
  %vm8188 = vcmp.ge.f32.partialorder %v8162, 0.0
  %vm8189 = vcmp.ge.f32.partialorder %v8163, 0.0
  %vm8190 = vcmp.ge.f32.partialorder %v8164, 0.0
  %vm8191 = vcmp.ge.f32.partialorder %v8165, 0.0
  %vm8192 = vcmp.ge.f32.partialorder %v8166, 0.0
  %vm8193 = vcmp.ge.f32.partialorder %v8167, 0.0
  %vm8194 = vcmp.ge.f32.partialorder %v8168, 0.0
  %vm8195 = vcmp.ge.f32.partialorder %v8169, 0.0
  %vm8196 = vcmp.ge.f32.partialorder %v8170, 0.0
  %v8197 = vsel %vm8171, 1.0, -1.0
  %v8198 = vsel %vm8172, 1.0, -1.0
  %v8199 = vsel %vm8173, 1.0, -1.0
  %v8200 = vsel %vm8174, 1.0, -1.0
  %v8201 = vsel %vm8175, 1.0, -1.0
  %v8202 = vsel %vm8176, 1.0, -1.0
  %v8203 = vsel %vm8177, 1.0, -1.0
  %v8204 = vsel %vm8178, 1.0, -1.0
  %v8205 = vsel %vm8179, 1.0, -1.0
  %v8206 = vsel %vm8180, 1.0, -1.0
  %v8207 = vsel %vm8181, 1.0, -1.0
  %v8208 = vsel %vm8182, 1.0, -1.0
  %v8209 = vsel %vm8183, 1.0, -1.0
  %v8210 = vsel %vm8184, 1.0, -1.0
  %v8211 = vsel %vm8185, 1.0, -1.0
  %v8212 = vsel %vm8186, 1.0, -1.0
  %v8213 = vsel %vm8187, 1.0, -1.0
  %v8214 = vsel %vm8188, 1.0, -1.0
  %v8215 = vsel %vm8189, 1.0, -1.0
  %v8216 = vsel %vm8190, 1.0, -1.0
  %v8217 = vsel %vm8191, 1.0, -1.0
  %v8218 = vsel %vm8192, 1.0, -1.0
  %v8219 = vsel %vm8193, 1.0, -1.0
  %v8220 = vsel %vm8194, 1.0, -1.0
  %v8221 = vsel %vm8195, 1.0, -1.0
  %v8222 = vsel %vm8196, 1.0, -1.0
  %v8223 = vand.u32 2147483647, %v8145
  %v8224 = vand.u32 2147483647, %v8146
  %v8225 = vand.u32 2147483647, %v8147
  %v8226 = vand.u32 2147483647, %v8148
  %v8227 = vand.u32 2147483647, %v8149
  %v8228 = vand.u32 2147483647, %v8150
  %v8229 = vand.u32 2147483647, %v8151
  %v8230 = vand.u32 2147483647, %v8152
  %v8231 = vand.u32 2147483647, %v8153
  %v8232 = vand.u32 2147483647, %v8154
  %v8233 = vand.u32 2147483647, %v8155
  %v8234 = vand.u32 2147483647, %v8156
  %v8235 = vand.u32 2147483647, %v8157
  %v8236 = vand.u32 2147483647, %v8158
  %v8237 = vand.u32 2147483647, %v8159
  %v8238 = vand.u32 2147483647, %v8160
  %v8239 = vand.u32 2147483647, %v8161
  %v8240 = vand.u32 2147483647, %v8162
  %v8241 = vand.u32 2147483647, %v8163
  %v8242 = vand.u32 2147483647, %v8164
  %v8243 = vand.u32 2147483647, %v8165
  %v8244 = vand.u32 2147483647, %v8166
  %v8245 = vand.u32 2147483647, %v8167
  %v8246 = vand.u32 2147483647, %v8168
  %v8247 = vand.u32 2147483647, %v8169
  %v8248 = vand.u32 2147483647, %v8170
  %v8249 = vmul.f32 %v8223, 0.3275911
  %v8250 = vmul.f32 %v8224, 0.3275911
  %v8251 = vmul.f32 %v8225, 0.3275911
  %v8252 = vmul.f32 %v8226, 0.3275911
  %v8253 = vmul.f32 %v8227, 0.3275911
  %v8254 = vmul.f32 %v8228, 0.3275911
  %v8255 = vmul.f32 %v8229, 0.3275911
  %v8256 = vmul.f32 %v8230, 0.3275911
  %v8257 = vmul.f32 %v8231, 0.3275911
  %v8258 = vmul.f32 %v8232, 0.3275911
  %v8259 = vmul.f32 %v8233, 0.3275911
  %v8260 = vmul.f32 %v8234, 0.3275911
  %v8261 = vmul.f32 %v8235, 0.3275911
  %v8262 = vmul.f32 %v8236, 0.3275911
  %v8263 = vmul.f32 %v8237, 0.3275911
  %v8264 = vmul.f32 %v8238, 0.3275911
  %v8265 = vmul.f32 %v8239, 0.3275911
  %v8266 = vmul.f32 %v8240, 0.3275911
  %v8267 = vmul.f32 %v8241, 0.3275911
  %v8268 = vmul.f32 %v8242, 0.3275911
  %v8269 = vmul.f32 %v8243, 0.3275911
  %v8270 = vmul.f32 %v8244, 0.3275911
  %v8271 = vmul.f32 %v8245, 0.3275911
  %v8272 = vmul.f32 %v8246, 0.3275911
  %v8273 = vmul.f32 %v8247, 0.3275911
  %v8274 = vmul.f32 %v8248, 0.3275911
  %v8275 = vadd.f32 %v8249, 1.0
  %v8276 = vadd.f32 %v8250, 1.0
  %v8277 = vadd.f32 %v8251, 1.0
  %v8278 = vadd.f32 %v8252, 1.0
  %v8279 = vadd.f32 %v8253, 1.0
  %v8280 = vadd.f32 %v8254, 1.0
  %v8281 = vadd.f32 %v8255, 1.0
  %v8282 = vadd.f32 %v8256, 1.0
  %v8283 = vadd.f32 %v8257, 1.0
  %v8284 = vadd.f32 %v8258, 1.0
  %v8285 = vadd.f32 %v8259, 1.0
  %v8286 = vadd.f32 %v8260, 1.0
  %v8287 = vadd.f32 %v8261, 1.0
  %v8288 = vadd.f32 %v8262, 1.0
  %v8289 = vadd.f32 %v8263, 1.0
  %v8290 = vadd.f32 %v8264, 1.0
  %v8291 = vadd.f32 %v8265, 1.0
  %v8292 = vadd.f32 %v8266, 1.0
  %v8293 = vadd.f32 %v8267, 1.0
  %v8294 = vadd.f32 %v8268, 1.0
  %v8295 = vadd.f32 %v8269, 1.0
  %v8296 = vadd.f32 %v8270, 1.0
  %v8297 = vadd.f32 %v8271, 1.0
  %v8298 = vadd.f32 %v8272, 1.0
  %v8299 = vadd.f32 %v8273, 1.0
  %v8300 = vadd.f32 %v8274, 1.0
  %v8301 = vrcp.pop %v8275
  %v8302 = vrcp.pop %v8276
  %v8303 = vrcp.pop %v8277
  %v8304 = vrcp.pop %v8278
  %v8305 = vrcp.pop %v8279
  %v8306 = vrcp.pop %v8280
  %v8307 = vrcp.pop %v8281
  %v8308 = vrcp.pop %v8282
  %v8309 = vrcp.pop %v8283
  %v8310 = vrcp.pop %v8284
  %v8311 = vrcp.pop %v8285
  %v8312 = vrcp.pop %v8286
  %v8313 = vrcp.pop %v8287
  %v8314 = vrcp.pop %v8288
  %v8315 = vrcp.pop %v8289
  %v8316 = vrcp.pop %v8290
  %v8317 = vrcp.pop %v8291
  %v8318 = vrcp.pop %v8292
  %v8319 = vrcp.pop %v8293
  %v8320 = vrcp.pop %v8294
  %v8321 = vrcp.pop %v8295
  %v8322 = vrcp.pop %v8296
  %v8323 = vrcp.pop %v8297
  %v8324 = vrcp.pop %v8298
  %v8325 = vrcp.pop %v8299
  %v8326 = vrcp.pop %v8300
  %v8327 = vmul.f32 %v8301, 1.0614054
  %v8328 = vmul.f32 %v8302, 1.0614054
  %v8329 = vmul.f32 %v8303, 1.0614054
  %v8330 = vmul.f32 %v8304, 1.0614054
  %v8331 = vmul.f32 %v8305, 1.0614054
  %v8332 = vmul.f32 %v8306, 1.0614054
  %v8333 = vmul.f32 %v8307, 1.0614054
  %v8334 = vmul.f32 %v8308, 1.0614054
  %v8335 = vmul.f32 %v8309, 1.0614054
  %v8336 = vmul.f32 %v8310, 1.0614054
  %v8337 = vmul.f32 %v8311, 1.0614054
  %v8338 = vmul.f32 %v8312, 1.0614054
  %v8339 = vmul.f32 %v8313, 1.0614054
  %v8340 = vmul.f32 %v8314, 1.0614054
  %v8341 = vmul.f32 %v8315, 1.0614054
  %v8342 = vmul.f32 %v8316, 1.0614054
  %v8343 = vmul.f32 %v8317, 1.0614054
  %v8344 = vmul.f32 %v8318, 1.0614054
  %v8345 = vmul.f32 %v8319, 1.0614054
  %v8346 = vmul.f32 %v8320, 1.0614054
  %v8347 = vmul.f32 %v8321, 1.0614054
  %v8348 = vmul.f32 %v8322, 1.0614054
  %v8349 = vmul.f32 %v8323, 1.0614054
  %v8350 = vmul.f32 %v8324, 1.0614054
  %v8351 = vmul.f32 %v8325, 1.0614054
  %v8352 = vmul.f32 %v8326, 1.0614054
  %v8353 = vadd.f32 %v8327, -1.4531521
  %v8354 = vadd.f32 %v8328, -1.4531521
  %v8355 = vadd.f32 %v8329, -1.4531521
  %v8356 = vadd.f32 %v8330, -1.4531521
  %v8357 = vadd.f32 %v8331, -1.4531521
  %v8358 = vadd.f32 %v8332, -1.4531521
  %v8359 = vadd.f32 %v8333, -1.4531521
  %v8360 = vadd.f32 %v8334, -1.4531521
  %v8361 = vadd.f32 %v8335, -1.4531521
  %v8362 = vadd.f32 %v8336, -1.4531521
  %v8363 = vadd.f32 %v8337, -1.4531521
  %v8364 = vadd.f32 %v8338, -1.4531521
  %v8365 = vadd.f32 %v8339, -1.4531521
  %v8366 = vadd.f32 %v8340, -1.4531521
  %v8367 = vadd.f32 %v8341, -1.4531521
  %v8368 = vadd.f32 %v8342, -1.4531521
  %v8369 = vadd.f32 %v8343, -1.4531521
  %v8370 = vadd.f32 %v8344, -1.4531521
  %v8371 = vadd.f32 %v8345, -1.4531521
  %v8372 = vadd.f32 %v8346, -1.4531521
  %v8373 = vadd.f32 %v8347, -1.4531521
  %v8374 = vadd.f32 %v8348, -1.4531521
  %v8375 = vadd.f32 %v8349, -1.4531521
  %v8376 = vadd.f32 %v8350, -1.4531521
  %v8377 = vadd.f32 %v8351, -1.4531521
  %v8378 = vadd.f32 %v8352, -1.4531521
  %v8379 = vmul.f32 %v8301, %v8353
  %v8380 = vmul.f32 %v8302, %v8354
  %v8381 = vmul.f32 %v8303, %v8355
  %v8382 = vmul.f32 %v8304, %v8356
  %v8383 = vmul.f32 %v8305, %v8357
  %v8384 = vmul.f32 %v8306, %v8358
  %v8385 = vmul.f32 %v8307, %v8359
  %v8386 = vmul.f32 %v8308, %v8360
  %v8387 = vmul.f32 %v8309, %v8361
  %v8388 = vmul.f32 %v8310, %v8362
  %v8389 = vmul.f32 %v8311, %v8363
  %v8390 = vmul.f32 %v8312, %v8364
  %v8391 = vmul.f32 %v8313, %v8365
  %v8392 = vmul.f32 %v8314, %v8366
  %v8393 = vmul.f32 %v8315, %v8367
  %v8394 = vmul.f32 %v8316, %v8368
  %v8395 = vmul.f32 %v8317, %v8369
  %v8396 = vmul.f32 %v8318, %v8370
  %v8397 = vmul.f32 %v8319, %v8371
  %v8398 = vmul.f32 %v8320, %v8372
  %v8399 = vmul.f32 %v8321, %v8373
  %v8400 = vmul.f32 %v8322, %v8374
  %v8401 = vmul.f32 %v8323, %v8375
  %v8402 = vmul.f32 %v8324, %v8376
  %v8403 = vmul.f32 %v8325, %v8377
  %v8404 = vmul.f32 %v8326, %v8378
  %v8405 = vadd.f32 %v8379, 1.4214138
  %v8406 = vadd.f32 %v8380, 1.4214138
  %v8407 = vadd.f32 %v8381, 1.4214138
  %v8408 = vadd.f32 %v8382, 1.4214138
  %v8409 = vadd.f32 %v8383, 1.4214138
  %v8410 = vadd.f32 %v8384, 1.4214138
  %v8411 = vadd.f32 %v8385, 1.4214138
  %v8412 = vadd.f32 %v8386, 1.4214138
  %v8413 = vadd.f32 %v8387, 1.4214138
  %v8414 = vadd.f32 %v8388, 1.4214138
  %v8415 = vadd.f32 %v8389, 1.4214138
  %v8416 = vadd.f32 %v8390, 1.4214138
  %v8417 = vadd.f32 %v8391, 1.4214138
  %v8418 = vadd.f32 %v8392, 1.4214138
  %v8419 = vadd.f32 %v8393, 1.4214138
  %v8420 = vadd.f32 %v8394, 1.4214138
  %v8421 = vadd.f32 %v8395, 1.4214138
  %v8422 = vadd.f32 %v8396, 1.4214138
  %v8423 = vadd.f32 %v8397, 1.4214138
  %v8424 = vadd.f32 %v8398, 1.4214138
  %v8425 = vadd.f32 %v8399, 1.4214138
  %v8426 = vadd.f32 %v8400, 1.4214138
  %v8427 = vadd.f32 %v8401, 1.4214138
  %v8428 = vadd.f32 %v8402, 1.4214138
  %v8429 = vadd.f32 %v8403, 1.4214138
  %v8430 = vadd.f32 %v8404, 1.4214138
  %v8431 = vmul.f32 %v8301, %v8405
  %v8432 = vmul.f32 %v8302, %v8406
  %v8433 = vmul.f32 %v8303, %v8407
  %v8434 = vmul.f32 %v8304, %v8408
  %v8435 = vmul.f32 %v8305, %v8409
  %v8436 = vmul.f32 %v8306, %v8410
  %v8437 = vmul.f32 %v8307, %v8411
  %v8438 = vmul.f32 %v8308, %v8412
  %v8439 = vmul.f32 %v8309, %v8413
  %v8440 = vmul.f32 %v8310, %v8414
  %v8441 = vmul.f32 %v8311, %v8415
  %v8442 = vmul.f32 %v8312, %v8416
  %v8443 = vmul.f32 %v8313, %v8417
  %v8444 = vmul.f32 %v8314, %v8418
  %v8445 = vmul.f32 %v8315, %v8419
  %v8446 = vmul.f32 %v8316, %v8420
  %v8447 = vmul.f32 %v8317, %v8421
  %v8448 = vmul.f32 %v8318, %v8422
  %v8449 = vmul.f32 %v8319, %v8423
  %v8450 = vmul.f32 %v8320, %v8424
  %v8451 = vmul.f32 %v8321, %v8425
  %v8452 = vmul.f32 %v8322, %v8426
  %v8453 = vmul.f32 %v8323, %v8427
  %v8454 = vmul.f32 %v8324, %v8428
  %v8455 = vmul.f32 %v8325, %v8429
  %v8456 = vmul.f32 %v8326, %v8430
  %v8457 = vadd.f32 %v8431, -0.28449672
  %v8458 = vadd.f32 %v8432, -0.28449672
  %v8459 = vadd.f32 %v8433, -0.28449672
  %v8460 = vadd.f32 %v8434, -0.28449672
  %v8461 = vadd.f32 %v8435, -0.28449672
  %v8462 = vadd.f32 %v8436, -0.28449672
  %v8463 = vadd.f32 %v8437, -0.28449672
  %v8464 = vadd.f32 %v8438, -0.28449672
  %v8465 = vadd.f32 %v8439, -0.28449672
  %v8466 = vadd.f32 %v8440, -0.28449672
  %v8467 = vadd.f32 %v8441, -0.28449672
  %v8468 = vadd.f32 %v8442, -0.28449672
  %v8469 = vadd.f32 %v8443, -0.28449672
  %v8470 = vadd.f32 %v8444, -0.28449672
  %v8471 = vadd.f32 %v8445, -0.28449672
  %v8472 = vadd.f32 %v8446, -0.28449672
  %v8473 = vadd.f32 %v8447, -0.28449672
  %v8474 = vadd.f32 %v8448, -0.28449672
  %v8475 = vadd.f32 %v8449, -0.28449672
  %v8476 = vadd.f32 %v8450, -0.28449672
  %v8477 = vadd.f32 %v8451, -0.28449672
  %v8478 = vadd.f32 %v8452, -0.28449672
  %v8479 = vadd.f32 %v8453, -0.28449672
  %v8480 = vadd.f32 %v8454, -0.28449672
  %v8481 = vadd.f32 %v8455, -0.28449672
  %v8482 = vadd.f32 %v8456, -0.28449672
  %v8483 = vmul.f32 %v8301, %v8457
  %v8484 = vmul.f32 %v8302, %v8458
  %v8485 = vmul.f32 %v8303, %v8459
  %v8486 = vmul.f32 %v8304, %v8460
  %v8487 = vmul.f32 %v8305, %v8461
  %v8488 = vmul.f32 %v8306, %v8462
  %v8489 = vmul.f32 %v8307, %v8463
  %v8490 = vmul.f32 %v8308, %v8464
  %v8491 = vmul.f32 %v8309, %v8465
  %v8492 = vmul.f32 %v8310, %v8466
  %v8493 = vmul.f32 %v8311, %v8467
  %v8494 = vmul.f32 %v8312, %v8468
  %v8495 = vmul.f32 %v8313, %v8469
  %v8496 = vmul.f32 %v8314, %v8470
  %v8497 = vmul.f32 %v8315, %v8471
  %v8498 = vmul.f32 %v8316, %v8472
  %v8499 = vmul.f32 %v8317, %v8473
  %v8500 = vmul.f32 %v8318, %v8474
  %v8501 = vmul.f32 %v8319, %v8475
  %v8502 = vmul.f32 %v8320, %v8476
  %v8503 = vmul.f32 %v8321, %v8477
  %v8504 = vmul.f32 %v8322, %v8478
  %v8505 = vmul.f32 %v8323, %v8479
  %v8506 = vmul.f32 %v8324, %v8480
  %v8507 = vmul.f32 %v8325, %v8481
  %v8508 = vmul.f32 %v8326, %v8482
  %v8509 = vadd.f32 %v8483, 0.2548296
  %v8510 = vadd.f32 %v8484, 0.2548296
  %v8511 = vadd.f32 %v8485, 0.2548296
  %v8512 = vadd.f32 %v8486, 0.2548296
  %v8513 = vadd.f32 %v8487, 0.2548296
  %v8514 = vadd.f32 %v8488, 0.2548296
  %v8515 = vadd.f32 %v8489, 0.2548296
  %v8516 = vadd.f32 %v8490, 0.2548296
  %v8517 = vadd.f32 %v8491, 0.2548296
  %v8518 = vadd.f32 %v8492, 0.2548296
  %v8519 = vadd.f32 %v8493, 0.2548296
  %v8520 = vadd.f32 %v8494, 0.2548296
  %v8521 = vadd.f32 %v8495, 0.2548296
  %v8522 = vadd.f32 %v8496, 0.2548296
  %v8523 = vadd.f32 %v8497, 0.2548296
  %v8524 = vadd.f32 %v8498, 0.2548296
  %v8525 = vadd.f32 %v8499, 0.2548296
  %v8526 = vadd.f32 %v8500, 0.2548296
  %v8527 = vadd.f32 %v8501, 0.2548296
  %v8528 = vadd.f32 %v8502, 0.2548296
  %v8529 = vadd.f32 %v8503, 0.2548296
  %v8530 = vadd.f32 %v8504, 0.2548296
  %v8531 = vadd.f32 %v8505, 0.2548296
  %v8532 = vadd.f32 %v8506, 0.2548296
  %v8533 = vadd.f32 %v8507, 0.2548296
  %v8534 = vadd.f32 %v8508, 0.2548296
  %v8535 = vmul.f32 %v8301, %v8509
  %v8536 = vmul.f32 %v8302, %v8510
  %v8537 = vmul.f32 %v8303, %v8511
  %v8538 = vmul.f32 %v8304, %v8512
  %v8539 = vmul.f32 %v8305, %v8513
  %v8540 = vmul.f32 %v8306, %v8514
  %v8541 = vmul.f32 %v8307, %v8515
  %v8542 = vmul.f32 %v8308, %v8516
  %v8543 = vmul.f32 %v8309, %v8517
  %v8544 = vmul.f32 %v8310, %v8518
  %v8545 = vmul.f32 %v8311, %v8519
  %v8546 = vmul.f32 %v8312, %v8520
  %v8547 = vmul.f32 %v8313, %v8521
  %v8548 = vmul.f32 %v8314, %v8522
  %v8549 = vmul.f32 %v8315, %v8523
  %v8550 = vmul.f32 %v8316, %v8524
  %v8551 = vmul.f32 %v8317, %v8525
  %v8552 = vmul.f32 %v8318, %v8526
  %v8553 = vmul.f32 %v8319, %v8527
  %v8554 = vmul.f32 %v8320, %v8528
  %v8555 = vmul.f32 %v8321, %v8529
  %v8556 = vmul.f32 %v8322, %v8530
  %v8557 = vmul.f32 %v8323, %v8531
  %v8558 = vmul.f32 %v8324, %v8532
  %v8559 = vmul.f32 %v8325, %v8533
  %v8560 = vmul.f32 %v8326, %v8534
  %v8561 = vsub.f32 0.0, %v8223
  %v8562 = vsub.f32 0.0, %v8224
  %v8563 = vsub.f32 0.0, %v8225
  %v8564 = vsub.f32 0.0, %v8226
  %v8565 = vsub.f32 0.0, %v8227
  %v8566 = vsub.f32 0.0, %v8228
  %v8567 = vsub.f32 0.0, %v8229
  %v8568 = vsub.f32 0.0, %v8230
  %v8569 = vsub.f32 0.0, %v8231
  %v8570 = vsub.f32 0.0, %v8232
  %v8571 = vsub.f32 0.0, %v8233
  %v8572 = vsub.f32 0.0, %v8234
  %v8573 = vsub.f32 0.0, %v8235
  %v8574 = vsub.f32 0.0, %v8236
  %v8575 = vsub.f32 0.0, %v8237
  %v8576 = vsub.f32 0.0, %v8238
  %v8577 = vsub.f32 0.0, %v8239
  %v8578 = vsub.f32 0.0, %v8240
  %v8579 = vsub.f32 0.0, %v8241
  %v8580 = vsub.f32 0.0, %v8242
  %v8581 = vsub.f32 0.0, %v8243
  %v8582 = vsub.f32 0.0, %v8244
  %v8583 = vsub.f32 0.0, %v8245
  %v8584 = vsub.f32 0.0, %v8246
  %v8585 = vsub.f32 0.0, %v8247
  %v8586 = vsub.f32 0.0, %v8248
  %v8587 = vmul.f32 %v8561, %v8223
  %v8588 = vmul.f32 %v8562, %v8224
  %v8589 = vmul.f32 %v8563, %v8225
  %v8590 = vmul.f32 %v8564, %v8226
  %v8591 = vmul.f32 %v8565, %v8227
  %v8592 = vmul.f32 %v8566, %v8228
  %v8593 = vmul.f32 %v8567, %v8229
  %v8594 = vmul.f32 %v8568, %v8230
  %v8595 = vmul.f32 %v8569, %v8231
  %v8596 = vmul.f32 %v8570, %v8232
  %v8597 = vmul.f32 %v8571, %v8233
  %v8598 = vmul.f32 %v8572, %v8234
  %v8599 = vmul.f32 %v8573, %v8235
  %v8600 = vmul.f32 %v8574, %v8236
  %v8601 = vmul.f32 %v8575, %v8237
  %v8602 = vmul.f32 %v8576, %v8238
  %v8603 = vmul.f32 %v8577, %v8239
  %v8604 = vmul.f32 %v8578, %v8240
  %v8605 = vmul.f32 %v8579, %v8241
  %v8606 = vmul.f32 %v8580, %v8242
  %v8607 = vmul.f32 %v8581, %v8243
  %v8608 = vmul.f32 %v8582, %v8244
  %v8609 = vmul.f32 %v8583, %v8245
  %v8610 = vmul.f32 %v8584, %v8246
  %v8611 = vmul.f32 %v8585, %v8247
  %v8612 = vmul.f32 %v8586, %v8248
  %v8613 = vmul.f32 %v8587, 1.442695
  %v8614 = vpow.pop %v8613
  %v8615 = vmul.f32 %v8588, 1.442695
  %v8616 = vpow.pop %v8615
  %v8617 = vmul.f32 %v8589, 1.442695
  %v8618 = vpow.pop %v8617
  %v8619 = vmul.f32 %v8590, 1.442695
  %v8620 = vpow.pop %v8619
  %v8621 = vmul.f32 %v8591, 1.442695
  %v8622 = vpow.pop %v8621
  %v8623 = vmul.f32 %v8592, 1.442695
  %v8624 = vpow.pop %v8623
  %v8625 = vmul.f32 %v8593, 1.442695
  %v8626 = vpow.pop %v8625
  %v8627 = vmul.f32 %v8594, 1.442695
  %v8628 = vpow.pop %v8627
  %v8629 = vmul.f32 %v8595, 1.442695
  %v8630 = vpow.pop %v8629
  %v8631 = vmul.f32 %v8596, 1.442695
  %v8632 = vpow.pop %v8631
  %v8633 = vmul.f32 %v8597, 1.442695
  %v8634 = vpow.pop %v8633
  %v8635 = vmul.f32 %v8598, 1.442695
  %v8636 = vpow.pop %v8635
  %v8637 = vmul.f32 %v8599, 1.442695
  %v8638 = vpow.pop %v8637
  %v8639 = vmul.f32 %v8600, 1.442695
  %v8640 = vpow.pop %v8639
  %v8641 = vmul.f32 %v8601, 1.442695
  %v8642 = vpow.pop %v8641
  %v8643 = vmul.f32 %v8602, 1.442695
  %v8644 = vpow.pop %v8643
  %v8645 = vmul.f32 %v8603, 1.442695
  %v8646 = vpow.pop %v8645
  %v8647 = vmul.f32 %v8604, 1.442695
  %v8648 = vpow.pop %v8647
  %v8649 = vmul.f32 %v8605, 1.442695
  %v8650 = vpow.pop %v8649
  %v8651 = vmul.f32 %v8606, 1.442695
  %v8652 = vpow.pop %v8651
  %v8653 = vmul.f32 %v8607, 1.442695
  %v8654 = vpow.pop %v8653
  %v8655 = vmul.f32 %v8608, 1.442695
  %v8656 = vpow.pop %v8655
  %v8657 = vmul.f32 %v8609, 1.442695
  %v8658 = vpow.pop %v8657
  %v8659 = vmul.f32 %v8610, 1.442695
  %v8660 = vpow.pop %v8659
  %v8661 = vmul.f32 %v8611, 1.442695
  %v8662 = vpow.pop %v8661
  %v8663 = vmul.f32 %v8612, 1.442695
  %v8664 = vpow.pop %v8663
  %v8665 = vmul.f32 %v8535, %v8614
  %v8666 = vmul.f32 %v8536, %v8616
  %v8667 = vmul.f32 %v8537, %v8618
  %v8668 = vmul.f32 %v8538, %v8620
  %v8669 = vmul.f32 %v8539, %v8622
  %v8670 = vmul.f32 %v8540, %v8624
  %v8671 = vmul.f32 %v8541, %v8626
  %v8672 = vmul.f32 %v8542, %v8628
  %v8673 = vmul.f32 %v8543, %v8630
  %v8674 = vmul.f32 %v8544, %v8632
  %v8675 = vmul.f32 %v8545, %v8634
  %v8676 = vmul.f32 %v8546, %v8636
  %v8677 = vmul.f32 %v8547, %v8638
  %v8678 = vmul.f32 %v8548, %v8640
  %v8679 = vmul.f32 %v8549, %v8642
  %v8680 = vmul.f32 %v8550, %v8644
  %v8681 = vmul.f32 %v8551, %v8646
  %v8682 = vmul.f32 %v8552, %v8648
  %v8683 = vmul.f32 %v8553, %v8650
  %v8684 = vmul.f32 %v8554, %v8652
  %v8685 = vmul.f32 %v8555, %v8654
  %v8686 = vmul.f32 %v8556, %v8656
  %v8687 = vmul.f32 %v8557, %v8658
  %v8688 = vmul.f32 %v8558, %v8660
  %v8689 = vmul.f32 %v8559, %v8662
  %v8690 = vmul.f32 %v8560, %v8664
  %v8691 = vsub.f32 1.0, %v8665
  %v8692 = vsub.f32 1.0, %v8666
  %v8693 = vsub.f32 1.0, %v8667
  %v8694 = vsub.f32 1.0, %v8668
  %v8695 = vsub.f32 1.0, %v8669
  %v8696 = vsub.f32 1.0, %v8670
  %v8697 = vsub.f32 1.0, %v8671
  %v8698 = vsub.f32 1.0, %v8672
  %v8699 = vsub.f32 1.0, %v8673
  %v8700 = vsub.f32 1.0, %v8674
  %v8701 = vsub.f32 1.0, %v8675
  %v8702 = vsub.f32 1.0, %v8676
  %v8703 = vsub.f32 1.0, %v8677
  %v8704 = vsub.f32 1.0, %v8678
  %v8705 = vsub.f32 1.0, %v8679
  %v8706 = vsub.f32 1.0, %v8680
  %v8707 = vsub.f32 1.0, %v8681
  %v8708 = vsub.f32 1.0, %v8682
  %v8709 = vsub.f32 1.0, %v8683
  %v8710 = vsub.f32 1.0, %v8684
  %v8711 = vsub.f32 1.0, %v8685
  %v8712 = vsub.f32 1.0, %v8686
  %v8713 = vsub.f32 1.0, %v8687
  %v8714 = vsub.f32 1.0, %v8688
  %v8715 = vsub.f32 1.0, %v8689
  %v8716 = vsub.f32 1.0, %v8690
  %v8717 = vmul.f32 %v8197, %v8691
  %v8718 = vmul.f32 %v8198, %v8692
  %v8719 = vmul.f32 %v8199, %v8693
  %v8720 = vmul.f32 %v8200, %v8694
  %v8721 = vmul.f32 %v8201, %v8695
  %v8722 = vmul.f32 %v8202, %v8696
  %v8723 = vmul.f32 %v8203, %v8697
  %v8724 = vmul.f32 %v8204, %v8698
  %v8725 = vmul.f32 %v8205, %v8699
  %v8726 = vmul.f32 %v8206, %v8700
  %v8727 = vmul.f32 %v8207, %v8701
  %v8728 = vmul.f32 %v8208, %v8702
  %v8729 = vmul.f32 %v8209, %v8703
  %v8730 = vmul.f32 %v8210, %v8704
  %v8731 = vmul.f32 %v8211, %v8705
  %v8732 = vmul.f32 %v8212, %v8706
  %v8733 = vmul.f32 %v8213, %v8707
  %v8734 = vmul.f32 %v8214, %v8708
  %v8735 = vmul.f32 %v8215, %v8709
  %v8736 = vmul.f32 %v8216, %v8710
  %v8737 = vmul.f32 %v8217, %v8711
  %v8738 = vmul.f32 %v8218, %v8712
  %v8739 = vmul.f32 %v8219, %v8713
  %v8740 = vmul.f32 %v8220, %v8714
  %v8741 = vmul.f32 %v8221, %v8715
  %v8742 = vmul.f32 %v8222, %v8716
  %v8743 = vadd.f32 %v8717, 1.0
  %v8744 = vadd.f32 %v8718, 1.0
  %v8745 = vadd.f32 %v8719, 1.0
  %v8746 = vadd.f32 %v8720, 1.0
  %v8747 = vadd.f32 %v8721, 1.0
  %v8748 = vadd.f32 %v8722, 1.0
  %v8749 = vadd.f32 %v8723, 1.0
  %v8750 = vadd.f32 %v8724, 1.0
  %v8751 = vadd.f32 %v8725, 1.0
  %v8752 = vadd.f32 %v8726, 1.0
  %v8753 = vadd.f32 %v8727, 1.0
  %v8754 = vadd.f32 %v8728, 1.0
  %v8755 = vadd.f32 %v8729, 1.0
  %v8756 = vadd.f32 %v8730, 1.0
  %v8757 = vadd.f32 %v8731, 1.0
  %v8758 = vadd.f32 %v8732, 1.0
  %v8759 = vadd.f32 %v8733, 1.0
  %v8760 = vadd.f32 %v8734, 1.0
  %v8761 = vadd.f32 %v8735, 1.0
  %v8762 = vadd.f32 %v8736, 1.0
  %v8763 = vadd.f32 %v8737, 1.0
  %v8764 = vadd.f32 %v8738, 1.0
  %v8765 = vadd.f32 %v8739, 1.0
  %v8766 = vadd.f32 %v8740, 1.0
  %v8767 = vadd.f32 %v8741, 1.0
  %v8768 = vadd.f32 %v8742, 1.0
  %v8769 = vmul.f32 %v8119, %v8743
  %v8770 = vmul.f32 %v8120, %v8744
  %v8771 = vmul.f32 %v8121, %v8745
  %v8772 = vmul.f32 %v8122, %v8746
  %v8773 = vmul.f32 %v8123, %v8747
  %v8774 = vmul.f32 %v8124, %v8748
  %v8775 = vmul.f32 %v8125, %v8749
  %v8776 = vmul.f32 %v8126, %v8750
  %v8777 = vmul.f32 %v8127, %v8751
  %v8778 = vmul.f32 %v8128, %v8752
  %v8779 = vmul.f32 %v8129, %v8753
  %v8780 = vmul.f32 %v8130, %v8754
  %v8781 = vmul.f32 %v8131, %v8755
  %v8782 = vmul.f32 %v8132, %v8756
  %v8783 = vmul.f32 %v8133, %v8757
  %v8784 = vmul.f32 %v8134, %v8758
  %v8785 = vmul.f32 %v8135, %v8759
  %v8786 = vmul.f32 %v8136, %v8760
  %v8787 = vmul.f32 %v8137, %v8761
  %v8788 = vmul.f32 %v8138, %v8762
  %v8789 = vmul.f32 %v8139, %v8763
  %v8790 = vmul.f32 %v8140, %v8764
  %v8791 = vmul.f32 %v8141, %v8765
  %v8792 = vmul.f32 %v8142, %v8766
  %v8793 = vmul.f32 %v8143, %v8767
  %v8794 = vmul.f32 %v8144, %v8768
  %s8795 = scalar_lea.vmem %s7, 624
  %8796 = vst.msk [vmem:[%s8795 - $0x2] sm:$0xfc] %vm5216, %v8769
  %8797 = vst.msk [vmem:[%s8795 + $0x6] sm:$0x7f] %vm5218, %v8770
  %8798 = vst.msk [vmem:[%s8795 + $0xe] sm:$0xfc] %vm5216, %v8771
  %8799 = vst.msk [vmem:[%s8795 + $0x16] sm:$0x7f] %vm5218, %v8772
  %8800 = vst.msk [vmem:[%s8795 + $0x1e] sm:$0xfc] %vm5216, %v8773
  %8801 = vst.msk [vmem:[%s8795 + $0x26] sm:$0x7f] %vm5218, %v8774
  %8802 = vst.msk [vmem:[%s8795 + $0x2e] sm:$0xfc] %vm5216, %v8775
  %8803 = vst.msk [vmem:[%s8795 + $0x36] sm:$0x7f] %vm5218, %v8776
  %8804 = vst.msk [vmem:[%s8795 + $0x3e] sm:$0xfc] %vm5216, %v8777
  %8805 = vst.msk [vmem:[%s8795 + $0x46] sm:$0x7f] %vm5218, %v8778
  %8806 = vst.msk [vmem:[%s8795 + $0x4e] sm:$0xfc] %vm5216, %v8779
  %8807 = vst.msk [vmem:[%s8795 + $0x56] sm:$0x7f] %vm5218, %v8780
  %8808 = vst.msk [vmem:[%s8795 + $0x5e] sm:$0xfc] %vm5216, %v8781
  %8809 = vst.msk [vmem:[%s8795 + $0x66] sm:$0x7f] %vm5218, %v8782
  %8810 = vst.msk [vmem:[%s8795 + $0x6e] sm:$0xfc] %vm5216, %v8783
  %8811 = vst.msk [vmem:[%s8795 + $0x76] sm:$0x7f] %vm5218, %v8784
  %8812 = vst.msk [vmem:[%s8795 + $0x7e] sm:$0xfc] %vm5216, %v8785
  %8813 = vst.msk [vmem:[%s8795 + $0x86] sm:$0x7f] %vm5218, %v8786
  %8814 = vst.msk [vmem:[%s8795 + $0x8e] sm:$0xfc] %vm5216, %v8787
  %8815 = vst.msk [vmem:[%s8795 + $0x96] sm:$0x7f] %vm5218, %v8788
  %8816 = vst.msk [vmem:[%s8795 + $0x9e] sm:$0xfc] %vm5216, %v8789
  %8817 = vst.msk [vmem:[%s8795 + $0xa6] sm:$0x7f] %vm5218, %v8790
  %8818 = vst.msk [vmem:[%s8795 + $0xae] sm:$0xfc] %vm5216, %v8791
  %8819 = vst.msk [vmem:[%s8795 + $0xb6] sm:$0x7f] %vm5218, %v8792
  %8820 = vst.msk [vmem:[%s8795 + $0xbe] sm:$0xfc] %vm5216, %v8793
  %8821 = vst.msk [vmem:[%s8795 + $0xc6] sm:$0x7f] %vm5218, %v8794
  // Predicated region
  $region30: #{model_forward.1} parent=0 // pred_check
    _
  $region31: #{model_forward.1} parent=0 // pred_check_branch
    %8823 = sbr.rel (0) target = $region33
  $region32: #{model_forward.1} parent=0 // pred_region
    _
  $region33: #{model_forward.1} parent=0 // pred_fallthru
    _
  // Predicated region
  $region34: #{model_forward.1} parent=0 // pred_check
    _
  $region35: #{model_forward.1} parent=0 // pred_check_branch
    %8825 = sbr.rel (0) target = $region37
  $region36: #{model_forward.1} parent=0 // pred_region
    _
  $region37: #{model_forward.1} parent=0 // pred_fallthru
    _

</llo_original>
